<compile_context>
chip_gen: v5e
topology: v5e:2x2
jax: 0.10.0
libtpu: 0.0.40
codegen_flags: <defaults>
</compile_context>

<pallas_src>
import math

import jax
import jax.numpy as jnp
from jax.experimental import pallas as pl
from jax.experimental.pallas import tpu as pltpu


# ---------------- Config (mirrors the PyTorch config object) -----------------
class RPNConfig:
    backbone_out_channels = 32
    scales = [16.0, 32.0, 64.0]
    aspect_ratios = [0.5, 1.0, 2.0]
    rpn_bg_threshold = 0.3
    rpn_fg_threshold = 0.7
    rpn_nms_threshold = 0.7
    rpn_batch_size = 256
    rpn_pos_fraction = 0.5
    rpn_test_topk = 32
    rpn_test_prenms_topk = 128


BBOX_XFORM_CLIP = math.log(1000.0 / 16.0)
MIN_BOX_SIZE = 16.0


# ------------------------------ Pallas kernel ---------------------------------
def make_rpn_fused_kernel(tile_h, tile_m, w_dim, c_dim, num_a, npad, img_h, img_w):
    """Fused: 3x3 conv + ReLU + combined cls/bbox 1x1 conv + anchor decode."""
    img_h = float(img_h)
    img_w = float(img_w)

    def kernel(anch_ref, feat_ref, wconv_ref, bconv_ref, whead_ref, bhead_ref,
               out_ref):
        i = pl.program_id(0)
        row0 = i * tile_h  # first output row of this tile (in un-padded coords)

        # ---- 3x3 conv as 9 shifted matmuls (bf16 MXU, f32 accumulation) ----
        acc = jnp.zeros((tile_m, c_dim), jnp.float32)
        for ky in range(3):
            for kx in range(3):
                x = feat_ref[pl.ds(row0 + ky, tile_h), pl.ds(kx, w_dim), :]
                x = x.reshape(tile_m, c_dim)                  # (TILE_M, C) bf16
                acc = acc + jnp.dot(x, wconv_ref[3 * ky + kx],
                                    preferred_element_type=jnp.float32)
        hidden = jnp.maximum(acc + bconv_ref[...], 0.0)       # ReLU(conv3x3)

        # ---- combined cls + bbox 1x1 conv, coordinate-major, padded to 128 ----
        y = jnp.dot(hidden.astype(jnp.bfloat16), whead_ref[...],
                    preferred_element_type=jnp.float32) + bhead_ref[...]

        logits = y[:, 0:num_a]
        dx = y[:, num_a:2 * num_a]
        dy = y[:, 2 * num_a:3 * num_a]
        dw = jnp.minimum(y[:, 3 * num_a:4 * num_a], BBOX_XFORM_CLIP)
        dh = jnp.minimum(y[:, 4 * num_a:5 * num_a], BBOX_XFORM_CLIP)

        # ---- fused anchor decode + clamp + sigmoid ----
        anc = anch_ref[...]                                   # (TILE_M, 4A) f32
        ax1 = anc[:, 0:num_a]
        ay1 = anc[:, num_a:2 * num_a]
        ax2 = anc[:, 2 * num_a:3 * num_a]
        ay2 = anc[:, 3 * num_a:4 * num_a]
        aw = ax2 - ax1
        ah = ay2 - ay1
        acx = ax1 + 0.5 * aw
        acy = ay1 + 0.5 * ah

        pcx = dx * aw + acx
        pcy = dy * ah + acy
        pw = jnp.exp(dw) * aw
        ph = jnp.exp(dh) * ah

        px1 = jnp.clip(pcx - 0.5 * pw, 0.0, img_w)
        py1 = jnp.clip(pcy - 0.5 * ph, 0.0, img_h)
        px2 = jnp.clip(pcx + 0.5 * pw, 0.0, img_w)
        py2 = jnp.clip(pcy + 0.5 * ph, 0.0, img_h)

        scores = jax.nn.sigmoid(logits)

        # Single lane-dense (TILE_M, 128) store: [scores|x1|y1|x2|y2|pad].
        pad = jnp.zeros((tile_m, npad - 5 * num_a), jnp.float32)
        out_ref[...] = jnp.concatenate([scores, px1, py1, px2, py2, pad], axis=-1)

    return kernel


# ------------------------------- JAX glue --------------------------------------
def _choose_tile_h(H, W, target_rows=512):
    """Largest divisor of H with tile_h*W <= target_rows and (tile_h*W) % 8 == 0."""
    best = None
    for th in range(1, H + 1):
        if H % th:
            continue
        tm = th * W
        if tm % 8 == 0 and tm <= target_rows:
            best = th
    return best if best is not None else H


def generate_anchors_cm(image_shape, feat_shape, scales, aspect_ratios):
    """Anchors directly in the coordinate-major (HW, 4A) layout the kernel reads.

    Column layout: [x1(a=0..A-1) | y1(...) | x2(...) | y2(...)].
    Semantics match RegionProposalNetwork.generate_anchors.
    """
    grid_h, grid_w = feat_shape[-2:]
    image_h, image_w = image_shape[-2:]
    stride_h = float(image_h // grid_h)
    stride_w = float(image_w // grid_w)

    scales = jnp.asarray(scales, jnp.float32)
    ars = jnp.asarray(aspect_ratios, jnp.float32)
    h_ratios = jnp.sqrt(ars)
    w_ratios = 1.0 / h_ratios
    ws = (w_ratios[:, None] * scales[None, :]).reshape(-1)
    hs = (h_ratios[:, None] * scales[None, :]).reshape(-1)
    base = jnp.round(jnp.stack([-ws, -hs, ws, hs], axis=1) / 2.0)      # (A, 4)

    sx = jnp.arange(grid_w, dtype=jnp.float32) * stride_w
    sy = jnp.arange(grid_h, dtype=jnp.float32) * stride_h
    syy, sxx = jnp.meshgrid(sy, sx, indexing="ij")
    sxx = sxx.reshape(-1)
    syy = syy.reshape(-1)
    shifts = jnp.stack([sxx, syy, sxx, syy], axis=1)                    # (HW, 4)

    anchors = shifts[:, None, :] + base[None, :, :]                     # (HW, A, 4)
    A = base.shape[0]
    return jnp.transpose(anchors, (0, 2, 1)).reshape(grid_h * grid_w, 4 * A)


def pairwise_iou(boxes):
    x1, y1, x2, y2 = boxes[:, 0], boxes[:, 1], boxes[:, 2], boxes[:, 3]
    area = (x2 - x1) * (y2 - y1)
    xx1 = jnp.maximum(x1[:, None], x1[None, :])
    yy1 = jnp.maximum(y1[:, None], y1[None, :])
    xx2 = jnp.minimum(x2[:, None], x2[None, :])
    yy2 = jnp.minimum(y2[:, None], y2[None, :])
    inter = jnp.maximum(xx2 - xx1, 0.0) * jnp.maximum(yy2 - yy1, 0.0)
    union = area[:, None] + area[None, :] - inter
    return inter / jnp.maximum(union, 1e-9)


def filter_proposals(proposals, scores, prenms_topk, topk, nms_thresh):
    """Pre-NMS topk -> min-size filter -> greedy NMS -> post-NMS topk.

    Static shapes: boxes are masked (score = -1) instead of dropped; fixed-size
    (topk, 4)/(topk,) outputs plus the count of valid entries are returned.
    """
    n = scores.shape[0]
    K = min(prenms_topk, n)
    top_scores, top_idx = jax.lax.top_k(scores, K)     # already sorted descending
    top_boxes = proposals[top_idx]

    ws = top_boxes[:, 2] - top_boxes[:, 0]
    hs = top_boxes[:, 3] - top_boxes[:, 1]
    valid = (ws >= MIN_BOX_SIZE) & (hs >= MIN_BOX_SIZE)
    eff_scores = jnp.where(valid, top_scores, -1.0)

    iou = pairwise_iou(top_boxes)
    keep0 = eff_scores > 0.0
    idxs = jnp.arange(K)

    def body(i, keep):
        suppress = (iou[i] > nms_thresh) & (idxs > i) & keep[i]
        return keep & (~suppress)

    keep = jax.lax.fori_loop(0, K, body, keep0)

    final_scores = jnp.where(keep, eff_scores, -1.0)
    k_out = min(topk, K)
    out_scores, sel = jax.lax.top_k(final_scores, k_out)
    out_boxes = top_boxes[sel]
    num_valid = jnp.sum(out_scores > 0.0)
    return out_boxes, out_scores, num_valid


# ------------------------------ Full forward ------------------------------------
def rpn_forward(image, feat, params, cfg: RPNConfig):
    """image: (1, 3, IH, IW) NCHW; feat: (1, C, H, W) NCHW."""
    C = cfg.backbone_out_channels
    A = len(cfg.scales) * len(cfg.aspect_ratios)
    _, _, H, W = feat.shape
    IH, IW = int(image.shape[-2]), int(image.shape[-1])
    HW = H * W
    NA = HW * A
    NPAD = ((5 * A + 127) // 128) * 128          # pad cls+box columns to 128 lanes

    w_conv, b_conv, w_cls, b_cls, w_box, b_box = params

    # --- weight prep (glue) ---
    # conv taps: (C_out, C_in, 3, 3) -> (9, C_in, C_out), tap index = ky*3 + kx
    w_conv_taps = jnp.transpose(w_conv, (2, 3, 1, 0)).reshape(9, C, C)
    w_conv_taps = w_conv_taps.astype(jnp.bfloat16)
    b_conv2 = b_conv.reshape(1, C).astype(jnp.float32)

    # combined head weight (C, NPAD), columns = [cls(A) | dx(A) | dy(A) | dw(A) | dh(A) | 0]
    w_cls_mat = jnp.transpose(w_cls[:, :, 0, 0])                       # (C, A)
    w_box_mat = w_box[:, :, 0, 0]                                      # (4A, C), row = a*4 + k
    w_box_cm = jnp.transpose(w_box_mat.reshape(A, 4, C), (1, 0, 2))    # (4, A, C)
    w_box_cm = jnp.transpose(w_box_cm.reshape(4 * A, C))               # (C, 4A), col = k*A + a
    w_head = jnp.concatenate(
        [w_cls_mat, w_box_cm, jnp.zeros((C, NPAD - 5 * A), jnp.float32)], axis=1
    ).astype(jnp.bfloat16)                                             # (C, NPAD)
    b_box_cm = jnp.transpose(b_box.reshape(A, 4)).reshape(4 * A)
    b_head = jnp.concatenate(
        [b_cls, b_box_cm, jnp.zeros((NPAD - 5 * A,), jnp.float32)]
    ).reshape(1, NPAD).astype(jnp.float32)

    # zero-padded NHWC feature (read once by the kernel, stays VMEM-resident)
    feat_nhwc = jnp.transpose(feat[0], (1, 2, 0))                      # (H, W, C)
    feat_pad = jnp.pad(feat_nhwc, ((1, 1), (1, 1), (0, 0))).astype(jnp.bfloat16)

    # anchors, coordinate-major per spatial location
    anchors_cm = generate_anchors_cm(image.shape, feat.shape,
                                     cfg.scales, cfg.aspect_ratios)    # (HW, 4A) f32

    TILE_H = _choose_tile_h(H, W)
    TILE_M = TILE_H * W
    grid = (H // TILE_H,)

    kernel = make_rpn_fused_kernel(TILE_H, TILE_M, W, C, A, NPAD, IH, IW)

    packed = pl.pallas_call(
        kernel,
        out_shape=jax.ShapeDtypeStruct((HW, NPAD), jnp.float32),
        grid=grid,
        in_specs=[
            pl.BlockSpec((TILE_M, 4 * A), lambda i: (i, 0)),           # anchors tile
            pl.BlockSpec((H + 2, W + 2, C), lambda i: (0, 0, 0)),      # resident feature
            pl.BlockSpec((9, C, C), lambda i: (0, 0, 0)),              # conv taps
            pl.BlockSpec((1, C), lambda i: (0, 0)),                    # conv bias
            pl.BlockSpec((C, NPAD), lambda i: (0, 0)),                 # fused head W
            pl.BlockSpec((1, NPAD), lambda i: (0, 0)),                 # fused head b
        ],
        out_specs=pl.BlockSpec((TILE_M, NPAD), lambda i: (i, 0)),
        compiler_params=pltpu.CompilerParams(
            dimension_semantics=("parallel",),
            vmem_limit_bytes=32 * 1024 * 1024),
    )(anchors_cm, feat_pad, w_conv_taps, b_conv2, w_head, b_head)

    # unpack: row order is (h, w), column blocks are coordinate-major per anchor
    scores = packed[:, 0:A].reshape(NA)                                # (hw, a) order
    px1 = packed[:, A:2 * A].reshape(NA)
    py1 = packed[:, 2 * A:3 * A].reshape(NA)
    px2 = packed[:, 3 * A:4 * A].reshape(NA)
    py2 = packed[:, 4 * A:5 * A].reshape(NA)
    proposals = jnp.stack([px1, py1, px2, py2], axis=1)                # (NA, 4), clamped

    out_boxes, out_scores, num_valid = filter_proposals(
        proposals, scores,
        prenms_topk=cfg.rpn_test_prenms_topk,
        topk=cfg.rpn_test_topk,
        nms_thresh=cfg.rpn_nms_threshold)

    return {"proposals": out_boxes, "scores": out_scores, "num_valid": num_valid}


# ------------------------------ Parameter init ----------------------------------
def init_params(key, C, A):
    k1, k2, k3 = jax.random.split(key, 3)
    w_conv = 0.01 * jax.random.normal(k1, (C, C, 3, 3), jnp.float32)
    b_conv = jnp.zeros((C,), jnp.float32)
    w_cls = 0.01 * jax.random.normal(k2, (A, C, 1, 1), jnp.float32)
    b_cls = jnp.zeros((A,), jnp.float32)
    w_box = 0.01 * jax.random.normal(k3, (4 * A, C, 1, 1), jnp.float32)
    b_box = jnp.zeros((4 * A,), jnp.float32)
    return (w_conv, b_conv, w_cls, b_cls, w_box, b_box)


if __name__ == "__main__":
    cfg = RPNConfig()
    C = cfg.backbone_out_channels
    A = len(cfg.scales) * len(cfg.aspect_ratios)

    key = jax.random.PRNGKey(0)
    k_img, k_feat, k_par = jax.random.split(key, 3)

    # Small deterministic example: image (1, 3, 128, 128), feature (1, 32, 32, 32).
    # H=32, W=32 -> TILE_H=16, TILE_M=512, grid=(2,) so the row tiling is exercised.
    image = jax.random.normal(k_img, (1, 3, 128, 128), jnp.float32)
    feat = jax.random.normal(k_feat, (1, C, 32, 32), jnp.float32)
    params = init_params(k_par, C, A)

    fwd = jax.jit(lambda im, ft, pr: rpn_forward(im, ft, pr, cfg))
    out = fwd(image, feat, params)
    out = jax.block_until_ready(out)

    assert out["proposals"].shape == (cfg.rpn_test_topk, 4)
    assert out["scores"].shape == (cfg.rpn_test_topk,)
    assert bool(jnp.all(jnp.isfinite(out["proposals"])))
    print("KERNEL_OK")
</pallas_src>

<mosaic_0001>
module attributes {stable_mosaic.version = 11 : i64} {
  func.func @kernel(%arg0: i32, %arg1: memref<512x36xf32, #tpu.memory_space<vmem>>, %arg2: memref<34x34x32xbf16, #tpu.memory_space<vmem>>, %arg3: memref<9x32x32xbf16, #tpu.memory_space<vmem>>, %arg4: memref<1x32xf32, #tpu.memory_space<vmem>>, %arg5: memref<32x128xbf16, #tpu.memory_space<vmem>>, %arg6: memref<1x128xf32, #tpu.memory_space<vmem>>, %arg7: memref<512x128xf32, #tpu.memory_space<vmem>>) attributes {dimension_semantics = [#tpu.dimension_semantics<parallel>], iteration_bounds = array<i64: 2>, scalar_prefetch = 0 : i64, scratch_operands = 0 : i64, tpu.core_type = #tpu.core_type<tc>, window_params = [{transform_indices = @transform_0, window_bounds = array<i64: 512, 36>}, {pipeline_mode = #tpu.pipeline_mode<synchronous>, transform_indices = @transform_1, window_bounds = array<i64: 34, 34, 32>}, {pipeline_mode = #tpu.pipeline_mode<synchronous>, transform_indices = @transform_2, window_bounds = array<i64: 9, 32, 32>}, {pipeline_mode = #tpu.pipeline_mode<synchronous>, transform_indices = @transform_3, window_bounds = array<i64: 1, 32>}, {pipeline_mode = #tpu.pipeline_mode<synchronous>, transform_indices = @transform_4, window_bounds = array<i64: 32, 128>}, {pipeline_mode = #tpu.pipeline_mode<synchronous>, transform_indices = @transform_5, window_bounds = array<i64: 1, 128>}, {transform_indices = @transform_6, window_bounds = array<i64: 512, 128>}]} {
    %c16_i32 = arith.constant 16 : i32
    %0 = arith.muli %arg0, %c16_i32 : i32
    %cst = arith.constant 0.000000e+00 : f32
    %1 = vector.broadcast %cst : f32 to vector<512x32xf32>
    %c0_i32 = arith.constant 0 : i32
    %2 = arith.addi %0, %c0_i32 : i32
    %3 = arith.index_cast %2 : i32 to index
    %c0 = arith.constant 0 : index
    %c0_0 = arith.constant 0 : index
    %4 = vector.load %arg2[%3, %c0, %c0_0] : memref<34x34x32xbf16, #tpu.memory_space<vmem>>, vector<16x32x32xbf16>
    %5 = vector.shape_cast %4 : vector<16x32x32xbf16> to vector<512x32xbf16>
    %c0_1 = arith.constant 0 : index
    %c0_2 = arith.constant 0 : index
    %c0_3 = arith.constant 0 : index
    %6 = vector.load %arg3[%c0_1, %c0_2, %c0_3] : memref<9x32x32xbf16, #tpu.memory_space<vmem>>, vector<1x32x32xbf16>
    %7 = vector.shape_cast %6 : vector<1x32x32xbf16> to vector<32x32xbf16>
    %cst_4 = arith.constant dense<0.000000e+00> : vector<512x32xf32>
    %8 = tpu.matmul %5, %7, %cst_4 {dimension_numbers = #tpu.dot_dimension_numbers<[1], [0], [0], [1], [0, 0, 1, 1], [], []>} : vector<512x32xbf16>, vector<32x32xbf16>, vector<512x32xf32> -> vector<512x32xf32>
    %9 = arith.addf %1, %8 : vector<512x32xf32>
    %c0_i32_5 = arith.constant 0 : i32
    %10 = arith.addi %0, %c0_i32_5 : i32
    %11 = arith.index_cast %10 : i32 to index
    %c1 = arith.constant 1 : index
    %c0_6 = arith.constant 0 : index
    %12 = vector.load %arg2[%11, %c1, %c0_6] : memref<34x34x32xbf16, #tpu.memory_space<vmem>>, vector<16x32x32xbf16>
    %13 = vector.shape_cast %12 : vector<16x32x32xbf16> to vector<512x32xbf16>
    %c1_7 = arith.constant 1 : index
    %c0_8 = arith.constant 0 : index
    %c0_9 = arith.constant 0 : index
    %14 = vector.load %arg3[%c1_7, %c0_8, %c0_9] : memref<9x32x32xbf16, #tpu.memory_space<vmem>>, vector<1x32x32xbf16>
    %15 = vector.shape_cast %14 : vector<1x32x32xbf16> to vector<32x32xbf16>
    %cst_10 = arith.constant dense<0.000000e+00> : vector<512x32xf32>
    %16 = tpu.matmul %13, %15, %cst_10 {dimension_numbers = #tpu.dot_dimension_numbers<[1], [0], [0], [1], [0, 0, 1, 1], [], []>} : vector<512x32xbf16>, vector<32x32xbf16>, vector<512x32xf32> -> vector<512x32xf32>
    %17 = arith.addf %9, %16 : vector<512x32xf32>
    %c0_i32_11 = arith.constant 0 : i32
    %18 = arith.addi %0, %c0_i32_11 : i32
    %19 = arith.index_cast %18 : i32 to index
    %c2 = arith.constant 2 : index
    %c0_12 = arith.constant 0 : index
    %20 = vector.load %arg2[%19, %c2, %c0_12] : memref<34x34x32xbf16, #tpu.memory_space<vmem>>, vector<16x32x32xbf16>
    %21 = vector.shape_cast %20 : vector<16x32x32xbf16> to vector<512x32xbf16>
    %c2_13 = arith.constant 2 : index
    %c0_14 = arith.constant 0 : index
    %c0_15 = arith.constant 0 : index
    %22 = vector.load %arg3[%c2_13, %c0_14, %c0_15] : memref<9x32x32xbf16, #tpu.memory_space<vmem>>, vector<1x32x32xbf16>
    %23 = vector.shape_cast %22 : vector<1x32x32xbf16> to vector<32x32xbf16>
    %cst_16 = arith.constant dense<0.000000e+00> : vector<512x32xf32>
    %24 = tpu.matmul %21, %23, %cst_16 {dimension_numbers = #tpu.dot_dimension_numbers<[1], [0], [0], [1], [0, 0, 1, 1], [], []>} : vector<512x32xbf16>, vector<32x32xbf16>, vector<512x32xf32> -> vector<512x32xf32>
    %25 = arith.addf %17, %24 : vector<512x32xf32>
    %c1_i32 = arith.constant 1 : i32
    %26 = arith.addi %0, %c1_i32 : i32
    %27 = arith.index_cast %26 : i32 to index
    %c0_17 = arith.constant 0 : index
    %c0_18 = arith.constant 0 : index
    %28 = vector.load %arg2[%27, %c0_17, %c0_18] : memref<34x34x32xbf16, #tpu.memory_space<vmem>>, vector<16x32x32xbf16>
    %29 = vector.shape_cast %28 : vector<16x32x32xbf16> to vector<512x32xbf16>
    %c3 = arith.constant 3 : index
    %c0_19 = arith.constant 0 : index
    %c0_20 = arith.constant 0 : index
    %30 = vector.load %arg3[%c3, %c0_19, %c0_20] : memref<9x32x32xbf16, #tpu.memory_space<vmem>>, vector<1x32x32xbf16>
    %31 = vector.shape_cast %30 : vector<1x32x32xbf16> to vector<32x32xbf16>
    %cst_21 = arith.constant dense<0.000000e+00> : vector<512x32xf32>
    %32 = tpu.matmul %29, %31, %cst_21 {dimension_numbers = #tpu.dot_dimension_numbers<[1], [0], [0], [1], [0, 0, 1, 1], [], []>} : vector<512x32xbf16>, vector<32x32xbf16>, vector<512x32xf32> -> vector<512x32xf32>
    %33 = arith.addf %25, %32 : vector<512x32xf32>
    %c1_i32_22 = arith.constant 1 : i32
    %34 = arith.addi %0, %c1_i32_22 : i32
    %35 = arith.index_cast %34 : i32 to index
    %c1_23 = arith.constant 1 : index
    %c0_24 = arith.constant 0 : index
    %36 = vector.load %arg2[%35, %c1_23, %c0_24] : memref<34x34x32xbf16, #tpu.memory_space<vmem>>, vector<16x32x32xbf16>
    %37 = vector.shape_cast %36 : vector<16x32x32xbf16> to vector<512x32xbf16>
    %c4 = arith.constant 4 : index
    %c0_25 = arith.constant 0 : index
    %c0_26 = arith.constant 0 : index
    %38 = vector.load %arg3[%c4, %c0_25, %c0_26] : memref<9x32x32xbf16, #tpu.memory_space<vmem>>, vector<1x32x32xbf16>
    %39 = vector.shape_cast %38 : vector<1x32x32xbf16> to vector<32x32xbf16>
    %cst_27 = arith.constant dense<0.000000e+00> : vector<512x32xf32>
    %40 = tpu.matmul %37, %39, %cst_27 {dimension_numbers = #tpu.dot_dimension_numbers<[1], [0], [0], [1], [0, 0, 1, 1], [], []>} : vector<512x32xbf16>, vector<32x32xbf16>, vector<512x32xf32> -> vector<512x32xf32>
    %41 = arith.addf %33, %40 : vector<512x32xf32>
    %c1_i32_28 = arith.constant 1 : i32
    %42 = arith.addi %0, %c1_i32_28 : i32
    %43 = arith.index_cast %42 : i32 to index
    %c2_29 = arith.constant 2 : index
    %c0_30 = arith.constant 0 : index
    %44 = vector.load %arg2[%43, %c2_29, %c0_30] : memref<34x34x32xbf16, #tpu.memory_space<vmem>>, vector<16x32x32xbf16>
    %45 = vector.shape_cast %44 : vector<16x32x32xbf16> to vector<512x32xbf16>
    %c5 = arith.constant 5 : index
    %c0_31 = arith.constant 0 : index
    %c0_32 = arith.constant 0 : index
    %46 = vector.load %arg3[%c5, %c0_31, %c0_32] : memref<9x32x32xbf16, #tpu.memory_space<vmem>>, vector<1x32x32xbf16>
    %47 = vector.shape_cast %46 : vector<1x32x32xbf16> to vector<32x32xbf16>
    %cst_33 = arith.constant dense<0.000000e+00> : vector<512x32xf32>
    %48 = tpu.matmul %45, %47, %cst_33 {dimension_numbers = #tpu.dot_dimension_numbers<[1], [0], [0], [1], [0, 0, 1, 1], [], []>} : vector<512x32xbf16>, vector<32x32xbf16>, vector<512x32xf32> -> vector<512x32xf32>
    %49 = arith.addf %41, %48 : vector<512x32xf32>
    %c2_i32 = arith.constant 2 : i32
    %50 = arith.addi %0, %c2_i32 : i32
    %51 = arith.index_cast %50 : i32 to index
    %c0_34 = arith.constant 0 : index
    %c0_35 = arith.constant 0 : index
    %52 = vector.load %arg2[%51, %c0_34, %c0_35] : memref<34x34x32xbf16, #tpu.memory_space<vmem>>, vector<16x32x32xbf16>
    %53 = vector.shape_cast %52 : vector<16x32x32xbf16> to vector<512x32xbf16>
    %c6 = arith.constant 6 : index
    %c0_36 = arith.constant 0 : index
    %c0_37 = arith.constant 0 : index
    %54 = vector.load %arg3[%c6, %c0_36, %c0_37] : memref<9x32x32xbf16, #tpu.memory_space<vmem>>, vector<1x32x32xbf16>
    %55 = vector.shape_cast %54 : vector<1x32x32xbf16> to vector<32x32xbf16>
    %cst_38 = arith.constant dense<0.000000e+00> : vector<512x32xf32>
    %56 = tpu.matmul %53, %55, %cst_38 {dimension_numbers = #tpu.dot_dimension_numbers<[1], [0], [0], [1], [0, 0, 1, 1], [], []>} : vector<512x32xbf16>, vector<32x32xbf16>, vector<512x32xf32> -> vector<512x32xf32>
    %57 = arith.addf %49, %56 : vector<512x32xf32>
    %c2_i32_39 = arith.constant 2 : i32
    %58 = arith.addi %0, %c2_i32_39 : i32
    %59 = arith.index_cast %58 : i32 to index
    %c1_40 = arith.constant 1 : index
    %c0_41 = arith.constant 0 : index
    %60 = vector.load %arg2[%59, %c1_40, %c0_41] : memref<34x34x32xbf16, #tpu.memory_space<vmem>>, vector<16x32x32xbf16>
    %61 = vector.shape_cast %60 : vector<16x32x32xbf16> to vector<512x32xbf16>
    %c7 = arith.constant 7 : index
    %c0_42 = arith.constant 0 : index
    %c0_43 = arith.constant 0 : index
    %62 = vector.load %arg3[%c7, %c0_42, %c0_43] : memref<9x32x32xbf16, #tpu.memory_space<vmem>>, vector<1x32x32xbf16>
    %63 = vector.shape_cast %62 : vector<1x32x32xbf16> to vector<32x32xbf16>
    %cst_44 = arith.constant dense<0.000000e+00> : vector<512x32xf32>
    %64 = tpu.matmul %61, %63, %cst_44 {dimension_numbers = #tpu.dot_dimension_numbers<[1], [0], [0], [1], [0, 0, 1, 1], [], []>} : vector<512x32xbf16>, vector<32x32xbf16>, vector<512x32xf32> -> vector<512x32xf32>
    %65 = arith.addf %57, %64 : vector<512x32xf32>
    %c2_i32_45 = arith.constant 2 : i32
    %66 = arith.addi %0, %c2_i32_45 : i32
    %67 = arith.index_cast %66 : i32 to index
    %c2_46 = arith.constant 2 : index
    %c0_47 = arith.constant 0 : index
    %68 = vector.load %arg2[%67, %c2_46, %c0_47] : memref<34x34x32xbf16, #tpu.memory_space<vmem>>, vector<16x32x32xbf16>
    %69 = vector.shape_cast %68 : vector<16x32x32xbf16> to vector<512x32xbf16>
    %c8 = arith.constant 8 : index
    %c0_48 = arith.constant 0 : index
    %c0_49 = arith.constant 0 : index
    %70 = vector.load %arg3[%c8, %c0_48, %c0_49] : memref<9x32x32xbf16, #tpu.memory_space<vmem>>, vector<1x32x32xbf16>
    %71 = vector.shape_cast %70 : vector<1x32x32xbf16> to vector<32x32xbf16>
    %cst_50 = arith.constant dense<0.000000e+00> : vector<512x32xf32>
    %72 = tpu.matmul %69, %71, %cst_50 {dimension_numbers = #tpu.dot_dimension_numbers<[1], [0], [0], [1], [0, 0, 1, 1], [], []>} : vector<512x32xbf16>, vector<32x32xbf16>, vector<512x32xf32> -> vector<512x32xf32>
    %73 = arith.addf %65, %72 : vector<512x32xf32>
    %c0_51 = arith.constant 0 : index
    %c0_52 = arith.constant 0 : index
    %74 = vector.load %arg4[%c0_51, %c0_52] : memref<1x32xf32, #tpu.memory_space<vmem>>, vector<1x32xf32>
    %75 = vector.broadcast %74 : vector<1x32xf32> to vector<512x32xf32>
    %76 = arith.addf %73, %75 : vector<512x32xf32>
    %cst_53 = arith.constant 0.000000e+00 : f32
    %77 = vector.broadcast %cst_53 : f32 to vector<512x32xf32>
    %78 = arith.maximumf %76, %77 : vector<512x32xf32>
    %79 = arith.truncf %78 : vector<512x32xf32> to vector<512x32xbf16>
    %c0_54 = arith.constant 0 : index
    %c0_55 = arith.constant 0 : index
    %80 = vector.load %arg5[%c0_54, %c0_55] : memref<32x128xbf16, #tpu.memory_space<vmem>>, vector<32x128xbf16>
    %cst_56 = arith.constant dense<0.000000e+00> : vector<512x128xf32>
    %81 = tpu.matmul %79, %80, %cst_56 {dimension_numbers = #tpu.dot_dimension_numbers<[1], [0], [0], [1], [0, 0, 1, 1], [], []>} : vector<512x32xbf16>, vector<32x128xbf16>, vector<512x128xf32> -> vector<512x128xf32>
    %c0_57 = arith.constant 0 : index
    %c0_58 = arith.constant 0 : index
    %82 = vector.load %arg6[%c0_57, %c0_58] : memref<1x128xf32, #tpu.memory_space<vmem>>, vector<1x128xf32>
    %83 = vector.broadcast %82 : vector<1x128xf32> to vector<512x128xf32>
    %84 = arith.addf %81, %83 : vector<512x128xf32>
    %85 = vector.extract_strided_slice %84 {offsets = [0, 0], sizes = [512, 9], strides = [1, 1]} : vector<512x128xf32> to vector<512x9xf32>
    %86 = vector.extract_strided_slice %84 {offsets = [0, 9], sizes = [512, 9], strides = [1, 1]} : vector<512x128xf32> to vector<512x9xf32>
    %87 = vector.extract_strided_slice %84 {offsets = [0, 18], sizes = [512, 9], strides = [1, 1]} : vector<512x128xf32> to vector<512x9xf32>
    %88 = vector.extract_strided_slice %84 {offsets = [0, 27], sizes = [512, 9], strides = [1, 1]} : vector<512x128xf32> to vector<512x9xf32>
    %cst_59 = arith.constant 4.13516665 : f32
    %89 = vector.broadcast %cst_59 : f32 to vector<512x9xf32>
    %90 = arith.minimumf %88, %89 : vector<512x9xf32>
    %91 = vector.extract_strided_slice %84 {offsets = [0, 36], sizes = [512, 9], strides = [1, 1]} : vector<512x128xf32> to vector<512x9xf32>
    %cst_60 = arith.constant 4.13516665 : f32
    %92 = vector.broadcast %cst_60 : f32 to vector<512x9xf32>
    %93 = arith.minimumf %91, %92 : vector<512x9xf32>
    %c0_61 = arith.constant 0 : index
    %c0_62 = arith.constant 0 : index
    %94 = vector.load %arg1[%c0_61, %c0_62] : memref<512x36xf32, #tpu.memory_space<vmem>>, vector<512x36xf32>
    %95 = vector.extract_strided_slice %94 {offsets = [0, 0], sizes = [512, 9], strides = [1, 1]} : vector<512x36xf32> to vector<512x9xf32>
    %96 = vector.extract_strided_slice %94 {offsets = [0, 9], sizes = [512, 9], strides = [1, 1]} : vector<512x36xf32> to vector<512x9xf32>
    %97 = vector.extract_strided_slice %94 {offsets = [0, 18], sizes = [512, 9], strides = [1, 1]} : vector<512x36xf32> to vector<512x9xf32>
    %98 = vector.extract_strided_slice %94 {offsets = [0, 27], sizes = [512, 9], strides = [1, 1]} : vector<512x36xf32> to vector<512x9xf32>
    %99 = arith.subf %97, %95 : vector<512x9xf32>
    %100 = arith.subf %98, %96 : vector<512x9xf32>
    %cst_63 = arith.constant 5.000000e-01 : f32
    %101 = vector.broadcast %cst_63 : f32 to vector<512x9xf32>
    %102 = arith.mulf %101, %99 : vector<512x9xf32>
    %103 = arith.addf %95, %102 : vector<512x9xf32>
    %cst_64 = arith.constant 5.000000e-01 : f32
    %104 = vector.broadcast %cst_64 : f32 to vector<512x9xf32>
    %105 = arith.mulf %104, %100 : vector<512x9xf32>
    %106 = arith.addf %96, %105 : vector<512x9xf32>
    %107 = arith.mulf %86, %99 : vector<512x9xf32>
    %108 = arith.addf %107, %103 : vector<512x9xf32>
    %109 = arith.mulf %87, %100 : vector<512x9xf32>
    %110 = arith.addf %109, %106 : vector<512x9xf32>
    %111 = math.exp %90 : vector<512x9xf32>
    %112 = arith.mulf %111, %99 : vector<512x9xf32>
    %113 = math.exp %93 : vector<512x9xf32>
    %114 = arith.mulf %113, %100 : vector<512x9xf32>
    %cst_65 = arith.constant 5.000000e-01 : f32
    %115 = vector.broadcast %cst_65 : f32 to vector<512x9xf32>
    %116 = arith.mulf %115, %112 : vector<512x9xf32>
    %117 = arith.subf %108, %116 : vector<512x9xf32>
    %cst_66 = arith.constant 0.000000e+00 : f32
    %cst_67 = arith.constant 1.280000e+02 : f32
    %118 = vector.broadcast %cst_66 : f32 to vector<512x9xf32>
    %119 = arith.maximumf %118, %117 : vector<512x9xf32>
    %120 = vector.broadcast %cst_67 : f32 to vector<512x9xf32>
    %121 = arith.minimumf %120, %119 : vector<512x9xf32>
    %cst_68 = arith.constant 5.000000e-01 : f32
    %122 = vector.broadcast %cst_68 : f32 to vector<512x9xf32>
    %123 = arith.mulf %122, %114 : vector<512x9xf32>
    %124 = arith.subf %110, %123 : vector<512x9xf32>
    %cst_69 = arith.constant 0.000000e+00 : f32
    %cst_70 = arith.constant 1.280000e+02 : f32
    %125 = vector.broadcast %cst_69 : f32 to vector<512x9xf32>
    %126 = arith.maximumf %125, %124 : vector<512x9xf32>
    %127 = vector.broadcast %cst_70 : f32 to vector<512x9xf32>
    %128 = arith.minimumf %127, %126 : vector<512x9xf32>
    %cst_71 = arith.constant 5.000000e-01 : f32
    %129 = vector.broadcast %cst_71 : f32 to vector<512x9xf32>
    %130 = arith.mulf %129, %112 : vector<512x9xf32>
    %131 = arith.addf %108, %130 : vector<512x9xf32>
    %cst_72 = arith.constant 0.000000e+00 : f32
    %cst_73 = arith.constant 1.280000e+02 : f32
    %132 = vector.broadcast %cst_72 : f32 to vector<512x9xf32>
    %133 = arith.maximumf %132, %131 : vector<512x9xf32>
    %134 = vector.broadcast %cst_73 : f32 to vector<512x9xf32>
    %135 = arith.minimumf %134, %133 : vector<512x9xf32>
    %cst_74 = arith.constant 5.000000e-01 : f32
    %136 = vector.broadcast %cst_74 : f32 to vector<512x9xf32>
    %137 = arith.mulf %136, %114 : vector<512x9xf32>
    %138 = arith.addf %110, %137 : vector<512x9xf32>
    %cst_75 = arith.constant 0.000000e+00 : f32
    %cst_76 = arith.constant 1.280000e+02 : f32
    %139 = vector.broadcast %cst_75 : f32 to vector<512x9xf32>
    %140 = arith.maximumf %139, %138 : vector<512x9xf32>
    %141 = vector.broadcast %cst_76 : f32 to vector<512x9xf32>
    %142 = arith.minimumf %141, %140 : vector<512x9xf32>
    %143 = arith.negf %85 : vector<512x9xf32>
    %144 = math.exp %143 : vector<512x9xf32>
    %cst_77 = arith.constant 1.000000e+00 : f32
    %145 = vector.broadcast %cst_77 : f32 to vector<512x9xf32>
    %146 = arith.addf %145, %144 : vector<512x9xf32>
    %147 = arith.divf %145, %146 : vector<512x9xf32>
    %cst_78 = arith.constant 0.000000e+00 : f32
    %148 = vector.broadcast %cst_78 : f32 to vector<512x83xf32>
    %149 = tpu.concatenate %147, %121, %128, %135, %142, %148 in 1 : vector<512x9xf32>, vector<512x9xf32>, vector<512x9xf32>, vector<512x9xf32>, vector<512x9xf32>, vector<512x83xf32> -> vector<512x128xf32>
    %c0_79 = arith.constant 0 : index
    %c0_80 = arith.constant 0 : index
    %150 = vector.load %arg7[%c0_79, %c0_80] : memref<512x128xf32, #tpu.memory_space<vmem>>, vector<512x128xf32>
    tpu.vector_store %arg7[%c0_79, %c0_80], %149 {strides = array<i32>} : memref<512x128xf32, #tpu.memory_space<vmem>>, vector<512x128xf32>,
    return
  }
  func.func @transform_0(%arg0: i32) -> (i32, i32) {
    %c0_i32 = arith.constant 0 : i32
    %c0_i32_0 = arith.constant 0 : i32
    return %arg0, %c0_i32 : i32, i32
  }
  func.func @transform_1(%arg0: i32) -> (i32, i32, i32) {
    %c0_i32 = arith.constant 0 : i32
    %c0_i32_0 = arith.constant 0 : i32
    %c0_i32_1 = arith.constant 0 : i32
    %c0_i32_2 = arith.constant 0 : i32
    return %c0_i32, %c0_i32_0, %c0_i32_1 : i32, i32, i32
  }
  func.func @transform_2(%arg0: i32) -> (i32, i32, i32) {
    %c0_i32 = arith.constant 0 : i32
    %c0_i32_0 = arith.constant 0 : i32
    %c0_i32_1 = arith.constant 0 : i32
    %c0_i32_2 = arith.constant 0 : i32
    return %c0_i32, %c0_i32_0, %c0_i32_1 : i32, i32, i32
  }
  func.func @transform_3(%arg0: i32) -> (i32, i32) {
    %c0_i32 = arith.constant 0 : i32
    %c0_i32_0 = arith.constant 0 : i32
    %c0_i32_1 = arith.constant 0 : i32
    return %c0_i32, %c0_i32_0 : i32, i32
  }
  func.func @transform_4(%arg0: i32) -> (i32, i32) {
    %c0_i32 = arith.constant 0 : i32
    %c0_i32_0 = arith.constant 0 : i32
    %c0_i32_1 = arith.constant 0 : i32
    return %c0_i32, %c0_i32_0 : i32, i32
  }
  func.func @transform_5(%arg0: i32) -> (i32, i32) {
    %c0_i32 = arith.constant 0 : i32
    %c0_i32_0 = arith.constant 0 : i32
    %c0_i32_1 = arith.constant 0 : i32
    return %c0_i32, %c0_i32_0 : i32, i32
  }
  func.func @transform_6(%arg0: i32) -> (i32, i32) {
    %c0_i32 = arith.constant 0 : i32
    %c0_i32_0 = arith.constant 0 : i32
    return %arg0, %c0_i32 : i32, i32
  }
}

</mosaic_0001>

<llo_original>
// kernel: neg.7
$region0: #{neg.7}
  #allocation0 [shape = 's32[1]{0}', space=sflag, size = 0x4, scoped, tag = 'scoped memory for neg.7']
  %s0 = inlined_call_operand.vmem [shape: f32[9,1], index: 0, kind: input, shape index: {}]
  %s1 = inlined_call_operand.vmem [shape: f32[9,1], index: 1, kind: output, shape index: {}]
  %v2 = vld [vmem:[%s0] sm:$0x1]
  %3 = xla_tuple %v2
  %4 = xla_tuple %3
  %v5 = vxor.u32 %v2, 2147483648
  %6 = xla_tuple %v5
  %7 = vst [vmem:[%s1] sm:$0x1] %v5

// kernel: squeeze.10
$region0: #{squeeze.10}
  %s0 = inlined_call_operand.vmem [shape: bf16[36,32,1,1], index: 0, kind: input, shape index: {}]
  %s1 = inlined_call_operand.vmem [shape: bf16[9,4,32], index: 1, kind: output, shape index: {}]
  $region1: #{squeeze.10} parent=0
    #allocation0 [shape = 'u8[36864]{0}', space=vmem, size = 0x9000, scoped, tag = 'scoped mem for output reshape']
    #allocation1 [shape = 'u8[20480]{0}', space=vmem, size = 0x5000, scoped, tag = 'scoped mem for input reshape']
    %s3 = ssub.s32 256, 1
    %s4 = scalar_lea.vmem %s0, 16
    %s5 = sshrl.u32 %s3, 1
    %s6 = sor.u32 %s3, %s5
    %s7 = sand.u32 %s6, 85
    %s8 = sshrl.u32 %s7, 1
    %s9 = sor.u32 %s7, %s8
    %s10 = sand.u32 51, %s9
    %s11 = sshrl.u32 %s10, 2
    %s12 = sor.u32 %s10, %s11
    %s13 = sand.u32 15, %s12
    %v14 = vld [vmem:[%s4] sm:%s13]
    %v15 = vunpack.c.l.bf16 %v14
    %v16 = vunpack.c.h.bf16 %v14
    %s17 = scalar_lea.vmem [#allocation1], 32
    %18 = vst [vmem:[%s17] sm:%s3] %v15
    %s19 = scalar_lea.vmem %s0, 12
    %s20 = sshrl.u32 %s3, 1
    %s21 = sor.u32 %s3, %s20
    %s22 = sand.u32 %s21, 85
    %s23 = sshrl.u32 %s22, 1
    %s24 = sor.u32 %s22, %s23
    %s25 = sand.u32 51, %s24
    %s26 = sshrl.u32 %s25, 2
    %s27 = sor.u32 %s25, %s26
    %s28 = sand.u32 15, %s27
    %v29 = vld [vmem:[%s19] sm:%s28]
    %v30 = vunpack.c.l.bf16 %v29
    %v31 = vunpack.c.h.bf16 %v29
    %s32 = scalar_lea.vmem [#allocation1], 24
    %33 = vst [vmem:[%s32] sm:%s3] %v30
    %s34 = scalar_lea.vmem %s0, 8
    %s35 = sshrl.u32 %s3, 1
    %s36 = sor.u32 %s3, %s35
    %s37 = sand.u32 %s36, 85
    %s38 = sshrl.u32 %s37, 1
    %s39 = sor.u32 %s37, %s38
    %s40 = sand.u32 51, %s39
    %s41 = sshrl.u32 %s40, 2
    %s42 = sor.u32 %s40, %s41
    %s43 = sand.u32 15, %s42
    %v44 = vld [vmem:[%s34] sm:%s43]
    %v45 = vunpack.c.l.bf16 %v44
    %v46 = vunpack.c.h.bf16 %v44
    %s47 = scalar_lea.vmem [#allocation1], 16
    %48 = vst [vmem:[%s47] sm:%s3] %v45
    %s49 = scalar_lea.vmem %s0, 4
    %s50 = sshrl.u32 %s3, 1
    %s51 = sor.u32 %s3, %s50
    %s52 = sand.u32 %s51, 85
    %s53 = sshrl.u32 %s52, 1
    %s54 = sor.u32 %s52, %s53
    %s55 = sand.u32 51, %s54
    %s56 = sshrl.u32 %s55, 2
    %s57 = sor.u32 %s55, %s56
    %s58 = sand.u32 15, %s57
    %v59 = vld [vmem:[%s49] sm:%s58]
    %v60 = vunpack.c.l.bf16 %v59
    %v61 = vunpack.c.h.bf16 %v59
    %s62 = scalar_lea.vmem [#allocation1], 8
    %63 = vst [vmem:[%s62] sm:%s3] %v60
    %s64 = sshrl.u32 %s3, 1
    %s65 = sor.u32 %s3, %s64
    %s66 = sand.u32 %s65, 85
    %s67 = sshrl.u32 %s66, 1
    %s68 = sor.u32 %s66, %s67
    %s69 = sand.u32 51, %s68
    %s70 = sshrl.u32 %s69, 2
    %s71 = sor.u32 %s69, %s70
    %s72 = sand.u32 15, %s71
    %v73 = vld [vmem:[%s0] sm:%s72]
    %v74 = vunpack.c.l.bf16 %v73
    %v75 = vunpack.c.h.bf16 %v73
    %76 = vst [vmem:[#allocation1] sm:%s3] %v74
    %v77 = vld [vmem:[#allocation1] sm:$0xff]
    %vm78 = vcmask 261120
    %79 = vst.msk [vmem:[#allocation0] sm:$0xf] %vm78, %v77
    %s80 = scalar_lea.vmem [#allocation0], 4
    %81 = vst.msk [vmem:[%s80] sm:$0xf0] %vm78, %v77
    %s82 = scalar_lea.vmem [#allocation1], 8
    %v83 = vld [vmem:[%s82] sm:$0xff]
    %vm84 = vcmask 261120
    %s85 = scalar_lea.vmem [#allocation0], 16
    %86 = vst.msk [vmem:[%s85] sm:$0xf] %vm84, %v83
    %s87 = scalar_lea.vmem [#allocation0], 20
    %88 = vst.msk [vmem:[%s87] sm:$0xf0] %vm84, %v83
    %s89 = scalar_lea.vmem [#allocation1], 16
    %v90 = vld [vmem:[%s89] sm:$0xff]
    %vm91 = vcmask 261120
    %s92 = scalar_lea.vmem [#allocation0], 32
    %93 = vst.msk [vmem:[%s92] sm:$0xf] %vm91, %v90
    %s94 = scalar_lea.vmem [#allocation0], 36
    %95 = vst.msk [vmem:[%s94] sm:$0xf0] %vm91, %v90
    %s96 = scalar_lea.vmem [#allocation1], 24
    %v97 = vld [vmem:[%s96] sm:$0xff]
    %vm98 = vcmask 261120
    %s99 = scalar_lea.vmem [#allocation0], 48
    %100 = vst.msk [vmem:[%s99] sm:$0xf] %vm98, %v97
    %s101 = scalar_lea.vmem [#allocation0], 52
    %102 = vst.msk [vmem:[%s101] sm:$0xf0] %vm98, %v97
    %s103 = scalar_lea.vmem [#allocation1], 32
    %v104 = vld [vmem:[%s103] sm:$0xf]
    %vm105 = vcmask 261120
    %s106 = scalar_lea.vmem [#allocation0], 64
    %107 = vst.msk [vmem:[%s106] sm:$0xf] %vm105, %v104
    %s109 = ssub.s32 16, 1
    %v110 = vld [vmem:[#allocation0] sm:%s109]
    %v111 = vpack.c.bf16 0.0, %v110
    %s113 = ssub.s32 4, 1
    %114 = vst [vmem:[%s1] sm:%s113] %v111
    %s115 = scalar_lea.vmem [#allocation0], 8
    %v116 = vld [vmem:[%s115] sm:%s109]
    %v117 = vpack.c.bf16 0.0, %v116
    %s119 = ssub.s32 4, 1
    %s120 = scalar_lea.vmem %s1, 2
    %121 = vst [vmem:[%s120] sm:%s119] %v117
    %s122 = scalar_lea.vmem [#allocation0], 16
    %v123 = vld [vmem:[%s122] sm:%s109]
    %v124 = vpack.c.bf16 0.0, %v123
    %s126 = ssub.s32 4, 1
    %s127 = scalar_lea.vmem %s1, 4
    %128 = vst [vmem:[%s127] sm:%s126] %v124
    %s129 = scalar_lea.vmem [#allocation0], 24
    %v130 = vld [vmem:[%s129] sm:%s109]
    %v131 = vpack.c.bf16 0.0, %v130
    %s133 = ssub.s32 4, 1
    %s134 = scalar_lea.vmem %s1, 6
    %135 = vst [vmem:[%s134] sm:%s133] %v131
    %s136 = scalar_lea.vmem [#allocation0], 32
    %v137 = vld [vmem:[%s136] sm:%s109]
    %v138 = vpack.c.bf16 0.0, %v137
    %s140 = ssub.s32 4, 1
    %s141 = scalar_lea.vmem %s1, 8
    %142 = vst [vmem:[%s141] sm:%s140] %v138
    %s143 = scalar_lea.vmem [#allocation0], 40
    %v144 = vld [vmem:[%s143] sm:%s109]
    %v145 = vpack.c.bf16 0.0, %v144
    %s147 = ssub.s32 4, 1
    %s148 = scalar_lea.vmem %s1, 10
    %149 = vst [vmem:[%s148] sm:%s147] %v145
    %s150 = scalar_lea.vmem [#allocation0], 48
    %v151 = vld [vmem:[%s150] sm:%s109]
    %v152 = vpack.c.bf16 0.0, %v151
    %s154 = ssub.s32 4, 1
    %s155 = scalar_lea.vmem %s1, 12
    %156 = vst [vmem:[%s155] sm:%s154] %v152
    %s157 = scalar_lea.vmem [#allocation0], 56
    %v158 = vld [vmem:[%s157] sm:%s109]
    %v159 = vpack.c.bf16 0.0, %v158
    %s161 = ssub.s32 4, 1
    %s162 = scalar_lea.vmem %s1, 14
    %163 = vst [vmem:[%s162] sm:%s161] %v159
    %s164 = scalar_lea.vmem [#allocation0], 64
    %v165 = vld [vmem:[%s164] sm:%s109]
    %v166 = vpack.c.bf16 0.0, %v165
    %s168 = ssub.s32 4, 1
    %s169 = scalar_lea.vmem %s1, 16
    %170 = vst [vmem:[%s169] sm:%s168] %v166

// kernel: _lambda_.1
$region0: #{_lambda_.1}
  #allocation0 [shape = 'u32[]', space=smem, size = 0x4, offset = 0x4, fixed_abs, tag = 'smem constant byte address 0x4 - core index']
  #allocation1 [shape = 'u32[72,128]{1,0:T(1,128)}', space=vmem, size = 0x9000, scoped, tag = 'internal scratch']
  %s0 = inlined_call_operand.vmem [shape: f32[1024,36], index: 0, kind: input, shape index: {}]
  %s1 = inlined_call_operand.vmem [shape: bf16[34,34,32], index: 1, kind: input, shape index: {}]
  %s2 = inlined_call_operand.vmem [shape: bf16[9,32,32], index: 2, kind: input, shape index: {}]
  %s3 = inlined_call_operand.hbm [shape: f32[1,32], index: 3, kind: input, shape index: {}]
  %s4 = inlined_call_operand.vmem [shape: bf16[32,128], index: 4, kind: input, shape index: {}]
  %s5 = inlined_call_operand.vmem [shape: f32[1,128], index: 5, kind: input, shape index: {}]
  %s6 = inlined_call_operand.vmem [shape: f32[1024,128], index: 6, kind: output, shape index: {}]
  %s7 = sld [smem:[#allocation0]]
  $region61: #{_lambda_.1} parent=0
    _
  %s9 = ssub.s32 1, %s7
  %s10 = scalar_select 0, %s9, %s7
  $region1: #{_lambda_.1} parent=0
    #allocation2 [shape = 'u8[512]{0}', space=vmem, size = 0x400, scoped, tag = 'input window, operand 3, single buffered']
    #allocation3 [shape = 's32[2]{0}', space=sflag, size = 0x8, scoped, tag = 'scoped memory for _lambda_.1']
    %11 = vsyncpa [#allocation3], 0
    loop: start=0, step=1, limit=4
    $region2: #{_lambda_.1} parent=1 // loop_pre_header
      _
    $region3: #{_lambda_.1} parent=1 // loop_header
      %s13 = sphi 0, %s17
      %p14 = scmp.ge.s32.totalorder %s13, 4
      %s23 = sphi 0, %s25
      %s26 = sphi 0, %s23
      %s27 = sphi 0, %s26
      %s43 = sphi 0, %s27
      %s47 = sphi 0, %s47
      %s49 = sphi 0, %s47
      %s50 = sphi 0, %s49
      %s64 = sphi 0, %s50
      %s68 = sphi 0, %s68
      %s70 = sphi 0, %s68
      %s71 = sphi 0, %s70
      %s85 = sphi 0, %s71
      %s89 = sphi 0, %s89
      %s91 = sphi 0, %s89
      %s92 = sphi 0, %s91
      %s106 = sphi 0, %s92
      %s110 = sphi 0, %s110
      %s112 = sphi 0, %s110
      %s113 = sphi 0, %s112
      %s127 = sphi 0, %s113
      %s131 = sphi 0, %s131
      %s133 = sphi 0, %s131
      %s134 = sphi 0, %s133
      %s148 = sphi 0, %s134
      %s154 = sphi 0, %s156
      %s157 = sphi 0, %s154
      %s158 = sphi 0, %s157
      %s174 = sphi 0, %s158
    $region4: #{_lambda_.1} parent=1 // loop_header_branch
      %16 = sbr.rel (%p14) target = $region8
    $region5: #{_lambda_.1} parent=1 // loop_body
      %s18 = ssub.s32 %s13, 1
      %s19 = ssub.s32 %s13, 2
      %s20 = sadd.s32 %s13, 1
      %s21 = ssub.s32 %s13, %s20
      %p22 = scmp.eq.s32.totalorder %s21, 0
      %s24 = sadd.s32 %s23, 1
      %s25 = scalar_select %p22, %s23, %s24
      %p28 = pneg %p22
      %p29 = scmp.eq.s32.totalorder %s13, 1
      %p30 = por %p28, %p29
      %p31 = scmp.ne.s32.totalorder %s23, %s26
      %p32 = scmp.eq.s32.totalorder %s13, 0
      %p33 = por %p31, %p32
      %p34 = scmp.ne.s32.totalorder %s23, %s26
      %p35 = scmp.eq.s32.totalorder %s18, 1
      %p36 = por %p34, %p35
      %p37 = scmp.ne.s32.totalorder %s26, %s27
      %p38 = scmp.eq.s32.totalorder %s18, 0
      %p39 = por %p37, %p38
      %p40 = scmp.ne.s32.totalorder %s26, %s27
      %p41 = scmp.eq.s32.totalorder %s19, 1
      %p42 = por %p40, %p41
      %p44 = scmp.ne.s32.totalorder %s27, %s43
      %p45 = scmp.eq.s32.totalorder %s19, 0
      %p46 = por %p44, %p45
      %s48 = sadd.s32 %s47, 1
      %p51 = scmp.eq.s32.totalorder %s13, 1
      %p52 = scmp.ne.s32.totalorder %s47, %s49
      %p53 = scmp.eq.s32.totalorder %s13, 0
      %p54 = por %p52, %p53
      %p55 = scmp.ne.s32.totalorder %s47, %s49
      %p56 = scmp.eq.s32.totalorder %s18, 1
      %p57 = por %p55, %p56
      %p58 = scmp.ne.s32.totalorder %s49, %s50
      %p59 = scmp.eq.s32.totalorder %s18, 0
      %p60 = por %p58, %p59
      %p61 = scmp.ne.s32.totalorder %s49, %s50
      %p62 = scmp.eq.s32.totalorder %s19, 1
      %p63 = por %p61, %p62
      %p65 = scmp.ne.s32.totalorder %s50, %s64
      %p66 = scmp.eq.s32.totalorder %s19, 0
      %p67 = por %p65, %p66
      %s69 = sadd.s32 %s68, 1
      %p72 = scmp.eq.s32.totalorder %s13, 1
      %p73 = scmp.ne.s32.totalorder %s68, %s70
      %p74 = scmp.eq.s32.totalorder %s13, 0
      %p75 = por %p73, %p74
      %p76 = scmp.ne.s32.totalorder %s68, %s70
      %p77 = scmp.eq.s32.totalorder %s18, 1
      %p78 = por %p76, %p77
      %p79 = scmp.ne.s32.totalorder %s70, %s71
      %p80 = scmp.eq.s32.totalorder %s18, 0
      %p81 = por %p79, %p80
      %p82 = scmp.ne.s32.totalorder %s70, %s71
      %p83 = scmp.eq.s32.totalorder %s19, 1
      %p84 = por %p82, %p83
      %p86 = scmp.ne.s32.totalorder %s71, %s85
      %p87 = scmp.eq.s32.totalorder %s19, 0
      %p88 = por %p86, %p87
      %s90 = sadd.s32 %s89, 1
      %p93 = scmp.eq.s32.totalorder %s13, 1
      %p94 = scmp.ne.s32.totalorder %s89, %s91
      %p95 = scmp.eq.s32.totalorder %s13, 0
      %p96 = por %p94, %p95
      %p97 = scmp.ne.s32.totalorder %s89, %s91
      %p98 = scmp.eq.s32.totalorder %s18, 1
      %p99 = por %p97, %p98
      %p100 = scmp.ne.s32.totalorder %s91, %s92
      %p101 = scmp.eq.s32.totalorder %s18, 0
      %p102 = por %p100, %p101
      %p103 = scmp.ne.s32.totalorder %s91, %s92
      %p104 = scmp.eq.s32.totalorder %s19, 1
      %p105 = por %p103, %p104
      %p107 = scmp.ne.s32.totalorder %s92, %s106
      %p108 = scmp.eq.s32.totalorder %s19, 0
      %p109 = por %p107, %p108
      %s111 = sadd.s32 %s110, 1
      %p114 = scmp.eq.s32.totalorder %s13, 1
      %p115 = scmp.ne.s32.totalorder %s110, %s112
      %p116 = scmp.eq.s32.totalorder %s13, 0
      %p117 = por %p115, %p116
      %p118 = scmp.ne.s32.totalorder %s110, %s112
      %p119 = scmp.eq.s32.totalorder %s18, 1
      %p120 = por %p118, %p119
      %p121 = scmp.ne.s32.totalorder %s112, %s113
      %p122 = scmp.eq.s32.totalorder %s18, 0
      %p123 = por %p121, %p122
      %p124 = scmp.ne.s32.totalorder %s112, %s113
      %p125 = scmp.eq.s32.totalorder %s19, 1
      %p126 = por %p124, %p125
      %p128 = scmp.ne.s32.totalorder %s113, %s127
      %p129 = scmp.eq.s32.totalorder %s19, 0
      %p130 = por %p128, %p129
      %s132 = sadd.s32 %s131, 1
      %p135 = scmp.eq.s32.totalorder %s13, 1
      %p136 = scmp.ne.s32.totalorder %s131, %s133
      %p137 = scmp.eq.s32.totalorder %s13, 0
      %p138 = por %p136, %p137
      %p139 = scmp.ne.s32.totalorder %s131, %s133
      %p140 = scmp.eq.s32.totalorder %s18, 1
      %p141 = por %p139, %p140
      %p142 = scmp.ne.s32.totalorder %s133, %s134
      %p143 = scmp.eq.s32.totalorder %s18, 0
      %p144 = por %p142, %p143
      %p145 = scmp.ne.s32.totalorder %s133, %s134
      %p146 = scmp.eq.s32.totalorder %s19, 1
      %p147 = por %p145, %p146
      %p149 = scmp.ne.s32.totalorder %s134, %s148
      %p150 = scmp.eq.s32.totalorder %s19, 0
      %p151 = por %p149, %p150
      %s152 = ssub.s32 %s13, %s20
      %p153 = scmp.eq.s32.totalorder %s152, 0
      %s155 = sadd.s32 %s154, 1
      %s156 = scalar_select %p153, %s154, %s155
      %p159 = pneg %p153
      %p160 = scmp.eq.s32.totalorder %s13, 1
      %p161 = por %p159, %p160
      %p162 = scmp.ne.s32.totalorder %s154, %s157
      %p163 = scmp.eq.s32.totalorder %s13, 0
      %p164 = por %p162, %p163
      %p165 = scmp.ne.s32.totalorder %s154, %s157
      %p166 = scmp.eq.s32.totalorder %s18, 1
      %p167 = por %p165, %p166
      %p168 = scmp.ne.s32.totalorder %s157, %s158
      %p169 = scmp.eq.s32.totalorder %s18, 0
      %p170 = por %p168, %p169
      %p171 = scmp.ne.s32.totalorder %s157, %s158
      %p172 = scmp.eq.s32.totalorder %s19, 1
      %p173 = por %p171, %p172
      %p175 = scmp.ne.s32.totalorder %s158, %s174
      %p176 = scmp.eq.s32.totalorder %s19, 0
      %p177 = por %p175, %p176
      %p178 = scmp.le.s32.totalorder 1, %s13
      %p179 = scmp.lt.s32.totalorder %s13, 3
      %p180 = pnand %p178, %p179
      %p181 = pneg %p180
      // Predicated region
      $region9: #{_lambda_.1} parent=5 // pred_check
        _
      $region10: #{_lambda_.1} parent=5 // pred_check_branch
        %183 = sbr.rel (%p180) target = $region12
      $region11: #{_lambda_.1} parent=5 // pred_region
        %s184 = ssub.s32 %s13, 1
        // Predicated region
        $region13: #{_lambda_.1} parent=11 // pred_check
          %p185 = pneg %p60
        $region14: #{_lambda_.1} parent=11 // pred_check_branch
          %187 = sbr.rel (%p185) target = $region16
        $region15: #{_lambda_.1} parent=11 // pred_region
          _
        $region16: #{_lambda_.1} parent=11 // pred_fallthru
          _
        // Predicated region
        $region17: #{_lambda_.1} parent=11 // pred_check
          %p188 = pneg %p81
        $region18: #{_lambda_.1} parent=11 // pred_check_branch
          %190 = sbr.rel (%p188) target = $region20
        $region19: #{_lambda_.1} parent=11 // pred_region
          _
        $region20: #{_lambda_.1} parent=11 // pred_fallthru
          _
        // Predicated region
        $region21: #{_lambda_.1} parent=11 // pred_check
          %p191 = pneg %p102
        $region22: #{_lambda_.1} parent=11 // pred_check_branch
          %193 = sbr.rel (%p191) target = $region24
        $region23: #{_lambda_.1} parent=11 // pred_region
          %195 = vsyncadd [#allocation3], 0
          %s197 = sshll.u32 %s3, 4
          %s198 = int_to_ptr.hbm [resolvable:$true] %s197
          %s199 = sshll.u32 [#allocation2], 4
          %s200 = int_to_ptr.vmem [resolvable:$true] %s199
          %202 = dma.hbm_to_vmem [thread:$0]  %s198, 16, %s200, [#allocation3]
        $region24: #{_lambda_.1} parent=11 // pred_fallthru
          _
        // Predicated region
        $region25: #{_lambda_.1} parent=11 // pred_check
          %p203 = pneg %p123
        $region26: #{_lambda_.1} parent=11 // pred_check_branch
          %205 = sbr.rel (%p203) target = $region28
        $region27: #{_lambda_.1} parent=11 // pred_region
          _
        $region28: #{_lambda_.1} parent=11 // pred_fallthru
          _
        // Predicated region
        $region29: #{_lambda_.1} parent=11 // pred_check
          %p206 = pneg %p144
        $region30: #{_lambda_.1} parent=11 // pred_check_branch
          %208 = sbr.rel (%p206) target = $region32
        $region31: #{_lambda_.1} parent=11 // pred_region
          _
        $region32: #{_lambda_.1} parent=11 // pred_fallthru
          _
      $region12: #{_lambda_.1} parent=5 // pred_fallthru
        _
      %p209 = scmp.lt.s32.totalorder %s13, 2
      // Predicated region
      $region33: #{_lambda_.1} parent=5 // pred_check
        %p210 = pneg %p209
      $region34: #{_lambda_.1} parent=5 // pred_check_branch
        %212 = sbr.rel (%p210) target = $region36
      $region35: #{_lambda_.1} parent=5 // pred_region
        // Predicated region
        $region37: #{_lambda_.1} parent=35 // pred_check
          %p213 = pneg %p33
        $region38: #{_lambda_.1} parent=35 // pred_check_branch
          %215 = sbr.rel (%p213) target = $region40
        $region39: #{_lambda_.1} parent=35 // pred_region
          %s216 = smul.u32 64, %s13
          %p217 = scmp.lt.s32.totalorder %s216, 127
          %s218 = scalar_select %p217, %s216, 127
          %s219 = smul.addr %s218, 8
          %s220 = scalar_lea.vmem %s0, %s219
          %s221 = smul.u32 64, %s13
        $region40: #{_lambda_.1} parent=35 // pred_fallthru
          _
      $region36: #{_lambda_.1} parent=5 // pred_fallthru
        _
      %p222 = scmp.le.s32.totalorder 1, %s13
      %p223 = scmp.lt.s32.totalorder %s13, 3
      %p224 = pnand %p222, %p223
      %p225 = pneg %p224
      // Predicated region
      $region41: #{_lambda_.1} parent=5 // pred_check
        _
      $region42: #{_lambda_.1} parent=5 // pred_check_branch
        %227 = sbr.rel (%p224) target = $region44
      $region43: #{_lambda_.1} parent=5 // pred_region
        %s228 = ssub.s32 %s13, 1
        // Predicated region
        $region45: #{_lambda_.1} parent=43 // pred_check
          %p229 = pneg %p102
        $region46: #{_lambda_.1} parent=43 // pred_check_branch
          %231 = sbr.rel (%p229) target = $region48
        $region47: #{_lambda_.1} parent=43 // pred_region
          %233 = dma.done [#allocation3], 16
        $region48: #{_lambda_.1} parent=43 // pred_fallthru
          _
        %s234 = smul.u32 64, %s18
        %p235 = scmp.lt.s32.totalorder %s234, 127
        %s236 = scalar_select %p235, %s234, 127
        %s237 = smul.addr %s236, 8
        %s238 = scalar_lea.vmem %s0, %s237
        %p239 = pneg %p39
        %p240 = pneg %p36
        %p241 = pneg %p60
        %p242 = pneg %p57
        %p243 = pneg %p81
        %p244 = pneg %p78
        %p245 = pneg %p102
        %p246 = pneg %p99
        %p247 = pneg %p123
        %p248 = pneg %p120
        %p249 = pneg %p144
        %p250 = pneg %p141
        %p251 = pneg %p170
        %p252 = pneg %p167
        %s253 = smul.u32 64, %s18
        %p254 = scmp.lt.s32.totalorder %s253, 127
        %s255 = scalar_select %p254, %s253, 127
        %s256 = smul.addr %s255, 8
        %s257 = scalar_lea.vmem %s6, %s256
        %s258 = smul.u32 64, %s18
        %p259 = scmp.lt.s32.totalorder %s258, 127
        %s260 = scalar_select %p259, %s258, 127
        %s261 = smul.addr %s260, 8
        %s262 = scalar_lea.vmem %s0, %s261
        %s263 = smul.u32 64, %s18
        %s264 = smul.u32 64, %s18
        %p265 = scmp.lt.s32.totalorder %s264, 127
        %s266 = scalar_select %p265, %s264, 127
        %s267 = smul.addr %s266, 8
        %s268 = scalar_lea.vmem %s6, %s267
        %s269 = smul.u32 64, %s18
        %s271 = smul.u32 %s18, 16
        %s272 = smul.u32 %s271, 5
        %s273 = smul.addr %s272, 4
        %s274 = scalar_lea.vmem %s1, %s273
        %v275 = vld [vmem:[%s274] sm:$0xf]
        %v276 = vld [vmem:[%s274 + $0x4] sm:$0xf]
        %v277 = vld [vmem:[%s274 + $0x8] sm:$0xf]
        %v278 = vld [vmem:[%s274 + $0xc] sm:$0xf]
        %v279 = vld [vmem:[%s274 + $0x14] sm:$0xf]
        %v280 = vld [vmem:[%s274 + $0x18] sm:$0xf]
        %v281 = vld [vmem:[%s274 + $0x1c] sm:$0xf]
        %v282 = vld [vmem:[%s274 + $0x20] sm:$0xf]
        %v283 = vld [vmem:[%s274 + $0x28] sm:$0xf]
        %v284 = vld [vmem:[%s274 + $0x2c] sm:$0xf]
        %v285 = vld [vmem:[%s274 + $0x30] sm:$0xf]
        %v286 = vld [vmem:[%s274 + $0x34] sm:$0xf]
        %v287 = vld [vmem:[%s274 + $0x3c] sm:$0xf]
        %v288 = vld [vmem:[%s274 + $0x40] sm:$0xf]
        %v289 = vld [vmem:[%s274 + $0x44] sm:$0xf]
        %v290 = vld [vmem:[%s274 + $0x48] sm:$0xf]
        %v291 = vld [vmem:[%s274 + $0x50] sm:$0xf]
        %v292 = vld [vmem:[%s274 + $0x54] sm:$0xf]
        %v293 = vld [vmem:[%s274 + $0x58] sm:$0xf]
        %v294 = vld [vmem:[%s274 + $0x5c] sm:$0xf]
        %v295 = vld [vmem:[%s274 + $0x64] sm:$0xf]
        %v296 = vld [vmem:[%s274 + $0x68] sm:$0xf]
        %v297 = vld [vmem:[%s274 + $0x6c] sm:$0xf]
        %v298 = vld [vmem:[%s274 + $0x70] sm:$0xf]
        %v299 = vld [vmem:[%s274 + $0x78] sm:$0xf]
        %v300 = vld [vmem:[%s274 + $0x7c] sm:$0xf]
        %v301 = vld [vmem:[%s274 + $0x80] sm:$0xf]
        %v302 = vld [vmem:[%s274 + $0x84] sm:$0xf]
        %v303 = vld [vmem:[%s274 + $0x8c] sm:$0xf]
        %v304 = vld [vmem:[%s274 + $0x90] sm:$0xf]
        %v305 = vld [vmem:[%s274 + $0x94] sm:$0xf]
        %v306 = vld [vmem:[%s274 + $0x98] sm:$0xf]
        %v307 = vld [vmem:[%s274 + $0xa0] sm:$0xf]
        %v308 = vld [vmem:[%s274 + $0xa4] sm:$0xf]
        %v309 = vld [vmem:[%s274 + $0xa8] sm:$0xf]
        %v310 = vld [vmem:[%s274 + $0xac] sm:$0xf]
        %v311 = vld [vmem:[%s274 + $0xb4] sm:$0xf]
        %v312 = vld [vmem:[%s274 + $0xb8] sm:$0xf]
        %v313 = vld [vmem:[%s274 + $0xbc] sm:$0xf]
        %v314 = vld [vmem:[%s274 + $0xc0] sm:$0xf]
        %v315 = vld [vmem:[%s274 + $0xc8] sm:$0xf]
        %v316 = vld [vmem:[%s274 + $0xcc] sm:$0xf]
        %v317 = vld [vmem:[%s274 + $0xd0] sm:$0xf]
        %v318 = vld [vmem:[%s274 + $0xd4] sm:$0xf]
        %v319 = vld [vmem:[%s274 + $0xdc] sm:$0xf]
        %v320 = vld [vmem:[%s274 + $0xe0] sm:$0xf]
        %v321 = vld [vmem:[%s274 + $0xe4] sm:$0xf]
        %v322 = vld [vmem:[%s274 + $0xe8] sm:$0xf]
        %v323 = vld [vmem:[%s274 + $0xf0] sm:$0xf]
        %v324 = vld [vmem:[%s274 + $0xf4] sm:$0xf]
        %v325 = vld [vmem:[%s274 + $0xf8] sm:$0xf]
        %v326 = vld [vmem:[%s274 + $0xfc] sm:$0xf]
        %v327 = vld [vmem:[%s274 + $0x104] sm:$0xf]
        %v328 = vld [vmem:[%s274 + $0x108] sm:$0xf]
        %v329 = vld [vmem:[%s274 + $0x10c] sm:$0xf]
        %v330 = vld [vmem:[%s274 + $0x110] sm:$0xf]
        %v331 = vld [vmem:[%s274 + $0x118] sm:$0xf]
        %v332 = vld [vmem:[%s274 + $0x11c] sm:$0xf]
        %v333 = vld [vmem:[%s274 + $0x120] sm:$0xf]
        %v334 = vld [vmem:[%s274 + $0x124] sm:$0xf]
        %v335 = vld [vmem:[%s274 + $0x12c] sm:$0xf]
        %v336 = vld [vmem:[%s274 + $0x130] sm:$0xf]
        %v337 = vld [vmem:[%s274 + $0x134] sm:$0xf]
        %v338 = vld [vmem:[%s274 + $0x138] sm:$0xf]
        %v339 = vld [vmem:[%s2] sm:$0xf]
        %v340 = vld [vmem:[%s2 + $0x4] sm:$0xf]
        %v341 = vld [vmem:[%s2 + $0x8] sm:$0xf]
        %v342 = vld [vmem:[%s2 + $0xc] sm:$0xf]
        %v343 = vld [vmem:[%s274 + $0x10] sm:$0x1]
        %v344 = vld [vmem:[%s274 + $0x24] sm:$0x1]
        %v345 = vld [vmem:[%s274 + $0x38] sm:$0x1]
        %v346 = vld [vmem:[%s274 + $0x4c] sm:$0x1]
        %v347 = vld [vmem:[%s274 + $0x60] sm:$0x1]
        %v348 = vld [vmem:[%s274 + $0x74] sm:$0x1]
        %v349 = vld [vmem:[%s274 + $0x88] sm:$0x1]
        %v350 = vld [vmem:[%s274 + $0x9c] sm:$0x1]
        %v351 = vld [vmem:[%s274 + $0xb0] sm:$0x1]
        %v352 = vld [vmem:[%s274 + $0xc4] sm:$0x1]
        %v353 = vld [vmem:[%s274 + $0xd8] sm:$0x1]
        %v354 = vld [vmem:[%s274 + $0xec] sm:$0x1]
        %v355 = vld [vmem:[%s274 + $0x100] sm:$0x1]
        %v356 = vld [vmem:[%s274 + $0x114] sm:$0x1]
        %v357 = vld [vmem:[%s274 + $0x128] sm:$0x1]
        %v358 = vld [vmem:[%s274 + $0x13c] sm:$0x1]
        %vm359 = vsmask.f32 3328
        %vm360 = vsmask.f32 7440
        %vm361 = vmor %vm359, %vm360
        %v363 = vshrl.u32 %v275, 16
        %v365 = vrot.slane %v363, 4
        %v366 = vshll.u32 %v275, 16
        %v368 = vrot.slane %v366, 5
        %v369 = vor.u32 %v365, %v368
        %v370 = vrot.slane %v369, 4
        %v372 = vshll.u32 %v276, 16
        %v374 = vrot.slane %v372, 5
        %v375 = vsel %vm361, %v370, %v374
        %v376 = vshrl.u32 %v276, 16
        %v378 = vrot.slane %v376, 4
        %v379 = vor.u32 %v378, %v374
        %v380 = vrot.slane %v379, 4
        %v382 = vshll.u32 %v277, 16
        %v384 = vrot.slane %v382, 5
        %v385 = vsel %vm361, %v380, %v384
        %v386 = vshrl.u32 %v277, 16
        %v388 = vrot.slane %v386, 4
        %v389 = vor.u32 %v388, %v384
        %v390 = vrot.slane %v389, 4
        %v392 = vshll.u32 %v278, 16
        %v394 = vrot.slane %v392, 5
        %v395 = vsel %vm361, %v390, %v394
        %v396 = vshrl.u32 %v278, 16
        %v398 = vrot.slane %v396, 4
        %v399 = vor.u32 %v398, %v394
        %v400 = vrot.slane %v399, 4
        %v402 = vshll.u32 %v343, 16
        %v404 = vrot.slane %v402, 5
        %v405 = vsel %vm361, %v400, %v404
        %v407 = vshrl.u32 %v279, 16
        %v409 = vrot.slane %v407, 4
        %v410 = vshll.u32 %v279, 16
        %v412 = vrot.slane %v410, 5
        %v413 = vor.u32 %v409, %v412
        %v414 = vrot.slane %v413, 4
        %v416 = vshll.u32 %v280, 16
        %v418 = vrot.slane %v416, 5
        %v419 = vsel %vm361, %v414, %v418
        %v420 = vshrl.u32 %v280, 16
        %v422 = vrot.slane %v420, 4
        %v423 = vor.u32 %v422, %v418
        %v424 = vrot.slane %v423, 4
        %v426 = vshll.u32 %v281, 16
        %v428 = vrot.slane %v426, 5
        %v429 = vsel %vm361, %v424, %v428
        %v430 = vshrl.u32 %v281, 16
        %v432 = vrot.slane %v430, 4
        %v433 = vor.u32 %v432, %v428
        %v434 = vrot.slane %v433, 4
        %v436 = vshll.u32 %v282, 16
        %v438 = vrot.slane %v436, 5
        %v439 = vsel %vm361, %v434, %v438
        %v440 = vshrl.u32 %v282, 16
        %v442 = vrot.slane %v440, 4
        %v443 = vor.u32 %v442, %v438
        %v444 = vrot.slane %v443, 4
        %v446 = vshll.u32 %v344, 16
        %v448 = vrot.slane %v446, 5
        %v449 = vsel %vm361, %v444, %v448
        %v451 = vshrl.u32 %v283, 16
        %v453 = vrot.slane %v451, 4
        %v454 = vshll.u32 %v283, 16
        %v456 = vrot.slane %v454, 5
        %v457 = vor.u32 %v453, %v456
        %v458 = vrot.slane %v457, 4
        %v460 = vshll.u32 %v284, 16
        %v462 = vrot.slane %v460, 5
        %v463 = vsel %vm361, %v458, %v462
        %v464 = vshrl.u32 %v284, 16
        %v466 = vrot.slane %v464, 4
        %v467 = vor.u32 %v466, %v462
        %v468 = vrot.slane %v467, 4
        %v470 = vshll.u32 %v285, 16
        %v472 = vrot.slane %v470, 5
        %v473 = vsel %vm361, %v468, %v472
        %v474 = vshrl.u32 %v285, 16
        %v476 = vrot.slane %v474, 4
        %v477 = vor.u32 %v476, %v472
        %v478 = vrot.slane %v477, 4
        %v480 = vshll.u32 %v286, 16
        %v482 = vrot.slane %v480, 5
        %v483 = vsel %vm361, %v478, %v482
        %v484 = vshrl.u32 %v286, 16
        %v486 = vrot.slane %v484, 4
        %v487 = vor.u32 %v486, %v482
        %v488 = vrot.slane %v487, 4
        %v490 = vshll.u32 %v345, 16
        %v492 = vrot.slane %v490, 5
        %v493 = vsel %vm361, %v488, %v492
        %v495 = vshrl.u32 %v287, 16
        %v497 = vrot.slane %v495, 4
        %v498 = vshll.u32 %v287, 16
        %v500 = vrot.slane %v498, 5
        %v501 = vor.u32 %v497, %v500
        %v502 = vrot.slane %v501, 4
        %v504 = vshll.u32 %v288, 16
        %v506 = vrot.slane %v504, 5
        %v507 = vsel %vm361, %v502, %v506
        %v508 = vshrl.u32 %v288, 16
        %v510 = vrot.slane %v508, 4
        %v511 = vor.u32 %v510, %v506
        %v512 = vrot.slane %v511, 4
        %v514 = vshll.u32 %v289, 16
        %v516 = vrot.slane %v514, 5
        %v517 = vsel %vm361, %v512, %v516
        %v518 = vshrl.u32 %v289, 16
        %v520 = vrot.slane %v518, 4
        %v521 = vor.u32 %v520, %v516
        %v522 = vrot.slane %v521, 4
        %v524 = vshll.u32 %v290, 16
        %v526 = vrot.slane %v524, 5
        %v527 = vsel %vm361, %v522, %v526
        %v528 = vshrl.u32 %v290, 16
        %v530 = vrot.slane %v528, 4
        %v531 = vor.u32 %v530, %v526
        %v532 = vrot.slane %v531, 4
        %v534 = vshll.u32 %v346, 16
        %v536 = vrot.slane %v534, 5
        %v537 = vsel %vm361, %v532, %v536
        %v539 = vshrl.u32 %v291, 16
        %v541 = vrot.slane %v539, 4
        %v542 = vshll.u32 %v291, 16
        %v544 = vrot.slane %v542, 5
        %v545 = vor.u32 %v541, %v544
        %v546 = vrot.slane %v545, 4
        %v548 = vshll.u32 %v292, 16
        %v550 = vrot.slane %v548, 5
        %v551 = vsel %vm361, %v546, %v550
        %v552 = vshrl.u32 %v292, 16
        %v554 = vrot.slane %v552, 4
        %v555 = vor.u32 %v554, %v550
        %v556 = vrot.slane %v555, 4
        %v558 = vshll.u32 %v293, 16
        %v560 = vrot.slane %v558, 5
        %v561 = vsel %vm361, %v556, %v560
        %v562 = vshrl.u32 %v293, 16
        %v564 = vrot.slane %v562, 4
        %v565 = vor.u32 %v564, %v560
        %v566 = vrot.slane %v565, 4
        %v568 = vshll.u32 %v294, 16
        %v570 = vrot.slane %v568, 5
        %v571 = vsel %vm361, %v566, %v570
        %v572 = vshrl.u32 %v294, 16
        %v574 = vrot.slane %v572, 4
        %v575 = vor.u32 %v574, %v570
        %v576 = vrot.slane %v575, 4
        %v578 = vshll.u32 %v347, 16
        %v580 = vrot.slane %v578, 5
        %v581 = vsel %vm361, %v576, %v580
        %v583 = vshrl.u32 %v295, 16
        %v585 = vrot.slane %v583, 4
        %v586 = vshll.u32 %v295, 16
        %v588 = vrot.slane %v586, 5
        %v589 = vor.u32 %v585, %v588
        %v590 = vrot.slane %v589, 4
        %v592 = vshll.u32 %v296, 16
        %v594 = vrot.slane %v592, 5
        %v595 = vsel %vm361, %v590, %v594
        %v596 = vshrl.u32 %v296, 16
        %v598 = vrot.slane %v596, 4
        %v599 = vor.u32 %v598, %v594
        %v600 = vrot.slane %v599, 4
        %v602 = vshll.u32 %v297, 16
        %v604 = vrot.slane %v602, 5
        %v605 = vsel %vm361, %v600, %v604
        %v606 = vshrl.u32 %v297, 16
        %v608 = vrot.slane %v606, 4
        %v609 = vor.u32 %v608, %v604
        %v610 = vrot.slane %v609, 4
        %v612 = vshll.u32 %v298, 16
        %v614 = vrot.slane %v612, 5
        %v615 = vsel %vm361, %v610, %v614
        %v616 = vshrl.u32 %v298, 16
        %v618 = vrot.slane %v616, 4
        %v619 = vor.u32 %v618, %v614
        %v620 = vrot.slane %v619, 4
        %v622 = vshll.u32 %v348, 16
        %v624 = vrot.slane %v622, 5
        %v625 = vsel %vm361, %v620, %v624
        %v627 = vshrl.u32 %v299, 16
        %v629 = vrot.slane %v627, 4
        %v630 = vshll.u32 %v299, 16
        %v632 = vrot.slane %v630, 5
        %v633 = vor.u32 %v629, %v632
        %v634 = vrot.slane %v633, 4
        %v636 = vshll.u32 %v300, 16
        %v638 = vrot.slane %v636, 5
        %v639 = vsel %vm361, %v634, %v638
        %v640 = vshrl.u32 %v300, 16
        %v642 = vrot.slane %v640, 4
        %v643 = vor.u32 %v642, %v638
        %v644 = vrot.slane %v643, 4
        %v646 = vshll.u32 %v301, 16
        %v648 = vrot.slane %v646, 5
        %v649 = vsel %vm361, %v644, %v648
        %v650 = vshrl.u32 %v301, 16
        %v652 = vrot.slane %v650, 4
        %v653 = vor.u32 %v652, %v648
        %v654 = vrot.slane %v653, 4
        %v656 = vshll.u32 %v302, 16
        %v658 = vrot.slane %v656, 5
        %v659 = vsel %vm361, %v654, %v658
        %v660 = vshrl.u32 %v302, 16
        %v662 = vrot.slane %v660, 4
        %v663 = vor.u32 %v662, %v658
        %v664 = vrot.slane %v663, 4
        %v666 = vshll.u32 %v349, 16
        %v668 = vrot.slane %v666, 5
        %v669 = vsel %vm361, %v664, %v668
        %v671 = vshrl.u32 %v303, 16
        %v673 = vrot.slane %v671, 4
        %v674 = vshll.u32 %v303, 16
        %v676 = vrot.slane %v674, 5
        %v677 = vor.u32 %v673, %v676
        %v678 = vrot.slane %v677, 4
        %v680 = vshll.u32 %v304, 16
        %v682 = vrot.slane %v680, 5
        %v683 = vsel %vm361, %v678, %v682
        %v684 = vshrl.u32 %v304, 16
        %v686 = vrot.slane %v684, 4
        %v687 = vor.u32 %v686, %v682
        %v688 = vrot.slane %v687, 4
        %v690 = vshll.u32 %v305, 16
        %v692 = vrot.slane %v690, 5
        %v693 = vsel %vm361, %v688, %v692
        %v694 = vshrl.u32 %v305, 16
        %v696 = vrot.slane %v694, 4
        %v697 = vor.u32 %v696, %v692
        %v698 = vrot.slane %v697, 4
        %v700 = vshll.u32 %v306, 16
        %v702 = vrot.slane %v700, 5
        %v703 = vsel %vm361, %v698, %v702
        %v704 = vshrl.u32 %v306, 16
        %v706 = vrot.slane %v704, 4
        %v707 = vor.u32 %v706, %v702
        %v708 = vrot.slane %v707, 4
        %v710 = vshll.u32 %v350, 16
        %v712 = vrot.slane %v710, 5
        %v713 = vsel %vm361, %v708, %v712
        %v715 = vshrl.u32 %v307, 16
        %v717 = vrot.slane %v715, 4
        %v718 = vshll.u32 %v307, 16
        %v720 = vrot.slane %v718, 5
        %v721 = vor.u32 %v717, %v720
        %v722 = vrot.slane %v721, 4
        %v724 = vshll.u32 %v308, 16
        %v726 = vrot.slane %v724, 5
        %v727 = vsel %vm361, %v722, %v726
        %v728 = vshrl.u32 %v308, 16
        %v730 = vrot.slane %v728, 4
        %v731 = vor.u32 %v730, %v726
        %v732 = vrot.slane %v731, 4
        %v734 = vshll.u32 %v309, 16
        %v736 = vrot.slane %v734, 5
        %v737 = vsel %vm361, %v732, %v736
        %v738 = vshrl.u32 %v309, 16
        %v740 = vrot.slane %v738, 4
        %v741 = vor.u32 %v740, %v736
        %v742 = vrot.slane %v741, 4
        %v744 = vshll.u32 %v310, 16
        %v746 = vrot.slane %v744, 5
        %v747 = vsel %vm361, %v742, %v746
        %v748 = vshrl.u32 %v310, 16
        %v750 = vrot.slane %v748, 4
        %v751 = vor.u32 %v750, %v746
        %v752 = vrot.slane %v751, 4
        %v754 = vshll.u32 %v351, 16
        %v756 = vrot.slane %v754, 5
        %v757 = vsel %vm361, %v752, %v756
        %v759 = vshrl.u32 %v311, 16
        %v761 = vrot.slane %v759, 4
        %v762 = vshll.u32 %v311, 16
        %v764 = vrot.slane %v762, 5
        %v765 = vor.u32 %v761, %v764
        %v766 = vrot.slane %v765, 4
        %v768 = vshll.u32 %v312, 16
        %v770 = vrot.slane %v768, 5
        %v771 = vsel %vm361, %v766, %v770
        %v772 = vshrl.u32 %v312, 16
        %v774 = vrot.slane %v772, 4
        %v775 = vor.u32 %v774, %v770
        %v776 = vrot.slane %v775, 4
        %v778 = vshll.u32 %v313, 16
        %v780 = vrot.slane %v778, 5
        %v781 = vsel %vm361, %v776, %v780
        %v782 = vshrl.u32 %v313, 16
        %v784 = vrot.slane %v782, 4
        %v785 = vor.u32 %v784, %v780
        %v786 = vrot.slane %v785, 4
        %v788 = vshll.u32 %v314, 16
        %v790 = vrot.slane %v788, 5
        %v791 = vsel %vm361, %v786, %v790
        %v792 = vshrl.u32 %v314, 16
        %v794 = vrot.slane %v792, 4
        %v795 = vor.u32 %v794, %v790
        %v796 = vrot.slane %v795, 4
        %v798 = vshll.u32 %v352, 16
        %v800 = vrot.slane %v798, 5
        %v801 = vsel %vm361, %v796, %v800
        %v803 = vshrl.u32 %v315, 16
        %v805 = vrot.slane %v803, 4
        %v806 = vshll.u32 %v315, 16
        %v808 = vrot.slane %v806, 5
        %v809 = vor.u32 %v805, %v808
        %v810 = vrot.slane %v809, 4
        %v812 = vshll.u32 %v316, 16
        %v814 = vrot.slane %v812, 5
        %v815 = vsel %vm361, %v810, %v814
        %v816 = vshrl.u32 %v316, 16
        %v818 = vrot.slane %v816, 4
        %v819 = vor.u32 %v818, %v814
        %v820 = vrot.slane %v819, 4
        %v822 = vshll.u32 %v317, 16
        %v824 = vrot.slane %v822, 5
        %v825 = vsel %vm361, %v820, %v824
        %v826 = vshrl.u32 %v317, 16
        %v828 = vrot.slane %v826, 4
        %v829 = vor.u32 %v828, %v824
        %v830 = vrot.slane %v829, 4
        %v832 = vshll.u32 %v318, 16
        %v834 = vrot.slane %v832, 5
        %v835 = vsel %vm361, %v830, %v834
        %v836 = vshrl.u32 %v318, 16
        %v838 = vrot.slane %v836, 4
        %v839 = vor.u32 %v838, %v834
        %v840 = vrot.slane %v839, 4
        %v842 = vshll.u32 %v353, 16
        %v844 = vrot.slane %v842, 5
        %v845 = vsel %vm361, %v840, %v844
        %v847 = vshrl.u32 %v319, 16
        %v849 = vrot.slane %v847, 4
        %v850 = vshll.u32 %v319, 16
        %v852 = vrot.slane %v850, 5
        %v853 = vor.u32 %v849, %v852
        %v854 = vrot.slane %v853, 4
        %v856 = vshll.u32 %v320, 16
        %v858 = vrot.slane %v856, 5
        %v859 = vsel %vm361, %v854, %v858
        %v860 = vshrl.u32 %v320, 16
        %v862 = vrot.slane %v860, 4
        %v863 = vor.u32 %v862, %v858
        %v864 = vrot.slane %v863, 4
        %v866 = vshll.u32 %v321, 16
        %v868 = vrot.slane %v866, 5
        %v869 = vsel %vm361, %v864, %v868
        %v870 = vshrl.u32 %v321, 16
        %v872 = vrot.slane %v870, 4
        %v873 = vor.u32 %v872, %v868
        %v874 = vrot.slane %v873, 4
        %v876 = vshll.u32 %v322, 16
        %v878 = vrot.slane %v876, 5
        %v879 = vsel %vm361, %v874, %v878
        %v880 = vshrl.u32 %v322, 16
        %v882 = vrot.slane %v880, 4
        %v883 = vor.u32 %v882, %v878
        %v884 = vrot.slane %v883, 4
        %v886 = vshll.u32 %v354, 16
        %v888 = vrot.slane %v886, 5
        %v889 = vsel %vm361, %v884, %v888
        %v891 = vshrl.u32 %v323, 16
        %v893 = vrot.slane %v891, 4
        %v894 = vshll.u32 %v323, 16
        %v896 = vrot.slane %v894, 5
        %v897 = vor.u32 %v893, %v896
        %v898 = vrot.slane %v897, 4
        %v900 = vshll.u32 %v324, 16
        %v902 = vrot.slane %v900, 5
        %v903 = vsel %vm361, %v898, %v902
        %v904 = vshrl.u32 %v324, 16
        %v906 = vrot.slane %v904, 4
        %v907 = vor.u32 %v906, %v902
        %v908 = vrot.slane %v907, 4
        %v910 = vshll.u32 %v325, 16
        %v912 = vrot.slane %v910, 5
        %v913 = vsel %vm361, %v908, %v912
        %v914 = vshrl.u32 %v325, 16
        %v916 = vrot.slane %v914, 4
        %v917 = vor.u32 %v916, %v912
        %v918 = vrot.slane %v917, 4
        %v920 = vshll.u32 %v326, 16
        %v922 = vrot.slane %v920, 5
        %v923 = vsel %vm361, %v918, %v922
        %v924 = vshrl.u32 %v326, 16
        %v926 = vrot.slane %v924, 4
        %v927 = vor.u32 %v926, %v922
        %v928 = vrot.slane %v927, 4
        %v930 = vshll.u32 %v355, 16
        %v932 = vrot.slane %v930, 5
        %v933 = vsel %vm361, %v928, %v932
        %v935 = vshrl.u32 %v327, 16
        %v937 = vrot.slane %v935, 4
        %v938 = vshll.u32 %v327, 16
        %v940 = vrot.slane %v938, 5
        %v941 = vor.u32 %v937, %v940
        %v942 = vrot.slane %v941, 4
        %v944 = vshll.u32 %v328, 16
        %v946 = vrot.slane %v944, 5
        %v947 = vsel %vm361, %v942, %v946
        %v948 = vshrl.u32 %v328, 16
        %v950 = vrot.slane %v948, 4
        %v951 = vor.u32 %v950, %v946
        %v952 = vrot.slane %v951, 4
        %v954 = vshll.u32 %v329, 16
        %v956 = vrot.slane %v954, 5
        %v957 = vsel %vm361, %v952, %v956
        %v958 = vshrl.u32 %v329, 16
        %v960 = vrot.slane %v958, 4
        %v961 = vor.u32 %v960, %v956
        %v962 = vrot.slane %v961, 4
        %v964 = vshll.u32 %v330, 16
        %v966 = vrot.slane %v964, 5
        %v967 = vsel %vm361, %v962, %v966
        %v968 = vshrl.u32 %v330, 16
        %v970 = vrot.slane %v968, 4
        %v971 = vor.u32 %v970, %v966
        %v972 = vrot.slane %v971, 4
        %v974 = vshll.u32 %v356, 16
        %v976 = vrot.slane %v974, 5
        %v977 = vsel %vm361, %v972, %v976
        %v979 = vshrl.u32 %v331, 16
        %v981 = vrot.slane %v979, 4
        %v982 = vshll.u32 %v331, 16
        %v984 = vrot.slane %v982, 5
        %v985 = vor.u32 %v981, %v984
        %v986 = vrot.slane %v985, 4
        %v988 = vshll.u32 %v332, 16
        %v990 = vrot.slane %v988, 5
        %v991 = vsel %vm361, %v986, %v990
        %v992 = vshrl.u32 %v332, 16
        %v994 = vrot.slane %v992, 4
        %v995 = vor.u32 %v994, %v990
        %v996 = vrot.slane %v995, 4
        %v998 = vshll.u32 %v333, 16
        %v1000 = vrot.slane %v998, 5
        %v1001 = vsel %vm361, %v996, %v1000
        %v1002 = vshrl.u32 %v333, 16
        %v1004 = vrot.slane %v1002, 4
        %v1005 = vor.u32 %v1004, %v1000
        %v1006 = vrot.slane %v1005, 4
        %v1008 = vshll.u32 %v334, 16
        %v1010 = vrot.slane %v1008, 5
        %v1011 = vsel %vm361, %v1006, %v1010
        %v1012 = vshrl.u32 %v334, 16
        %v1014 = vrot.slane %v1012, 4
        %v1015 = vor.u32 %v1014, %v1010
        %v1016 = vrot.slane %v1015, 4
        %v1018 = vshll.u32 %v357, 16
        %v1020 = vrot.slane %v1018, 5
        %v1021 = vsel %vm361, %v1016, %v1020
        %v1023 = vshrl.u32 %v335, 16
        %v1025 = vrot.slane %v1023, 4
        %v1026 = vshll.u32 %v335, 16
        %v1028 = vrot.slane %v1026, 5
        %v1029 = vor.u32 %v1025, %v1028
        %v1030 = vrot.slane %v1029, 4
        %v1032 = vshll.u32 %v336, 16
        %v1034 = vrot.slane %v1032, 5
        %v1035 = vsel %vm361, %v1030, %v1034
        %v1036 = vshrl.u32 %v336, 16
        %v1038 = vrot.slane %v1036, 4
        %v1039 = vor.u32 %v1038, %v1034
        %v1040 = vrot.slane %v1039, 4
        %v1042 = vshll.u32 %v337, 16
        %v1044 = vrot.slane %v1042, 5
        %v1045 = vsel %vm361, %v1040, %v1044
        %v1046 = vshrl.u32 %v337, 16
        %v1048 = vrot.slane %v1046, 4
        %v1049 = vor.u32 %v1048, %v1044
        %v1050 = vrot.slane %v1049, 4
        %v1052 = vshll.u32 %v338, 16
        %v1054 = vrot.slane %v1052, 5
        %v1055 = vsel %vm361, %v1050, %v1054
        %v1056 = vshrl.u32 %v338, 16
        %v1058 = vrot.slane %v1056, 4
        %v1059 = vor.u32 %v1058, %v1054
        %v1060 = vrot.slane %v1059, 4
        %v1062 = vshll.u32 %v358, 16
        %v1064 = vrot.slane %v1062, 5
        %v1065 = vsel %vm361, %v1060, %v1064
        %s1066 = scalar_lea.vmem %s2, 16
        %v1067 = vld [vmem:[%s1066] sm:$0xf]
        %v1068 = vld [vmem:[%s1066 + $0x4] sm:$0xf]
        %v1069 = vld [vmem:[%s1066 + $0x8] sm:$0xf]
        %v1070 = vld [vmem:[%s1066 + $0xc] sm:$0xf]
        %v1071 = vunpack.c.l.b16 %v375
        %v1072 = vunpack.c.l.b16 %v385
        %v1073 = vunpack.c.l.b16 %v395
        %v1074 = vunpack.c.l.b16 %v405
        %v1075 = vunpack.c.l.b16 %v419
        %v1076 = vunpack.c.l.b16 %v429
        %v1077 = vunpack.c.l.b16 %v439
        %v1078 = vunpack.c.l.b16 %v449
        %v1079 = vunpack.c.l.b16 %v463
        %v1080 = vunpack.c.l.b16 %v473
        %v1081 = vunpack.c.l.b16 %v483
        %v1082 = vunpack.c.l.b16 %v493
        %v1083 = vunpack.c.l.b16 %v507
        %v1084 = vunpack.c.l.b16 %v517
        %v1085 = vunpack.c.l.b16 %v527
        %v1086 = vunpack.c.l.b16 %v537
        %v1087 = vunpack.c.l.b16 %v551
        %v1088 = vunpack.c.l.b16 %v561
        %v1089 = vunpack.c.l.b16 %v571
        %v1090 = vunpack.c.l.b16 %v581
        %v1091 = vunpack.c.l.b16 %v595
        %v1092 = vunpack.c.l.b16 %v605
        %v1093 = vunpack.c.l.b16 %v615
        %v1094 = vunpack.c.l.b16 %v625
        %v1095 = vunpack.c.l.b16 %v639
        %v1096 = vunpack.c.l.b16 %v649
        %v1097 = vunpack.c.l.b16 %v659
        %v1098 = vunpack.c.l.b16 %v669
        %v1099 = vunpack.c.l.b16 %v683
        %v1100 = vunpack.c.l.b16 %v693
        %v1101 = vunpack.c.l.b16 %v703
        %v1102 = vunpack.c.l.b16 %v713
        %v1103 = vunpack.c.l.b16 %v727
        %v1104 = vunpack.c.l.b16 %v737
        %v1105 = vunpack.c.l.b16 %v747
        %v1106 = vunpack.c.l.b16 %v757
        %v1107 = vunpack.c.l.b16 %v771
        %v1108 = vunpack.c.l.b16 %v781
        %v1109 = vunpack.c.l.b16 %v791
        %v1110 = vunpack.c.l.b16 %v801
        %v1111 = vunpack.c.l.b16 %v815
        %v1112 = vunpack.c.l.b16 %v825
        %v1113 = vunpack.c.l.b16 %v835
        %v1114 = vunpack.c.l.b16 %v845
        %v1115 = vunpack.c.l.b16 %v859
        %v1116 = vunpack.c.l.b16 %v869
        %v1117 = vunpack.c.l.b16 %v879
        %v1118 = vunpack.c.l.b16 %v889
        %v1119 = vunpack.c.l.b16 %v903
        %v1120 = vunpack.c.l.b16 %v913
        %v1121 = vunpack.c.l.b16 %v923
        %v1122 = vunpack.c.l.b16 %v933
        %v1123 = vunpack.c.l.b16 %v947
        %v1124 = vunpack.c.l.b16 %v957
        %v1125 = vunpack.c.l.b16 %v967
        %v1126 = vunpack.c.l.b16 %v977
        %v1127 = vunpack.c.l.b16 %v991
        %v1128 = vunpack.c.l.b16 %v1001
        %v1129 = vunpack.c.l.b16 %v1011
        %v1130 = vunpack.c.l.b16 %v1021
        %v1131 = vunpack.c.l.b16 %v1035
        %v1132 = vunpack.c.l.b16 %v1045
        %v1133 = vunpack.c.l.b16 %v1055
        %v1134 = vunpack.c.l.b16 %v1065
        %v1135 = vpack.c.b16 %v1072, %v1071
        %v1136 = vpack.c.b16 %v1074, %v1073
        %v1137 = vpack.c.b16 %v1076, %v1075
        %v1138 = vpack.c.b16 %v1078, %v1077
        %v1139 = vpack.c.b16 %v1080, %v1079
        %v1140 = vpack.c.b16 %v1082, %v1081
        %v1141 = vpack.c.b16 %v1084, %v1083
        %v1142 = vpack.c.b16 %v1086, %v1085
        %v1143 = vpack.c.b16 %v1088, %v1087
        %v1144 = vpack.c.b16 %v1090, %v1089
        %v1145 = vpack.c.b16 %v1092, %v1091
        %v1146 = vpack.c.b16 %v1094, %v1093
        %v1147 = vpack.c.b16 %v1096, %v1095
        %v1148 = vpack.c.b16 %v1098, %v1097
        %v1149 = vpack.c.b16 %v1100, %v1099
        %v1150 = vpack.c.b16 %v1102, %v1101
        %v1151 = vpack.c.b16 %v1104, %v1103
        %v1152 = vpack.c.b16 %v1106, %v1105
        %v1153 = vpack.c.b16 %v1108, %v1107
        %v1154 = vpack.c.b16 %v1110, %v1109
        %v1155 = vpack.c.b16 %v1112, %v1111
        %v1156 = vpack.c.b16 %v1114, %v1113
        %v1157 = vpack.c.b16 %v1116, %v1115
        %v1158 = vpack.c.b16 %v1118, %v1117
        %v1159 = vpack.c.b16 %v1120, %v1119
        %v1160 = vpack.c.b16 %v1122, %v1121
        %v1161 = vpack.c.b16 %v1124, %v1123
        %v1162 = vpack.c.b16 %v1126, %v1125
        %v1163 = vpack.c.b16 %v1128, %v1127
        %v1164 = vpack.c.b16 %v1130, %v1129
        %v1165 = vpack.c.b16 %v1132, %v1131
        %v1166 = vpack.c.b16 %v1134, %v1133
        %v1171 = vunpack.c.l.b16 %v1067
        %v1172 = vunpack.c.l.b16 %v1068
        %v1173 = vunpack.c.l.b16 %v1069
        %v1174 = vunpack.c.l.b16 %v1070
        %v1175 = vpack.c.b16 %v1172, %v1171
        %v1176 = vpack.c.b16 %v1174, %v1173
        %vm1179 = vcmask 261120
        %v1181 = vsel %vm1179, %v1135, 0
        %v1184 = vsel %vm1179, %v1136, 0
        %v1187 = vsel %vm1179, %v1137, 0
        %v1190 = vsel %vm1179, %v1138, 0
        %v1193 = vsel %vm1179, %v1139, 0
        %v1196 = vsel %vm1179, %v1140, 0
        %v1199 = vsel %vm1179, %v1141, 0
        %v1202 = vsel %vm1179, %v1142, 0
        %v1205 = vsel %vm1179, %v1143, 0
        %v1208 = vsel %vm1179, %v1144, 0
        %v1211 = vsel %vm1179, %v1145, 0
        %v1214 = vsel %vm1179, %v1146, 0
        %v1217 = vsel %vm1179, %v1147, 0
        %v1220 = vsel %vm1179, %v1148, 0
        %v1223 = vsel %vm1179, %v1149, 0
        %v1226 = vsel %vm1179, %v1150, 0
        %v1229 = vsel %vm1179, %v1151, 0
        %v1232 = vsel %vm1179, %v1152, 0
        %v1235 = vsel %vm1179, %v1153, 0
        %v1238 = vsel %vm1179, %v1154, 0
        %v1241 = vsel %vm1179, %v1155, 0
        %v1244 = vsel %vm1179, %v1156, 0
        %v1247 = vsel %vm1179, %v1157, 0
        %v1250 = vsel %vm1179, %v1158, 0
        %v1253 = vsel %vm1179, %v1159, 0
        %v1256 = vsel %vm1179, %v1160, 0
        %v1259 = vsel %vm1179, %v1161, 0
        %v1262 = vsel %vm1179, %v1162, 0
        %v1265 = vsel %vm1179, %v1163, 0
        %v1268 = vsel %vm1179, %v1164, 0
        %v1271 = vsel %vm1179, %v1165, 0
        %v1274 = vsel %vm1179, %v1166, 0
        %1276 = vmatpush.bf16.msra.mxu0 0
        %1277 = vmatpush.bf16.msra.mxu0 0
        %1278 = vmatpush.bf16.msra.mxu0 0
        %1279 = vmatpush.bf16.msra.mxu0 0
        %1280 = vmatpush.bf16.msra.mxu0 0
        %1281 = vmatpush.bf16.msra.mxu0 0
        %1282 = vmatpush.bf16.msra.mxu0 %v1176
        %1283 = vmatpush.bf16.msra.mxu0 %v1175
        %1284 = vmatmul.bf16.gmra.mxu0 %v1181
        %v1285 = vpop.f32.mrf.mxu0
        %v1286 = vadd.f32 0.0, %v1285
        %v1287 = vpop.f32.mrf.mxu0
        %v1288 = vadd.f32 0.0, %v1287
        %1289 = vmatmul.bf16.gmra.mxu0 %v1184
        %v1290 = vpop.f32.mrf.mxu0
        %v1291 = vadd.f32 0.0, %v1290
        %v1292 = vpop.f32.mrf.mxu0
        %v1293 = vadd.f32 0.0, %v1292
        %1294 = vmatmul.bf16.gmra.mxu0 %v1187
        %v1295 = vpop.f32.mrf.mxu0
        %v1296 = vadd.f32 0.0, %v1295
        %v1297 = vpop.f32.mrf.mxu0
        %v1298 = vadd.f32 0.0, %v1297
        %1299 = vmatmul.bf16.gmra.mxu0 %v1190
        %v1300 = vpop.f32.mrf.mxu0
        %v1301 = vadd.f32 0.0, %v1300
        %v1302 = vpop.f32.mrf.mxu0
        %v1303 = vadd.f32 0.0, %v1302
        %1304 = vmatmul.bf16.gmra.mxu0 %v1193
        %v1305 = vpop.f32.mrf.mxu0
        %v1306 = vadd.f32 0.0, %v1305
        %v1307 = vpop.f32.mrf.mxu0
        %v1308 = vadd.f32 0.0, %v1307
        %1309 = vmatmul.bf16.gmra.mxu0 %v1196
        %v1310 = vpop.f32.mrf.mxu0
        %v1311 = vadd.f32 0.0, %v1310
        %v1312 = vpop.f32.mrf.mxu0
        %v1313 = vadd.f32 0.0, %v1312
        %1314 = vmatmul.bf16.gmra.mxu0 %v1199
        %v1315 = vpop.f32.mrf.mxu0
        %v1316 = vadd.f32 0.0, %v1315
        %v1317 = vpop.f32.mrf.mxu0
        %v1318 = vadd.f32 0.0, %v1317
        %1319 = vmatmul.bf16.gmra.mxu0 %v1202
        %v1320 = vpop.f32.mrf.mxu0
        %v1321 = vadd.f32 0.0, %v1320
        %v1322 = vpop.f32.mrf.mxu0
        %v1323 = vadd.f32 0.0, %v1322
        %1324 = vmatmul.bf16.gmra.mxu0 %v1205
        %v1325 = vpop.f32.mrf.mxu0
        %v1326 = vadd.f32 0.0, %v1325
        %v1327 = vpop.f32.mrf.mxu0
        %v1328 = vadd.f32 0.0, %v1327
        %1329 = vmatmul.bf16.gmra.mxu0 %v1208
        %v1330 = vpop.f32.mrf.mxu0
        %v1331 = vadd.f32 0.0, %v1330
        %v1332 = vpop.f32.mrf.mxu0
        %v1333 = vadd.f32 0.0, %v1332
        %1334 = vmatmul.bf16.gmra.mxu0 %v1211
        %v1335 = vpop.f32.mrf.mxu0
        %v1336 = vadd.f32 0.0, %v1335
        %v1337 = vpop.f32.mrf.mxu0
        %v1338 = vadd.f32 0.0, %v1337
        %1339 = vmatmul.bf16.gmra.mxu0 %v1214
        %v1340 = vpop.f32.mrf.mxu0
        %v1341 = vadd.f32 0.0, %v1340
        %v1342 = vpop.f32.mrf.mxu0
        %v1343 = vadd.f32 0.0, %v1342
        %1344 = vmatmul.bf16.gmra.mxu0 %v1217
        %v1345 = vpop.f32.mrf.mxu0
        %v1346 = vadd.f32 0.0, %v1345
        %v1347 = vpop.f32.mrf.mxu0
        %v1348 = vadd.f32 0.0, %v1347
        %1349 = vmatmul.bf16.gmra.mxu0 %v1220
        %v1350 = vpop.f32.mrf.mxu0
        %v1351 = vadd.f32 0.0, %v1350
        %v1352 = vpop.f32.mrf.mxu0
        %v1353 = vadd.f32 0.0, %v1352
        %1354 = vmatmul.bf16.gmra.mxu0 %v1223
        %v1355 = vpop.f32.mrf.mxu0
        %v1356 = vadd.f32 0.0, %v1355
        %v1357 = vpop.f32.mrf.mxu0
        %v1358 = vadd.f32 0.0, %v1357
        %1359 = vmatmul.bf16.gmra.mxu0 %v1226
        %v1360 = vpop.f32.mrf.mxu0
        %v1361 = vadd.f32 0.0, %v1360
        %v1362 = vpop.f32.mrf.mxu0
        %v1363 = vadd.f32 0.0, %v1362
        %1364 = vmatmul.bf16.gmra.mxu0 %v1229
        %v1365 = vpop.f32.mrf.mxu0
        %v1366 = vadd.f32 0.0, %v1365
        %v1367 = vpop.f32.mrf.mxu0
        %v1368 = vadd.f32 0.0, %v1367
        %1369 = vmatmul.bf16.gmra.mxu0 %v1232
        %v1370 = vpop.f32.mrf.mxu0
        %v1371 = vadd.f32 0.0, %v1370
        %v1372 = vpop.f32.mrf.mxu0
        %v1373 = vadd.f32 0.0, %v1372
        %1374 = vmatmul.bf16.gmra.mxu0 %v1235
        %v1375 = vpop.f32.mrf.mxu0
        %v1376 = vadd.f32 0.0, %v1375
        %v1377 = vpop.f32.mrf.mxu0
        %v1378 = vadd.f32 0.0, %v1377
        %1379 = vmatmul.bf16.gmra.mxu0 %v1238
        %v1380 = vpop.f32.mrf.mxu0
        %v1381 = vadd.f32 0.0, %v1380
        %v1382 = vpop.f32.mrf.mxu0
        %v1383 = vadd.f32 0.0, %v1382
        %1384 = vmatmul.bf16.gmra.mxu0 %v1241
        %v1385 = vpop.f32.mrf.mxu0
        %v1386 = vadd.f32 0.0, %v1385
        %v1387 = vpop.f32.mrf.mxu0
        %v1388 = vadd.f32 0.0, %v1387
        %1389 = vmatmul.bf16.gmra.mxu0 %v1244
        %v1390 = vpop.f32.mrf.mxu0
        %v1391 = vadd.f32 0.0, %v1390
        %v1392 = vpop.f32.mrf.mxu0
        %v1393 = vadd.f32 0.0, %v1392
        %1394 = vmatmul.bf16.gmra.mxu0 %v1247
        %v1395 = vpop.f32.mrf.mxu0
        %v1396 = vadd.f32 0.0, %v1395
        %v1397 = vpop.f32.mrf.mxu0
        %v1398 = vadd.f32 0.0, %v1397
        %1399 = vmatmul.bf16.gmra.mxu0 %v1250
        %v1400 = vpop.f32.mrf.mxu0
        %v1401 = vadd.f32 0.0, %v1400
        %v1402 = vpop.f32.mrf.mxu0
        %v1403 = vadd.f32 0.0, %v1402
        %1404 = vmatmul.bf16.gmra.mxu0 %v1253
        %v1405 = vpop.f32.mrf.mxu0
        %v1406 = vadd.f32 0.0, %v1405
        %v1407 = vpop.f32.mrf.mxu0
        %v1408 = vadd.f32 0.0, %v1407
        %1409 = vmatmul.bf16.gmra.mxu0 %v1256
        %v1410 = vpop.f32.mrf.mxu0
        %v1411 = vadd.f32 0.0, %v1410
        %v1412 = vpop.f32.mrf.mxu0
        %v1413 = vadd.f32 0.0, %v1412
        %1414 = vmatmul.bf16.gmra.mxu0 %v1259
        %v1415 = vpop.f32.mrf.mxu0
        %v1416 = vadd.f32 0.0, %v1415
        %v1417 = vpop.f32.mrf.mxu0
        %v1418 = vadd.f32 0.0, %v1417
        %1419 = vmatmul.bf16.gmra.mxu0 %v1262
        %v1420 = vpop.f32.mrf.mxu0
        %v1421 = vadd.f32 0.0, %v1420
        %v1422 = vpop.f32.mrf.mxu0
        %v1423 = vadd.f32 0.0, %v1422
        %1424 = vmatmul.bf16.gmra.mxu0 %v1265
        %v1425 = vpop.f32.mrf.mxu0
        %v1426 = vadd.f32 0.0, %v1425
        %v1427 = vpop.f32.mrf.mxu0
        %v1428 = vadd.f32 0.0, %v1427
        %1429 = vmatmul.bf16.gmra.mxu0 %v1268
        %v1430 = vpop.f32.mrf.mxu0
        %v1431 = vadd.f32 0.0, %v1430
        %v1432 = vpop.f32.mrf.mxu0
        %v1433 = vadd.f32 0.0, %v1432
        %1434 = vmatmul.bf16.gmra.mxu0 %v1271
        %v1435 = vpop.f32.mrf.mxu0
        %v1436 = vadd.f32 0.0, %v1435
        %v1437 = vpop.f32.mrf.mxu0
        %v1438 = vadd.f32 0.0, %v1437
        %1439 = vmatmul.bf16.gmra.mxu0 %v1274
        %v1440 = vpop.f32.mrf.mxu0
        %v1441 = vadd.f32 0.0, %v1440
        %v1442 = vpop.f32.mrf.mxu0
        %v1443 = vadd.f32 0.0, %v1442
        %1444 = vdwg.mxu0
        %v1509 = vunpack.c.l.b16 %v275
        %v1510 = vunpack.c.l.b16 %v276
        %v1511 = vunpack.c.l.b16 %v277
        %v1512 = vunpack.c.l.b16 %v278
        %v1513 = vunpack.c.l.b16 %v279
        %v1514 = vunpack.c.l.b16 %v280
        %v1515 = vunpack.c.l.b16 %v281
        %v1516 = vunpack.c.l.b16 %v282
        %v1517 = vunpack.c.l.b16 %v283
        %v1518 = vunpack.c.l.b16 %v284
        %v1519 = vunpack.c.l.b16 %v285
        %v1520 = vunpack.c.l.b16 %v286
        %v1521 = vunpack.c.l.b16 %v287
        %v1522 = vunpack.c.l.b16 %v288
        %v1523 = vunpack.c.l.b16 %v289
        %v1524 = vunpack.c.l.b16 %v290
        %v1525 = vunpack.c.l.b16 %v291
        %v1526 = vunpack.c.l.b16 %v292
        %v1527 = vunpack.c.l.b16 %v293
        %v1528 = vunpack.c.l.b16 %v294
        %v1529 = vunpack.c.l.b16 %v295
        %v1530 = vunpack.c.l.b16 %v296
        %v1531 = vunpack.c.l.b16 %v297
        %v1532 = vunpack.c.l.b16 %v298
        %v1533 = vunpack.c.l.b16 %v299
        %v1534 = vunpack.c.l.b16 %v300
        %v1535 = vunpack.c.l.b16 %v301
        %v1536 = vunpack.c.l.b16 %v302
        %v1537 = vunpack.c.l.b16 %v303
        %v1538 = vunpack.c.l.b16 %v304
        %v1539 = vunpack.c.l.b16 %v305
        %v1540 = vunpack.c.l.b16 %v306
        %v1541 = vunpack.c.l.b16 %v307
        %v1542 = vunpack.c.l.b16 %v308
        %v1543 = vunpack.c.l.b16 %v309
        %v1544 = vunpack.c.l.b16 %v310
        %v1545 = vunpack.c.l.b16 %v311
        %v1546 = vunpack.c.l.b16 %v312
        %v1547 = vunpack.c.l.b16 %v313
        %v1548 = vunpack.c.l.b16 %v314
        %v1549 = vunpack.c.l.b16 %v315
        %v1550 = vunpack.c.l.b16 %v316
        %v1551 = vunpack.c.l.b16 %v317
        %v1552 = vunpack.c.l.b16 %v318
        %v1553 = vunpack.c.l.b16 %v319
        %v1554 = vunpack.c.l.b16 %v320
        %v1555 = vunpack.c.l.b16 %v321
        %v1556 = vunpack.c.l.b16 %v322
        %v1557 = vunpack.c.l.b16 %v323
        %v1558 = vunpack.c.l.b16 %v324
        %v1559 = vunpack.c.l.b16 %v325
        %v1560 = vunpack.c.l.b16 %v326
        %v1561 = vunpack.c.l.b16 %v327
        %v1562 = vunpack.c.l.b16 %v328
        %v1563 = vunpack.c.l.b16 %v329
        %v1564 = vunpack.c.l.b16 %v330
        %v1565 = vunpack.c.l.b16 %v331
        %v1566 = vunpack.c.l.b16 %v332
        %v1567 = vunpack.c.l.b16 %v333
        %v1568 = vunpack.c.l.b16 %v334
        %v1569 = vunpack.c.l.b16 %v335
        %v1570 = vunpack.c.l.b16 %v336
        %v1571 = vunpack.c.l.b16 %v337
        %v1572 = vunpack.c.l.b16 %v338
        %v1573 = vpack.c.b16 %v1510, %v1509
        %v1574 = vpack.c.b16 %v1512, %v1511
        %v1575 = vpack.c.b16 %v1514, %v1513
        %v1576 = vpack.c.b16 %v1516, %v1515
        %v1577 = vpack.c.b16 %v1518, %v1517
        %v1578 = vpack.c.b16 %v1520, %v1519
        %v1579 = vpack.c.b16 %v1522, %v1521
        %v1580 = vpack.c.b16 %v1524, %v1523
        %v1581 = vpack.c.b16 %v1526, %v1525
        %v1582 = vpack.c.b16 %v1528, %v1527
        %v1583 = vpack.c.b16 %v1530, %v1529
        %v1584 = vpack.c.b16 %v1532, %v1531
        %v1585 = vpack.c.b16 %v1534, %v1533
        %v1586 = vpack.c.b16 %v1536, %v1535
        %v1587 = vpack.c.b16 %v1538, %v1537
        %v1588 = vpack.c.b16 %v1540, %v1539
        %v1589 = vpack.c.b16 %v1542, %v1541
        %v1590 = vpack.c.b16 %v1544, %v1543
        %v1591 = vpack.c.b16 %v1546, %v1545
        %v1592 = vpack.c.b16 %v1548, %v1547
        %v1593 = vpack.c.b16 %v1550, %v1549
        %v1594 = vpack.c.b16 %v1552, %v1551
        %v1595 = vpack.c.b16 %v1554, %v1553
        %v1596 = vpack.c.b16 %v1556, %v1555
        %v1597 = vpack.c.b16 %v1558, %v1557
        %v1598 = vpack.c.b16 %v1560, %v1559
        %v1599 = vpack.c.b16 %v1562, %v1561
        %v1600 = vpack.c.b16 %v1564, %v1563
        %v1601 = vpack.c.b16 %v1566, %v1565
        %v1602 = vpack.c.b16 %v1568, %v1567
        %v1603 = vpack.c.b16 %v1570, %v1569
        %v1604 = vpack.c.b16 %v1572, %v1571
        %v1609 = vunpack.c.l.b16 %v339
        %v1610 = vunpack.c.l.b16 %v340
        %v1611 = vunpack.c.l.b16 %v341
        %v1612 = vunpack.c.l.b16 %v342
        %v1613 = vpack.c.b16 %v1610, %v1609
        %v1614 = vpack.c.b16 %v1612, %v1611
        %v1618 = vsel %vm1179, %v1573, 0
        %v1621 = vsel %vm1179, %v1574, 0
        %v1624 = vsel %vm1179, %v1575, 0
        %v1627 = vsel %vm1179, %v1576, 0
        %v1630 = vsel %vm1179, %v1577, 0
        %v1633 = vsel %vm1179, %v1578, 0
        %v1636 = vsel %vm1179, %v1579, 0
        %v1639 = vsel %vm1179, %v1580, 0
        %v1642 = vsel %vm1179, %v1581, 0
        %v1645 = vsel %vm1179, %v1582, 0
        %v1648 = vsel %vm1179, %v1583, 0
        %v1651 = vsel %vm1179, %v1584, 0
        %v1654 = vsel %vm1179, %v1585, 0
        %v1657 = vsel %vm1179, %v1586, 0
        %v1660 = vsel %vm1179, %v1587, 0
        %v1663 = vsel %vm1179, %v1588, 0
        %v1666 = vsel %vm1179, %v1589, 0
        %v1669 = vsel %vm1179, %v1590, 0
        %v1672 = vsel %vm1179, %v1591, 0
        %v1675 = vsel %vm1179, %v1592, 0
        %v1678 = vsel %vm1179, %v1593, 0
        %v1681 = vsel %vm1179, %v1594, 0
        %v1684 = vsel %vm1179, %v1595, 0
        %v1687 = vsel %vm1179, %v1596, 0
        %v1690 = vsel %vm1179, %v1597, 0
        %v1693 = vsel %vm1179, %v1598, 0
        %v1696 = vsel %vm1179, %v1599, 0
        %v1699 = vsel %vm1179, %v1600, 0
        %v1702 = vsel %vm1179, %v1601, 0
        %v1705 = vsel %vm1179, %v1602, 0
        %v1708 = vsel %vm1179, %v1603, 0
        %v1711 = vsel %vm1179, %v1604, 0
        %1713 = vmatpush.bf16.msra.mxu0 0
        %1714 = vmatpush.bf16.msra.mxu0 0
        %1715 = vmatpush.bf16.msra.mxu0 0
        %1716 = vmatpush.bf16.msra.mxu0 0
        %1717 = vmatpush.bf16.msra.mxu0 0
        %1718 = vmatpush.bf16.msra.mxu0 0
        %1719 = vmatpush.bf16.msra.mxu0 %v1614
        %1720 = vmatpush.bf16.msra.mxu0 %v1613
        %1721 = vmatmul.bf16.gmra.mxu0 %v1618
        %v1722 = vpop.f32.mrf.mxu0
        %v1723 = vadd.f32 %v1286, %v1722
        %v1724 = vpop.f32.mrf.mxu0
        %v1725 = vadd.f32 %v1288, %v1724
        %1726 = vmatmul.bf16.gmra.mxu0 %v1621
        %v1727 = vpop.f32.mrf.mxu0
        %v1728 = vadd.f32 %v1291, %v1727
        %v1729 = vpop.f32.mrf.mxu0
        %v1730 = vadd.f32 %v1293, %v1729
        %1731 = vmatmul.bf16.gmra.mxu0 %v1624
        %v1732 = vpop.f32.mrf.mxu0
        %v1733 = vadd.f32 %v1296, %v1732
        %v1734 = vpop.f32.mrf.mxu0
        %v1735 = vadd.f32 %v1298, %v1734
        %1736 = vmatmul.bf16.gmra.mxu0 %v1627
        %v1737 = vpop.f32.mrf.mxu0
        %v1738 = vadd.f32 %v1301, %v1737
        %v1739 = vpop.f32.mrf.mxu0
        %v1740 = vadd.f32 %v1303, %v1739
        %1741 = vmatmul.bf16.gmra.mxu0 %v1630
        %v1742 = vpop.f32.mrf.mxu0
        %v1743 = vadd.f32 %v1306, %v1742
        %v1744 = vpop.f32.mrf.mxu0
        %v1745 = vadd.f32 %v1308, %v1744
        %1746 = vmatmul.bf16.gmra.mxu0 %v1633
        %v1747 = vpop.f32.mrf.mxu0
        %v1748 = vadd.f32 %v1311, %v1747
        %v1749 = vpop.f32.mrf.mxu0
        %v1750 = vadd.f32 %v1313, %v1749
        %1751 = vmatmul.bf16.gmra.mxu0 %v1636
        %v1752 = vpop.f32.mrf.mxu0
        %v1753 = vadd.f32 %v1316, %v1752
        %v1754 = vpop.f32.mrf.mxu0
        %v1755 = vadd.f32 %v1318, %v1754
        %1756 = vmatmul.bf16.gmra.mxu0 %v1639
        %v1757 = vpop.f32.mrf.mxu0
        %v1758 = vadd.f32 %v1321, %v1757
        %v1759 = vpop.f32.mrf.mxu0
        %v1760 = vadd.f32 %v1323, %v1759
        %1761 = vmatmul.bf16.gmra.mxu0 %v1642
        %v1762 = vpop.f32.mrf.mxu0
        %v1763 = vadd.f32 %v1326, %v1762
        %v1764 = vpop.f32.mrf.mxu0
        %v1765 = vadd.f32 %v1328, %v1764
        %1766 = vmatmul.bf16.gmra.mxu0 %v1645
        %v1767 = vpop.f32.mrf.mxu0
        %v1768 = vadd.f32 %v1331, %v1767
        %v1769 = vpop.f32.mrf.mxu0
        %v1770 = vadd.f32 %v1333, %v1769
        %1771 = vmatmul.bf16.gmra.mxu0 %v1648
        %v1772 = vpop.f32.mrf.mxu0
        %v1773 = vadd.f32 %v1336, %v1772
        %v1774 = vpop.f32.mrf.mxu0
        %v1775 = vadd.f32 %v1338, %v1774
        %1776 = vmatmul.bf16.gmra.mxu0 %v1651
        %v1777 = vpop.f32.mrf.mxu0
        %v1778 = vadd.f32 %v1341, %v1777
        %v1779 = vpop.f32.mrf.mxu0
        %v1780 = vadd.f32 %v1343, %v1779
        %1781 = vmatmul.bf16.gmra.mxu0 %v1654
        %v1782 = vpop.f32.mrf.mxu0
        %v1783 = vadd.f32 %v1346, %v1782
        %v1784 = vpop.f32.mrf.mxu0
        %v1785 = vadd.f32 %v1348, %v1784
        %1786 = vmatmul.bf16.gmra.mxu0 %v1657
        %v1787 = vpop.f32.mrf.mxu0
        %v1788 = vadd.f32 %v1351, %v1787
        %v1789 = vpop.f32.mrf.mxu0
        %v1790 = vadd.f32 %v1353, %v1789
        %1791 = vmatmul.bf16.gmra.mxu0 %v1660
        %v1792 = vpop.f32.mrf.mxu0
        %v1793 = vadd.f32 %v1356, %v1792
        %v1794 = vpop.f32.mrf.mxu0
        %v1795 = vadd.f32 %v1358, %v1794
        %1796 = vmatmul.bf16.gmra.mxu0 %v1663
        %v1797 = vpop.f32.mrf.mxu0
        %v1798 = vadd.f32 %v1361, %v1797
        %v1799 = vpop.f32.mrf.mxu0
        %v1800 = vadd.f32 %v1363, %v1799
        %1801 = vmatmul.bf16.gmra.mxu0 %v1666
        %v1802 = vpop.f32.mrf.mxu0
        %v1803 = vadd.f32 %v1366, %v1802
        %v1804 = vpop.f32.mrf.mxu0
        %v1805 = vadd.f32 %v1368, %v1804
        %1806 = vmatmul.bf16.gmra.mxu0 %v1669
        %v1807 = vpop.f32.mrf.mxu0
        %v1808 = vadd.f32 %v1371, %v1807
        %v1809 = vpop.f32.mrf.mxu0
        %v1810 = vadd.f32 %v1373, %v1809
        %1811 = vmatmul.bf16.gmra.mxu0 %v1672
        %v1812 = vpop.f32.mrf.mxu0
        %v1813 = vadd.f32 %v1376, %v1812
        %v1814 = vpop.f32.mrf.mxu0
        %v1815 = vadd.f32 %v1378, %v1814
        %1816 = vmatmul.bf16.gmra.mxu0 %v1675
        %v1817 = vpop.f32.mrf.mxu0
        %v1818 = vadd.f32 %v1381, %v1817
        %v1819 = vpop.f32.mrf.mxu0
        %v1820 = vadd.f32 %v1383, %v1819
        %1821 = vmatmul.bf16.gmra.mxu0 %v1678
        %v1822 = vpop.f32.mrf.mxu0
        %v1823 = vadd.f32 %v1386, %v1822
        %v1824 = vpop.f32.mrf.mxu0
        %v1825 = vadd.f32 %v1388, %v1824
        %1826 = vmatmul.bf16.gmra.mxu0 %v1681
        %v1827 = vpop.f32.mrf.mxu0
        %v1828 = vadd.f32 %v1391, %v1827
        %v1829 = vpop.f32.mrf.mxu0
        %v1830 = vadd.f32 %v1393, %v1829
        %1831 = vmatmul.bf16.gmra.mxu0 %v1684
        %v1832 = vpop.f32.mrf.mxu0
        %v1833 = vadd.f32 %v1396, %v1832
        %v1834 = vpop.f32.mrf.mxu0
        %v1835 = vadd.f32 %v1398, %v1834
        %1836 = vmatmul.bf16.gmra.mxu0 %v1687
        %v1837 = vpop.f32.mrf.mxu0
        %v1838 = vadd.f32 %v1401, %v1837
        %v1839 = vpop.f32.mrf.mxu0
        %v1840 = vadd.f32 %v1403, %v1839
        %1841 = vmatmul.bf16.gmra.mxu0 %v1690
        %v1842 = vpop.f32.mrf.mxu0
        %v1843 = vadd.f32 %v1406, %v1842
        %v1844 = vpop.f32.mrf.mxu0
        %v1845 = vadd.f32 %v1408, %v1844
        %1846 = vmatmul.bf16.gmra.mxu0 %v1693
        %v1847 = vpop.f32.mrf.mxu0
        %v1848 = vadd.f32 %v1411, %v1847
        %v1849 = vpop.f32.mrf.mxu0
        %v1850 = vadd.f32 %v1413, %v1849
        %1851 = vmatmul.bf16.gmra.mxu0 %v1696
        %v1852 = vpop.f32.mrf.mxu0
        %v1853 = vadd.f32 %v1416, %v1852
        %v1854 = vpop.f32.mrf.mxu0
        %v1855 = vadd.f32 %v1418, %v1854
        %1856 = vmatmul.bf16.gmra.mxu0 %v1699
        %v1857 = vpop.f32.mrf.mxu0
        %v1858 = vadd.f32 %v1421, %v1857
        %v1859 = vpop.f32.mrf.mxu0
        %v1860 = vadd.f32 %v1423, %v1859
        %1861 = vmatmul.bf16.gmra.mxu0 %v1702
        %v1862 = vpop.f32.mrf.mxu0
        %v1863 = vadd.f32 %v1426, %v1862
        %v1864 = vpop.f32.mrf.mxu0
        %v1865 = vadd.f32 %v1428, %v1864
        %1866 = vmatmul.bf16.gmra.mxu0 %v1705
        %v1867 = vpop.f32.mrf.mxu0
        %v1868 = vadd.f32 %v1431, %v1867
        %v1869 = vpop.f32.mrf.mxu0
        %v1870 = vadd.f32 %v1433, %v1869
        %1871 = vmatmul.bf16.gmra.mxu0 %v1708
        %v1872 = vpop.f32.mrf.mxu0
        %v1873 = vadd.f32 %v1436, %v1872
        %v1874 = vpop.f32.mrf.mxu0
        %v1875 = vadd.f32 %v1438, %v1874
        %1876 = vmatmul.bf16.gmra.mxu0 %v1711
        %v1877 = vpop.f32.mrf.mxu0
        %v1878 = vadd.f32 %v1441, %v1877
        %v1879 = vpop.f32.mrf.mxu0
        %v1880 = vadd.f32 %v1443, %v1879
        %1881 = vdwg.mxu0
        %v1882 = vld [vmem:[%s274] sm:$0xe]
        %v1883 = vld [vmem:[%s274 + $0x14] sm:$0xe]
        %v1884 = vld [vmem:[%s274 + $0x28] sm:$0xe]
        %v1885 = vld [vmem:[%s274 + $0x3c] sm:$0xe]
        %v1886 = vld [vmem:[%s274 + $0x50] sm:$0xe]
        %v1887 = vld [vmem:[%s274 + $0x64] sm:$0xe]
        %v1888 = vld [vmem:[%s274 + $0x78] sm:$0xe]
        %v1889 = vld [vmem:[%s274 + $0x8c] sm:$0xe]
        %v1890 = vld [vmem:[%s274 + $0xa0] sm:$0xe]
        %v1891 = vld [vmem:[%s274 + $0xb4] sm:$0xe]
        %v1892 = vld [vmem:[%s274 + $0xc8] sm:$0xe]
        %v1893 = vld [vmem:[%s274 + $0xdc] sm:$0xe]
        %v1894 = vld [vmem:[%s274 + $0xf0] sm:$0xe]
        %v1895 = vld [vmem:[%s274 + $0x104] sm:$0xe]
        %v1896 = vld [vmem:[%s274 + $0x118] sm:$0xe]
        %v1897 = vld [vmem:[%s274 + $0x12c] sm:$0xe]
        %vm1930 = vcmask 1042432
        %vm1931 = vcmask 1046532
        %vm1932 = vmor %vm1930, %vm1931
        %v1933 = vrot.slane %v1882, 5
        %v1934 = vrot.slane %v1933, 4
        %v1935 = vrot.slane %v276, 5
        %v1936 = vsel %vm1932, %v1934, %v1935
        %v1937 = vrot.slane %v1935, 4
        %v1938 = vrot.slane %v277, 5
        %v1939 = vsel %vm1932, %v1937, %v1938
        %v1940 = vrot.slane %v1938, 4
        %v1941 = vrot.slane %v278, 5
        %v1942 = vsel %vm1932, %v1940, %v1941
        %v1943 = vrot.slane %v1941, 4
        %v1944 = vrot.slane %v343, 5
        %v1945 = vsel %vm1932, %v1943, %v1944
        %v1946 = vrot.slane %v1883, 5
        %v1947 = vrot.slane %v1946, 4
        %v1948 = vrot.slane %v280, 5
        %v1949 = vsel %vm1932, %v1947, %v1948
        %v1950 = vrot.slane %v1948, 4
        %v1951 = vrot.slane %v281, 5
        %v1952 = vsel %vm1932, %v1950, %v1951
        %v1953 = vrot.slane %v1951, 4
        %v1954 = vrot.slane %v282, 5
        %v1955 = vsel %vm1932, %v1953, %v1954
        %v1956 = vrot.slane %v1954, 4
        %v1957 = vrot.slane %v344, 5
        %v1958 = vsel %vm1932, %v1956, %v1957
        %v1959 = vrot.slane %v1884, 5
        %v1960 = vrot.slane %v1959, 4
        %v1961 = vrot.slane %v284, 5
        %v1962 = vsel %vm1932, %v1960, %v1961
        %v1963 = vrot.slane %v1961, 4
        %v1964 = vrot.slane %v285, 5
        %v1965 = vsel %vm1932, %v1963, %v1964
        %v1966 = vrot.slane %v1964, 4
        %v1967 = vrot.slane %v286, 5
        %v1968 = vsel %vm1932, %v1966, %v1967
        %v1969 = vrot.slane %v1967, 4
        %v1970 = vrot.slane %v345, 5
        %v1971 = vsel %vm1932, %v1969, %v1970
        %v1972 = vrot.slane %v1885, 5
        %v1973 = vrot.slane %v1972, 4
        %v1974 = vrot.slane %v288, 5
        %v1975 = vsel %vm1932, %v1973, %v1974
        %v1976 = vrot.slane %v1974, 4
        %v1977 = vrot.slane %v289, 5
        %v1978 = vsel %vm1932, %v1976, %v1977
        %v1979 = vrot.slane %v1977, 4
        %v1980 = vrot.slane %v290, 5
        %v1981 = vsel %vm1932, %v1979, %v1980
        %v1982 = vrot.slane %v1980, 4
        %v1983 = vrot.slane %v346, 5
        %v1984 = vsel %vm1932, %v1982, %v1983
        %v1985 = vrot.slane %v1886, 5
        %v1986 = vrot.slane %v1985, 4
        %v1987 = vrot.slane %v292, 5
        %v1988 = vsel %vm1932, %v1986, %v1987
        %v1989 = vrot.slane %v1987, 4
        %v1990 = vrot.slane %v293, 5
        %v1991 = vsel %vm1932, %v1989, %v1990
        %v1992 = vrot.slane %v1990, 4
        %v1993 = vrot.slane %v294, 5
        %v1994 = vsel %vm1932, %v1992, %v1993
        %v1995 = vrot.slane %v1993, 4
        %v1996 = vrot.slane %v347, 5
        %v1997 = vsel %vm1932, %v1995, %v1996
        %v1998 = vrot.slane %v1887, 5
        %v1999 = vrot.slane %v1998, 4
        %v2000 = vrot.slane %v296, 5
        %v2001 = vsel %vm1932, %v1999, %v2000
        %v2002 = vrot.slane %v2000, 4
        %v2003 = vrot.slane %v297, 5
        %v2004 = vsel %vm1932, %v2002, %v2003
        %v2005 = vrot.slane %v2003, 4
        %v2006 = vrot.slane %v298, 5
        %v2007 = vsel %vm1932, %v2005, %v2006
        %v2008 = vrot.slane %v2006, 4
        %v2009 = vrot.slane %v348, 5
        %v2010 = vsel %vm1932, %v2008, %v2009
        %v2011 = vrot.slane %v1888, 5
        %v2012 = vrot.slane %v2011, 4
        %v2013 = vrot.slane %v300, 5
        %v2014 = vsel %vm1932, %v2012, %v2013
        %v2015 = vrot.slane %v2013, 4
        %v2016 = vrot.slane %v301, 5
        %v2017 = vsel %vm1932, %v2015, %v2016
        %v2018 = vrot.slane %v2016, 4
        %v2019 = vrot.slane %v302, 5
        %v2020 = vsel %vm1932, %v2018, %v2019
        %v2021 = vrot.slane %v2019, 4
        %v2022 = vrot.slane %v349, 5
        %v2023 = vsel %vm1932, %v2021, %v2022
        %v2024 = vrot.slane %v1889, 5
        %v2025 = vrot.slane %v2024, 4
        %v2026 = vrot.slane %v304, 5
        %v2027 = vsel %vm1932, %v2025, %v2026
        %v2028 = vrot.slane %v2026, 4
        %v2029 = vrot.slane %v305, 5
        %v2030 = vsel %vm1932, %v2028, %v2029
        %v2031 = vrot.slane %v2029, 4
        %v2032 = vrot.slane %v306, 5
        %v2033 = vsel %vm1932, %v2031, %v2032
        %v2034 = vrot.slane %v2032, 4
        %v2035 = vrot.slane %v350, 5
        %v2036 = vsel %vm1932, %v2034, %v2035
        %v2037 = vrot.slane %v1890, 5
        %v2038 = vrot.slane %v2037, 4
        %v2039 = vrot.slane %v308, 5
        %v2040 = vsel %vm1932, %v2038, %v2039
        %v2041 = vrot.slane %v2039, 4
        %v2042 = vrot.slane %v309, 5
        %v2043 = vsel %vm1932, %v2041, %v2042
        %v2044 = vrot.slane %v2042, 4
        %v2045 = vrot.slane %v310, 5
        %v2046 = vsel %vm1932, %v2044, %v2045
        %v2047 = vrot.slane %v2045, 4
        %v2048 = vrot.slane %v351, 5
        %v2049 = vsel %vm1932, %v2047, %v2048
        %v2050 = vrot.slane %v1891, 5
        %v2051 = vrot.slane %v2050, 4
        %v2052 = vrot.slane %v312, 5
        %v2053 = vsel %vm1932, %v2051, %v2052
        %v2054 = vrot.slane %v2052, 4
        %v2055 = vrot.slane %v313, 5
        %v2056 = vsel %vm1932, %v2054, %v2055
        %v2057 = vrot.slane %v2055, 4
        %v2058 = vrot.slane %v314, 5
        %v2059 = vsel %vm1932, %v2057, %v2058
        %v2060 = vrot.slane %v2058, 4
        %v2061 = vrot.slane %v352, 5
        %v2062 = vsel %vm1932, %v2060, %v2061
        %v2063 = vrot.slane %v1892, 5
        %v2064 = vrot.slane %v2063, 4
        %v2065 = vrot.slane %v316, 5
        %v2066 = vsel %vm1932, %v2064, %v2065
        %v2067 = vrot.slane %v2065, 4
        %v2068 = vrot.slane %v317, 5
        %v2069 = vsel %vm1932, %v2067, %v2068
        %v2070 = vrot.slane %v2068, 4
        %v2071 = vrot.slane %v318, 5
        %v2072 = vsel %vm1932, %v2070, %v2071
        %v2073 = vrot.slane %v2071, 4
        %v2074 = vrot.slane %v353, 5
        %v2075 = vsel %vm1932, %v2073, %v2074
        %v2076 = vrot.slane %v1893, 5
        %v2077 = vrot.slane %v2076, 4
        %v2078 = vrot.slane %v320, 5
        %v2079 = vsel %vm1932, %v2077, %v2078
        %v2080 = vrot.slane %v2078, 4
        %v2081 = vrot.slane %v321, 5
        %v2082 = vsel %vm1932, %v2080, %v2081
        %v2083 = vrot.slane %v2081, 4
        %v2084 = vrot.slane %v322, 5
        %v2085 = vsel %vm1932, %v2083, %v2084
        %v2086 = vrot.slane %v2084, 4
        %v2087 = vrot.slane %v354, 5
        %v2088 = vsel %vm1932, %v2086, %v2087
        %v2089 = vrot.slane %v1894, 5
        %v2090 = vrot.slane %v2089, 4
        %v2091 = vrot.slane %v324, 5
        %v2092 = vsel %vm1932, %v2090, %v2091
        %v2093 = vrot.slane %v2091, 4
        %v2094 = vrot.slane %v325, 5
        %v2095 = vsel %vm1932, %v2093, %v2094
        %v2096 = vrot.slane %v2094, 4
        %v2097 = vrot.slane %v326, 5
        %v2098 = vsel %vm1932, %v2096, %v2097
        %v2099 = vrot.slane %v2097, 4
        %v2100 = vrot.slane %v355, 5
        %v2101 = vsel %vm1932, %v2099, %v2100
        %v2102 = vrot.slane %v1895, 5
        %v2103 = vrot.slane %v2102, 4
        %v2104 = vrot.slane %v328, 5
        %v2105 = vsel %vm1932, %v2103, %v2104
        %v2106 = vrot.slane %v2104, 4
        %v2107 = vrot.slane %v329, 5
        %v2108 = vsel %vm1932, %v2106, %v2107
        %v2109 = vrot.slane %v2107, 4
        %v2110 = vrot.slane %v330, 5
        %v2111 = vsel %vm1932, %v2109, %v2110
        %v2112 = vrot.slane %v2110, 4
        %v2113 = vrot.slane %v356, 5
        %v2114 = vsel %vm1932, %v2112, %v2113
        %v2115 = vrot.slane %v1896, 5
        %v2116 = vrot.slane %v2115, 4
        %v2117 = vrot.slane %v332, 5
        %v2118 = vsel %vm1932, %v2116, %v2117
        %v2119 = vrot.slane %v2117, 4
        %v2120 = vrot.slane %v333, 5
        %v2121 = vsel %vm1932, %v2119, %v2120
        %v2122 = vrot.slane %v2120, 4
        %v2123 = vrot.slane %v334, 5
        %v2124 = vsel %vm1932, %v2122, %v2123
        %v2125 = vrot.slane %v2123, 4
        %v2126 = vrot.slane %v357, 5
        %v2127 = vsel %vm1932, %v2125, %v2126
        %v2128 = vrot.slane %v1897, 5
        %v2129 = vrot.slane %v2128, 4
        %v2130 = vrot.slane %v336, 5
        %v2131 = vsel %vm1932, %v2129, %v2130
        %v2132 = vrot.slane %v2130, 4
        %v2133 = vrot.slane %v337, 5
        %v2134 = vsel %vm1932, %v2132, %v2133
        %v2135 = vrot.slane %v2133, 4
        %v2136 = vrot.slane %v338, 5
        %v2137 = vsel %vm1932, %v2135, %v2136
        %v2138 = vrot.slane %v2136, 4
        %v2139 = vrot.slane %v358, 5
        %v2140 = vsel %vm1932, %v2138, %v2139
        %s2141 = scalar_lea.vmem %s2, 32
        %v2142 = vld [vmem:[%s2141] sm:$0xf]
        %v2143 = vld [vmem:[%s2141 + $0x4] sm:$0xf]
        %v2144 = vld [vmem:[%s2141 + $0x8] sm:$0xf]
        %v2145 = vld [vmem:[%s2141 + $0xc] sm:$0xf]
        %v2146 = vunpack.c.l.b16 %v1936
        %v2147 = vunpack.c.l.b16 %v1939
        %v2148 = vunpack.c.l.b16 %v1942
        %v2149 = vunpack.c.l.b16 %v1945
        %v2150 = vunpack.c.l.b16 %v1949
        %v2151 = vunpack.c.l.b16 %v1952
        %v2152 = vunpack.c.l.b16 %v1955
        %v2153 = vunpack.c.l.b16 %v1958
        %v2154 = vunpack.c.l.b16 %v1962
        %v2155 = vunpack.c.l.b16 %v1965
        %v2156 = vunpack.c.l.b16 %v1968
        %v2157 = vunpack.c.l.b16 %v1971
        %v2158 = vunpack.c.l.b16 %v1975
        %v2159 = vunpack.c.l.b16 %v1978
        %v2160 = vunpack.c.l.b16 %v1981
        %v2161 = vunpack.c.l.b16 %v1984
        %v2162 = vunpack.c.l.b16 %v1988
        %v2163 = vunpack.c.l.b16 %v1991
        %v2164 = vunpack.c.l.b16 %v1994
        %v2165 = vunpack.c.l.b16 %v1997
        %v2166 = vunpack.c.l.b16 %v2001
        %v2167 = vunpack.c.l.b16 %v2004
        %v2168 = vunpack.c.l.b16 %v2007
        %v2169 = vunpack.c.l.b16 %v2010
        %v2170 = vunpack.c.l.b16 %v2014
        %v2171 = vunpack.c.l.b16 %v2017
        %v2172 = vunpack.c.l.b16 %v2020
        %v2173 = vunpack.c.l.b16 %v2023
        %v2174 = vunpack.c.l.b16 %v2027
        %v2175 = vunpack.c.l.b16 %v2030
        %v2176 = vunpack.c.l.b16 %v2033
        %v2177 = vunpack.c.l.b16 %v2036
        %v2178 = vunpack.c.l.b16 %v2040
        %v2179 = vunpack.c.l.b16 %v2043
        %v2180 = vunpack.c.l.b16 %v2046
        %v2181 = vunpack.c.l.b16 %v2049
        %v2182 = vunpack.c.l.b16 %v2053
        %v2183 = vunpack.c.l.b16 %v2056
        %v2184 = vunpack.c.l.b16 %v2059
        %v2185 = vunpack.c.l.b16 %v2062
        %v2186 = vunpack.c.l.b16 %v2066
        %v2187 = vunpack.c.l.b16 %v2069
        %v2188 = vunpack.c.l.b16 %v2072
        %v2189 = vunpack.c.l.b16 %v2075
        %v2190 = vunpack.c.l.b16 %v2079
        %v2191 = vunpack.c.l.b16 %v2082
        %v2192 = vunpack.c.l.b16 %v2085
        %v2193 = vunpack.c.l.b16 %v2088
        %v2194 = vunpack.c.l.b16 %v2092
        %v2195 = vunpack.c.l.b16 %v2095
        %v2196 = vunpack.c.l.b16 %v2098
        %v2197 = vunpack.c.l.b16 %v2101
        %v2198 = vunpack.c.l.b16 %v2105
        %v2199 = vunpack.c.l.b16 %v2108
        %v2200 = vunpack.c.l.b16 %v2111
        %v2201 = vunpack.c.l.b16 %v2114
        %v2202 = vunpack.c.l.b16 %v2118
        %v2203 = vunpack.c.l.b16 %v2121
        %v2204 = vunpack.c.l.b16 %v2124
        %v2205 = vunpack.c.l.b16 %v2127
        %v2206 = vunpack.c.l.b16 %v2131
        %v2207 = vunpack.c.l.b16 %v2134
        %v2208 = vunpack.c.l.b16 %v2137
        %v2209 = vunpack.c.l.b16 %v2140
        %v2210 = vpack.c.b16 %v2147, %v2146
        %v2211 = vpack.c.b16 %v2149, %v2148
        %v2212 = vpack.c.b16 %v2151, %v2150
        %v2213 = vpack.c.b16 %v2153, %v2152
        %v2214 = vpack.c.b16 %v2155, %v2154
        %v2215 = vpack.c.b16 %v2157, %v2156
        %v2216 = vpack.c.b16 %v2159, %v2158
        %v2217 = vpack.c.b16 %v2161, %v2160
        %v2218 = vpack.c.b16 %v2163, %v2162
        %v2219 = vpack.c.b16 %v2165, %v2164
        %v2220 = vpack.c.b16 %v2167, %v2166
        %v2221 = vpack.c.b16 %v2169, %v2168
        %v2222 = vpack.c.b16 %v2171, %v2170
        %v2223 = vpack.c.b16 %v2173, %v2172
        %v2224 = vpack.c.b16 %v2175, %v2174
        %v2225 = vpack.c.b16 %v2177, %v2176
        %v2226 = vpack.c.b16 %v2179, %v2178
        %v2227 = vpack.c.b16 %v2181, %v2180
        %v2228 = vpack.c.b16 %v2183, %v2182
        %v2229 = vpack.c.b16 %v2185, %v2184
        %v2230 = vpack.c.b16 %v2187, %v2186
        %v2231 = vpack.c.b16 %v2189, %v2188
        %v2232 = vpack.c.b16 %v2191, %v2190
        %v2233 = vpack.c.b16 %v2193, %v2192
        %v2234 = vpack.c.b16 %v2195, %v2194
        %v2235 = vpack.c.b16 %v2197, %v2196
        %v2236 = vpack.c.b16 %v2199, %v2198
        %v2237 = vpack.c.b16 %v2201, %v2200
        %v2238 = vpack.c.b16 %v2203, %v2202
        %v2239 = vpack.c.b16 %v2205, %v2204
        %v2240 = vpack.c.b16 %v2207, %v2206
        %v2241 = vpack.c.b16 %v2209, %v2208
        %v2246 = vunpack.c.l.b16 %v2142
        %v2247 = vunpack.c.l.b16 %v2143
        %v2248 = vunpack.c.l.b16 %v2144
        %v2249 = vunpack.c.l.b16 %v2145
        %v2250 = vpack.c.b16 %v2247, %v2246
        %v2251 = vpack.c.b16 %v2249, %v2248
        %v2255 = vsel %vm1179, %v2210, 0
        %v2258 = vsel %vm1179, %v2211, 0
        %v2261 = vsel %vm1179, %v2212, 0
        %v2264 = vsel %vm1179, %v2213, 0
        %v2267 = vsel %vm1179, %v2214, 0
        %v2270 = vsel %vm1179, %v2215, 0
        %v2273 = vsel %vm1179, %v2216, 0
        %v2276 = vsel %vm1179, %v2217, 0
        %v2279 = vsel %vm1179, %v2218, 0
        %v2282 = vsel %vm1179, %v2219, 0
        %v2285 = vsel %vm1179, %v2220, 0
        %v2288 = vsel %vm1179, %v2221, 0
        %v2291 = vsel %vm1179, %v2222, 0
        %v2294 = vsel %vm1179, %v2223, 0
        %v2297 = vsel %vm1179, %v2224, 0
        %v2300 = vsel %vm1179, %v2225, 0
        %v2303 = vsel %vm1179, %v2226, 0
        %v2306 = vsel %vm1179, %v2227, 0
        %v2309 = vsel %vm1179, %v2228, 0
        %v2312 = vsel %vm1179, %v2229, 0
        %v2315 = vsel %vm1179, %v2230, 0
        %v2318 = vsel %vm1179, %v2231, 0
        %v2321 = vsel %vm1179, %v2232, 0
        %v2324 = vsel %vm1179, %v2233, 0
        %v2327 = vsel %vm1179, %v2234, 0
        %v2330 = vsel %vm1179, %v2235, 0
        %v2333 = vsel %vm1179, %v2236, 0
        %v2336 = vsel %vm1179, %v2237, 0
        %v2339 = vsel %vm1179, %v2238, 0
        %v2342 = vsel %vm1179, %v2239, 0
        %v2345 = vsel %vm1179, %v2240, 0
        %v2348 = vsel %vm1179, %v2241, 0
        %2350 = vmatpush.bf16.msra.mxu0 0
        %2351 = vmatpush.bf16.msra.mxu0 0
        %2352 = vmatpush.bf16.msra.mxu0 0
        %2353 = vmatpush.bf16.msra.mxu0 0
        %2354 = vmatpush.bf16.msra.mxu0 0
        %2355 = vmatpush.bf16.msra.mxu0 0
        %2356 = vmatpush.bf16.msra.mxu0 %v2251
        %2357 = vmatpush.bf16.msra.mxu0 %v2250
        %2358 = vmatmul.bf16.gmra.mxu0 %v2255
        %v2359 = vpop.f32.mrf.mxu0
        %v2360 = vadd.f32 0.0, %v2359
        %v2361 = vpop.f32.mrf.mxu0
        %v2362 = vadd.f32 0.0, %v2361
        %2363 = vmatmul.bf16.gmra.mxu0 %v2258
        %v2364 = vpop.f32.mrf.mxu0
        %v2365 = vadd.f32 0.0, %v2364
        %v2366 = vpop.f32.mrf.mxu0
        %v2367 = vadd.f32 0.0, %v2366
        %2368 = vmatmul.bf16.gmra.mxu0 %v2261
        %v2369 = vpop.f32.mrf.mxu0
        %v2370 = vadd.f32 0.0, %v2369
        %v2371 = vpop.f32.mrf.mxu0
        %v2372 = vadd.f32 0.0, %v2371
        %2373 = vmatmul.bf16.gmra.mxu0 %v2264
        %v2374 = vpop.f32.mrf.mxu0
        %v2375 = vadd.f32 0.0, %v2374
        %v2376 = vpop.f32.mrf.mxu0
        %v2377 = vadd.f32 0.0, %v2376
        %2378 = vmatmul.bf16.gmra.mxu0 %v2267
        %v2379 = vpop.f32.mrf.mxu0
        %v2380 = vadd.f32 0.0, %v2379
        %v2381 = vpop.f32.mrf.mxu0
        %v2382 = vadd.f32 0.0, %v2381
        %2383 = vmatmul.bf16.gmra.mxu0 %v2270
        %v2384 = vpop.f32.mrf.mxu0
        %v2385 = vadd.f32 0.0, %v2384
        %v2386 = vpop.f32.mrf.mxu0
        %v2387 = vadd.f32 0.0, %v2386
        %2388 = vmatmul.bf16.gmra.mxu0 %v2273
        %v2389 = vpop.f32.mrf.mxu0
        %v2390 = vadd.f32 0.0, %v2389
        %v2391 = vpop.f32.mrf.mxu0
        %v2392 = vadd.f32 0.0, %v2391
        %2393 = vmatmul.bf16.gmra.mxu0 %v2276
        %v2394 = vpop.f32.mrf.mxu0
        %v2395 = vadd.f32 0.0, %v2394
        %v2396 = vpop.f32.mrf.mxu0
        %v2397 = vadd.f32 0.0, %v2396
        %2398 = vmatmul.bf16.gmra.mxu0 %v2279
        %v2399 = vpop.f32.mrf.mxu0
        %v2400 = vadd.f32 0.0, %v2399
        %v2401 = vpop.f32.mrf.mxu0
        %v2402 = vadd.f32 0.0, %v2401
        %2403 = vmatmul.bf16.gmra.mxu0 %v2282
        %v2404 = vpop.f32.mrf.mxu0
        %v2405 = vadd.f32 0.0, %v2404
        %v2406 = vpop.f32.mrf.mxu0
        %v2407 = vadd.f32 0.0, %v2406
        %2408 = vmatmul.bf16.gmra.mxu0 %v2285
        %v2409 = vpop.f32.mrf.mxu0
        %v2410 = vadd.f32 0.0, %v2409
        %v2411 = vpop.f32.mrf.mxu0
        %v2412 = vadd.f32 0.0, %v2411
        %2413 = vmatmul.bf16.gmra.mxu0 %v2288
        %v2414 = vpop.f32.mrf.mxu0
        %v2415 = vadd.f32 0.0, %v2414
        %v2416 = vpop.f32.mrf.mxu0
        %v2417 = vadd.f32 0.0, %v2416
        %2418 = vmatmul.bf16.gmra.mxu0 %v2291
        %v2419 = vpop.f32.mrf.mxu0
        %v2420 = vadd.f32 0.0, %v2419
        %v2421 = vpop.f32.mrf.mxu0
        %v2422 = vadd.f32 0.0, %v2421
        %2423 = vmatmul.bf16.gmra.mxu0 %v2294
        %v2424 = vpop.f32.mrf.mxu0
        %v2425 = vadd.f32 0.0, %v2424
        %v2426 = vpop.f32.mrf.mxu0
        %v2427 = vadd.f32 0.0, %v2426
        %2428 = vmatmul.bf16.gmra.mxu0 %v2297
        %v2429 = vpop.f32.mrf.mxu0
        %v2430 = vadd.f32 0.0, %v2429
        %v2431 = vpop.f32.mrf.mxu0
        %v2432 = vadd.f32 0.0, %v2431
        %2433 = vmatmul.bf16.gmra.mxu0 %v2300
        %v2434 = vpop.f32.mrf.mxu0
        %v2435 = vadd.f32 0.0, %v2434
        %v2436 = vpop.f32.mrf.mxu0
        %v2437 = vadd.f32 0.0, %v2436
        %2438 = vmatmul.bf16.gmra.mxu0 %v2303
        %v2439 = vpop.f32.mrf.mxu0
        %v2440 = vadd.f32 0.0, %v2439
        %v2441 = vpop.f32.mrf.mxu0
        %v2442 = vadd.f32 0.0, %v2441
        %2443 = vmatmul.bf16.gmra.mxu0 %v2306
        %v2444 = vpop.f32.mrf.mxu0
        %v2445 = vadd.f32 0.0, %v2444
        %v2446 = vpop.f32.mrf.mxu0
        %v2447 = vadd.f32 0.0, %v2446
        %2448 = vmatmul.bf16.gmra.mxu0 %v2309
        %v2449 = vpop.f32.mrf.mxu0
        %v2450 = vadd.f32 0.0, %v2449
        %v2451 = vpop.f32.mrf.mxu0
        %v2452 = vadd.f32 0.0, %v2451
        %2453 = vmatmul.bf16.gmra.mxu0 %v2312
        %v2454 = vpop.f32.mrf.mxu0
        %v2455 = vadd.f32 0.0, %v2454
        %v2456 = vpop.f32.mrf.mxu0
        %v2457 = vadd.f32 0.0, %v2456
        %2458 = vmatmul.bf16.gmra.mxu0 %v2315
        %v2459 = vpop.f32.mrf.mxu0
        %v2460 = vadd.f32 0.0, %v2459
        %v2461 = vpop.f32.mrf.mxu0
        %v2462 = vadd.f32 0.0, %v2461
        %2463 = vmatmul.bf16.gmra.mxu0 %v2318
        %v2464 = vpop.f32.mrf.mxu0
        %v2465 = vadd.f32 0.0, %v2464
        %v2466 = vpop.f32.mrf.mxu0
        %v2467 = vadd.f32 0.0, %v2466
        %2468 = vmatmul.bf16.gmra.mxu0 %v2321
        %v2469 = vpop.f32.mrf.mxu0
        %v2470 = vadd.f32 0.0, %v2469
        %v2471 = vpop.f32.mrf.mxu0
        %v2472 = vadd.f32 0.0, %v2471
        %2473 = vmatmul.bf16.gmra.mxu0 %v2324
        %v2474 = vpop.f32.mrf.mxu0
        %v2475 = vadd.f32 0.0, %v2474
        %v2476 = vpop.f32.mrf.mxu0
        %v2477 = vadd.f32 0.0, %v2476
        %2478 = vmatmul.bf16.gmra.mxu0 %v2327
        %v2479 = vpop.f32.mrf.mxu0
        %v2480 = vadd.f32 0.0, %v2479
        %v2481 = vpop.f32.mrf.mxu0
        %v2482 = vadd.f32 0.0, %v2481
        %2483 = vmatmul.bf16.gmra.mxu0 %v2330
        %v2484 = vpop.f32.mrf.mxu0
        %v2485 = vadd.f32 0.0, %v2484
        %v2486 = vpop.f32.mrf.mxu0
        %v2487 = vadd.f32 0.0, %v2486
        %2488 = vmatmul.bf16.gmra.mxu0 %v2333
        %v2489 = vpop.f32.mrf.mxu0
        %v2490 = vadd.f32 0.0, %v2489
        %v2491 = vpop.f32.mrf.mxu0
        %v2492 = vadd.f32 0.0, %v2491
        %2493 = vmatmul.bf16.gmra.mxu0 %v2336
        %v2494 = vpop.f32.mrf.mxu0
        %v2495 = vadd.f32 0.0, %v2494
        %v2496 = vpop.f32.mrf.mxu0
        %v2497 = vadd.f32 0.0, %v2496
        %2498 = vmatmul.bf16.gmra.mxu0 %v2339
        %v2499 = vpop.f32.mrf.mxu0
        %v2500 = vadd.f32 0.0, %v2499
        %v2501 = vpop.f32.mrf.mxu0
        %v2502 = vadd.f32 0.0, %v2501
        %2503 = vmatmul.bf16.gmra.mxu0 %v2342
        %v2504 = vpop.f32.mrf.mxu0
        %v2505 = vadd.f32 0.0, %v2504
        %v2506 = vpop.f32.mrf.mxu0
        %v2507 = vadd.f32 0.0, %v2506
        %2508 = vmatmul.bf16.gmra.mxu0 %v2345
        %v2509 = vpop.f32.mrf.mxu0
        %v2510 = vadd.f32 0.0, %v2509
        %v2511 = vpop.f32.mrf.mxu0
        %v2512 = vadd.f32 0.0, %v2511
        %2513 = vmatmul.bf16.gmra.mxu0 %v2348
        %v2514 = vpop.f32.mrf.mxu0
        %v2515 = vadd.f32 0.0, %v2514
        %v2516 = vpop.f32.mrf.mxu0
        %v2517 = vadd.f32 0.0, %v2516
        %2518 = vdwg.mxu0
        %v2519 = vadd.f32 %v1723, %v2360
        %v2520 = vadd.f32 %v1725, %v2362
        %v2521 = vadd.f32 %v1728, %v2365
        %v2522 = vadd.f32 %v1730, %v2367
        %v2523 = vadd.f32 %v1733, %v2370
        %v2524 = vadd.f32 %v1735, %v2372
        %v2525 = vadd.f32 %v1738, %v2375
        %v2526 = vadd.f32 %v1740, %v2377
        %v2527 = vadd.f32 %v1743, %v2380
        %v2528 = vadd.f32 %v1745, %v2382
        %v2529 = vadd.f32 %v1748, %v2385
        %v2530 = vadd.f32 %v1750, %v2387
        %v2531 = vadd.f32 %v1753, %v2390
        %v2532 = vadd.f32 %v1755, %v2392
        %v2533 = vadd.f32 %v1758, %v2395
        %v2534 = vadd.f32 %v1760, %v2397
        %v2535 = vadd.f32 %v1763, %v2400
        %v2536 = vadd.f32 %v1765, %v2402
        %v2537 = vadd.f32 %v1768, %v2405
        %v2538 = vadd.f32 %v1770, %v2407
        %v2539 = vadd.f32 %v1773, %v2410
        %v2540 = vadd.f32 %v1775, %v2412
        %v2541 = vadd.f32 %v1778, %v2415
        %v2542 = vadd.f32 %v1780, %v2417
        %v2543 = vadd.f32 %v1783, %v2420
        %v2544 = vadd.f32 %v1785, %v2422
        %v2545 = vadd.f32 %v1788, %v2425
        %v2546 = vadd.f32 %v1790, %v2427
        %v2547 = vadd.f32 %v1793, %v2430
        %v2548 = vadd.f32 %v1795, %v2432
        %v2549 = vadd.f32 %v1798, %v2435
        %v2550 = vadd.f32 %v1800, %v2437
        %v2551 = vadd.f32 %v1803, %v2440
        %v2552 = vadd.f32 %v1805, %v2442
        %v2553 = vadd.f32 %v1808, %v2445
        %v2554 = vadd.f32 %v1810, %v2447
        %v2555 = vadd.f32 %v1813, %v2450
        %v2556 = vadd.f32 %v1815, %v2452
        %v2557 = vadd.f32 %v1818, %v2455
        %v2558 = vadd.f32 %v1820, %v2457
        %v2559 = vadd.f32 %v1823, %v2460
        %v2560 = vadd.f32 %v1825, %v2462
        %v2561 = vadd.f32 %v1828, %v2465
        %v2562 = vadd.f32 %v1830, %v2467
        %v2563 = vadd.f32 %v1833, %v2470
        %v2564 = vadd.f32 %v1835, %v2472
        %v2565 = vadd.f32 %v1838, %v2475
        %v2566 = vadd.f32 %v1840, %v2477
        %v2567 = vadd.f32 %v1843, %v2480
        %v2568 = vadd.f32 %v1845, %v2482
        %v2569 = vadd.f32 %v1848, %v2485
        %v2570 = vadd.f32 %v1850, %v2487
        %v2571 = vadd.f32 %v1853, %v2490
        %v2572 = vadd.f32 %v1855, %v2492
        %v2573 = vadd.f32 %v1858, %v2495
        %v2574 = vadd.f32 %v1860, %v2497
        %v2575 = vadd.f32 %v1863, %v2500
        %v2576 = vadd.f32 %v1865, %v2502
        %v2577 = vadd.f32 %v1868, %v2505
        %v2578 = vadd.f32 %v1870, %v2507
        %v2579 = vadd.f32 %v1873, %v2510
        %v2580 = vadd.f32 %v1875, %v2512
        %v2581 = vadd.f32 %v1878, %v2515
        %v2582 = vadd.f32 %v1880, %v2517
        %s2583 = sadd.s32 %s271, 1
        %s2584 = smul.u32 %s2583, 5
        %s2585 = smul.addr %s2584, 4
        %s2586 = scalar_lea.vmem %s1, %s2585
        %v2587 = vld [vmem:[%s2586] sm:$0xf]
        %v2588 = vld [vmem:[%s2586 + $0x4] sm:$0xf]
        %v2589 = vld [vmem:[%s2586 + $0x8] sm:$0xf]
        %v2590 = vld [vmem:[%s2586 + $0xc] sm:$0xf]
        %v2591 = vld [vmem:[%s2586 + $0x14] sm:$0xf]
        %v2592 = vld [vmem:[%s2586 + $0x18] sm:$0xf]
        %v2593 = vld [vmem:[%s2586 + $0x1c] sm:$0xf]
        %v2594 = vld [vmem:[%s2586 + $0x20] sm:$0xf]
        %v2595 = vld [vmem:[%s2586 + $0x28] sm:$0xf]
        %v2596 = vld [vmem:[%s2586 + $0x2c] sm:$0xf]
        %v2597 = vld [vmem:[%s2586 + $0x30] sm:$0xf]
        %v2598 = vld [vmem:[%s2586 + $0x34] sm:$0xf]
        %v2599 = vld [vmem:[%s2586 + $0x3c] sm:$0xf]
        %v2600 = vld [vmem:[%s2586 + $0x40] sm:$0xf]
        %v2601 = vld [vmem:[%s2586 + $0x44] sm:$0xf]
        %v2602 = vld [vmem:[%s2586 + $0x48] sm:$0xf]
        %v2603 = vld [vmem:[%s2586 + $0x50] sm:$0xf]
        %v2604 = vld [vmem:[%s2586 + $0x54] sm:$0xf]
        %v2605 = vld [vmem:[%s2586 + $0x58] sm:$0xf]
        %v2606 = vld [vmem:[%s2586 + $0x5c] sm:$0xf]
        %v2607 = vld [vmem:[%s2586 + $0x64] sm:$0xf]
        %v2608 = vld [vmem:[%s2586 + $0x68] sm:$0xf]
        %v2609 = vld [vmem:[%s2586 + $0x6c] sm:$0xf]
        %v2610 = vld [vmem:[%s2586 + $0x70] sm:$0xf]
        %v2611 = vld [vmem:[%s2586 + $0x78] sm:$0xf]
        %v2612 = vld [vmem:[%s2586 + $0x7c] sm:$0xf]
        %v2613 = vld [vmem:[%s2586 + $0x80] sm:$0xf]
        %v2614 = vld [vmem:[%s2586 + $0x84] sm:$0xf]
        %v2615 = vld [vmem:[%s2586 + $0x8c] sm:$0xf]
        %v2616 = vld [vmem:[%s2586 + $0x90] sm:$0xf]
        %v2617 = vld [vmem:[%s2586 + $0x94] sm:$0xf]
        %v2618 = vld [vmem:[%s2586 + $0x98] sm:$0xf]
        %v2619 = vld [vmem:[%s2586 + $0xa0] sm:$0xf]
        %v2620 = vld [vmem:[%s2586 + $0xa4] sm:$0xf]
        %v2621 = vld [vmem:[%s2586 + $0xa8] sm:$0xf]
        %v2622 = vld [vmem:[%s2586 + $0xac] sm:$0xf]
        %v2623 = vld [vmem:[%s2586 + $0xb4] sm:$0xf]
        %v2624 = vld [vmem:[%s2586 + $0xb8] sm:$0xf]
        %v2625 = vld [vmem:[%s2586 + $0xbc] sm:$0xf]
        %v2626 = vld [vmem:[%s2586 + $0xc0] sm:$0xf]
        %v2627 = vld [vmem:[%s2586 + $0xc8] sm:$0xf]
        %v2628 = vld [vmem:[%s2586 + $0xcc] sm:$0xf]
        %v2629 = vld [vmem:[%s2586 + $0xd0] sm:$0xf]
        %v2630 = vld [vmem:[%s2586 + $0xd4] sm:$0xf]
        %v2631 = vld [vmem:[%s2586 + $0xdc] sm:$0xf]
        %v2632 = vld [vmem:[%s2586 + $0xe0] sm:$0xf]
        %v2633 = vld [vmem:[%s2586 + $0xe4] sm:$0xf]
        %v2634 = vld [vmem:[%s2586 + $0xe8] sm:$0xf]
        %v2635 = vld [vmem:[%s2586 + $0xf0] sm:$0xf]
        %v2636 = vld [vmem:[%s2586 + $0xf4] sm:$0xf]
        %v2637 = vld [vmem:[%s2586 + $0xf8] sm:$0xf]
        %v2638 = vld [vmem:[%s2586 + $0xfc] sm:$0xf]
        %v2639 = vld [vmem:[%s2586 + $0x104] sm:$0xf]
        %v2640 = vld [vmem:[%s2586 + $0x108] sm:$0xf]
        %v2641 = vld [vmem:[%s2586 + $0x10c] sm:$0xf]
        %v2642 = vld [vmem:[%s2586 + $0x110] sm:$0xf]
        %v2643 = vld [vmem:[%s2586 + $0x118] sm:$0xf]
        %v2644 = vld [vmem:[%s2586 + $0x11c] sm:$0xf]
        %v2645 = vld [vmem:[%s2586 + $0x120] sm:$0xf]
        %v2646 = vld [vmem:[%s2586 + $0x124] sm:$0xf]
        %v2647 = vld [vmem:[%s2586 + $0x12c] sm:$0xf]
        %v2648 = vld [vmem:[%s2586 + $0x130] sm:$0xf]
        %v2649 = vld [vmem:[%s2586 + $0x134] sm:$0xf]
        %v2650 = vld [vmem:[%s2586 + $0x138] sm:$0xf]
        %s2651 = scalar_lea.vmem %s2, 48
        %v2652 = vld [vmem:[%s2651] sm:$0xf]
        %v2653 = vld [vmem:[%s2651 + $0x4] sm:$0xf]
        %v2654 = vld [vmem:[%s2651 + $0x8] sm:$0xf]
        %v2655 = vld [vmem:[%s2651 + $0xc] sm:$0xf]
        %v2720 = vunpack.c.l.b16 %v2587
        %v2721 = vunpack.c.l.b16 %v2588
        %v2722 = vunpack.c.l.b16 %v2589
        %v2723 = vunpack.c.l.b16 %v2590
        %v2724 = vunpack.c.l.b16 %v2591
        %v2725 = vunpack.c.l.b16 %v2592
        %v2726 = vunpack.c.l.b16 %v2593
        %v2727 = vunpack.c.l.b16 %v2594
        %v2728 = vunpack.c.l.b16 %v2595
        %v2729 = vunpack.c.l.b16 %v2596
        %v2730 = vunpack.c.l.b16 %v2597
        %v2731 = vunpack.c.l.b16 %v2598
        %v2732 = vunpack.c.l.b16 %v2599
        %v2733 = vunpack.c.l.b16 %v2600
        %v2734 = vunpack.c.l.b16 %v2601
        %v2735 = vunpack.c.l.b16 %v2602
        %v2736 = vunpack.c.l.b16 %v2603
        %v2737 = vunpack.c.l.b16 %v2604
        %v2738 = vunpack.c.l.b16 %v2605
        %v2739 = vunpack.c.l.b16 %v2606
        %v2740 = vunpack.c.l.b16 %v2607
        %v2741 = vunpack.c.l.b16 %v2608
        %v2742 = vunpack.c.l.b16 %v2609
        %v2743 = vunpack.c.l.b16 %v2610
        %v2744 = vunpack.c.l.b16 %v2611
        %v2745 = vunpack.c.l.b16 %v2612
        %v2746 = vunpack.c.l.b16 %v2613
        %v2747 = vunpack.c.l.b16 %v2614
        %v2748 = vunpack.c.l.b16 %v2615
        %v2749 = vunpack.c.l.b16 %v2616
        %v2750 = vunpack.c.l.b16 %v2617
        %v2751 = vunpack.c.l.b16 %v2618
        %v2752 = vunpack.c.l.b16 %v2619
        %v2753 = vunpack.c.l.b16 %v2620
        %v2754 = vunpack.c.l.b16 %v2621
        %v2755 = vunpack.c.l.b16 %v2622
        %v2756 = vunpack.c.l.b16 %v2623
        %v2757 = vunpack.c.l.b16 %v2624
        %v2758 = vunpack.c.l.b16 %v2625
        %v2759 = vunpack.c.l.b16 %v2626
        %v2760 = vunpack.c.l.b16 %v2627
        %v2761 = vunpack.c.l.b16 %v2628
        %v2762 = vunpack.c.l.b16 %v2629
        %v2763 = vunpack.c.l.b16 %v2630
        %v2764 = vunpack.c.l.b16 %v2631
        %v2765 = vunpack.c.l.b16 %v2632
        %v2766 = vunpack.c.l.b16 %v2633
        %v2767 = vunpack.c.l.b16 %v2634
        %v2768 = vunpack.c.l.b16 %v2635
        %v2769 = vunpack.c.l.b16 %v2636
        %v2770 = vunpack.c.l.b16 %v2637
        %v2771 = vunpack.c.l.b16 %v2638
        %v2772 = vunpack.c.l.b16 %v2639
        %v2773 = vunpack.c.l.b16 %v2640
        %v2774 = vunpack.c.l.b16 %v2641
        %v2775 = vunpack.c.l.b16 %v2642
        %v2776 = vunpack.c.l.b16 %v2643
        %v2777 = vunpack.c.l.b16 %v2644
        %v2778 = vunpack.c.l.b16 %v2645
        %v2779 = vunpack.c.l.b16 %v2646
        %v2780 = vunpack.c.l.b16 %v2647
        %v2781 = vunpack.c.l.b16 %v2648
        %v2782 = vunpack.c.l.b16 %v2649
        %v2783 = vunpack.c.l.b16 %v2650
        %v2784 = vpack.c.b16 %v2721, %v2720
        %v2785 = vpack.c.b16 %v2723, %v2722
        %v2786 = vpack.c.b16 %v2725, %v2724
        %v2787 = vpack.c.b16 %v2727, %v2726
        %v2788 = vpack.c.b16 %v2729, %v2728
        %v2789 = vpack.c.b16 %v2731, %v2730
        %v2790 = vpack.c.b16 %v2733, %v2732
        %v2791 = vpack.c.b16 %v2735, %v2734
        %v2792 = vpack.c.b16 %v2737, %v2736
        %v2793 = vpack.c.b16 %v2739, %v2738
        %v2794 = vpack.c.b16 %v2741, %v2740
        %v2795 = vpack.c.b16 %v2743, %v2742
        %v2796 = vpack.c.b16 %v2745, %v2744
        %v2797 = vpack.c.b16 %v2747, %v2746
        %v2798 = vpack.c.b16 %v2749, %v2748
        %v2799 = vpack.c.b16 %v2751, %v2750
        %v2800 = vpack.c.b16 %v2753, %v2752
        %v2801 = vpack.c.b16 %v2755, %v2754
        %v2802 = vpack.c.b16 %v2757, %v2756
        %v2803 = vpack.c.b16 %v2759, %v2758
        %v2804 = vpack.c.b16 %v2761, %v2760
        %v2805 = vpack.c.b16 %v2763, %v2762
        %v2806 = vpack.c.b16 %v2765, %v2764
        %v2807 = vpack.c.b16 %v2767, %v2766
        %v2808 = vpack.c.b16 %v2769, %v2768
        %v2809 = vpack.c.b16 %v2771, %v2770
        %v2810 = vpack.c.b16 %v2773, %v2772
        %v2811 = vpack.c.b16 %v2775, %v2774
        %v2812 = vpack.c.b16 %v2777, %v2776
        %v2813 = vpack.c.b16 %v2779, %v2778
        %v2814 = vpack.c.b16 %v2781, %v2780
        %v2815 = vpack.c.b16 %v2783, %v2782
        %v2820 = vunpack.c.l.b16 %v2652
        %v2821 = vunpack.c.l.b16 %v2653
        %v2822 = vunpack.c.l.b16 %v2654
        %v2823 = vunpack.c.l.b16 %v2655
        %v2824 = vpack.c.b16 %v2821, %v2820
        %v2825 = vpack.c.b16 %v2823, %v2822
        %v2829 = vsel %vm1179, %v2784, 0
        %v2832 = vsel %vm1179, %v2785, 0
        %v2835 = vsel %vm1179, %v2786, 0
        %v2838 = vsel %vm1179, %v2787, 0
        %v2841 = vsel %vm1179, %v2788, 0
        %v2844 = vsel %vm1179, %v2789, 0
        %v2847 = vsel %vm1179, %v2790, 0
        %v2850 = vsel %vm1179, %v2791, 0
        %v2853 = vsel %vm1179, %v2792, 0
        %v2856 = vsel %vm1179, %v2793, 0
        %v2859 = vsel %vm1179, %v2794, 0
        %v2862 = vsel %vm1179, %v2795, 0
        %v2865 = vsel %vm1179, %v2796, 0
        %v2868 = vsel %vm1179, %v2797, 0
        %v2871 = vsel %vm1179, %v2798, 0
        %v2874 = vsel %vm1179, %v2799, 0
        %v2877 = vsel %vm1179, %v2800, 0
        %v2880 = vsel %vm1179, %v2801, 0
        %v2883 = vsel %vm1179, %v2802, 0
        %v2886 = vsel %vm1179, %v2803, 0
        %v2889 = vsel %vm1179, %v2804, 0
        %v2892 = vsel %vm1179, %v2805, 0
        %v2895 = vsel %vm1179, %v2806, 0
        %v2898 = vsel %vm1179, %v2807, 0
        %v2901 = vsel %vm1179, %v2808, 0
        %v2904 = vsel %vm1179, %v2809, 0
        %v2907 = vsel %vm1179, %v2810, 0
        %v2910 = vsel %vm1179, %v2811, 0
        %v2913 = vsel %vm1179, %v2812, 0
        %v2916 = vsel %vm1179, %v2813, 0
        %v2919 = vsel %vm1179, %v2814, 0
        %v2922 = vsel %vm1179, %v2815, 0
        %2924 = vmatpush.bf16.msra.mxu0 0
        %2925 = vmatpush.bf16.msra.mxu0 0
        %2926 = vmatpush.bf16.msra.mxu0 0
        %2927 = vmatpush.bf16.msra.mxu0 0
        %2928 = vmatpush.bf16.msra.mxu0 0
        %2929 = vmatpush.bf16.msra.mxu0 0
        %2930 = vmatpush.bf16.msra.mxu0 %v2825
        %2931 = vmatpush.bf16.msra.mxu0 %v2824
        %2932 = vmatmul.bf16.gmra.mxu0 %v2829
        %v2933 = vpop.f32.mrf.mxu0
        %v2934 = vadd.f32 0.0, %v2933
        %v2935 = vpop.f32.mrf.mxu0
        %v2936 = vadd.f32 0.0, %v2935
        %2937 = vmatmul.bf16.gmra.mxu0 %v2832
        %v2938 = vpop.f32.mrf.mxu0
        %v2939 = vadd.f32 0.0, %v2938
        %v2940 = vpop.f32.mrf.mxu0
        %v2941 = vadd.f32 0.0, %v2940
        %2942 = vmatmul.bf16.gmra.mxu0 %v2835
        %v2943 = vpop.f32.mrf.mxu0
        %v2944 = vadd.f32 0.0, %v2943
        %v2945 = vpop.f32.mrf.mxu0
        %v2946 = vadd.f32 0.0, %v2945
        %2947 = vmatmul.bf16.gmra.mxu0 %v2838
        %v2948 = vpop.f32.mrf.mxu0
        %v2949 = vadd.f32 0.0, %v2948
        %v2950 = vpop.f32.mrf.mxu0
        %v2951 = vadd.f32 0.0, %v2950
        %2952 = vmatmul.bf16.gmra.mxu0 %v2841
        %v2953 = vpop.f32.mrf.mxu0
        %v2954 = vadd.f32 0.0, %v2953
        %v2955 = vpop.f32.mrf.mxu0
        %v2956 = vadd.f32 0.0, %v2955
        %2957 = vmatmul.bf16.gmra.mxu0 %v2844
        %v2958 = vpop.f32.mrf.mxu0
        %v2959 = vadd.f32 0.0, %v2958
        %v2960 = vpop.f32.mrf.mxu0
        %v2961 = vadd.f32 0.0, %v2960
        %2962 = vmatmul.bf16.gmra.mxu0 %v2847
        %v2963 = vpop.f32.mrf.mxu0
        %v2964 = vadd.f32 0.0, %v2963
        %v2965 = vpop.f32.mrf.mxu0
        %v2966 = vadd.f32 0.0, %v2965
        %2967 = vmatmul.bf16.gmra.mxu0 %v2850
        %v2968 = vpop.f32.mrf.mxu0
        %v2969 = vadd.f32 0.0, %v2968
        %v2970 = vpop.f32.mrf.mxu0
        %v2971 = vadd.f32 0.0, %v2970
        %2972 = vmatmul.bf16.gmra.mxu0 %v2853
        %v2973 = vpop.f32.mrf.mxu0
        %v2974 = vadd.f32 0.0, %v2973
        %v2975 = vpop.f32.mrf.mxu0
        %v2976 = vadd.f32 0.0, %v2975
        %2977 = vmatmul.bf16.gmra.mxu0 %v2856
        %v2978 = vpop.f32.mrf.mxu0
        %v2979 = vadd.f32 0.0, %v2978
        %v2980 = vpop.f32.mrf.mxu0
        %v2981 = vadd.f32 0.0, %v2980
        %2982 = vmatmul.bf16.gmra.mxu0 %v2859
        %v2983 = vpop.f32.mrf.mxu0
        %v2984 = vadd.f32 0.0, %v2983
        %v2985 = vpop.f32.mrf.mxu0
        %v2986 = vadd.f32 0.0, %v2985
        %2987 = vmatmul.bf16.gmra.mxu0 %v2862
        %v2988 = vpop.f32.mrf.mxu0
        %v2989 = vadd.f32 0.0, %v2988
        %v2990 = vpop.f32.mrf.mxu0
        %v2991 = vadd.f32 0.0, %v2990
        %2992 = vmatmul.bf16.gmra.mxu0 %v2865
        %v2993 = vpop.f32.mrf.mxu0
        %v2994 = vadd.f32 0.0, %v2993
        %v2995 = vpop.f32.mrf.mxu0
        %v2996 = vadd.f32 0.0, %v2995
        %2997 = vmatmul.bf16.gmra.mxu0 %v2868
        %v2998 = vpop.f32.mrf.mxu0
        %v2999 = vadd.f32 0.0, %v2998
        %v3000 = vpop.f32.mrf.mxu0
        %v3001 = vadd.f32 0.0, %v3000
        %3002 = vmatmul.bf16.gmra.mxu0 %v2871
        %v3003 = vpop.f32.mrf.mxu0
        %v3004 = vadd.f32 0.0, %v3003
        %v3005 = vpop.f32.mrf.mxu0
        %v3006 = vadd.f32 0.0, %v3005
        %3007 = vmatmul.bf16.gmra.mxu0 %v2874
        %v3008 = vpop.f32.mrf.mxu0
        %v3009 = vadd.f32 0.0, %v3008
        %v3010 = vpop.f32.mrf.mxu0
        %v3011 = vadd.f32 0.0, %v3010
        %3012 = vmatmul.bf16.gmra.mxu0 %v2877
        %v3013 = vpop.f32.mrf.mxu0
        %v3014 = vadd.f32 0.0, %v3013
        %v3015 = vpop.f32.mrf.mxu0
        %v3016 = vadd.f32 0.0, %v3015
        %3017 = vmatmul.bf16.gmra.mxu0 %v2880
        %v3018 = vpop.f32.mrf.mxu0
        %v3019 = vadd.f32 0.0, %v3018
        %v3020 = vpop.f32.mrf.mxu0
        %v3021 = vadd.f32 0.0, %v3020
        %3022 = vmatmul.bf16.gmra.mxu0 %v2883
        %v3023 = vpop.f32.mrf.mxu0
        %v3024 = vadd.f32 0.0, %v3023
        %v3025 = vpop.f32.mrf.mxu0
        %v3026 = vadd.f32 0.0, %v3025
        %3027 = vmatmul.bf16.gmra.mxu0 %v2886
        %v3028 = vpop.f32.mrf.mxu0
        %v3029 = vadd.f32 0.0, %v3028
        %v3030 = vpop.f32.mrf.mxu0
        %v3031 = vadd.f32 0.0, %v3030
        %3032 = vmatmul.bf16.gmra.mxu0 %v2889
        %v3033 = vpop.f32.mrf.mxu0
        %v3034 = vadd.f32 0.0, %v3033
        %v3035 = vpop.f32.mrf.mxu0
        %v3036 = vadd.f32 0.0, %v3035
        %3037 = vmatmul.bf16.gmra.mxu0 %v2892
        %v3038 = vpop.f32.mrf.mxu0
        %v3039 = vadd.f32 0.0, %v3038
        %v3040 = vpop.f32.mrf.mxu0
        %v3041 = vadd.f32 0.0, %v3040
        %3042 = vmatmul.bf16.gmra.mxu0 %v2895
        %v3043 = vpop.f32.mrf.mxu0
        %v3044 = vadd.f32 0.0, %v3043
        %v3045 = vpop.f32.mrf.mxu0
        %v3046 = vadd.f32 0.0, %v3045
        %3047 = vmatmul.bf16.gmra.mxu0 %v2898
        %v3048 = vpop.f32.mrf.mxu0
        %v3049 = vadd.f32 0.0, %v3048
        %v3050 = vpop.f32.mrf.mxu0
        %v3051 = vadd.f32 0.0, %v3050
        %3052 = vmatmul.bf16.gmra.mxu0 %v2901
        %v3053 = vpop.f32.mrf.mxu0
        %v3054 = vadd.f32 0.0, %v3053
        %v3055 = vpop.f32.mrf.mxu0
        %v3056 = vadd.f32 0.0, %v3055
        %3057 = vmatmul.bf16.gmra.mxu0 %v2904
        %v3058 = vpop.f32.mrf.mxu0
        %v3059 = vadd.f32 0.0, %v3058
        %v3060 = vpop.f32.mrf.mxu0
        %v3061 = vadd.f32 0.0, %v3060
        %3062 = vmatmul.bf16.gmra.mxu0 %v2907
        %v3063 = vpop.f32.mrf.mxu0
        %v3064 = vadd.f32 0.0, %v3063
        %v3065 = vpop.f32.mrf.mxu0
        %v3066 = vadd.f32 0.0, %v3065
        %3067 = vmatmul.bf16.gmra.mxu0 %v2910
        %v3068 = vpop.f32.mrf.mxu0
        %v3069 = vadd.f32 0.0, %v3068
        %v3070 = vpop.f32.mrf.mxu0
        %v3071 = vadd.f32 0.0, %v3070
        %3072 = vmatmul.bf16.gmra.mxu0 %v2913
        %v3073 = vpop.f32.mrf.mxu0
        %v3074 = vadd.f32 0.0, %v3073
        %v3075 = vpop.f32.mrf.mxu0
        %v3076 = vadd.f32 0.0, %v3075
        %3077 = vmatmul.bf16.gmra.mxu0 %v2916
        %v3078 = vpop.f32.mrf.mxu0
        %v3079 = vadd.f32 0.0, %v3078
        %v3080 = vpop.f32.mrf.mxu0
        %v3081 = vadd.f32 0.0, %v3080
        %3082 = vmatmul.bf16.gmra.mxu0 %v2919
        %v3083 = vpop.f32.mrf.mxu0
        %v3084 = vadd.f32 0.0, %v3083
        %v3085 = vpop.f32.mrf.mxu0
        %v3086 = vadd.f32 0.0, %v3085
        %3087 = vmatmul.bf16.gmra.mxu0 %v2922
        %v3088 = vpop.f32.mrf.mxu0
        %v3089 = vadd.f32 0.0, %v3088
        %v3090 = vpop.f32.mrf.mxu0
        %v3091 = vadd.f32 0.0, %v3090
        %3092 = vdwg.mxu0
        %v3093 = vadd.f32 %v2519, %v2934
        %v3094 = vadd.f32 %v2520, %v2936
        %v3095 = vadd.f32 %v2521, %v2939
        %v3096 = vadd.f32 %v2522, %v2941
        %v3097 = vadd.f32 %v2523, %v2944
        %v3098 = vadd.f32 %v2524, %v2946
        %v3099 = vadd.f32 %v2525, %v2949
        %v3100 = vadd.f32 %v2526, %v2951
        %v3101 = vadd.f32 %v2527, %v2954
        %v3102 = vadd.f32 %v2528, %v2956
        %v3103 = vadd.f32 %v2529, %v2959
        %v3104 = vadd.f32 %v2530, %v2961
        %v3105 = vadd.f32 %v2531, %v2964
        %v3106 = vadd.f32 %v2532, %v2966
        %v3107 = vadd.f32 %v2533, %v2969
        %v3108 = vadd.f32 %v2534, %v2971
        %v3109 = vadd.f32 %v2535, %v2974
        %v3110 = vadd.f32 %v2536, %v2976
        %v3111 = vadd.f32 %v2537, %v2979
        %v3112 = vadd.f32 %v2538, %v2981
        %v3113 = vadd.f32 %v2539, %v2984
        %v3114 = vadd.f32 %v2540, %v2986
        %v3115 = vadd.f32 %v2541, %v2989
        %v3116 = vadd.f32 %v2542, %v2991
        %v3117 = vadd.f32 %v2543, %v2994
        %v3118 = vadd.f32 %v2544, %v2996
        %v3119 = vadd.f32 %v2545, %v2999
        %v3120 = vadd.f32 %v2546, %v3001
        %v3121 = vadd.f32 %v2547, %v3004
        %v3122 = vadd.f32 %v2548, %v3006
        %v3123 = vadd.f32 %v2549, %v3009
        %v3124 = vadd.f32 %v2550, %v3011
        %v3125 = vadd.f32 %v2551, %v3014
        %v3126 = vadd.f32 %v2552, %v3016
        %v3127 = vadd.f32 %v2553, %v3019
        %v3128 = vadd.f32 %v2554, %v3021
        %v3129 = vadd.f32 %v2555, %v3024
        %v3130 = vadd.f32 %v2556, %v3026
        %v3131 = vadd.f32 %v2557, %v3029
        %v3132 = vadd.f32 %v2558, %v3031
        %v3133 = vadd.f32 %v2559, %v3034
        %v3134 = vadd.f32 %v2560, %v3036
        %v3135 = vadd.f32 %v2561, %v3039
        %v3136 = vadd.f32 %v2562, %v3041
        %v3137 = vadd.f32 %v2563, %v3044
        %v3138 = vadd.f32 %v2564, %v3046
        %v3139 = vadd.f32 %v2565, %v3049
        %v3140 = vadd.f32 %v2566, %v3051
        %v3141 = vadd.f32 %v2567, %v3054
        %v3142 = vadd.f32 %v2568, %v3056
        %v3143 = vadd.f32 %v2569, %v3059
        %v3144 = vadd.f32 %v2570, %v3061
        %v3145 = vadd.f32 %v2571, %v3064
        %v3146 = vadd.f32 %v2572, %v3066
        %v3147 = vadd.f32 %v2573, %v3069
        %v3148 = vadd.f32 %v2574, %v3071
        %v3149 = vadd.f32 %v2575, %v3074
        %v3150 = vadd.f32 %v2576, %v3076
        %v3151 = vadd.f32 %v2577, %v3079
        %v3152 = vadd.f32 %v2578, %v3081
        %v3153 = vadd.f32 %v2579, %v3084
        %v3154 = vadd.f32 %v2580, %v3086
        %v3155 = vadd.f32 %v2581, %v3089
        %v3156 = vadd.f32 %v2582, %v3091
        %v3157 = vld [vmem:[%s2586] sm:$0xf]
        %v3158 = vld [vmem:[%s2586 + $0x4] sm:$0xf]
        %v3159 = vld [vmem:[%s2586 + $0x8] sm:$0xf]
        %v3160 = vld [vmem:[%s2586 + $0xc] sm:$0xf]
        %v3161 = vld [vmem:[%s2586 + $0x10] sm:$0x1]
        %v3162 = vld [vmem:[%s2586 + $0x14] sm:$0xf]
        %v3163 = vld [vmem:[%s2586 + $0x18] sm:$0xf]
        %v3164 = vld [vmem:[%s2586 + $0x1c] sm:$0xf]
        %v3165 = vld [vmem:[%s2586 + $0x20] sm:$0xf]
        %v3166 = vld [vmem:[%s2586 + $0x24] sm:$0x1]
        %v3167 = vld [vmem:[%s2586 + $0x28] sm:$0xf]
        %v3168 = vld [vmem:[%s2586 + $0x2c] sm:$0xf]
        %v3169 = vld [vmem:[%s2586 + $0x30] sm:$0xf]
        %v3170 = vld [vmem:[%s2586 + $0x34] sm:$0xf]
        %v3171 = vld [vmem:[%s2586 + $0x38] sm:$0x1]
        %v3172 = vld [vmem:[%s2586 + $0x3c] sm:$0xf]
        %v3173 = vld [vmem:[%s2586 + $0x40] sm:$0xf]
        %v3174 = vld [vmem:[%s2586 + $0x44] sm:$0xf]
        %v3175 = vld [vmem:[%s2586 + $0x48] sm:$0xf]
        %v3176 = vld [vmem:[%s2586 + $0x4c] sm:$0x1]
        %v3177 = vld [vmem:[%s2586 + $0x50] sm:$0xf]
        %v3178 = vld [vmem:[%s2586 + $0x54] sm:$0xf]
        %v3179 = vld [vmem:[%s2586 + $0x58] sm:$0xf]
        %v3180 = vld [vmem:[%s2586 + $0x5c] sm:$0xf]
        %v3181 = vld [vmem:[%s2586 + $0x60] sm:$0x1]
        %v3182 = vld [vmem:[%s2586 + $0x64] sm:$0xf]
        %v3183 = vld [vmem:[%s2586 + $0x68] sm:$0xf]
        %v3184 = vld [vmem:[%s2586 + $0x6c] sm:$0xf]
        %v3185 = vld [vmem:[%s2586 + $0x70] sm:$0xf]
        %v3186 = vld [vmem:[%s2586 + $0x74] sm:$0x1]
        %v3187 = vld [vmem:[%s2586 + $0x78] sm:$0xf]
        %v3188 = vld [vmem:[%s2586 + $0x7c] sm:$0xf]
        %v3189 = vld [vmem:[%s2586 + $0x80] sm:$0xf]
        %v3190 = vld [vmem:[%s2586 + $0x84] sm:$0xf]
        %v3191 = vld [vmem:[%s2586 + $0x88] sm:$0x1]
        %v3192 = vld [vmem:[%s2586 + $0x8c] sm:$0xf]
        %v3193 = vld [vmem:[%s2586 + $0x90] sm:$0xf]
        %v3194 = vld [vmem:[%s2586 + $0x94] sm:$0xf]
        %v3195 = vld [vmem:[%s2586 + $0x98] sm:$0xf]
        %v3196 = vld [vmem:[%s2586 + $0x9c] sm:$0x1]
        %v3197 = vld [vmem:[%s2586 + $0xa0] sm:$0xf]
        %v3198 = vld [vmem:[%s2586 + $0xa4] sm:$0xf]
        %v3199 = vld [vmem:[%s2586 + $0xa8] sm:$0xf]
        %v3200 = vld [vmem:[%s2586 + $0xac] sm:$0xf]
        %v3201 = vld [vmem:[%s2586 + $0xb0] sm:$0x1]
        %v3202 = vld [vmem:[%s2586 + $0xb4] sm:$0xf]
        %v3203 = vld [vmem:[%s2586 + $0xb8] sm:$0xf]
        %v3204 = vld [vmem:[%s2586 + $0xbc] sm:$0xf]
        %v3205 = vld [vmem:[%s2586 + $0xc0] sm:$0xf]
        %v3206 = vld [vmem:[%s2586 + $0xc4] sm:$0x1]
        %v3207 = vld [vmem:[%s2586 + $0xc8] sm:$0xf]
        %v3208 = vld [vmem:[%s2586 + $0xcc] sm:$0xf]
        %v3209 = vld [vmem:[%s2586 + $0xd0] sm:$0xf]
        %v3210 = vld [vmem:[%s2586 + $0xd4] sm:$0xf]
        %v3211 = vld [vmem:[%s2586 + $0xd8] sm:$0x1]
        %v3212 = vld [vmem:[%s2586 + $0xdc] sm:$0xf]
        %v3213 = vld [vmem:[%s2586 + $0xe0] sm:$0xf]
        %v3214 = vld [vmem:[%s2586 + $0xe4] sm:$0xf]
        %v3215 = vld [vmem:[%s2586 + $0xe8] sm:$0xf]
        %v3216 = vld [vmem:[%s2586 + $0xec] sm:$0x1]
        %v3217 = vld [vmem:[%s2586 + $0xf0] sm:$0xf]
        %v3218 = vld [vmem:[%s2586 + $0xf4] sm:$0xf]
        %v3219 = vld [vmem:[%s2586 + $0xf8] sm:$0xf]
        %v3220 = vld [vmem:[%s2586 + $0xfc] sm:$0xf]
        %v3221 = vld [vmem:[%s2586 + $0x100] sm:$0x1]
        %v3222 = vld [vmem:[%s2586 + $0x104] sm:$0xf]
        %v3223 = vld [vmem:[%s2586 + $0x108] sm:$0xf]
        %v3224 = vld [vmem:[%s2586 + $0x10c] sm:$0xf]
        %v3225 = vld [vmem:[%s2586 + $0x110] sm:$0xf]
        %v3226 = vld [vmem:[%s2586 + $0x114] sm:$0x1]
        %v3227 = vld [vmem:[%s2586 + $0x118] sm:$0xf]
        %v3228 = vld [vmem:[%s2586 + $0x11c] sm:$0xf]
        %v3229 = vld [vmem:[%s2586 + $0x120] sm:$0xf]
        %v3230 = vld [vmem:[%s2586 + $0x124] sm:$0xf]
        %v3231 = vld [vmem:[%s2586 + $0x128] sm:$0x1]
        %v3232 = vld [vmem:[%s2586 + $0x12c] sm:$0xf]
        %v3233 = vld [vmem:[%s2586 + $0x130] sm:$0xf]
        %v3234 = vld [vmem:[%s2586 + $0x134] sm:$0xf]
        %v3235 = vld [vmem:[%s2586 + $0x138] sm:$0xf]
        %v3236 = vld [vmem:[%s2586 + $0x13c] sm:$0x1]
        %v3238 = vshrl.u32 %v3157, 16
        %v3240 = vrot.slane %v3238, 4
        %v3241 = vshll.u32 %v3157, 16
        %v3243 = vrot.slane %v3241, 5
        %v3244 = vor.u32 %v3240, %v3243
        %v3245 = vrot.slane %v3244, 4
        %v3247 = vshll.u32 %v3158, 16
        %v3249 = vrot.slane %v3247, 5
        %v3250 = vsel %vm361, %v3245, %v3249
        %v3251 = vshrl.u32 %v3158, 16
        %v3253 = vrot.slane %v3251, 4
        %v3254 = vor.u32 %v3253, %v3249
        %v3255 = vrot.slane %v3254, 4
        %v3257 = vshll.u32 %v3159, 16
        %v3259 = vrot.slane %v3257, 5
        %v3260 = vsel %vm361, %v3255, %v3259
        %v3261 = vshrl.u32 %v3159, 16
        %v3263 = vrot.slane %v3261, 4
        %v3264 = vor.u32 %v3263, %v3259
        %v3265 = vrot.slane %v3264, 4
        %v3267 = vshll.u32 %v3160, 16
        %v3269 = vrot.slane %v3267, 5
        %v3270 = vsel %vm361, %v3265, %v3269
        %v3271 = vshrl.u32 %v3160, 16
        %v3273 = vrot.slane %v3271, 4
        %v3274 = vor.u32 %v3273, %v3269
        %v3275 = vrot.slane %v3274, 4
        %v3277 = vshll.u32 %v3161, 16
        %v3279 = vrot.slane %v3277, 5
        %v3280 = vsel %vm361, %v3275, %v3279
        %v3282 = vshrl.u32 %v3162, 16
        %v3284 = vrot.slane %v3282, 4
        %v3285 = vshll.u32 %v3162, 16
        %v3287 = vrot.slane %v3285, 5
        %v3288 = vor.u32 %v3284, %v3287
        %v3289 = vrot.slane %v3288, 4
        %v3291 = vshll.u32 %v3163, 16
        %v3293 = vrot.slane %v3291, 5
        %v3294 = vsel %vm361, %v3289, %v3293
        %v3295 = vshrl.u32 %v3163, 16
        %v3297 = vrot.slane %v3295, 4
        %v3298 = vor.u32 %v3297, %v3293
        %v3299 = vrot.slane %v3298, 4
        %v3301 = vshll.u32 %v3164, 16
        %v3303 = vrot.slane %v3301, 5
        %v3304 = vsel %vm361, %v3299, %v3303
        %v3305 = vshrl.u32 %v3164, 16
        %v3307 = vrot.slane %v3305, 4
        %v3308 = vor.u32 %v3307, %v3303
        %v3309 = vrot.slane %v3308, 4
        %v3311 = vshll.u32 %v3165, 16
        %v3313 = vrot.slane %v3311, 5
        %v3314 = vsel %vm361, %v3309, %v3313
        %v3315 = vshrl.u32 %v3165, 16
        %v3317 = vrot.slane %v3315, 4
        %v3318 = vor.u32 %v3317, %v3313
        %v3319 = vrot.slane %v3318, 4
        %v3321 = vshll.u32 %v3166, 16
        %v3323 = vrot.slane %v3321, 5
        %v3324 = vsel %vm361, %v3319, %v3323
        %v3326 = vshrl.u32 %v3167, 16
        %v3328 = vrot.slane %v3326, 4
        %v3329 = vshll.u32 %v3167, 16
        %v3331 = vrot.slane %v3329, 5
        %v3332 = vor.u32 %v3328, %v3331
        %v3333 = vrot.slane %v3332, 4
        %v3335 = vshll.u32 %v3168, 16
        %v3337 = vrot.slane %v3335, 5
        %v3338 = vsel %vm361, %v3333, %v3337
        %v3339 = vshrl.u32 %v3168, 16
        %v3341 = vrot.slane %v3339, 4
        %v3342 = vor.u32 %v3341, %v3337
        %v3343 = vrot.slane %v3342, 4
        %v3345 = vshll.u32 %v3169, 16
        %v3347 = vrot.slane %v3345, 5
        %v3348 = vsel %vm361, %v3343, %v3347
        %v3349 = vshrl.u32 %v3169, 16
        %v3351 = vrot.slane %v3349, 4
        %v3352 = vor.u32 %v3351, %v3347
        %v3353 = vrot.slane %v3352, 4
        %v3355 = vshll.u32 %v3170, 16
        %v3357 = vrot.slane %v3355, 5
        %v3358 = vsel %vm361, %v3353, %v3357
        %v3359 = vshrl.u32 %v3170, 16
        %v3361 = vrot.slane %v3359, 4
        %v3362 = vor.u32 %v3361, %v3357
        %v3363 = vrot.slane %v3362, 4
        %v3365 = vshll.u32 %v3171, 16
        %v3367 = vrot.slane %v3365, 5
        %v3368 = vsel %vm361, %v3363, %v3367
        %v3370 = vshrl.u32 %v3172, 16
        %v3372 = vrot.slane %v3370, 4
        %v3373 = vshll.u32 %v3172, 16
        %v3375 = vrot.slane %v3373, 5
        %v3376 = vor.u32 %v3372, %v3375
        %v3377 = vrot.slane %v3376, 4
        %v3379 = vshll.u32 %v3173, 16
        %v3381 = vrot.slane %v3379, 5
        %v3382 = vsel %vm361, %v3377, %v3381
        %v3383 = vshrl.u32 %v3173, 16
        %v3385 = vrot.slane %v3383, 4
        %v3386 = vor.u32 %v3385, %v3381
        %v3387 = vrot.slane %v3386, 4
        %v3389 = vshll.u32 %v3174, 16
        %v3391 = vrot.slane %v3389, 5
        %v3392 = vsel %vm361, %v3387, %v3391
        %v3393 = vshrl.u32 %v3174, 16
        %v3395 = vrot.slane %v3393, 4
        %v3396 = vor.u32 %v3395, %v3391
        %v3397 = vrot.slane %v3396, 4
        %v3399 = vshll.u32 %v3175, 16
        %v3401 = vrot.slane %v3399, 5
        %v3402 = vsel %vm361, %v3397, %v3401
        %v3403 = vshrl.u32 %v3175, 16
        %v3405 = vrot.slane %v3403, 4
        %v3406 = vor.u32 %v3405, %v3401
        %v3407 = vrot.slane %v3406, 4
        %v3409 = vshll.u32 %v3176, 16
        %v3411 = vrot.slane %v3409, 5
        %v3412 = vsel %vm361, %v3407, %v3411
        %v3414 = vshrl.u32 %v3177, 16
        %v3416 = vrot.slane %v3414, 4
        %v3417 = vshll.u32 %v3177, 16
        %v3419 = vrot.slane %v3417, 5
        %v3420 = vor.u32 %v3416, %v3419
        %v3421 = vrot.slane %v3420, 4
        %v3423 = vshll.u32 %v3178, 16
        %v3425 = vrot.slane %v3423, 5
        %v3426 = vsel %vm361, %v3421, %v3425
        %v3427 = vshrl.u32 %v3178, 16
        %v3429 = vrot.slane %v3427, 4
        %v3430 = vor.u32 %v3429, %v3425
        %v3431 = vrot.slane %v3430, 4
        %v3433 = vshll.u32 %v3179, 16
        %v3435 = vrot.slane %v3433, 5
        %v3436 = vsel %vm361, %v3431, %v3435
        %v3437 = vshrl.u32 %v3179, 16
        %v3439 = vrot.slane %v3437, 4
        %v3440 = vor.u32 %v3439, %v3435
        %v3441 = vrot.slane %v3440, 4
        %v3443 = vshll.u32 %v3180, 16
        %v3445 = vrot.slane %v3443, 5
        %v3446 = vsel %vm361, %v3441, %v3445
        %v3447 = vshrl.u32 %v3180, 16
        %v3449 = vrot.slane %v3447, 4
        %v3450 = vor.u32 %v3449, %v3445
        %v3451 = vrot.slane %v3450, 4
        %v3453 = vshll.u32 %v3181, 16
        %v3455 = vrot.slane %v3453, 5
        %v3456 = vsel %vm361, %v3451, %v3455
        %v3458 = vshrl.u32 %v3182, 16
        %v3460 = vrot.slane %v3458, 4
        %v3461 = vshll.u32 %v3182, 16
        %v3463 = vrot.slane %v3461, 5
        %v3464 = vor.u32 %v3460, %v3463
        %v3465 = vrot.slane %v3464, 4
        %v3467 = vshll.u32 %v3183, 16
        %v3469 = vrot.slane %v3467, 5
        %v3470 = vsel %vm361, %v3465, %v3469
        %v3471 = vshrl.u32 %v3183, 16
        %v3473 = vrot.slane %v3471, 4
        %v3474 = vor.u32 %v3473, %v3469
        %v3475 = vrot.slane %v3474, 4
        %v3477 = vshll.u32 %v3184, 16
        %v3479 = vrot.slane %v3477, 5
        %v3480 = vsel %vm361, %v3475, %v3479
        %v3481 = vshrl.u32 %v3184, 16
        %v3483 = vrot.slane %v3481, 4
        %v3484 = vor.u32 %v3483, %v3479
        %v3485 = vrot.slane %v3484, 4
        %v3487 = vshll.u32 %v3185, 16
        %v3489 = vrot.slane %v3487, 5
        %v3490 = vsel %vm361, %v3485, %v3489
        %v3491 = vshrl.u32 %v3185, 16
        %v3493 = vrot.slane %v3491, 4
        %v3494 = vor.u32 %v3493, %v3489
        %v3495 = vrot.slane %v3494, 4
        %v3497 = vshll.u32 %v3186, 16
        %v3499 = vrot.slane %v3497, 5
        %v3500 = vsel %vm361, %v3495, %v3499
        %v3502 = vshrl.u32 %v3187, 16
        %v3504 = vrot.slane %v3502, 4
        %v3505 = vshll.u32 %v3187, 16
        %v3507 = vrot.slane %v3505, 5
        %v3508 = vor.u32 %v3504, %v3507
        %v3509 = vrot.slane %v3508, 4
        %v3511 = vshll.u32 %v3188, 16
        %v3513 = vrot.slane %v3511, 5
        %v3514 = vsel %vm361, %v3509, %v3513
        %v3515 = vshrl.u32 %v3188, 16
        %v3517 = vrot.slane %v3515, 4
        %v3518 = vor.u32 %v3517, %v3513
        %v3519 = vrot.slane %v3518, 4
        %v3521 = vshll.u32 %v3189, 16
        %v3523 = vrot.slane %v3521, 5
        %v3524 = vsel %vm361, %v3519, %v3523
        %v3525 = vshrl.u32 %v3189, 16
        %v3527 = vrot.slane %v3525, 4
        %v3528 = vor.u32 %v3527, %v3523
        %v3529 = vrot.slane %v3528, 4
        %v3531 = vshll.u32 %v3190, 16
        %v3533 = vrot.slane %v3531, 5
        %v3534 = vsel %vm361, %v3529, %v3533
        %v3535 = vshrl.u32 %v3190, 16
        %v3537 = vrot.slane %v3535, 4
        %v3538 = vor.u32 %v3537, %v3533
        %v3539 = vrot.slane %v3538, 4
        %v3541 = vshll.u32 %v3191, 16
        %v3543 = vrot.slane %v3541, 5
        %v3544 = vsel %vm361, %v3539, %v3543
        %v3546 = vshrl.u32 %v3192, 16
        %v3548 = vrot.slane %v3546, 4
        %v3549 = vshll.u32 %v3192, 16
        %v3551 = vrot.slane %v3549, 5
        %v3552 = vor.u32 %v3548, %v3551
        %v3553 = vrot.slane %v3552, 4
        %v3555 = vshll.u32 %v3193, 16
        %v3557 = vrot.slane %v3555, 5
        %v3558 = vsel %vm361, %v3553, %v3557
        %v3559 = vshrl.u32 %v3193, 16
        %v3561 = vrot.slane %v3559, 4
        %v3562 = vor.u32 %v3561, %v3557
        %v3563 = vrot.slane %v3562, 4
        %v3565 = vshll.u32 %v3194, 16
        %v3567 = vrot.slane %v3565, 5
        %v3568 = vsel %vm361, %v3563, %v3567
        %v3569 = vshrl.u32 %v3194, 16
        %v3571 = vrot.slane %v3569, 4
        %v3572 = vor.u32 %v3571, %v3567
        %v3573 = vrot.slane %v3572, 4
        %v3575 = vshll.u32 %v3195, 16
        %v3577 = vrot.slane %v3575, 5
        %v3578 = vsel %vm361, %v3573, %v3577
        %v3579 = vshrl.u32 %v3195, 16
        %v3581 = vrot.slane %v3579, 4
        %v3582 = vor.u32 %v3581, %v3577
        %v3583 = vrot.slane %v3582, 4
        %v3585 = vshll.u32 %v3196, 16
        %v3587 = vrot.slane %v3585, 5
        %v3588 = vsel %vm361, %v3583, %v3587
        %v3590 = vshrl.u32 %v3197, 16
        %v3592 = vrot.slane %v3590, 4
        %v3593 = vshll.u32 %v3197, 16
        %v3595 = vrot.slane %v3593, 5
        %v3596 = vor.u32 %v3592, %v3595
        %v3597 = vrot.slane %v3596, 4
        %v3599 = vshll.u32 %v3198, 16
        %v3601 = vrot.slane %v3599, 5
        %v3602 = vsel %vm361, %v3597, %v3601
        %v3603 = vshrl.u32 %v3198, 16
        %v3605 = vrot.slane %v3603, 4
        %v3606 = vor.u32 %v3605, %v3601
        %v3607 = vrot.slane %v3606, 4
        %v3609 = vshll.u32 %v3199, 16
        %v3611 = vrot.slane %v3609, 5
        %v3612 = vsel %vm361, %v3607, %v3611
        %v3613 = vshrl.u32 %v3199, 16
        %v3615 = vrot.slane %v3613, 4
        %v3616 = vor.u32 %v3615, %v3611
        %v3617 = vrot.slane %v3616, 4
        %v3619 = vshll.u32 %v3200, 16
        %v3621 = vrot.slane %v3619, 5
        %v3622 = vsel %vm361, %v3617, %v3621
        %v3623 = vshrl.u32 %v3200, 16
        %v3625 = vrot.slane %v3623, 4
        %v3626 = vor.u32 %v3625, %v3621
        %v3627 = vrot.slane %v3626, 4
        %v3629 = vshll.u32 %v3201, 16
        %v3631 = vrot.slane %v3629, 5
        %v3632 = vsel %vm361, %v3627, %v3631
        %v3634 = vshrl.u32 %v3202, 16
        %v3636 = vrot.slane %v3634, 4
        %v3637 = vshll.u32 %v3202, 16
        %v3639 = vrot.slane %v3637, 5
        %v3640 = vor.u32 %v3636, %v3639
        %v3641 = vrot.slane %v3640, 4
        %v3643 = vshll.u32 %v3203, 16
        %v3645 = vrot.slane %v3643, 5
        %v3646 = vsel %vm361, %v3641, %v3645
        %v3647 = vshrl.u32 %v3203, 16
        %v3649 = vrot.slane %v3647, 4
        %v3650 = vor.u32 %v3649, %v3645
        %v3651 = vrot.slane %v3650, 4
        %v3653 = vshll.u32 %v3204, 16
        %v3655 = vrot.slane %v3653, 5
        %v3656 = vsel %vm361, %v3651, %v3655
        %v3657 = vshrl.u32 %v3204, 16
        %v3659 = vrot.slane %v3657, 4
        %v3660 = vor.u32 %v3659, %v3655
        %v3661 = vrot.slane %v3660, 4
        %v3663 = vshll.u32 %v3205, 16
        %v3665 = vrot.slane %v3663, 5
        %v3666 = vsel %vm361, %v3661, %v3665
        %v3667 = vshrl.u32 %v3205, 16
        %v3669 = vrot.slane %v3667, 4
        %v3670 = vor.u32 %v3669, %v3665
        %v3671 = vrot.slane %v3670, 4
        %v3673 = vshll.u32 %v3206, 16
        %v3675 = vrot.slane %v3673, 5
        %v3676 = vsel %vm361, %v3671, %v3675
        %v3678 = vshrl.u32 %v3207, 16
        %v3680 = vrot.slane %v3678, 4
        %v3681 = vshll.u32 %v3207, 16
        %v3683 = vrot.slane %v3681, 5
        %v3684 = vor.u32 %v3680, %v3683
        %v3685 = vrot.slane %v3684, 4
        %v3687 = vshll.u32 %v3208, 16
        %v3689 = vrot.slane %v3687, 5
        %v3690 = vsel %vm361, %v3685, %v3689
        %v3691 = vshrl.u32 %v3208, 16
        %v3693 = vrot.slane %v3691, 4
        %v3694 = vor.u32 %v3693, %v3689
        %v3695 = vrot.slane %v3694, 4
        %v3697 = vshll.u32 %v3209, 16
        %v3699 = vrot.slane %v3697, 5
        %v3700 = vsel %vm361, %v3695, %v3699
        %v3701 = vshrl.u32 %v3209, 16
        %v3703 = vrot.slane %v3701, 4
        %v3704 = vor.u32 %v3703, %v3699
        %v3705 = vrot.slane %v3704, 4
        %v3707 = vshll.u32 %v3210, 16
        %v3709 = vrot.slane %v3707, 5
        %v3710 = vsel %vm361, %v3705, %v3709
        %v3711 = vshrl.u32 %v3210, 16
        %v3713 = vrot.slane %v3711, 4
        %v3714 = vor.u32 %v3713, %v3709
        %v3715 = vrot.slane %v3714, 4
        %v3717 = vshll.u32 %v3211, 16
        %v3719 = vrot.slane %v3717, 5
        %v3720 = vsel %vm361, %v3715, %v3719
        %v3722 = vshrl.u32 %v3212, 16
        %v3724 = vrot.slane %v3722, 4
        %v3725 = vshll.u32 %v3212, 16
        %v3727 = vrot.slane %v3725, 5
        %v3728 = vor.u32 %v3724, %v3727
        %v3729 = vrot.slane %v3728, 4
        %v3731 = vshll.u32 %v3213, 16
        %v3733 = vrot.slane %v3731, 5
        %v3734 = vsel %vm361, %v3729, %v3733
        %v3735 = vshrl.u32 %v3213, 16
        %v3737 = vrot.slane %v3735, 4
        %v3738 = vor.u32 %v3737, %v3733
        %v3739 = vrot.slane %v3738, 4
        %v3741 = vshll.u32 %v3214, 16
        %v3743 = vrot.slane %v3741, 5
        %v3744 = vsel %vm361, %v3739, %v3743
        %v3745 = vshrl.u32 %v3214, 16
        %v3747 = vrot.slane %v3745, 4
        %v3748 = vor.u32 %v3747, %v3743
        %v3749 = vrot.slane %v3748, 4
        %v3751 = vshll.u32 %v3215, 16
        %v3753 = vrot.slane %v3751, 5
        %v3754 = vsel %vm361, %v3749, %v3753
        %v3755 = vshrl.u32 %v3215, 16
        %v3757 = vrot.slane %v3755, 4
        %v3758 = vor.u32 %v3757, %v3753
        %v3759 = vrot.slane %v3758, 4
        %v3761 = vshll.u32 %v3216, 16
        %v3763 = vrot.slane %v3761, 5
        %v3764 = vsel %vm361, %v3759, %v3763
        %v3766 = vshrl.u32 %v3217, 16
        %v3768 = vrot.slane %v3766, 4
        %v3769 = vshll.u32 %v3217, 16
        %v3771 = vrot.slane %v3769, 5
        %v3772 = vor.u32 %v3768, %v3771
        %v3773 = vrot.slane %v3772, 4
        %v3775 = vshll.u32 %v3218, 16
        %v3777 = vrot.slane %v3775, 5
        %v3778 = vsel %vm361, %v3773, %v3777
        %v3779 = vshrl.u32 %v3218, 16
        %v3781 = vrot.slane %v3779, 4
        %v3782 = vor.u32 %v3781, %v3777
        %v3783 = vrot.slane %v3782, 4
        %v3785 = vshll.u32 %v3219, 16
        %v3787 = vrot.slane %v3785, 5
        %v3788 = vsel %vm361, %v3783, %v3787
        %v3789 = vshrl.u32 %v3219, 16
        %v3791 = vrot.slane %v3789, 4
        %v3792 = vor.u32 %v3791, %v3787
        %v3793 = vrot.slane %v3792, 4
        %v3795 = vshll.u32 %v3220, 16
        %v3797 = vrot.slane %v3795, 5
        %v3798 = vsel %vm361, %v3793, %v3797
        %v3799 = vshrl.u32 %v3220, 16
        %v3801 = vrot.slane %v3799, 4
        %v3802 = vor.u32 %v3801, %v3797
        %v3803 = vrot.slane %v3802, 4
        %v3805 = vshll.u32 %v3221, 16
        %v3807 = vrot.slane %v3805, 5
        %v3808 = vsel %vm361, %v3803, %v3807
        %v3810 = vshrl.u32 %v3222, 16
        %v3812 = vrot.slane %v3810, 4
        %v3813 = vshll.u32 %v3222, 16
        %v3815 = vrot.slane %v3813, 5
        %v3816 = vor.u32 %v3812, %v3815
        %v3817 = vrot.slane %v3816, 4
        %v3819 = vshll.u32 %v3223, 16
        %v3821 = vrot.slane %v3819, 5
        %v3822 = vsel %vm361, %v3817, %v3821
        %v3823 = vshrl.u32 %v3223, 16
        %v3825 = vrot.slane %v3823, 4
        %v3826 = vor.u32 %v3825, %v3821
        %v3827 = vrot.slane %v3826, 4
        %v3829 = vshll.u32 %v3224, 16
        %v3831 = vrot.slane %v3829, 5
        %v3832 = vsel %vm361, %v3827, %v3831
        %v3833 = vshrl.u32 %v3224, 16
        %v3835 = vrot.slane %v3833, 4
        %v3836 = vor.u32 %v3835, %v3831
        %v3837 = vrot.slane %v3836, 4
        %v3839 = vshll.u32 %v3225, 16
        %v3841 = vrot.slane %v3839, 5
        %v3842 = vsel %vm361, %v3837, %v3841
        %v3843 = vshrl.u32 %v3225, 16
        %v3845 = vrot.slane %v3843, 4
        %v3846 = vor.u32 %v3845, %v3841
        %v3847 = vrot.slane %v3846, 4
        %v3849 = vshll.u32 %v3226, 16
        %v3851 = vrot.slane %v3849, 5
        %v3852 = vsel %vm361, %v3847, %v3851
        %v3854 = vshrl.u32 %v3227, 16
        %v3856 = vrot.slane %v3854, 4
        %v3857 = vshll.u32 %v3227, 16
        %v3859 = vrot.slane %v3857, 5
        %v3860 = vor.u32 %v3856, %v3859
        %v3861 = vrot.slane %v3860, 4
        %v3863 = vshll.u32 %v3228, 16
        %v3865 = vrot.slane %v3863, 5
        %v3866 = vsel %vm361, %v3861, %v3865
        %v3867 = vshrl.u32 %v3228, 16
        %v3869 = vrot.slane %v3867, 4
        %v3870 = vor.u32 %v3869, %v3865
        %v3871 = vrot.slane %v3870, 4
        %v3873 = vshll.u32 %v3229, 16
        %v3875 = vrot.slane %v3873, 5
        %v3876 = vsel %vm361, %v3871, %v3875
        %v3877 = vshrl.u32 %v3229, 16
        %v3879 = vrot.slane %v3877, 4
        %v3880 = vor.u32 %v3879, %v3875
        %v3881 = vrot.slane %v3880, 4
        %v3883 = vshll.u32 %v3230, 16
        %v3885 = vrot.slane %v3883, 5
        %v3886 = vsel %vm361, %v3881, %v3885
        %v3887 = vshrl.u32 %v3230, 16
        %v3889 = vrot.slane %v3887, 4
        %v3890 = vor.u32 %v3889, %v3885
        %v3891 = vrot.slane %v3890, 4
        %v3893 = vshll.u32 %v3231, 16
        %v3895 = vrot.slane %v3893, 5
        %v3896 = vsel %vm361, %v3891, %v3895
        %v3898 = vshrl.u32 %v3232, 16
        %v3900 = vrot.slane %v3898, 4
        %v3901 = vshll.u32 %v3232, 16
        %v3903 = vrot.slane %v3901, 5
        %v3904 = vor.u32 %v3900, %v3903
        %v3905 = vrot.slane %v3904, 4
        %v3907 = vshll.u32 %v3233, 16
        %v3909 = vrot.slane %v3907, 5
        %v3910 = vsel %vm361, %v3905, %v3909
        %v3911 = vshrl.u32 %v3233, 16
        %v3913 = vrot.slane %v3911, 4
        %v3914 = vor.u32 %v3913, %v3909
        %v3915 = vrot.slane %v3914, 4
        %v3917 = vshll.u32 %v3234, 16
        %v3919 = vrot.slane %v3917, 5
        %v3920 = vsel %vm361, %v3915, %v3919
        %v3921 = vshrl.u32 %v3234, 16
        %v3923 = vrot.slane %v3921, 4
        %v3924 = vor.u32 %v3923, %v3919
        %v3925 = vrot.slane %v3924, 4
        %v3927 = vshll.u32 %v3235, 16
        %v3929 = vrot.slane %v3927, 5
        %v3930 = vsel %vm361, %v3925, %v3929
        %v3931 = vshrl.u32 %v3235, 16
        %v3933 = vrot.slane %v3931, 4
        %v3934 = vor.u32 %v3933, %v3929
        %v3935 = vrot.slane %v3934, 4
        %v3937 = vshll.u32 %v3236, 16
        %v3939 = vrot.slane %v3937, 5
        %v3940 = vsel %vm361, %v3935, %v3939
        %s3941 = scalar_lea.vmem %s2, 64
        %v3942 = vld [vmem:[%s3941] sm:$0xf]
        %v3943 = vld [vmem:[%s3941 + $0x4] sm:$0xf]
        %v3944 = vld [vmem:[%s3941 + $0x8] sm:$0xf]
        %v3945 = vld [vmem:[%s3941 + $0xc] sm:$0xf]
        %v3946 = vunpack.c.l.b16 %v3250
        %v3947 = vunpack.c.l.b16 %v3260
        %v3948 = vunpack.c.l.b16 %v3270
        %v3949 = vunpack.c.l.b16 %v3280
        %v3950 = vunpack.c.l.b16 %v3294
        %v3951 = vunpack.c.l.b16 %v3304
        %v3952 = vunpack.c.l.b16 %v3314
        %v3953 = vunpack.c.l.b16 %v3324
        %v3954 = vunpack.c.l.b16 %v3338
        %v3955 = vunpack.c.l.b16 %v3348
        %v3956 = vunpack.c.l.b16 %v3358
        %v3957 = vunpack.c.l.b16 %v3368
        %v3958 = vunpack.c.l.b16 %v3382
        %v3959 = vunpack.c.l.b16 %v3392
        %v3960 = vunpack.c.l.b16 %v3402
        %v3961 = vunpack.c.l.b16 %v3412
        %v3962 = vunpack.c.l.b16 %v3426
        %v3963 = vunpack.c.l.b16 %v3436
        %v3964 = vunpack.c.l.b16 %v3446
        %v3965 = vunpack.c.l.b16 %v3456
        %v3966 = vunpack.c.l.b16 %v3470
        %v3967 = vunpack.c.l.b16 %v3480
        %v3968 = vunpack.c.l.b16 %v3490
        %v3969 = vunpack.c.l.b16 %v3500
        %v3970 = vunpack.c.l.b16 %v3514
        %v3971 = vunpack.c.l.b16 %v3524
        %v3972 = vunpack.c.l.b16 %v3534
        %v3973 = vunpack.c.l.b16 %v3544
        %v3974 = vunpack.c.l.b16 %v3558
        %v3975 = vunpack.c.l.b16 %v3568
        %v3976 = vunpack.c.l.b16 %v3578
        %v3977 = vunpack.c.l.b16 %v3588
        %v3978 = vunpack.c.l.b16 %v3602
        %v3979 = vunpack.c.l.b16 %v3612
        %v3980 = vunpack.c.l.b16 %v3622
        %v3981 = vunpack.c.l.b16 %v3632
        %v3982 = vunpack.c.l.b16 %v3646
        %v3983 = vunpack.c.l.b16 %v3656
        %v3984 = vunpack.c.l.b16 %v3666
        %v3985 = vunpack.c.l.b16 %v3676
        %v3986 = vunpack.c.l.b16 %v3690
        %v3987 = vunpack.c.l.b16 %v3700
        %v3988 = vunpack.c.l.b16 %v3710
        %v3989 = vunpack.c.l.b16 %v3720
        %v3990 = vunpack.c.l.b16 %v3734
        %v3991 = vunpack.c.l.b16 %v3744
        %v3992 = vunpack.c.l.b16 %v3754
        %v3993 = vunpack.c.l.b16 %v3764
        %v3994 = vunpack.c.l.b16 %v3778
        %v3995 = vunpack.c.l.b16 %v3788
        %v3996 = vunpack.c.l.b16 %v3798
        %v3997 = vunpack.c.l.b16 %v3808
        %v3998 = vunpack.c.l.b16 %v3822
        %v3999 = vunpack.c.l.b16 %v3832
        %v4000 = vunpack.c.l.b16 %v3842
        %v4001 = vunpack.c.l.b16 %v3852
        %v4002 = vunpack.c.l.b16 %v3866
        %v4003 = vunpack.c.l.b16 %v3876
        %v4004 = vunpack.c.l.b16 %v3886
        %v4005 = vunpack.c.l.b16 %v3896
        %v4006 = vunpack.c.l.b16 %v3910
        %v4007 = vunpack.c.l.b16 %v3920
        %v4008 = vunpack.c.l.b16 %v3930
        %v4009 = vunpack.c.l.b16 %v3940
        %v4010 = vpack.c.b16 %v3947, %v3946
        %v4011 = vpack.c.b16 %v3949, %v3948
        %v4012 = vpack.c.b16 %v3951, %v3950
        %v4013 = vpack.c.b16 %v3953, %v3952
        %v4014 = vpack.c.b16 %v3955, %v3954
        %v4015 = vpack.c.b16 %v3957, %v3956
        %v4016 = vpack.c.b16 %v3959, %v3958
        %v4017 = vpack.c.b16 %v3961, %v3960
        %v4018 = vpack.c.b16 %v3963, %v3962
        %v4019 = vpack.c.b16 %v3965, %v3964
        %v4020 = vpack.c.b16 %v3967, %v3966
        %v4021 = vpack.c.b16 %v3969, %v3968
        %v4022 = vpack.c.b16 %v3971, %v3970
        %v4023 = vpack.c.b16 %v3973, %v3972
        %v4024 = vpack.c.b16 %v3975, %v3974
        %v4025 = vpack.c.b16 %v3977, %v3976
        %v4026 = vpack.c.b16 %v3979, %v3978
        %v4027 = vpack.c.b16 %v3981, %v3980
        %v4028 = vpack.c.b16 %v3983, %v3982
        %v4029 = vpack.c.b16 %v3985, %v3984
        %v4030 = vpack.c.b16 %v3987, %v3986
        %v4031 = vpack.c.b16 %v3989, %v3988
        %v4032 = vpack.c.b16 %v3991, %v3990
        %v4033 = vpack.c.b16 %v3993, %v3992
        %v4034 = vpack.c.b16 %v3995, %v3994
        %v4035 = vpack.c.b16 %v3997, %v3996
        %v4036 = vpack.c.b16 %v3999, %v3998
        %v4037 = vpack.c.b16 %v4001, %v4000
        %v4038 = vpack.c.b16 %v4003, %v4002
        %v4039 = vpack.c.b16 %v4005, %v4004
        %v4040 = vpack.c.b16 %v4007, %v4006
        %v4041 = vpack.c.b16 %v4009, %v4008
        %v4046 = vunpack.c.l.b16 %v3942
        %v4047 = vunpack.c.l.b16 %v3943
        %v4048 = vunpack.c.l.b16 %v3944
        %v4049 = vunpack.c.l.b16 %v3945
        %v4050 = vpack.c.b16 %v4047, %v4046
        %v4051 = vpack.c.b16 %v4049, %v4048
        %v4055 = vsel %vm1179, %v4010, 0
        %v4058 = vsel %vm1179, %v4011, 0
        %v4061 = vsel %vm1179, %v4012, 0
        %v4064 = vsel %vm1179, %v4013, 0
        %v4067 = vsel %vm1179, %v4014, 0
        %v4070 = vsel %vm1179, %v4015, 0
        %v4073 = vsel %vm1179, %v4016, 0
        %v4076 = vsel %vm1179, %v4017, 0
        %v4079 = vsel %vm1179, %v4018, 0
        %v4082 = vsel %vm1179, %v4019, 0
        %v4085 = vsel %vm1179, %v4020, 0
        %v4088 = vsel %vm1179, %v4021, 0
        %v4091 = vsel %vm1179, %v4022, 0
        %v4094 = vsel %vm1179, %v4023, 0
        %v4097 = vsel %vm1179, %v4024, 0
        %v4100 = vsel %vm1179, %v4025, 0
        %v4103 = vsel %vm1179, %v4026, 0
        %v4106 = vsel %vm1179, %v4027, 0
        %v4109 = vsel %vm1179, %v4028, 0
        %v4112 = vsel %vm1179, %v4029, 0
        %v4115 = vsel %vm1179, %v4030, 0
        %v4118 = vsel %vm1179, %v4031, 0
        %v4121 = vsel %vm1179, %v4032, 0
        %v4124 = vsel %vm1179, %v4033, 0
        %v4127 = vsel %vm1179, %v4034, 0
        %v4130 = vsel %vm1179, %v4035, 0
        %v4133 = vsel %vm1179, %v4036, 0
        %v4136 = vsel %vm1179, %v4037, 0
        %v4139 = vsel %vm1179, %v4038, 0
        %v4142 = vsel %vm1179, %v4039, 0
        %v4145 = vsel %vm1179, %v4040, 0
        %v4148 = vsel %vm1179, %v4041, 0
        %4150 = vmatpush.bf16.msra.mxu0 0
        %4151 = vmatpush.bf16.msra.mxu0 0
        %4152 = vmatpush.bf16.msra.mxu0 0
        %4153 = vmatpush.bf16.msra.mxu0 0
        %4154 = vmatpush.bf16.msra.mxu0 0
        %4155 = vmatpush.bf16.msra.mxu0 0
        %4156 = vmatpush.bf16.msra.mxu0 %v4051
        %4157 = vmatpush.bf16.msra.mxu0 %v4050
        %4158 = vmatmul.bf16.gmra.mxu0 %v4055
        %v4159 = vpop.f32.mrf.mxu0
        %v4160 = vadd.f32 0.0, %v4159
        %v4161 = vpop.f32.mrf.mxu0
        %v4162 = vadd.f32 0.0, %v4161
        %4163 = vmatmul.bf16.gmra.mxu0 %v4058
        %v4164 = vpop.f32.mrf.mxu0
        %v4165 = vadd.f32 0.0, %v4164
        %v4166 = vpop.f32.mrf.mxu0
        %v4167 = vadd.f32 0.0, %v4166
        %4168 = vmatmul.bf16.gmra.mxu0 %v4061
        %v4169 = vpop.f32.mrf.mxu0
        %v4170 = vadd.f32 0.0, %v4169
        %v4171 = vpop.f32.mrf.mxu0
        %v4172 = vadd.f32 0.0, %v4171
        %4173 = vmatmul.bf16.gmra.mxu0 %v4064
        %v4174 = vpop.f32.mrf.mxu0
        %v4175 = vadd.f32 0.0, %v4174
        %v4176 = vpop.f32.mrf.mxu0
        %v4177 = vadd.f32 0.0, %v4176
        %4178 = vmatmul.bf16.gmra.mxu0 %v4067
        %v4179 = vpop.f32.mrf.mxu0
        %v4180 = vadd.f32 0.0, %v4179
        %v4181 = vpop.f32.mrf.mxu0
        %v4182 = vadd.f32 0.0, %v4181
        %4183 = vmatmul.bf16.gmra.mxu0 %v4070
        %v4184 = vpop.f32.mrf.mxu0
        %v4185 = vadd.f32 0.0, %v4184
        %v4186 = vpop.f32.mrf.mxu0
        %v4187 = vadd.f32 0.0, %v4186
        %4188 = vmatmul.bf16.gmra.mxu0 %v4073
        %v4189 = vpop.f32.mrf.mxu0
        %v4190 = vadd.f32 0.0, %v4189
        %v4191 = vpop.f32.mrf.mxu0
        %v4192 = vadd.f32 0.0, %v4191
        %4193 = vmatmul.bf16.gmra.mxu0 %v4076
        %v4194 = vpop.f32.mrf.mxu0
        %v4195 = vadd.f32 0.0, %v4194
        %v4196 = vpop.f32.mrf.mxu0
        %v4197 = vadd.f32 0.0, %v4196
        %4198 = vmatmul.bf16.gmra.mxu0 %v4079
        %v4199 = vpop.f32.mrf.mxu0
        %v4200 = vadd.f32 0.0, %v4199
        %v4201 = vpop.f32.mrf.mxu0
        %v4202 = vadd.f32 0.0, %v4201
        %4203 = vmatmul.bf16.gmra.mxu0 %v4082
        %v4204 = vpop.f32.mrf.mxu0
        %v4205 = vadd.f32 0.0, %v4204
        %v4206 = vpop.f32.mrf.mxu0
        %v4207 = vadd.f32 0.0, %v4206
        %4208 = vmatmul.bf16.gmra.mxu0 %v4085
        %v4209 = vpop.f32.mrf.mxu0
        %v4210 = vadd.f32 0.0, %v4209
        %v4211 = vpop.f32.mrf.mxu0
        %v4212 = vadd.f32 0.0, %v4211
        %4213 = vmatmul.bf16.gmra.mxu0 %v4088
        %v4214 = vpop.f32.mrf.mxu0
        %v4215 = vadd.f32 0.0, %v4214
        %v4216 = vpop.f32.mrf.mxu0
        %v4217 = vadd.f32 0.0, %v4216
        %4218 = vmatmul.bf16.gmra.mxu0 %v4091
        %v4219 = vpop.f32.mrf.mxu0
        %v4220 = vadd.f32 0.0, %v4219
        %v4221 = vpop.f32.mrf.mxu0
        %v4222 = vadd.f32 0.0, %v4221
        %4223 = vmatmul.bf16.gmra.mxu0 %v4094
        %v4224 = vpop.f32.mrf.mxu0
        %v4225 = vadd.f32 0.0, %v4224
        %v4226 = vpop.f32.mrf.mxu0
        %v4227 = vadd.f32 0.0, %v4226
        %4228 = vmatmul.bf16.gmra.mxu0 %v4097
        %v4229 = vpop.f32.mrf.mxu0
        %v4230 = vadd.f32 0.0, %v4229
        %v4231 = vpop.f32.mrf.mxu0
        %v4232 = vadd.f32 0.0, %v4231
        %4233 = vmatmul.bf16.gmra.mxu0 %v4100
        %v4234 = vpop.f32.mrf.mxu0
        %v4235 = vadd.f32 0.0, %v4234
        %v4236 = vpop.f32.mrf.mxu0
        %v4237 = vadd.f32 0.0, %v4236
        %4238 = vmatmul.bf16.gmra.mxu0 %v4103
        %v4239 = vpop.f32.mrf.mxu0
        %v4240 = vadd.f32 0.0, %v4239
        %v4241 = vpop.f32.mrf.mxu0
        %v4242 = vadd.f32 0.0, %v4241
        %4243 = vmatmul.bf16.gmra.mxu0 %v4106
        %v4244 = vpop.f32.mrf.mxu0
        %v4245 = vadd.f32 0.0, %v4244
        %v4246 = vpop.f32.mrf.mxu0
        %v4247 = vadd.f32 0.0, %v4246
        %4248 = vmatmul.bf16.gmra.mxu0 %v4109
        %v4249 = vpop.f32.mrf.mxu0
        %v4250 = vadd.f32 0.0, %v4249
        %v4251 = vpop.f32.mrf.mxu0
        %v4252 = vadd.f32 0.0, %v4251
        %4253 = vmatmul.bf16.gmra.mxu0 %v4112
        %v4254 = vpop.f32.mrf.mxu0
        %v4255 = vadd.f32 0.0, %v4254
        %v4256 = vpop.f32.mrf.mxu0
        %v4257 = vadd.f32 0.0, %v4256
        %4258 = vmatmul.bf16.gmra.mxu0 %v4115
        %v4259 = vpop.f32.mrf.mxu0
        %v4260 = vadd.f32 0.0, %v4259
        %v4261 = vpop.f32.mrf.mxu0
        %v4262 = vadd.f32 0.0, %v4261
        %4263 = vmatmul.bf16.gmra.mxu0 %v4118
        %v4264 = vpop.f32.mrf.mxu0
        %v4265 = vadd.f32 0.0, %v4264
        %v4266 = vpop.f32.mrf.mxu0
        %v4267 = vadd.f32 0.0, %v4266
        %4268 = vmatmul.bf16.gmra.mxu0 %v4121
        %v4269 = vpop.f32.mrf.mxu0
        %v4270 = vadd.f32 0.0, %v4269
        %v4271 = vpop.f32.mrf.mxu0
        %v4272 = vadd.f32 0.0, %v4271
        %4273 = vmatmul.bf16.gmra.mxu0 %v4124
        %v4274 = vpop.f32.mrf.mxu0
        %v4275 = vadd.f32 0.0, %v4274
        %v4276 = vpop.f32.mrf.mxu0
        %v4277 = vadd.f32 0.0, %v4276
        %4278 = vmatmul.bf16.gmra.mxu0 %v4127
        %v4279 = vpop.f32.mrf.mxu0
        %v4280 = vadd.f32 0.0, %v4279
        %v4281 = vpop.f32.mrf.mxu0
        %v4282 = vadd.f32 0.0, %v4281
        %4283 = vmatmul.bf16.gmra.mxu0 %v4130
        %v4284 = vpop.f32.mrf.mxu0
        %v4285 = vadd.f32 0.0, %v4284
        %v4286 = vpop.f32.mrf.mxu0
        %v4287 = vadd.f32 0.0, %v4286
        %4288 = vmatmul.bf16.gmra.mxu0 %v4133
        %v4289 = vpop.f32.mrf.mxu0
        %v4290 = vadd.f32 0.0, %v4289
        %v4291 = vpop.f32.mrf.mxu0
        %v4292 = vadd.f32 0.0, %v4291
        %4293 = vmatmul.bf16.gmra.mxu0 %v4136
        %v4294 = vpop.f32.mrf.mxu0
        %v4295 = vadd.f32 0.0, %v4294
        %v4296 = vpop.f32.mrf.mxu0
        %v4297 = vadd.f32 0.0, %v4296
        %4298 = vmatmul.bf16.gmra.mxu0 %v4139
        %v4299 = vpop.f32.mrf.mxu0
        %v4300 = vadd.f32 0.0, %v4299
        %v4301 = vpop.f32.mrf.mxu0
        %v4302 = vadd.f32 0.0, %v4301
        %4303 = vmatmul.bf16.gmra.mxu0 %v4142
        %v4304 = vpop.f32.mrf.mxu0
        %v4305 = vadd.f32 0.0, %v4304
        %v4306 = vpop.f32.mrf.mxu0
        %v4307 = vadd.f32 0.0, %v4306
        %4308 = vmatmul.bf16.gmra.mxu0 %v4145
        %v4309 = vpop.f32.mrf.mxu0
        %v4310 = vadd.f32 0.0, %v4309
        %v4311 = vpop.f32.mrf.mxu0
        %v4312 = vadd.f32 0.0, %v4311
        %4313 = vmatmul.bf16.gmra.mxu0 %v4148
        %v4314 = vpop.f32.mrf.mxu0
        %v4315 = vadd.f32 0.0, %v4314
        %v4316 = vpop.f32.mrf.mxu0
        %v4317 = vadd.f32 0.0, %v4316
        %4318 = vdwg.mxu0
        %v4319 = vadd.f32 %v3093, %v4160
        %v4320 = vadd.f32 %v3094, %v4162
        %v4321 = vadd.f32 %v3095, %v4165
        %v4322 = vadd.f32 %v3096, %v4167
        %v4323 = vadd.f32 %v3097, %v4170
        %v4324 = vadd.f32 %v3098, %v4172
        %v4325 = vadd.f32 %v3099, %v4175
        %v4326 = vadd.f32 %v3100, %v4177
        %v4327 = vadd.f32 %v3101, %v4180
        %v4328 = vadd.f32 %v3102, %v4182
        %v4329 = vadd.f32 %v3103, %v4185
        %v4330 = vadd.f32 %v3104, %v4187
        %v4331 = vadd.f32 %v3105, %v4190
        %v4332 = vadd.f32 %v3106, %v4192
        %v4333 = vadd.f32 %v3107, %v4195
        %v4334 = vadd.f32 %v3108, %v4197
        %v4335 = vadd.f32 %v3109, %v4200
        %v4336 = vadd.f32 %v3110, %v4202
        %v4337 = vadd.f32 %v3111, %v4205
        %v4338 = vadd.f32 %v3112, %v4207
        %v4339 = vadd.f32 %v3113, %v4210
        %v4340 = vadd.f32 %v3114, %v4212
        %v4341 = vadd.f32 %v3115, %v4215
        %v4342 = vadd.f32 %v3116, %v4217
        %v4343 = vadd.f32 %v3117, %v4220
        %v4344 = vadd.f32 %v3118, %v4222
        %v4345 = vadd.f32 %v3119, %v4225
        %v4346 = vadd.f32 %v3120, %v4227
        %v4347 = vadd.f32 %v3121, %v4230
        %v4348 = vadd.f32 %v3122, %v4232
        %v4349 = vadd.f32 %v3123, %v4235
        %v4350 = vadd.f32 %v3124, %v4237
        %v4351 = vadd.f32 %v3125, %v4240
        %v4352 = vadd.f32 %v3126, %v4242
        %v4353 = vadd.f32 %v3127, %v4245
        %v4354 = vadd.f32 %v3128, %v4247
        %v4355 = vadd.f32 %v3129, %v4250
        %v4356 = vadd.f32 %v3130, %v4252
        %v4357 = vadd.f32 %v3131, %v4255
        %v4358 = vadd.f32 %v3132, %v4257
        %v4359 = vadd.f32 %v3133, %v4260
        %v4360 = vadd.f32 %v3134, %v4262
        %v4361 = vadd.f32 %v3135, %v4265
        %v4362 = vadd.f32 %v3136, %v4267
        %v4363 = vadd.f32 %v3137, %v4270
        %v4364 = vadd.f32 %v3138, %v4272
        %v4365 = vadd.f32 %v3139, %v4275
        %v4366 = vadd.f32 %v3140, %v4277
        %v4367 = vadd.f32 %v3141, %v4280
        %v4368 = vadd.f32 %v3142, %v4282
        %v4369 = vadd.f32 %v3143, %v4285
        %v4370 = vadd.f32 %v3144, %v4287
        %v4371 = vadd.f32 %v3145, %v4290
        %v4372 = vadd.f32 %v3146, %v4292
        %v4373 = vadd.f32 %v3147, %v4295
        %v4374 = vadd.f32 %v3148, %v4297
        %v4375 = vadd.f32 %v3149, %v4300
        %v4376 = vadd.f32 %v3150, %v4302
        %v4377 = vadd.f32 %v3151, %v4305
        %v4378 = vadd.f32 %v3152, %v4307
        %v4379 = vadd.f32 %v3153, %v4310
        %v4380 = vadd.f32 %v3154, %v4312
        %v4381 = vadd.f32 %v3155, %v4315
        %v4382 = vadd.f32 %v3156, %v4317
        %v4383 = vld [vmem:[%s2586] sm:$0xe]
        %v4384 = vld [vmem:[%s2586 + $0x14] sm:$0xe]
        %v4385 = vld [vmem:[%s2586 + $0x28] sm:$0xe]
        %v4386 = vld [vmem:[%s2586 + $0x3c] sm:$0xe]
        %v4387 = vld [vmem:[%s2586 + $0x50] sm:$0xe]
        %v4388 = vld [vmem:[%s2586 + $0x64] sm:$0xe]
        %v4389 = vld [vmem:[%s2586 + $0x78] sm:$0xe]
        %v4390 = vld [vmem:[%s2586 + $0x8c] sm:$0xe]
        %v4391 = vld [vmem:[%s2586 + $0xa0] sm:$0xe]
        %v4392 = vld [vmem:[%s2586 + $0xb4] sm:$0xe]
        %v4393 = vld [vmem:[%s2586 + $0xc8] sm:$0xe]
        %v4394 = vld [vmem:[%s2586 + $0xdc] sm:$0xe]
        %v4395 = vld [vmem:[%s2586 + $0xf0] sm:$0xe]
        %v4396 = vld [vmem:[%s2586 + $0x104] sm:$0xe]
        %v4397 = vld [vmem:[%s2586 + $0x118] sm:$0xe]
        %v4398 = vld [vmem:[%s2586 + $0x12c] sm:$0xe]
        %v4479 = vrot.slane %v4383, 5
        %v4480 = vrot.slane %v4479, 4
        %v4481 = vrot.slane %v3158, 5
        %v4482 = vsel %vm1932, %v4480, %v4481
        %v4483 = vrot.slane %v4481, 4
        %v4484 = vrot.slane %v3159, 5
        %v4485 = vsel %vm1932, %v4483, %v4484
        %v4486 = vrot.slane %v4484, 4
        %v4487 = vrot.slane %v3160, 5
        %v4488 = vsel %vm1932, %v4486, %v4487
        %v4489 = vrot.slane %v4487, 4
        %v4490 = vrot.slane %v3161, 5
        %v4491 = vsel %vm1932, %v4489, %v4490
        %v4492 = vrot.slane %v4384, 5
        %v4493 = vrot.slane %v4492, 4
        %v4494 = vrot.slane %v3163, 5
        %v4495 = vsel %vm1932, %v4493, %v4494
        %v4496 = vrot.slane %v4494, 4
        %v4497 = vrot.slane %v3164, 5
        %v4498 = vsel %vm1932, %v4496, %v4497
        %v4499 = vrot.slane %v4497, 4
        %v4500 = vrot.slane %v3165, 5
        %v4501 = vsel %vm1932, %v4499, %v4500
        %v4502 = vrot.slane %v4500, 4
        %v4503 = vrot.slane %v3166, 5
        %v4504 = vsel %vm1932, %v4502, %v4503
        %v4505 = vrot.slane %v4385, 5
        %v4506 = vrot.slane %v4505, 4
        %v4507 = vrot.slane %v3168, 5
        %v4508 = vsel %vm1932, %v4506, %v4507
        %v4509 = vrot.slane %v4507, 4
        %v4510 = vrot.slane %v3169, 5
        %v4511 = vsel %vm1932, %v4509, %v4510
        %v4512 = vrot.slane %v4510, 4
        %v4513 = vrot.slane %v3170, 5
        %v4514 = vsel %vm1932, %v4512, %v4513
        %v4515 = vrot.slane %v4513, 4
        %v4516 = vrot.slane %v3171, 5
        %v4517 = vsel %vm1932, %v4515, %v4516
        %v4518 = vrot.slane %v4386, 5
        %v4519 = vrot.slane %v4518, 4
        %v4520 = vrot.slane %v3173, 5
        %v4521 = vsel %vm1932, %v4519, %v4520
        %v4522 = vrot.slane %v4520, 4
        %v4523 = vrot.slane %v3174, 5
        %v4524 = vsel %vm1932, %v4522, %v4523
        %v4525 = vrot.slane %v4523, 4
        %v4526 = vrot.slane %v3175, 5
        %v4527 = vsel %vm1932, %v4525, %v4526
        %v4528 = vrot.slane %v4526, 4
        %v4529 = vrot.slane %v3176, 5
        %v4530 = vsel %vm1932, %v4528, %v4529
        %v4531 = vrot.slane %v4387, 5
        %v4532 = vrot.slane %v4531, 4
        %v4533 = vrot.slane %v3178, 5
        %v4534 = vsel %vm1932, %v4532, %v4533
        %v4535 = vrot.slane %v4533, 4
        %v4536 = vrot.slane %v3179, 5
        %v4537 = vsel %vm1932, %v4535, %v4536
        %v4538 = vrot.slane %v4536, 4
        %v4539 = vrot.slane %v3180, 5
        %v4540 = vsel %vm1932, %v4538, %v4539
        %v4541 = vrot.slane %v4539, 4
        %v4542 = vrot.slane %v3181, 5
        %v4543 = vsel %vm1932, %v4541, %v4542
        %v4544 = vrot.slane %v4388, 5
        %v4545 = vrot.slane %v4544, 4
        %v4546 = vrot.slane %v3183, 5
        %v4547 = vsel %vm1932, %v4545, %v4546
        %v4548 = vrot.slane %v4546, 4
        %v4549 = vrot.slane %v3184, 5
        %v4550 = vsel %vm1932, %v4548, %v4549
        %v4551 = vrot.slane %v4549, 4
        %v4552 = vrot.slane %v3185, 5
        %v4553 = vsel %vm1932, %v4551, %v4552
        %v4554 = vrot.slane %v4552, 4
        %v4555 = vrot.slane %v3186, 5
        %v4556 = vsel %vm1932, %v4554, %v4555
        %v4557 = vrot.slane %v4389, 5
        %v4558 = vrot.slane %v4557, 4
        %v4559 = vrot.slane %v3188, 5
        %v4560 = vsel %vm1932, %v4558, %v4559
        %v4561 = vrot.slane %v4559, 4
        %v4562 = vrot.slane %v3189, 5
        %v4563 = vsel %vm1932, %v4561, %v4562
        %v4564 = vrot.slane %v4562, 4
        %v4565 = vrot.slane %v3190, 5
        %v4566 = vsel %vm1932, %v4564, %v4565
        %v4567 = vrot.slane %v4565, 4
        %v4568 = vrot.slane %v3191, 5
        %v4569 = vsel %vm1932, %v4567, %v4568
        %v4570 = vrot.slane %v4390, 5
        %v4571 = vrot.slane %v4570, 4
        %v4572 = vrot.slane %v3193, 5
        %v4573 = vsel %vm1932, %v4571, %v4572
        %v4574 = vrot.slane %v4572, 4
        %v4575 = vrot.slane %v3194, 5
        %v4576 = vsel %vm1932, %v4574, %v4575
        %v4577 = vrot.slane %v4575, 4
        %v4578 = vrot.slane %v3195, 5
        %v4579 = vsel %vm1932, %v4577, %v4578
        %v4580 = vrot.slane %v4578, 4
        %v4581 = vrot.slane %v3196, 5
        %v4582 = vsel %vm1932, %v4580, %v4581
        %v4583 = vrot.slane %v4391, 5
        %v4584 = vrot.slane %v4583, 4
        %v4585 = vrot.slane %v3198, 5
        %v4586 = vsel %vm1932, %v4584, %v4585
        %v4587 = vrot.slane %v4585, 4
        %v4588 = vrot.slane %v3199, 5
        %v4589 = vsel %vm1932, %v4587, %v4588
        %v4590 = vrot.slane %v4588, 4
        %v4591 = vrot.slane %v3200, 5
        %v4592 = vsel %vm1932, %v4590, %v4591
        %v4593 = vrot.slane %v4591, 4
        %v4594 = vrot.slane %v3201, 5
        %v4595 = vsel %vm1932, %v4593, %v4594
        %v4596 = vrot.slane %v4392, 5
        %v4597 = vrot.slane %v4596, 4
        %v4598 = vrot.slane %v3203, 5
        %v4599 = vsel %vm1932, %v4597, %v4598
        %v4600 = vrot.slane %v4598, 4
        %v4601 = vrot.slane %v3204, 5
        %v4602 = vsel %vm1932, %v4600, %v4601
        %v4603 = vrot.slane %v4601, 4
        %v4604 = vrot.slane %v3205, 5
        %v4605 = vsel %vm1932, %v4603, %v4604
        %v4606 = vrot.slane %v4604, 4
        %v4607 = vrot.slane %v3206, 5
        %v4608 = vsel %vm1932, %v4606, %v4607
        %v4609 = vrot.slane %v4393, 5
        %v4610 = vrot.slane %v4609, 4
        %v4611 = vrot.slane %v3208, 5
        %v4612 = vsel %vm1932, %v4610, %v4611
        %v4613 = vrot.slane %v4611, 4
        %v4614 = vrot.slane %v3209, 5
        %v4615 = vsel %vm1932, %v4613, %v4614
        %v4616 = vrot.slane %v4614, 4
        %v4617 = vrot.slane %v3210, 5
        %v4618 = vsel %vm1932, %v4616, %v4617
        %v4619 = vrot.slane %v4617, 4
        %v4620 = vrot.slane %v3211, 5
        %v4621 = vsel %vm1932, %v4619, %v4620
        %v4622 = vrot.slane %v4394, 5
        %v4623 = vrot.slane %v4622, 4
        %v4624 = vrot.slane %v3213, 5
        %v4625 = vsel %vm1932, %v4623, %v4624
        %v4626 = vrot.slane %v4624, 4
        %v4627 = vrot.slane %v3214, 5
        %v4628 = vsel %vm1932, %v4626, %v4627
        %v4629 = vrot.slane %v4627, 4
        %v4630 = vrot.slane %v3215, 5
        %v4631 = vsel %vm1932, %v4629, %v4630
        %v4632 = vrot.slane %v4630, 4
        %v4633 = vrot.slane %v3216, 5
        %v4634 = vsel %vm1932, %v4632, %v4633
        %v4635 = vrot.slane %v4395, 5
        %v4636 = vrot.slane %v4635, 4
        %v4637 = vrot.slane %v3218, 5
        %v4638 = vsel %vm1932, %v4636, %v4637
        %v4639 = vrot.slane %v4637, 4
        %v4640 = vrot.slane %v3219, 5
        %v4641 = vsel %vm1932, %v4639, %v4640
        %v4642 = vrot.slane %v4640, 4
        %v4643 = vrot.slane %v3220, 5
        %v4644 = vsel %vm1932, %v4642, %v4643
        %v4645 = vrot.slane %v4643, 4
        %v4646 = vrot.slane %v3221, 5
        %v4647 = vsel %vm1932, %v4645, %v4646
        %v4648 = vrot.slane %v4396, 5
        %v4649 = vrot.slane %v4648, 4
        %v4650 = vrot.slane %v3223, 5
        %v4651 = vsel %vm1932, %v4649, %v4650
        %v4652 = vrot.slane %v4650, 4
        %v4653 = vrot.slane %v3224, 5
        %v4654 = vsel %vm1932, %v4652, %v4653
        %v4655 = vrot.slane %v4653, 4
        %v4656 = vrot.slane %v3225, 5
        %v4657 = vsel %vm1932, %v4655, %v4656
        %v4658 = vrot.slane %v4656, 4
        %v4659 = vrot.slane %v3226, 5
        %v4660 = vsel %vm1932, %v4658, %v4659
        %v4661 = vrot.slane %v4397, 5
        %v4662 = vrot.slane %v4661, 4
        %v4663 = vrot.slane %v3228, 5
        %v4664 = vsel %vm1932, %v4662, %v4663
        %v4665 = vrot.slane %v4663, 4
        %v4666 = vrot.slane %v3229, 5
        %v4667 = vsel %vm1932, %v4665, %v4666
        %v4668 = vrot.slane %v4666, 4
        %v4669 = vrot.slane %v3230, 5
        %v4670 = vsel %vm1932, %v4668, %v4669
        %v4671 = vrot.slane %v4669, 4
        %v4672 = vrot.slane %v3231, 5
        %v4673 = vsel %vm1932, %v4671, %v4672
        %v4674 = vrot.slane %v4398, 5
        %v4675 = vrot.slane %v4674, 4
        %v4676 = vrot.slane %v3233, 5
        %v4677 = vsel %vm1932, %v4675, %v4676
        %v4678 = vrot.slane %v4676, 4
        %v4679 = vrot.slane %v3234, 5
        %v4680 = vsel %vm1932, %v4678, %v4679
        %v4681 = vrot.slane %v4679, 4
        %v4682 = vrot.slane %v3235, 5
        %v4683 = vsel %vm1932, %v4681, %v4682
        %v4684 = vrot.slane %v4682, 4
        %v4685 = vrot.slane %v3236, 5
        %v4686 = vsel %vm1932, %v4684, %v4685
        %s4687 = scalar_lea.vmem %s2, 80
        %v4688 = vld [vmem:[%s4687] sm:$0xf]
        %v4689 = vld [vmem:[%s4687 + $0x4] sm:$0xf]
        %v4690 = vld [vmem:[%s4687 + $0x8] sm:$0xf]
        %v4691 = vld [vmem:[%s4687 + $0xc] sm:$0xf]
        %v4692 = vunpack.c.l.b16 %v4482
        %v4693 = vunpack.c.l.b16 %v4485
        %v4694 = vunpack.c.l.b16 %v4488
        %v4695 = vunpack.c.l.b16 %v4491
        %v4696 = vunpack.c.l.b16 %v4495
        %v4697 = vunpack.c.l.b16 %v4498
        %v4698 = vunpack.c.l.b16 %v4501
        %v4699 = vunpack.c.l.b16 %v4504
        %v4700 = vunpack.c.l.b16 %v4508
        %v4701 = vunpack.c.l.b16 %v4511
        %v4702 = vunpack.c.l.b16 %v4514
        %v4703 = vunpack.c.l.b16 %v4517
        %v4704 = vunpack.c.l.b16 %v4521
        %v4705 = vunpack.c.l.b16 %v4524
        %v4706 = vunpack.c.l.b16 %v4527
        %v4707 = vunpack.c.l.b16 %v4530
        %v4708 = vunpack.c.l.b16 %v4534
        %v4709 = vunpack.c.l.b16 %v4537
        %v4710 = vunpack.c.l.b16 %v4540
        %v4711 = vunpack.c.l.b16 %v4543
        %v4712 = vunpack.c.l.b16 %v4547
        %v4713 = vunpack.c.l.b16 %v4550
        %v4714 = vunpack.c.l.b16 %v4553
        %v4715 = vunpack.c.l.b16 %v4556
        %v4716 = vunpack.c.l.b16 %v4560
        %v4717 = vunpack.c.l.b16 %v4563
        %v4718 = vunpack.c.l.b16 %v4566
        %v4719 = vunpack.c.l.b16 %v4569
        %v4720 = vunpack.c.l.b16 %v4573
        %v4721 = vunpack.c.l.b16 %v4576
        %v4722 = vunpack.c.l.b16 %v4579
        %v4723 = vunpack.c.l.b16 %v4582
        %v4724 = vunpack.c.l.b16 %v4586
        %v4725 = vunpack.c.l.b16 %v4589
        %v4726 = vunpack.c.l.b16 %v4592
        %v4727 = vunpack.c.l.b16 %v4595
        %v4728 = vunpack.c.l.b16 %v4599
        %v4729 = vunpack.c.l.b16 %v4602
        %v4730 = vunpack.c.l.b16 %v4605
        %v4731 = vunpack.c.l.b16 %v4608
        %v4732 = vunpack.c.l.b16 %v4612
        %v4733 = vunpack.c.l.b16 %v4615
        %v4734 = vunpack.c.l.b16 %v4618
        %v4735 = vunpack.c.l.b16 %v4621
        %v4736 = vunpack.c.l.b16 %v4625
        %v4737 = vunpack.c.l.b16 %v4628
        %v4738 = vunpack.c.l.b16 %v4631
        %v4739 = vunpack.c.l.b16 %v4634
        %v4740 = vunpack.c.l.b16 %v4638
        %v4741 = vunpack.c.l.b16 %v4641
        %v4742 = vunpack.c.l.b16 %v4644
        %v4743 = vunpack.c.l.b16 %v4647
        %v4744 = vunpack.c.l.b16 %v4651
        %v4745 = vunpack.c.l.b16 %v4654
        %v4746 = vunpack.c.l.b16 %v4657
        %v4747 = vunpack.c.l.b16 %v4660
        %v4748 = vunpack.c.l.b16 %v4664
        %v4749 = vunpack.c.l.b16 %v4667
        %v4750 = vunpack.c.l.b16 %v4670
        %v4751 = vunpack.c.l.b16 %v4673
        %v4752 = vunpack.c.l.b16 %v4677
        %v4753 = vunpack.c.l.b16 %v4680
        %v4754 = vunpack.c.l.b16 %v4683
        %v4755 = vunpack.c.l.b16 %v4686
        %v4756 = vpack.c.b16 %v4693, %v4692
        %v4757 = vpack.c.b16 %v4695, %v4694
        %v4758 = vpack.c.b16 %v4697, %v4696
        %v4759 = vpack.c.b16 %v4699, %v4698
        %v4760 = vpack.c.b16 %v4701, %v4700
        %v4761 = vpack.c.b16 %v4703, %v4702
        %v4762 = vpack.c.b16 %v4705, %v4704
        %v4763 = vpack.c.b16 %v4707, %v4706
        %v4764 = vpack.c.b16 %v4709, %v4708
        %v4765 = vpack.c.b16 %v4711, %v4710
        %v4766 = vpack.c.b16 %v4713, %v4712
        %v4767 = vpack.c.b16 %v4715, %v4714
        %v4768 = vpack.c.b16 %v4717, %v4716
        %v4769 = vpack.c.b16 %v4719, %v4718
        %v4770 = vpack.c.b16 %v4721, %v4720
        %v4771 = vpack.c.b16 %v4723, %v4722
        %v4772 = vpack.c.b16 %v4725, %v4724
        %v4773 = vpack.c.b16 %v4727, %v4726
        %v4774 = vpack.c.b16 %v4729, %v4728
        %v4775 = vpack.c.b16 %v4731, %v4730
        %v4776 = vpack.c.b16 %v4733, %v4732
        %v4777 = vpack.c.b16 %v4735, %v4734
        %v4778 = vpack.c.b16 %v4737, %v4736
        %v4779 = vpack.c.b16 %v4739, %v4738
        %v4780 = vpack.c.b16 %v4741, %v4740
        %v4781 = vpack.c.b16 %v4743, %v4742
        %v4782 = vpack.c.b16 %v4745, %v4744
        %v4783 = vpack.c.b16 %v4747, %v4746
        %v4784 = vpack.c.b16 %v4749, %v4748
        %v4785 = vpack.c.b16 %v4751, %v4750
        %v4786 = vpack.c.b16 %v4753, %v4752
        %v4787 = vpack.c.b16 %v4755, %v4754
        %v4792 = vunpack.c.l.b16 %v4688
        %v4793 = vunpack.c.l.b16 %v4689
        %v4794 = vunpack.c.l.b16 %v4690
        %v4795 = vunpack.c.l.b16 %v4691
        %v4796 = vpack.c.b16 %v4793, %v4792
        %v4797 = vpack.c.b16 %v4795, %v4794
        %v4801 = vsel %vm1179, %v4756, 0
        %v4804 = vsel %vm1179, %v4757, 0
        %v4807 = vsel %vm1179, %v4758, 0
        %v4810 = vsel %vm1179, %v4759, 0
        %v4813 = vsel %vm1179, %v4760, 0
        %v4816 = vsel %vm1179, %v4761, 0
        %v4819 = vsel %vm1179, %v4762, 0
        %v4822 = vsel %vm1179, %v4763, 0
        %v4825 = vsel %vm1179, %v4764, 0
        %v4828 = vsel %vm1179, %v4765, 0
        %v4831 = vsel %vm1179, %v4766, 0
        %v4834 = vsel %vm1179, %v4767, 0
        %v4837 = vsel %vm1179, %v4768, 0
        %v4840 = vsel %vm1179, %v4769, 0
        %v4843 = vsel %vm1179, %v4770, 0
        %v4846 = vsel %vm1179, %v4771, 0
        %v4849 = vsel %vm1179, %v4772, 0
        %v4852 = vsel %vm1179, %v4773, 0
        %v4855 = vsel %vm1179, %v4774, 0
        %v4858 = vsel %vm1179, %v4775, 0
        %v4861 = vsel %vm1179, %v4776, 0
        %v4864 = vsel %vm1179, %v4777, 0
        %v4867 = vsel %vm1179, %v4778, 0
        %v4870 = vsel %vm1179, %v4779, 0
        %v4873 = vsel %vm1179, %v4780, 0
        %v4876 = vsel %vm1179, %v4781, 0
        %v4879 = vsel %vm1179, %v4782, 0
        %v4882 = vsel %vm1179, %v4783, 0
        %v4885 = vsel %vm1179, %v4784, 0
        %v4888 = vsel %vm1179, %v4785, 0
        %v4891 = vsel %vm1179, %v4786, 0
        %v4894 = vsel %vm1179, %v4787, 0
        %4896 = vmatpush.bf16.msra.mxu0 0
        %4897 = vmatpush.bf16.msra.mxu0 0
        %4898 = vmatpush.bf16.msra.mxu0 0
        %4899 = vmatpush.bf16.msra.mxu0 0
        %4900 = vmatpush.bf16.msra.mxu0 0
        %4901 = vmatpush.bf16.msra.mxu0 0
        %4902 = vmatpush.bf16.msra.mxu0 %v4797
        %4903 = vmatpush.bf16.msra.mxu0 %v4796
        %4904 = vmatmul.bf16.gmra.mxu0 %v4801
        %v4905 = vpop.f32.mrf.mxu0
        %v4906 = vadd.f32 0.0, %v4905
        %v4907 = vpop.f32.mrf.mxu0
        %v4908 = vadd.f32 0.0, %v4907
        %4909 = vmatmul.bf16.gmra.mxu0 %v4804
        %v4910 = vpop.f32.mrf.mxu0
        %v4911 = vadd.f32 0.0, %v4910
        %v4912 = vpop.f32.mrf.mxu0
        %v4913 = vadd.f32 0.0, %v4912
        %4914 = vmatmul.bf16.gmra.mxu0 %v4807
        %v4915 = vpop.f32.mrf.mxu0
        %v4916 = vadd.f32 0.0, %v4915
        %v4917 = vpop.f32.mrf.mxu0
        %v4918 = vadd.f32 0.0, %v4917
        %4919 = vmatmul.bf16.gmra.mxu0 %v4810
        %v4920 = vpop.f32.mrf.mxu0
        %v4921 = vadd.f32 0.0, %v4920
        %v4922 = vpop.f32.mrf.mxu0
        %v4923 = vadd.f32 0.0, %v4922
        %4924 = vmatmul.bf16.gmra.mxu0 %v4813
        %v4925 = vpop.f32.mrf.mxu0
        %v4926 = vadd.f32 0.0, %v4925
        %v4927 = vpop.f32.mrf.mxu0
        %v4928 = vadd.f32 0.0, %v4927
        %4929 = vmatmul.bf16.gmra.mxu0 %v4816
        %v4930 = vpop.f32.mrf.mxu0
        %v4931 = vadd.f32 0.0, %v4930
        %v4932 = vpop.f32.mrf.mxu0
        %v4933 = vadd.f32 0.0, %v4932
        %4934 = vmatmul.bf16.gmra.mxu0 %v4819
        %v4935 = vpop.f32.mrf.mxu0
        %v4936 = vadd.f32 0.0, %v4935
        %v4937 = vpop.f32.mrf.mxu0
        %v4938 = vadd.f32 0.0, %v4937
        %4939 = vmatmul.bf16.gmra.mxu0 %v4822
        %v4940 = vpop.f32.mrf.mxu0
        %v4941 = vadd.f32 0.0, %v4940
        %v4942 = vpop.f32.mrf.mxu0
        %v4943 = vadd.f32 0.0, %v4942
        %4944 = vmatmul.bf16.gmra.mxu0 %v4825
        %v4945 = vpop.f32.mrf.mxu0
        %v4946 = vadd.f32 0.0, %v4945
        %v4947 = vpop.f32.mrf.mxu0
        %v4948 = vadd.f32 0.0, %v4947
        %4949 = vmatmul.bf16.gmra.mxu0 %v4828
        %v4950 = vpop.f32.mrf.mxu0
        %v4951 = vadd.f32 0.0, %v4950
        %v4952 = vpop.f32.mrf.mxu0
        %v4953 = vadd.f32 0.0, %v4952
        %4954 = vmatmul.bf16.gmra.mxu0 %v4831
        %v4955 = vpop.f32.mrf.mxu0
        %v4956 = vadd.f32 0.0, %v4955
        %v4957 = vpop.f32.mrf.mxu0
        %v4958 = vadd.f32 0.0, %v4957
        %4959 = vmatmul.bf16.gmra.mxu0 %v4834
        %v4960 = vpop.f32.mrf.mxu0
        %v4961 = vadd.f32 0.0, %v4960
        %v4962 = vpop.f32.mrf.mxu0
        %v4963 = vadd.f32 0.0, %v4962
        %4964 = vmatmul.bf16.gmra.mxu0 %v4837
        %v4965 = vpop.f32.mrf.mxu0
        %v4966 = vadd.f32 0.0, %v4965
        %v4967 = vpop.f32.mrf.mxu0
        %v4968 = vadd.f32 0.0, %v4967
        %4969 = vmatmul.bf16.gmra.mxu0 %v4840
        %v4970 = vpop.f32.mrf.mxu0
        %v4971 = vadd.f32 0.0, %v4970
        %v4972 = vpop.f32.mrf.mxu0
        %v4973 = vadd.f32 0.0, %v4972
        %4974 = vmatmul.bf16.gmra.mxu0 %v4843
        %v4975 = vpop.f32.mrf.mxu0
        %v4976 = vadd.f32 0.0, %v4975
        %v4977 = vpop.f32.mrf.mxu0
        %v4978 = vadd.f32 0.0, %v4977
        %4979 = vmatmul.bf16.gmra.mxu0 %v4846
        %v4980 = vpop.f32.mrf.mxu0
        %v4981 = vadd.f32 0.0, %v4980
        %v4982 = vpop.f32.mrf.mxu0
        %v4983 = vadd.f32 0.0, %v4982
        %4984 = vmatmul.bf16.gmra.mxu0 %v4849
        %v4985 = vpop.f32.mrf.mxu0
        %v4986 = vadd.f32 0.0, %v4985
        %v4987 = vpop.f32.mrf.mxu0
        %v4988 = vadd.f32 0.0, %v4987
        %4989 = vmatmul.bf16.gmra.mxu0 %v4852
        %v4990 = vpop.f32.mrf.mxu0
        %v4991 = vadd.f32 0.0, %v4990
        %v4992 = vpop.f32.mrf.mxu0
        %v4993 = vadd.f32 0.0, %v4992
        %4994 = vmatmul.bf16.gmra.mxu0 %v4855
        %v4995 = vpop.f32.mrf.mxu0
        %v4996 = vadd.f32 0.0, %v4995
        %v4997 = vpop.f32.mrf.mxu0
        %v4998 = vadd.f32 0.0, %v4997
        %4999 = vmatmul.bf16.gmra.mxu0 %v4858
        %v5000 = vpop.f32.mrf.mxu0
        %v5001 = vadd.f32 0.0, %v5000
        %v5002 = vpop.f32.mrf.mxu0
        %v5003 = vadd.f32 0.0, %v5002
        %5004 = vmatmul.bf16.gmra.mxu0 %v4861
        %v5005 = vpop.f32.mrf.mxu0
        %v5006 = vadd.f32 0.0, %v5005
        %v5007 = vpop.f32.mrf.mxu0
        %v5008 = vadd.f32 0.0, %v5007
        %5009 = vmatmul.bf16.gmra.mxu0 %v4864
        %v5010 = vpop.f32.mrf.mxu0
        %v5011 = vadd.f32 0.0, %v5010
        %v5012 = vpop.f32.mrf.mxu0
        %v5013 = vadd.f32 0.0, %v5012
        %5014 = vmatmul.bf16.gmra.mxu0 %v4867
        %v5015 = vpop.f32.mrf.mxu0
        %v5016 = vadd.f32 0.0, %v5015
        %v5017 = vpop.f32.mrf.mxu0
        %v5018 = vadd.f32 0.0, %v5017
        %5019 = vmatmul.bf16.gmra.mxu0 %v4870
        %v5020 = vpop.f32.mrf.mxu0
        %v5021 = vadd.f32 0.0, %v5020
        %v5022 = vpop.f32.mrf.mxu0
        %v5023 = vadd.f32 0.0, %v5022
        %5024 = vmatmul.bf16.gmra.mxu0 %v4873
        %v5025 = vpop.f32.mrf.mxu0
        %v5026 = vadd.f32 0.0, %v5025
        %v5027 = vpop.f32.mrf.mxu0
        %v5028 = vadd.f32 0.0, %v5027
        %5029 = vmatmul.bf16.gmra.mxu0 %v4876
        %v5030 = vpop.f32.mrf.mxu0
        %v5031 = vadd.f32 0.0, %v5030
        %v5032 = vpop.f32.mrf.mxu0
        %v5033 = vadd.f32 0.0, %v5032
        %5034 = vmatmul.bf16.gmra.mxu0 %v4879
        %v5035 = vpop.f32.mrf.mxu0
        %v5036 = vadd.f32 0.0, %v5035
        %v5037 = vpop.f32.mrf.mxu0
        %v5038 = vadd.f32 0.0, %v5037
        %5039 = vmatmul.bf16.gmra.mxu0 %v4882
        %v5040 = vpop.f32.mrf.mxu0
        %v5041 = vadd.f32 0.0, %v5040
        %v5042 = vpop.f32.mrf.mxu0
        %v5043 = vadd.f32 0.0, %v5042
        %5044 = vmatmul.bf16.gmra.mxu0 %v4885
        %v5045 = vpop.f32.mrf.mxu0
        %v5046 = vadd.f32 0.0, %v5045
        %v5047 = vpop.f32.mrf.mxu0
        %v5048 = vadd.f32 0.0, %v5047
        %5049 = vmatmul.bf16.gmra.mxu0 %v4888
        %v5050 = vpop.f32.mrf.mxu0
        %v5051 = vadd.f32 0.0, %v5050
        %v5052 = vpop.f32.mrf.mxu0
        %v5053 = vadd.f32 0.0, %v5052
        %5054 = vmatmul.bf16.gmra.mxu0 %v4891
        %v5055 = vpop.f32.mrf.mxu0
        %v5056 = vadd.f32 0.0, %v5055
        %v5057 = vpop.f32.mrf.mxu0
        %v5058 = vadd.f32 0.0, %v5057
        %5059 = vmatmul.bf16.gmra.mxu0 %v4894
        %v5060 = vpop.f32.mrf.mxu0
        %v5061 = vadd.f32 0.0, %v5060
        %v5062 = vpop.f32.mrf.mxu0
        %v5063 = vadd.f32 0.0, %v5062
        %5064 = vdwg.mxu0
        %v5065 = vadd.f32 %v4319, %v4906
        %v5066 = vadd.f32 %v4320, %v4908
        %v5067 = vadd.f32 %v4321, %v4911
        %v5068 = vadd.f32 %v4322, %v4913
        %v5069 = vadd.f32 %v4323, %v4916
        %v5070 = vadd.f32 %v4324, %v4918
        %v5071 = vadd.f32 %v4325, %v4921
        %v5072 = vadd.f32 %v4326, %v4923
        %v5073 = vadd.f32 %v4327, %v4926
        %v5074 = vadd.f32 %v4328, %v4928
        %v5075 = vadd.f32 %v4329, %v4931
        %v5076 = vadd.f32 %v4330, %v4933
        %v5077 = vadd.f32 %v4331, %v4936
        %v5078 = vadd.f32 %v4332, %v4938
        %v5079 = vadd.f32 %v4333, %v4941
        %v5080 = vadd.f32 %v4334, %v4943
        %v5081 = vadd.f32 %v4335, %v4946
        %v5082 = vadd.f32 %v4336, %v4948
        %v5083 = vadd.f32 %v4337, %v4951
        %v5084 = vadd.f32 %v4338, %v4953
        %v5085 = vadd.f32 %v4339, %v4956
        %v5086 = vadd.f32 %v4340, %v4958
        %v5087 = vadd.f32 %v4341, %v4961
        %v5088 = vadd.f32 %v4342, %v4963
        %v5089 = vadd.f32 %v4343, %v4966
        %v5090 = vadd.f32 %v4344, %v4968
        %v5091 = vadd.f32 %v4345, %v4971
        %v5092 = vadd.f32 %v4346, %v4973
        %v5093 = vadd.f32 %v4347, %v4976
        %v5094 = vadd.f32 %v4348, %v4978
        %v5095 = vadd.f32 %v4349, %v4981
        %v5096 = vadd.f32 %v4350, %v4983
        %v5097 = vadd.f32 %v4351, %v4986
        %v5098 = vadd.f32 %v4352, %v4988
        %v5099 = vadd.f32 %v4353, %v4991
        %v5100 = vadd.f32 %v4354, %v4993
        %v5101 = vadd.f32 %v4355, %v4996
        %v5102 = vadd.f32 %v4356, %v4998
        %v5103 = vadd.f32 %v4357, %v5001
        %v5104 = vadd.f32 %v4358, %v5003
        %v5105 = vadd.f32 %v4359, %v5006
        %v5106 = vadd.f32 %v4360, %v5008
        %v5107 = vadd.f32 %v4361, %v5011
        %v5108 = vadd.f32 %v4362, %v5013
        %v5109 = vadd.f32 %v4363, %v5016
        %v5110 = vadd.f32 %v4364, %v5018
        %v5111 = vadd.f32 %v4365, %v5021
        %v5112 = vadd.f32 %v4366, %v5023
        %v5113 = vadd.f32 %v4367, %v5026
        %v5114 = vadd.f32 %v4368, %v5028
        %v5115 = vadd.f32 %v4369, %v5031
        %v5116 = vadd.f32 %v4370, %v5033
        %v5117 = vadd.f32 %v4371, %v5036
        %v5118 = vadd.f32 %v4372, %v5038
        %v5119 = vadd.f32 %v4373, %v5041
        %v5120 = vadd.f32 %v4374, %v5043
        %v5121 = vadd.f32 %v4375, %v5046
        %v5122 = vadd.f32 %v4376, %v5048
        %v5123 = vadd.f32 %v4377, %v5051
        %v5124 = vadd.f32 %v4378, %v5053
        %v5125 = vadd.f32 %v4379, %v5056
        %v5126 = vadd.f32 %v4380, %v5058
        %v5127 = vadd.f32 %v4381, %v5061
        %v5128 = vadd.f32 %v4382, %v5063
        %s5129 = sadd.s32 %s271, 2
        %s5130 = smul.u32 %s5129, 5
        %s5131 = smul.addr %s5130, 4
        %s5132 = scalar_lea.vmem %s1, %s5131
        %v5133 = vld [vmem:[%s5132] sm:$0xf]
        %v5134 = vld [vmem:[%s5132 + $0x4] sm:$0xf]
        %v5135 = vld [vmem:[%s5132 + $0x8] sm:$0xf]
        %v5136 = vld [vmem:[%s5132 + $0xc] sm:$0xf]
        %v5137 = vld [vmem:[%s5132 + $0x14] sm:$0xf]
        %v5138 = vld [vmem:[%s5132 + $0x18] sm:$0xf]
        %v5139 = vld [vmem:[%s5132 + $0x1c] sm:$0xf]
        %v5140 = vld [vmem:[%s5132 + $0x20] sm:$0xf]
        %v5141 = vld [vmem:[%s5132 + $0x28] sm:$0xf]
        %v5142 = vld [vmem:[%s5132 + $0x2c] sm:$0xf]
        %v5143 = vld [vmem:[%s5132 + $0x30] sm:$0xf]
        %v5144 = vld [vmem:[%s5132 + $0x34] sm:$0xf]
        %v5145 = vld [vmem:[%s5132 + $0x3c] sm:$0xf]
        %v5146 = vld [vmem:[%s5132 + $0x40] sm:$0xf]
        %v5147 = vld [vmem:[%s5132 + $0x44] sm:$0xf]
        %v5148 = vld [vmem:[%s5132 + $0x48] sm:$0xf]
        %v5149 = vld [vmem:[%s5132 + $0x50] sm:$0xf]
        %v5150 = vld [vmem:[%s5132 + $0x54] sm:$0xf]
        %v5151 = vld [vmem:[%s5132 + $0x58] sm:$0xf]
        %v5152 = vld [vmem:[%s5132 + $0x5c] sm:$0xf]
        %v5153 = vld [vmem:[%s5132 + $0x64] sm:$0xf]
        %v5154 = vld [vmem:[%s5132 + $0x68] sm:$0xf]
        %v5155 = vld [vmem:[%s5132 + $0x6c] sm:$0xf]
        %v5156 = vld [vmem:[%s5132 + $0x70] sm:$0xf]
        %v5157 = vld [vmem:[%s5132 + $0x78] sm:$0xf]
        %v5158 = vld [vmem:[%s5132 + $0x7c] sm:$0xf]
        %v5159 = vld [vmem:[%s5132 + $0x80] sm:$0xf]
        %v5160 = vld [vmem:[%s5132 + $0x84] sm:$0xf]
        %v5161 = vld [vmem:[%s5132 + $0x8c] sm:$0xf]
        %v5162 = vld [vmem:[%s5132 + $0x90] sm:$0xf]
        %v5163 = vld [vmem:[%s5132 + $0x94] sm:$0xf]
        %v5164 = vld [vmem:[%s5132 + $0x98] sm:$0xf]
        %v5165 = vld [vmem:[%s5132 + $0xa0] sm:$0xf]
        %v5166 = vld [vmem:[%s5132 + $0xa4] sm:$0xf]
        %v5167 = vld [vmem:[%s5132 + $0xa8] sm:$0xf]
        %v5168 = vld [vmem:[%s5132 + $0xac] sm:$0xf]
        %v5169 = vld [vmem:[%s5132 + $0xb4] sm:$0xf]
        %v5170 = vld [vmem:[%s5132 + $0xb8] sm:$0xf]
        %v5171 = vld [vmem:[%s5132 + $0xbc] sm:$0xf]
        %v5172 = vld [vmem:[%s5132 + $0xc0] sm:$0xf]
        %v5173 = vld [vmem:[%s5132 + $0xc8] sm:$0xf]
        %v5174 = vld [vmem:[%s5132 + $0xcc] sm:$0xf]
        %v5175 = vld [vmem:[%s5132 + $0xd0] sm:$0xf]
        %v5176 = vld [vmem:[%s5132 + $0xd4] sm:$0xf]
        %v5177 = vld [vmem:[%s5132 + $0xdc] sm:$0xf]
        %v5178 = vld [vmem:[%s5132 + $0xe0] sm:$0xf]
        %v5179 = vld [vmem:[%s5132 + $0xe4] sm:$0xf]
        %v5180 = vld [vmem:[%s5132 + $0xe8] sm:$0xf]
        %v5181 = vld [vmem:[%s5132 + $0xf0] sm:$0xf]
        %v5182 = vld [vmem:[%s5132 + $0xf4] sm:$0xf]
        %v5183 = vld [vmem:[%s5132 + $0xf8] sm:$0xf]
        %v5184 = vld [vmem:[%s5132 + $0xfc] sm:$0xf]
        %v5185 = vld [vmem:[%s5132 + $0x104] sm:$0xf]
        %v5186 = vld [vmem:[%s5132 + $0x108] sm:$0xf]
        %v5187 = vld [vmem:[%s5132 + $0x10c] sm:$0xf]
        %v5188 = vld [vmem:[%s5132 + $0x110] sm:$0xf]
        %v5189 = vld [vmem:[%s5132 + $0x118] sm:$0xf]
        %v5190 = vld [vmem:[%s5132 + $0x11c] sm:$0xf]
        %v5191 = vld [vmem:[%s5132 + $0x120] sm:$0xf]
        %v5192 = vld [vmem:[%s5132 + $0x124] sm:$0xf]
        %v5193 = vld [vmem:[%s5132 + $0x12c] sm:$0xf]
        %v5194 = vld [vmem:[%s5132 + $0x130] sm:$0xf]
        %v5195 = vld [vmem:[%s5132 + $0x134] sm:$0xf]
        %v5196 = vld [vmem:[%s5132 + $0x138] sm:$0xf]
        %s5197 = scalar_lea.vmem %s2, 96
        %v5198 = vld [vmem:[%s5197] sm:$0xf]
        %v5199 = vld [vmem:[%s5197 + $0x4] sm:$0xf]
        %v5200 = vld [vmem:[%s5197 + $0x8] sm:$0xf]
        %v5201 = vld [vmem:[%s5197 + $0xc] sm:$0xf]
        %v5266 = vunpack.c.l.b16 %v5133
        %v5267 = vunpack.c.l.b16 %v5134
        %v5268 = vunpack.c.l.b16 %v5135
        %v5269 = vunpack.c.l.b16 %v5136
        %v5270 = vunpack.c.l.b16 %v5137
        %v5271 = vunpack.c.l.b16 %v5138
        %v5272 = vunpack.c.l.b16 %v5139
        %v5273 = vunpack.c.l.b16 %v5140
        %v5274 = vunpack.c.l.b16 %v5141
        %v5275 = vunpack.c.l.b16 %v5142
        %v5276 = vunpack.c.l.b16 %v5143
        %v5277 = vunpack.c.l.b16 %v5144
        %v5278 = vunpack.c.l.b16 %v5145
        %v5279 = vunpack.c.l.b16 %v5146
        %v5280 = vunpack.c.l.b16 %v5147
        %v5281 = vunpack.c.l.b16 %v5148
        %v5282 = vunpack.c.l.b16 %v5149
        %v5283 = vunpack.c.l.b16 %v5150
        %v5284 = vunpack.c.l.b16 %v5151
        %v5285 = vunpack.c.l.b16 %v5152
        %v5286 = vunpack.c.l.b16 %v5153
        %v5287 = vunpack.c.l.b16 %v5154
        %v5288 = vunpack.c.l.b16 %v5155
        %v5289 = vunpack.c.l.b16 %v5156
        %v5290 = vunpack.c.l.b16 %v5157
        %v5291 = vunpack.c.l.b16 %v5158
        %v5292 = vunpack.c.l.b16 %v5159
        %v5293 = vunpack.c.l.b16 %v5160
        %v5294 = vunpack.c.l.b16 %v5161
        %v5295 = vunpack.c.l.b16 %v5162
        %v5296 = vunpack.c.l.b16 %v5163
        %v5297 = vunpack.c.l.b16 %v5164
        %v5298 = vunpack.c.l.b16 %v5165
        %v5299 = vunpack.c.l.b16 %v5166
        %v5300 = vunpack.c.l.b16 %v5167
        %v5301 = vunpack.c.l.b16 %v5168
        %v5302 = vunpack.c.l.b16 %v5169
        %v5303 = vunpack.c.l.b16 %v5170
        %v5304 = vunpack.c.l.b16 %v5171
        %v5305 = vunpack.c.l.b16 %v5172
        %v5306 = vunpack.c.l.b16 %v5173
        %v5307 = vunpack.c.l.b16 %v5174
        %v5308 = vunpack.c.l.b16 %v5175
        %v5309 = vunpack.c.l.b16 %v5176
        %v5310 = vunpack.c.l.b16 %v5177
        %v5311 = vunpack.c.l.b16 %v5178
        %v5312 = vunpack.c.l.b16 %v5179
        %v5313 = vunpack.c.l.b16 %v5180
        %v5314 = vunpack.c.l.b16 %v5181
        %v5315 = vunpack.c.l.b16 %v5182
        %v5316 = vunpack.c.l.b16 %v5183
        %v5317 = vunpack.c.l.b16 %v5184
        %v5318 = vunpack.c.l.b16 %v5185
        %v5319 = vunpack.c.l.b16 %v5186
        %v5320 = vunpack.c.l.b16 %v5187
        %v5321 = vunpack.c.l.b16 %v5188
        %v5322 = vunpack.c.l.b16 %v5189
        %v5323 = vunpack.c.l.b16 %v5190
        %v5324 = vunpack.c.l.b16 %v5191
        %v5325 = vunpack.c.l.b16 %v5192
        %v5326 = vunpack.c.l.b16 %v5193
        %v5327 = vunpack.c.l.b16 %v5194
        %v5328 = vunpack.c.l.b16 %v5195
        %v5329 = vunpack.c.l.b16 %v5196
        %v5330 = vpack.c.b16 %v5267, %v5266
        %v5331 = vpack.c.b16 %v5269, %v5268
        %v5332 = vpack.c.b16 %v5271, %v5270
        %v5333 = vpack.c.b16 %v5273, %v5272
        %v5334 = vpack.c.b16 %v5275, %v5274
        %v5335 = vpack.c.b16 %v5277, %v5276
        %v5336 = vpack.c.b16 %v5279, %v5278
        %v5337 = vpack.c.b16 %v5281, %v5280
        %v5338 = vpack.c.b16 %v5283, %v5282
        %v5339 = vpack.c.b16 %v5285, %v5284
        %v5340 = vpack.c.b16 %v5287, %v5286
        %v5341 = vpack.c.b16 %v5289, %v5288
        %v5342 = vpack.c.b16 %v5291, %v5290
        %v5343 = vpack.c.b16 %v5293, %v5292
        %v5344 = vpack.c.b16 %v5295, %v5294
        %v5345 = vpack.c.b16 %v5297, %v5296
        %v5346 = vpack.c.b16 %v5299, %v5298
        %v5347 = vpack.c.b16 %v5301, %v5300
        %v5348 = vpack.c.b16 %v5303, %v5302
        %v5349 = vpack.c.b16 %v5305, %v5304
        %v5350 = vpack.c.b16 %v5307, %v5306
        %v5351 = vpack.c.b16 %v5309, %v5308
        %v5352 = vpack.c.b16 %v5311, %v5310
        %v5353 = vpack.c.b16 %v5313, %v5312
        %v5354 = vpack.c.b16 %v5315, %v5314
        %v5355 = vpack.c.b16 %v5317, %v5316
        %v5356 = vpack.c.b16 %v5319, %v5318
        %v5357 = vpack.c.b16 %v5321, %v5320
        %v5358 = vpack.c.b16 %v5323, %v5322
        %v5359 = vpack.c.b16 %v5325, %v5324
        %v5360 = vpack.c.b16 %v5327, %v5326
        %v5361 = vpack.c.b16 %v5329, %v5328
        %v5366 = vunpack.c.l.b16 %v5198
        %v5367 = vunpack.c.l.b16 %v5199
        %v5368 = vunpack.c.l.b16 %v5200
        %v5369 = vunpack.c.l.b16 %v5201
        %v5370 = vpack.c.b16 %v5367, %v5366
        %v5371 = vpack.c.b16 %v5369, %v5368
        %v5375 = vsel %vm1179, %v5330, 0
        %v5378 = vsel %vm1179, %v5331, 0
        %v5381 = vsel %vm1179, %v5332, 0
        %v5384 = vsel %vm1179, %v5333, 0
        %v5387 = vsel %vm1179, %v5334, 0
        %v5390 = vsel %vm1179, %v5335, 0
        %v5393 = vsel %vm1179, %v5336, 0
        %v5396 = vsel %vm1179, %v5337, 0
        %v5399 = vsel %vm1179, %v5338, 0
        %v5402 = vsel %vm1179, %v5339, 0
        %v5405 = vsel %vm1179, %v5340, 0
        %v5408 = vsel %vm1179, %v5341, 0
        %v5411 = vsel %vm1179, %v5342, 0
        %v5414 = vsel %vm1179, %v5343, 0
        %v5417 = vsel %vm1179, %v5344, 0
        %v5420 = vsel %vm1179, %v5345, 0
        %v5423 = vsel %vm1179, %v5346, 0
        %v5426 = vsel %vm1179, %v5347, 0
        %v5429 = vsel %vm1179, %v5348, 0
        %v5432 = vsel %vm1179, %v5349, 0
        %v5435 = vsel %vm1179, %v5350, 0
        %v5438 = vsel %vm1179, %v5351, 0
        %v5441 = vsel %vm1179, %v5352, 0
        %v5444 = vsel %vm1179, %v5353, 0
        %v5447 = vsel %vm1179, %v5354, 0
        %v5450 = vsel %vm1179, %v5355, 0
        %v5453 = vsel %vm1179, %v5356, 0
        %v5456 = vsel %vm1179, %v5357, 0
        %v5459 = vsel %vm1179, %v5358, 0
        %v5462 = vsel %vm1179, %v5359, 0
        %v5465 = vsel %vm1179, %v5360, 0
        %v5468 = vsel %vm1179, %v5361, 0
        %5470 = vmatpush.bf16.msra.mxu0 0
        %5471 = vmatpush.bf16.msra.mxu0 0
        %5472 = vmatpush.bf16.msra.mxu0 0
        %5473 = vmatpush.bf16.msra.mxu0 0
        %5474 = vmatpush.bf16.msra.mxu0 0
        %5475 = vmatpush.bf16.msra.mxu0 0
        %5476 = vmatpush.bf16.msra.mxu0 %v5371
        %5477 = vmatpush.bf16.msra.mxu0 %v5370
        %5478 = vmatmul.bf16.gmra.mxu0 %v5375
        %v5479 = vpop.f32.mrf.mxu0
        %v5480 = vadd.f32 0.0, %v5479
        %v5481 = vpop.f32.mrf.mxu0
        %v5482 = vadd.f32 0.0, %v5481
        %5483 = vmatmul.bf16.gmra.mxu0 %v5378
        %v5484 = vpop.f32.mrf.mxu0
        %v5485 = vadd.f32 0.0, %v5484
        %v5486 = vpop.f32.mrf.mxu0
        %v5487 = vadd.f32 0.0, %v5486
        %5488 = vmatmul.bf16.gmra.mxu0 %v5381
        %v5489 = vpop.f32.mrf.mxu0
        %v5490 = vadd.f32 0.0, %v5489
        %v5491 = vpop.f32.mrf.mxu0
        %v5492 = vadd.f32 0.0, %v5491
        %5493 = vmatmul.bf16.gmra.mxu0 %v5384
        %v5494 = vpop.f32.mrf.mxu0
        %v5495 = vadd.f32 0.0, %v5494
        %v5496 = vpop.f32.mrf.mxu0
        %v5497 = vadd.f32 0.0, %v5496
        %5498 = vmatmul.bf16.gmra.mxu0 %v5387
        %v5499 = vpop.f32.mrf.mxu0
        %v5500 = vadd.f32 0.0, %v5499
        %v5501 = vpop.f32.mrf.mxu0
        %v5502 = vadd.f32 0.0, %v5501
        %5503 = vmatmul.bf16.gmra.mxu0 %v5390
        %v5504 = vpop.f32.mrf.mxu0
        %v5505 = vadd.f32 0.0, %v5504
        %v5506 = vpop.f32.mrf.mxu0
        %v5507 = vadd.f32 0.0, %v5506
        %5508 = vmatmul.bf16.gmra.mxu0 %v5393
        %v5509 = vpop.f32.mrf.mxu0
        %v5510 = vadd.f32 0.0, %v5509
        %v5511 = vpop.f32.mrf.mxu0
        %v5512 = vadd.f32 0.0, %v5511
        %5513 = vmatmul.bf16.gmra.mxu0 %v5396
        %v5514 = vpop.f32.mrf.mxu0
        %v5515 = vadd.f32 0.0, %v5514
        %v5516 = vpop.f32.mrf.mxu0
        %v5517 = vadd.f32 0.0, %v5516
        %5518 = vmatmul.bf16.gmra.mxu0 %v5399
        %v5519 = vpop.f32.mrf.mxu0
        %v5520 = vadd.f32 0.0, %v5519
        %v5521 = vpop.f32.mrf.mxu0
        %v5522 = vadd.f32 0.0, %v5521
        %5523 = vmatmul.bf16.gmra.mxu0 %v5402
        %v5524 = vpop.f32.mrf.mxu0
        %v5525 = vadd.f32 0.0, %v5524
        %v5526 = vpop.f32.mrf.mxu0
        %v5527 = vadd.f32 0.0, %v5526
        %5528 = vmatmul.bf16.gmra.mxu0 %v5405
        %v5529 = vpop.f32.mrf.mxu0
        %v5530 = vadd.f32 0.0, %v5529
        %v5531 = vpop.f32.mrf.mxu0
        %v5532 = vadd.f32 0.0, %v5531
        %5533 = vmatmul.bf16.gmra.mxu0 %v5408
        %v5534 = vpop.f32.mrf.mxu0
        %v5535 = vadd.f32 0.0, %v5534
        %v5536 = vpop.f32.mrf.mxu0
        %v5537 = vadd.f32 0.0, %v5536
        %5538 = vmatmul.bf16.gmra.mxu0 %v5411
        %v5539 = vpop.f32.mrf.mxu0
        %v5540 = vadd.f32 0.0, %v5539
        %v5541 = vpop.f32.mrf.mxu0
        %v5542 = vadd.f32 0.0, %v5541
        %5543 = vmatmul.bf16.gmra.mxu0 %v5414
        %v5544 = vpop.f32.mrf.mxu0
        %v5545 = vadd.f32 0.0, %v5544
        %v5546 = vpop.f32.mrf.mxu0
        %v5547 = vadd.f32 0.0, %v5546
        %5548 = vmatmul.bf16.gmra.mxu0 %v5417
        %v5549 = vpop.f32.mrf.mxu0
        %v5550 = vadd.f32 0.0, %v5549
        %v5551 = vpop.f32.mrf.mxu0
        %v5552 = vadd.f32 0.0, %v5551
        %5553 = vmatmul.bf16.gmra.mxu0 %v5420
        %v5554 = vpop.f32.mrf.mxu0
        %v5555 = vadd.f32 0.0, %v5554
        %v5556 = vpop.f32.mrf.mxu0
        %v5557 = vadd.f32 0.0, %v5556
        %5558 = vmatmul.bf16.gmra.mxu0 %v5423
        %v5559 = vpop.f32.mrf.mxu0
        %v5560 = vadd.f32 0.0, %v5559
        %v5561 = vpop.f32.mrf.mxu0
        %v5562 = vadd.f32 0.0, %v5561
        %5563 = vmatmul.bf16.gmra.mxu0 %v5426
        %v5564 = vpop.f32.mrf.mxu0
        %v5565 = vadd.f32 0.0, %v5564
        %v5566 = vpop.f32.mrf.mxu0
        %v5567 = vadd.f32 0.0, %v5566
        %5568 = vmatmul.bf16.gmra.mxu0 %v5429
        %v5569 = vpop.f32.mrf.mxu0
        %v5570 = vadd.f32 0.0, %v5569
        %v5571 = vpop.f32.mrf.mxu0
        %v5572 = vadd.f32 0.0, %v5571
        %5573 = vmatmul.bf16.gmra.mxu0 %v5432
        %v5574 = vpop.f32.mrf.mxu0
        %v5575 = vadd.f32 0.0, %v5574
        %v5576 = vpop.f32.mrf.mxu0
        %v5577 = vadd.f32 0.0, %v5576
        %5578 = vmatmul.bf16.gmra.mxu0 %v5435
        %v5579 = vpop.f32.mrf.mxu0
        %v5580 = vadd.f32 0.0, %v5579
        %v5581 = vpop.f32.mrf.mxu0
        %v5582 = vadd.f32 0.0, %v5581
        %5583 = vmatmul.bf16.gmra.mxu0 %v5438
        %v5584 = vpop.f32.mrf.mxu0
        %v5585 = vadd.f32 0.0, %v5584
        %v5586 = vpop.f32.mrf.mxu0
        %v5587 = vadd.f32 0.0, %v5586
        %5588 = vmatmul.bf16.gmra.mxu0 %v5441
        %v5589 = vpop.f32.mrf.mxu0
        %v5590 = vadd.f32 0.0, %v5589
        %v5591 = vpop.f32.mrf.mxu0
        %v5592 = vadd.f32 0.0, %v5591
        %5593 = vmatmul.bf16.gmra.mxu0 %v5444
        %v5594 = vpop.f32.mrf.mxu0
        %v5595 = vadd.f32 0.0, %v5594
        %v5596 = vpop.f32.mrf.mxu0
        %v5597 = vadd.f32 0.0, %v5596
        %5598 = vmatmul.bf16.gmra.mxu0 %v5447
        %v5599 = vpop.f32.mrf.mxu0
        %v5600 = vadd.f32 0.0, %v5599
        %v5601 = vpop.f32.mrf.mxu0
        %v5602 = vadd.f32 0.0, %v5601
        %5603 = vmatmul.bf16.gmra.mxu0 %v5450
        %v5604 = vpop.f32.mrf.mxu0
        %v5605 = vadd.f32 0.0, %v5604
        %v5606 = vpop.f32.mrf.mxu0
        %v5607 = vadd.f32 0.0, %v5606
        %5608 = vmatmul.bf16.gmra.mxu0 %v5453
        %v5609 = vpop.f32.mrf.mxu0
        %v5610 = vadd.f32 0.0, %v5609
        %v5611 = vpop.f32.mrf.mxu0
        %v5612 = vadd.f32 0.0, %v5611
        %5613 = vmatmul.bf16.gmra.mxu0 %v5456
        %v5614 = vpop.f32.mrf.mxu0
        %v5615 = vadd.f32 0.0, %v5614
        %v5616 = vpop.f32.mrf.mxu0
        %v5617 = vadd.f32 0.0, %v5616
        %5618 = vmatmul.bf16.gmra.mxu0 %v5459
        %v5619 = vpop.f32.mrf.mxu0
        %v5620 = vadd.f32 0.0, %v5619
        %v5621 = vpop.f32.mrf.mxu0
        %v5622 = vadd.f32 0.0, %v5621
        %5623 = vmatmul.bf16.gmra.mxu0 %v5462
        %v5624 = vpop.f32.mrf.mxu0
        %v5625 = vadd.f32 0.0, %v5624
        %v5626 = vpop.f32.mrf.mxu0
        %v5627 = vadd.f32 0.0, %v5626
        %5628 = vmatmul.bf16.gmra.mxu0 %v5465
        %v5629 = vpop.f32.mrf.mxu0
        %v5630 = vadd.f32 0.0, %v5629
        %v5631 = vpop.f32.mrf.mxu0
        %v5632 = vadd.f32 0.0, %v5631
        %5633 = vmatmul.bf16.gmra.mxu0 %v5468
        %v5634 = vpop.f32.mrf.mxu0
        %v5635 = vadd.f32 0.0, %v5634
        %v5636 = vpop.f32.mrf.mxu0
        %v5637 = vadd.f32 0.0, %v5636
        %5638 = vdwg.mxu0
        %v5639 = vadd.f32 %v5065, %v5480
        %v5640 = vadd.f32 %v5066, %v5482
        %v5641 = vadd.f32 %v5067, %v5485
        %v5642 = vadd.f32 %v5068, %v5487
        %v5643 = vadd.f32 %v5069, %v5490
        %v5644 = vadd.f32 %v5070, %v5492
        %v5645 = vadd.f32 %v5071, %v5495
        %v5646 = vadd.f32 %v5072, %v5497
        %v5647 = vadd.f32 %v5073, %v5500
        %v5648 = vadd.f32 %v5074, %v5502
        %v5649 = vadd.f32 %v5075, %v5505
        %v5650 = vadd.f32 %v5076, %v5507
        %v5651 = vadd.f32 %v5077, %v5510
        %v5652 = vadd.f32 %v5078, %v5512
        %v5653 = vadd.f32 %v5079, %v5515
        %v5654 = vadd.f32 %v5080, %v5517
        %v5655 = vadd.f32 %v5081, %v5520
        %v5656 = vadd.f32 %v5082, %v5522
        %v5657 = vadd.f32 %v5083, %v5525
        %v5658 = vadd.f32 %v5084, %v5527
        %v5659 = vadd.f32 %v5085, %v5530
        %v5660 = vadd.f32 %v5086, %v5532
        %v5661 = vadd.f32 %v5087, %v5535
        %v5662 = vadd.f32 %v5088, %v5537
        %v5663 = vadd.f32 %v5089, %v5540
        %v5664 = vadd.f32 %v5090, %v5542
        %v5665 = vadd.f32 %v5091, %v5545
        %v5666 = vadd.f32 %v5092, %v5547
        %v5667 = vadd.f32 %v5093, %v5550
        %v5668 = vadd.f32 %v5094, %v5552
        %v5669 = vadd.f32 %v5095, %v5555
        %v5670 = vadd.f32 %v5096, %v5557
        %v5671 = vadd.f32 %v5097, %v5560
        %v5672 = vadd.f32 %v5098, %v5562
        %v5673 = vadd.f32 %v5099, %v5565
        %v5674 = vadd.f32 %v5100, %v5567
        %v5675 = vadd.f32 %v5101, %v5570
        %v5676 = vadd.f32 %v5102, %v5572
        %v5677 = vadd.f32 %v5103, %v5575
        %v5678 = vadd.f32 %v5104, %v5577
        %v5679 = vadd.f32 %v5105, %v5580
        %v5680 = vadd.f32 %v5106, %v5582
        %v5681 = vadd.f32 %v5107, %v5585
        %v5682 = vadd.f32 %v5108, %v5587
        %v5683 = vadd.f32 %v5109, %v5590
        %v5684 = vadd.f32 %v5110, %v5592
        %v5685 = vadd.f32 %v5111, %v5595
        %v5686 = vadd.f32 %v5112, %v5597
        %v5687 = vadd.f32 %v5113, %v5600
        %v5688 = vadd.f32 %v5114, %v5602
        %v5689 = vadd.f32 %v5115, %v5605
        %v5690 = vadd.f32 %v5116, %v5607
        %v5691 = vadd.f32 %v5117, %v5610
        %v5692 = vadd.f32 %v5118, %v5612
        %v5693 = vadd.f32 %v5119, %v5615
        %v5694 = vadd.f32 %v5120, %v5617
        %v5695 = vadd.f32 %v5121, %v5620
        %v5696 = vadd.f32 %v5122, %v5622
        %v5697 = vadd.f32 %v5123, %v5625
        %v5698 = vadd.f32 %v5124, %v5627
        %v5699 = vadd.f32 %v5125, %v5630
        %v5700 = vadd.f32 %v5126, %v5632
        %v5701 = vadd.f32 %v5127, %v5635
        %v5702 = vadd.f32 %v5128, %v5637
        %v5703 = vld [vmem:[%s5132] sm:$0xf]
        %v5704 = vld [vmem:[%s5132 + $0x4] sm:$0xf]
        %v5705 = vld [vmem:[%s5132 + $0x8] sm:$0xf]
        %v5706 = vld [vmem:[%s5132 + $0xc] sm:$0xf]
        %v5707 = vld [vmem:[%s5132 + $0x10] sm:$0x1]
        %v5708 = vld [vmem:[%s5132 + $0x14] sm:$0xf]
        %v5709 = vld [vmem:[%s5132 + $0x18] sm:$0xf]
        %v5710 = vld [vmem:[%s5132 + $0x1c] sm:$0xf]
        %v5711 = vld [vmem:[%s5132 + $0x20] sm:$0xf]
        %v5712 = vld [vmem:[%s5132 + $0x24] sm:$0x1]
        %v5713 = vld [vmem:[%s5132 + $0x28] sm:$0xf]
        %v5714 = vld [vmem:[%s5132 + $0x2c] sm:$0xf]
        %v5715 = vld [vmem:[%s5132 + $0x30] sm:$0xf]
        %v5716 = vld [vmem:[%s5132 + $0x34] sm:$0xf]
        %v5717 = vld [vmem:[%s5132 + $0x38] sm:$0x1]
        %v5718 = vld [vmem:[%s5132 + $0x3c] sm:$0xf]
        %v5719 = vld [vmem:[%s5132 + $0x40] sm:$0xf]
        %v5720 = vld [vmem:[%s5132 + $0x44] sm:$0xf]
        %v5721 = vld [vmem:[%s5132 + $0x48] sm:$0xf]
        %v5722 = vld [vmem:[%s5132 + $0x4c] sm:$0x1]
        %v5723 = vld [vmem:[%s5132 + $0x50] sm:$0xf]
        %v5724 = vld [vmem:[%s5132 + $0x54] sm:$0xf]
        %v5725 = vld [vmem:[%s5132 + $0x58] sm:$0xf]
        %v5726 = vld [vmem:[%s5132 + $0x5c] sm:$0xf]
        %v5727 = vld [vmem:[%s5132 + $0x60] sm:$0x1]
        %v5728 = vld [vmem:[%s5132 + $0x64] sm:$0xf]
        %v5729 = vld [vmem:[%s5132 + $0x68] sm:$0xf]
        %v5730 = vld [vmem:[%s5132 + $0x6c] sm:$0xf]
        %v5731 = vld [vmem:[%s5132 + $0x70] sm:$0xf]
        %v5732 = vld [vmem:[%s5132 + $0x74] sm:$0x1]
        %v5733 = vld [vmem:[%s5132 + $0x78] sm:$0xf]
        %v5734 = vld [vmem:[%s5132 + $0x7c] sm:$0xf]
        %v5735 = vld [vmem:[%s5132 + $0x80] sm:$0xf]
        %v5736 = vld [vmem:[%s5132 + $0x84] sm:$0xf]
        %v5737 = vld [vmem:[%s5132 + $0x88] sm:$0x1]
        %v5738 = vld [vmem:[%s5132 + $0x8c] sm:$0xf]
        %v5739 = vld [vmem:[%s5132 + $0x90] sm:$0xf]
        %v5740 = vld [vmem:[%s5132 + $0x94] sm:$0xf]
        %v5741 = vld [vmem:[%s5132 + $0x98] sm:$0xf]
        %v5742 = vld [vmem:[%s5132 + $0x9c] sm:$0x1]
        %v5743 = vld [vmem:[%s5132 + $0xa0] sm:$0xf]
        %v5744 = vld [vmem:[%s5132 + $0xa4] sm:$0xf]
        %v5745 = vld [vmem:[%s5132 + $0xa8] sm:$0xf]
        %v5746 = vld [vmem:[%s5132 + $0xac] sm:$0xf]
        %v5747 = vld [vmem:[%s5132 + $0xb0] sm:$0x1]
        %v5748 = vld [vmem:[%s5132 + $0xb4] sm:$0xf]
        %v5749 = vld [vmem:[%s5132 + $0xb8] sm:$0xf]
        %v5750 = vld [vmem:[%s5132 + $0xbc] sm:$0xf]
        %v5751 = vld [vmem:[%s5132 + $0xc0] sm:$0xf]
        %v5752 = vld [vmem:[%s5132 + $0xc4] sm:$0x1]
        %v5753 = vld [vmem:[%s5132 + $0xc8] sm:$0xf]
        %v5754 = vld [vmem:[%s5132 + $0xcc] sm:$0xf]
        %v5755 = vld [vmem:[%s5132 + $0xd0] sm:$0xf]
        %v5756 = vld [vmem:[%s5132 + $0xd4] sm:$0xf]
        %v5757 = vld [vmem:[%s5132 + $0xd8] sm:$0x1]
        %v5758 = vld [vmem:[%s5132 + $0xdc] sm:$0xf]
        %v5759 = vld [vmem:[%s5132 + $0xe0] sm:$0xf]
        %v5760 = vld [vmem:[%s5132 + $0xe4] sm:$0xf]
        %v5761 = vld [vmem:[%s5132 + $0xe8] sm:$0xf]
        %v5762 = vld [vmem:[%s5132 + $0xec] sm:$0x1]
        %v5763 = vld [vmem:[%s5132 + $0xf0] sm:$0xf]
        %v5764 = vld [vmem:[%s5132 + $0xf4] sm:$0xf]
        %v5765 = vld [vmem:[%s5132 + $0xf8] sm:$0xf]
        %v5766 = vld [vmem:[%s5132 + $0xfc] sm:$0xf]
        %v5767 = vld [vmem:[%s5132 + $0x100] sm:$0x1]
        %v5768 = vld [vmem:[%s5132 + $0x104] sm:$0xf]
        %v5769 = vld [vmem:[%s5132 + $0x108] sm:$0xf]
        %v5770 = vld [vmem:[%s5132 + $0x10c] sm:$0xf]
        %v5771 = vld [vmem:[%s5132 + $0x110] sm:$0xf]
        %v5772 = vld [vmem:[%s5132 + $0x114] sm:$0x1]
        %v5773 = vld [vmem:[%s5132 + $0x118] sm:$0xf]
        %v5774 = vld [vmem:[%s5132 + $0x11c] sm:$0xf]
        %v5775 = vld [vmem:[%s5132 + $0x120] sm:$0xf]
        %v5776 = vld [vmem:[%s5132 + $0x124] sm:$0xf]
        %v5777 = vld [vmem:[%s5132 + $0x128] sm:$0x1]
        %v5778 = vld [vmem:[%s5132 + $0x12c] sm:$0xf]
        %v5779 = vld [vmem:[%s5132 + $0x130] sm:$0xf]
        %v5780 = vld [vmem:[%s5132 + $0x134] sm:$0xf]
        %v5781 = vld [vmem:[%s5132 + $0x138] sm:$0xf]
        %v5782 = vld [vmem:[%s5132 + $0x13c] sm:$0x1]
        %v5784 = vshrl.u32 %v5703, 16
        %v5786 = vrot.slane %v5784, 4
        %v5787 = vshll.u32 %v5703, 16
        %v5789 = vrot.slane %v5787, 5
        %v5790 = vor.u32 %v5786, %v5789
        %v5791 = vrot.slane %v5790, 4
        %v5793 = vshll.u32 %v5704, 16
        %v5795 = vrot.slane %v5793, 5
        %v5796 = vsel %vm361, %v5791, %v5795
        %v5797 = vshrl.u32 %v5704, 16
        %v5799 = vrot.slane %v5797, 4
        %v5800 = vor.u32 %v5799, %v5795
        %v5801 = vrot.slane %v5800, 4
        %v5803 = vshll.u32 %v5705, 16
        %v5805 = vrot.slane %v5803, 5
        %v5806 = vsel %vm361, %v5801, %v5805
        %v5807 = vshrl.u32 %v5705, 16
        %v5809 = vrot.slane %v5807, 4
        %v5810 = vor.u32 %v5809, %v5805
        %v5811 = vrot.slane %v5810, 4
        %v5813 = vshll.u32 %v5706, 16
        %v5815 = vrot.slane %v5813, 5
        %v5816 = vsel %vm361, %v5811, %v5815
        %v5817 = vshrl.u32 %v5706, 16
        %v5819 = vrot.slane %v5817, 4
        %v5820 = vor.u32 %v5819, %v5815
        %v5821 = vrot.slane %v5820, 4
        %v5823 = vshll.u32 %v5707, 16
        %v5825 = vrot.slane %v5823, 5
        %v5826 = vsel %vm361, %v5821, %v5825
        %v5828 = vshrl.u32 %v5708, 16
        %v5830 = vrot.slane %v5828, 4
        %v5831 = vshll.u32 %v5708, 16
        %v5833 = vrot.slane %v5831, 5
        %v5834 = vor.u32 %v5830, %v5833
        %v5835 = vrot.slane %v5834, 4
        %v5837 = vshll.u32 %v5709, 16
        %v5839 = vrot.slane %v5837, 5
        %v5840 = vsel %vm361, %v5835, %v5839
        %v5841 = vshrl.u32 %v5709, 16
        %v5843 = vrot.slane %v5841, 4
        %v5844 = vor.u32 %v5843, %v5839
        %v5845 = vrot.slane %v5844, 4
        %v5847 = vshll.u32 %v5710, 16
        %v5849 = vrot.slane %v5847, 5
        %v5850 = vsel %vm361, %v5845, %v5849
        %v5851 = vshrl.u32 %v5710, 16
        %v5853 = vrot.slane %v5851, 4
        %v5854 = vor.u32 %v5853, %v5849
        %v5855 = vrot.slane %v5854, 4
        %v5857 = vshll.u32 %v5711, 16
        %v5859 = vrot.slane %v5857, 5
        %v5860 = vsel %vm361, %v5855, %v5859
        %v5861 = vshrl.u32 %v5711, 16
        %v5863 = vrot.slane %v5861, 4
        %v5864 = vor.u32 %v5863, %v5859
        %v5865 = vrot.slane %v5864, 4
        %v5867 = vshll.u32 %v5712, 16
        %v5869 = vrot.slane %v5867, 5
        %v5870 = vsel %vm361, %v5865, %v5869
        %v5872 = vshrl.u32 %v5713, 16
        %v5874 = vrot.slane %v5872, 4
        %v5875 = vshll.u32 %v5713, 16
        %v5877 = vrot.slane %v5875, 5
        %v5878 = vor.u32 %v5874, %v5877
        %v5879 = vrot.slane %v5878, 4
        %v5881 = vshll.u32 %v5714, 16
        %v5883 = vrot.slane %v5881, 5
        %v5884 = vsel %vm361, %v5879, %v5883
        %v5885 = vshrl.u32 %v5714, 16
        %v5887 = vrot.slane %v5885, 4
        %v5888 = vor.u32 %v5887, %v5883
        %v5889 = vrot.slane %v5888, 4
        %v5891 = vshll.u32 %v5715, 16
        %v5893 = vrot.slane %v5891, 5
        %v5894 = vsel %vm361, %v5889, %v5893
        %v5895 = vshrl.u32 %v5715, 16
        %v5897 = vrot.slane %v5895, 4
        %v5898 = vor.u32 %v5897, %v5893
        %v5899 = vrot.slane %v5898, 4
        %v5901 = vshll.u32 %v5716, 16
        %v5903 = vrot.slane %v5901, 5
        %v5904 = vsel %vm361, %v5899, %v5903
        %v5905 = vshrl.u32 %v5716, 16
        %v5907 = vrot.slane %v5905, 4
        %v5908 = vor.u32 %v5907, %v5903
        %v5909 = vrot.slane %v5908, 4
        %v5911 = vshll.u32 %v5717, 16
        %v5913 = vrot.slane %v5911, 5
        %v5914 = vsel %vm361, %v5909, %v5913
        %v5916 = vshrl.u32 %v5718, 16
        %v5918 = vrot.slane %v5916, 4
        %v5919 = vshll.u32 %v5718, 16
        %v5921 = vrot.slane %v5919, 5
        %v5922 = vor.u32 %v5918, %v5921
        %v5923 = vrot.slane %v5922, 4
        %v5925 = vshll.u32 %v5719, 16
        %v5927 = vrot.slane %v5925, 5
        %v5928 = vsel %vm361, %v5923, %v5927
        %v5929 = vshrl.u32 %v5719, 16
        %v5931 = vrot.slane %v5929, 4
        %v5932 = vor.u32 %v5931, %v5927
        %v5933 = vrot.slane %v5932, 4
        %v5935 = vshll.u32 %v5720, 16
        %v5937 = vrot.slane %v5935, 5
        %v5938 = vsel %vm361, %v5933, %v5937
        %v5939 = vshrl.u32 %v5720, 16
        %v5941 = vrot.slane %v5939, 4
        %v5942 = vor.u32 %v5941, %v5937
        %v5943 = vrot.slane %v5942, 4
        %v5945 = vshll.u32 %v5721, 16
        %v5947 = vrot.slane %v5945, 5
        %v5948 = vsel %vm361, %v5943, %v5947
        %v5949 = vshrl.u32 %v5721, 16
        %v5951 = vrot.slane %v5949, 4
        %v5952 = vor.u32 %v5951, %v5947
        %v5953 = vrot.slane %v5952, 4
        %v5955 = vshll.u32 %v5722, 16
        %v5957 = vrot.slane %v5955, 5
        %v5958 = vsel %vm361, %v5953, %v5957
        %v5960 = vshrl.u32 %v5723, 16
        %v5962 = vrot.slane %v5960, 4
        %v5963 = vshll.u32 %v5723, 16
        %v5965 = vrot.slane %v5963, 5
        %v5966 = vor.u32 %v5962, %v5965
        %v5967 = vrot.slane %v5966, 4
        %v5969 = vshll.u32 %v5724, 16
        %v5971 = vrot.slane %v5969, 5
        %v5972 = vsel %vm361, %v5967, %v5971
        %v5973 = vshrl.u32 %v5724, 16
        %v5975 = vrot.slane %v5973, 4
        %v5976 = vor.u32 %v5975, %v5971
        %v5977 = vrot.slane %v5976, 4
        %v5979 = vshll.u32 %v5725, 16
        %v5981 = vrot.slane %v5979, 5
        %v5982 = vsel %vm361, %v5977, %v5981
        %v5983 = vshrl.u32 %v5725, 16
        %v5985 = vrot.slane %v5983, 4
        %v5986 = vor.u32 %v5985, %v5981
        %v5987 = vrot.slane %v5986, 4
        %v5989 = vshll.u32 %v5726, 16
        %v5991 = vrot.slane %v5989, 5
        %v5992 = vsel %vm361, %v5987, %v5991
        %v5993 = vshrl.u32 %v5726, 16
        %v5995 = vrot.slane %v5993, 4
        %v5996 = vor.u32 %v5995, %v5991
        %v5997 = vrot.slane %v5996, 4
        %v5999 = vshll.u32 %v5727, 16
        %v6001 = vrot.slane %v5999, 5
        %v6002 = vsel %vm361, %v5997, %v6001
        %v6004 = vshrl.u32 %v5728, 16
        %v6006 = vrot.slane %v6004, 4
        %v6007 = vshll.u32 %v5728, 16
        %v6009 = vrot.slane %v6007, 5
        %v6010 = vor.u32 %v6006, %v6009
        %v6011 = vrot.slane %v6010, 4
        %v6013 = vshll.u32 %v5729, 16
        %v6015 = vrot.slane %v6013, 5
        %v6016 = vsel %vm361, %v6011, %v6015
        %v6017 = vshrl.u32 %v5729, 16
        %v6019 = vrot.slane %v6017, 4
        %v6020 = vor.u32 %v6019, %v6015
        %v6021 = vrot.slane %v6020, 4
        %v6023 = vshll.u32 %v5730, 16
        %v6025 = vrot.slane %v6023, 5
        %v6026 = vsel %vm361, %v6021, %v6025
        %v6027 = vshrl.u32 %v5730, 16
        %v6029 = vrot.slane %v6027, 4
        %v6030 = vor.u32 %v6029, %v6025
        %v6031 = vrot.slane %v6030, 4
        %v6033 = vshll.u32 %v5731, 16
        %v6035 = vrot.slane %v6033, 5
        %v6036 = vsel %vm361, %v6031, %v6035
        %v6037 = vshrl.u32 %v5731, 16
        %v6039 = vrot.slane %v6037, 4
        %v6040 = vor.u32 %v6039, %v6035
        %v6041 = vrot.slane %v6040, 4
        %v6043 = vshll.u32 %v5732, 16
        %v6045 = vrot.slane %v6043, 5
        %v6046 = vsel %vm361, %v6041, %v6045
        %v6048 = vshrl.u32 %v5733, 16
        %v6050 = vrot.slane %v6048, 4
        %v6051 = vshll.u32 %v5733, 16
        %v6053 = vrot.slane %v6051, 5
        %v6054 = vor.u32 %v6050, %v6053
        %v6055 = vrot.slane %v6054, 4
        %v6057 = vshll.u32 %v5734, 16
        %v6059 = vrot.slane %v6057, 5
        %v6060 = vsel %vm361, %v6055, %v6059
        %v6061 = vshrl.u32 %v5734, 16
        %v6063 = vrot.slane %v6061, 4
        %v6064 = vor.u32 %v6063, %v6059
        %v6065 = vrot.slane %v6064, 4
        %v6067 = vshll.u32 %v5735, 16
        %v6069 = vrot.slane %v6067, 5
        %v6070 = vsel %vm361, %v6065, %v6069
        %v6071 = vshrl.u32 %v5735, 16
        %v6073 = vrot.slane %v6071, 4
        %v6074 = vor.u32 %v6073, %v6069
        %v6075 = vrot.slane %v6074, 4
        %v6077 = vshll.u32 %v5736, 16
        %v6079 = vrot.slane %v6077, 5
        %v6080 = vsel %vm361, %v6075, %v6079
        %v6081 = vshrl.u32 %v5736, 16
        %v6083 = vrot.slane %v6081, 4
        %v6084 = vor.u32 %v6083, %v6079
        %v6085 = vrot.slane %v6084, 4
        %v6087 = vshll.u32 %v5737, 16
        %v6089 = vrot.slane %v6087, 5
        %v6090 = vsel %vm361, %v6085, %v6089
        %v6092 = vshrl.u32 %v5738, 16
        %v6094 = vrot.slane %v6092, 4
        %v6095 = vshll.u32 %v5738, 16
        %v6097 = vrot.slane %v6095, 5
        %v6098 = vor.u32 %v6094, %v6097
        %v6099 = vrot.slane %v6098, 4
        %v6101 = vshll.u32 %v5739, 16
        %v6103 = vrot.slane %v6101, 5
        %v6104 = vsel %vm361, %v6099, %v6103
        %v6105 = vshrl.u32 %v5739, 16
        %v6107 = vrot.slane %v6105, 4
        %v6108 = vor.u32 %v6107, %v6103
        %v6109 = vrot.slane %v6108, 4
        %v6111 = vshll.u32 %v5740, 16
        %v6113 = vrot.slane %v6111, 5
        %v6114 = vsel %vm361, %v6109, %v6113
        %v6115 = vshrl.u32 %v5740, 16
        %v6117 = vrot.slane %v6115, 4
        %v6118 = vor.u32 %v6117, %v6113
        %v6119 = vrot.slane %v6118, 4
        %v6121 = vshll.u32 %v5741, 16
        %v6123 = vrot.slane %v6121, 5
        %v6124 = vsel %vm361, %v6119, %v6123
        %v6125 = vshrl.u32 %v5741, 16
        %v6127 = vrot.slane %v6125, 4
        %v6128 = vor.u32 %v6127, %v6123
        %v6129 = vrot.slane %v6128, 4
        %v6131 = vshll.u32 %v5742, 16
        %v6133 = vrot.slane %v6131, 5
        %v6134 = vsel %vm361, %v6129, %v6133
        %v6136 = vshrl.u32 %v5743, 16
        %v6138 = vrot.slane %v6136, 4
        %v6139 = vshll.u32 %v5743, 16
        %v6141 = vrot.slane %v6139, 5
        %v6142 = vor.u32 %v6138, %v6141
        %v6143 = vrot.slane %v6142, 4
        %v6145 = vshll.u32 %v5744, 16
        %v6147 = vrot.slane %v6145, 5
        %v6148 = vsel %vm361, %v6143, %v6147
        %v6149 = vshrl.u32 %v5744, 16
        %v6151 = vrot.slane %v6149, 4
        %v6152 = vor.u32 %v6151, %v6147
        %v6153 = vrot.slane %v6152, 4
        %v6155 = vshll.u32 %v5745, 16
        %v6157 = vrot.slane %v6155, 5
        %v6158 = vsel %vm361, %v6153, %v6157
        %v6159 = vshrl.u32 %v5745, 16
        %v6161 = vrot.slane %v6159, 4
        %v6162 = vor.u32 %v6161, %v6157
        %v6163 = vrot.slane %v6162, 4
        %v6165 = vshll.u32 %v5746, 16
        %v6167 = vrot.slane %v6165, 5
        %v6168 = vsel %vm361, %v6163, %v6167
        %v6169 = vshrl.u32 %v5746, 16
        %v6171 = vrot.slane %v6169, 4
        %v6172 = vor.u32 %v6171, %v6167
        %v6173 = vrot.slane %v6172, 4
        %v6175 = vshll.u32 %v5747, 16
        %v6177 = vrot.slane %v6175, 5
        %v6178 = vsel %vm361, %v6173, %v6177
        %v6180 = vshrl.u32 %v5748, 16
        %v6182 = vrot.slane %v6180, 4
        %v6183 = vshll.u32 %v5748, 16
        %v6185 = vrot.slane %v6183, 5
        %v6186 = vor.u32 %v6182, %v6185
        %v6187 = vrot.slane %v6186, 4
        %v6189 = vshll.u32 %v5749, 16
        %v6191 = vrot.slane %v6189, 5
        %v6192 = vsel %vm361, %v6187, %v6191
        %v6193 = vshrl.u32 %v5749, 16
        %v6195 = vrot.slane %v6193, 4
        %v6196 = vor.u32 %v6195, %v6191
        %v6197 = vrot.slane %v6196, 4
        %v6199 = vshll.u32 %v5750, 16
        %v6201 = vrot.slane %v6199, 5
        %v6202 = vsel %vm361, %v6197, %v6201
        %v6203 = vshrl.u32 %v5750, 16
        %v6205 = vrot.slane %v6203, 4
        %v6206 = vor.u32 %v6205, %v6201
        %v6207 = vrot.slane %v6206, 4
        %v6209 = vshll.u32 %v5751, 16
        %v6211 = vrot.slane %v6209, 5
        %v6212 = vsel %vm361, %v6207, %v6211
        %v6213 = vshrl.u32 %v5751, 16
        %v6215 = vrot.slane %v6213, 4
        %v6216 = vor.u32 %v6215, %v6211
        %v6217 = vrot.slane %v6216, 4
        %v6219 = vshll.u32 %v5752, 16
        %v6221 = vrot.slane %v6219, 5
        %v6222 = vsel %vm361, %v6217, %v6221
        %v6224 = vshrl.u32 %v5753, 16
        %v6226 = vrot.slane %v6224, 4
        %v6227 = vshll.u32 %v5753, 16
        %v6229 = vrot.slane %v6227, 5
        %v6230 = vor.u32 %v6226, %v6229
        %v6231 = vrot.slane %v6230, 4
        %v6233 = vshll.u32 %v5754, 16
        %v6235 = vrot.slane %v6233, 5
        %v6236 = vsel %vm361, %v6231, %v6235
        %v6237 = vshrl.u32 %v5754, 16
        %v6239 = vrot.slane %v6237, 4
        %v6240 = vor.u32 %v6239, %v6235
        %v6241 = vrot.slane %v6240, 4
        %v6243 = vshll.u32 %v5755, 16
        %v6245 = vrot.slane %v6243, 5
        %v6246 = vsel %vm361, %v6241, %v6245
        %v6247 = vshrl.u32 %v5755, 16
        %v6249 = vrot.slane %v6247, 4
        %v6250 = vor.u32 %v6249, %v6245
        %v6251 = vrot.slane %v6250, 4
        %v6253 = vshll.u32 %v5756, 16
        %v6255 = vrot.slane %v6253, 5
        %v6256 = vsel %vm361, %v6251, %v6255
        %v6257 = vshrl.u32 %v5756, 16
        %v6259 = vrot.slane %v6257, 4
        %v6260 = vor.u32 %v6259, %v6255
        %v6261 = vrot.slane %v6260, 4
        %v6263 = vshll.u32 %v5757, 16
        %v6265 = vrot.slane %v6263, 5
        %v6266 = vsel %vm361, %v6261, %v6265
        %v6268 = vshrl.u32 %v5758, 16
        %v6270 = vrot.slane %v6268, 4
        %v6271 = vshll.u32 %v5758, 16
        %v6273 = vrot.slane %v6271, 5
        %v6274 = vor.u32 %v6270, %v6273
        %v6275 = vrot.slane %v6274, 4
        %v6277 = vshll.u32 %v5759, 16
        %v6279 = vrot.slane %v6277, 5
        %v6280 = vsel %vm361, %v6275, %v6279
        %v6281 = vshrl.u32 %v5759, 16
        %v6283 = vrot.slane %v6281, 4
        %v6284 = vor.u32 %v6283, %v6279
        %v6285 = vrot.slane %v6284, 4
        %v6287 = vshll.u32 %v5760, 16
        %v6289 = vrot.slane %v6287, 5
        %v6290 = vsel %vm361, %v6285, %v6289
        %v6291 = vshrl.u32 %v5760, 16
        %v6293 = vrot.slane %v6291, 4
        %v6294 = vor.u32 %v6293, %v6289
        %v6295 = vrot.slane %v6294, 4
        %v6297 = vshll.u32 %v5761, 16
        %v6299 = vrot.slane %v6297, 5
        %v6300 = vsel %vm361, %v6295, %v6299
        %v6301 = vshrl.u32 %v5761, 16
        %v6303 = vrot.slane %v6301, 4
        %v6304 = vor.u32 %v6303, %v6299
        %v6305 = vrot.slane %v6304, 4
        %v6307 = vshll.u32 %v5762, 16
        %v6309 = vrot.slane %v6307, 5
        %v6310 = vsel %vm361, %v6305, %v6309
        %v6312 = vshrl.u32 %v5763, 16
        %v6314 = vrot.slane %v6312, 4
        %v6315 = vshll.u32 %v5763, 16
        %v6317 = vrot.slane %v6315, 5
        %v6318 = vor.u32 %v6314, %v6317
        %v6319 = vrot.slane %v6318, 4
        %v6321 = vshll.u32 %v5764, 16
        %v6323 = vrot.slane %v6321, 5
        %v6324 = vsel %vm361, %v6319, %v6323
        %v6325 = vshrl.u32 %v5764, 16
        %v6327 = vrot.slane %v6325, 4
        %v6328 = vor.u32 %v6327, %v6323
        %v6329 = vrot.slane %v6328, 4
        %v6331 = vshll.u32 %v5765, 16
        %v6333 = vrot.slane %v6331, 5
        %v6334 = vsel %vm361, %v6329, %v6333
        %v6335 = vshrl.u32 %v5765, 16
        %v6337 = vrot.slane %v6335, 4
        %v6338 = vor.u32 %v6337, %v6333
        %v6339 = vrot.slane %v6338, 4
        %v6341 = vshll.u32 %v5766, 16
        %v6343 = vrot.slane %v6341, 5
        %v6344 = vsel %vm361, %v6339, %v6343
        %v6345 = vshrl.u32 %v5766, 16
        %v6347 = vrot.slane %v6345, 4
        %v6348 = vor.u32 %v6347, %v6343
        %v6349 = vrot.slane %v6348, 4
        %v6351 = vshll.u32 %v5767, 16
        %v6353 = vrot.slane %v6351, 5
        %v6354 = vsel %vm361, %v6349, %v6353
        %v6356 = vshrl.u32 %v5768, 16
        %v6358 = vrot.slane %v6356, 4
        %v6359 = vshll.u32 %v5768, 16
        %v6361 = vrot.slane %v6359, 5
        %v6362 = vor.u32 %v6358, %v6361
        %v6363 = vrot.slane %v6362, 4
        %v6365 = vshll.u32 %v5769, 16
        %v6367 = vrot.slane %v6365, 5
        %v6368 = vsel %vm361, %v6363, %v6367
        %v6369 = vshrl.u32 %v5769, 16
        %v6371 = vrot.slane %v6369, 4
        %v6372 = vor.u32 %v6371, %v6367
        %v6373 = vrot.slane %v6372, 4
        %v6375 = vshll.u32 %v5770, 16
        %v6377 = vrot.slane %v6375, 5
        %v6378 = vsel %vm361, %v6373, %v6377
        %v6379 = vshrl.u32 %v5770, 16
        %v6381 = vrot.slane %v6379, 4
        %v6382 = vor.u32 %v6381, %v6377
        %v6383 = vrot.slane %v6382, 4
        %v6385 = vshll.u32 %v5771, 16
        %v6387 = vrot.slane %v6385, 5
        %v6388 = vsel %vm361, %v6383, %v6387
        %v6389 = vshrl.u32 %v5771, 16
        %v6391 = vrot.slane %v6389, 4
        %v6392 = vor.u32 %v6391, %v6387
        %v6393 = vrot.slane %v6392, 4
        %v6395 = vshll.u32 %v5772, 16
        %v6397 = vrot.slane %v6395, 5
        %v6398 = vsel %vm361, %v6393, %v6397
        %v6400 = vshrl.u32 %v5773, 16
        %v6402 = vrot.slane %v6400, 4
        %v6403 = vshll.u32 %v5773, 16
        %v6405 = vrot.slane %v6403, 5
        %v6406 = vor.u32 %v6402, %v6405
        %v6407 = vrot.slane %v6406, 4
        %v6409 = vshll.u32 %v5774, 16
        %v6411 = vrot.slane %v6409, 5
        %v6412 = vsel %vm361, %v6407, %v6411
        %v6413 = vshrl.u32 %v5774, 16
        %v6415 = vrot.slane %v6413, 4
        %v6416 = vor.u32 %v6415, %v6411
        %v6417 = vrot.slane %v6416, 4
        %v6419 = vshll.u32 %v5775, 16
        %v6421 = vrot.slane %v6419, 5
        %v6422 = vsel %vm361, %v6417, %v6421
        %v6423 = vshrl.u32 %v5775, 16
        %v6425 = vrot.slane %v6423, 4
        %v6426 = vor.u32 %v6425, %v6421
        %v6427 = vrot.slane %v6426, 4
        %v6429 = vshll.u32 %v5776, 16
        %v6431 = vrot.slane %v6429, 5
        %v6432 = vsel %vm361, %v6427, %v6431
        %v6433 = vshrl.u32 %v5776, 16
        %v6435 = vrot.slane %v6433, 4
        %v6436 = vor.u32 %v6435, %v6431
        %v6437 = vrot.slane %v6436, 4
        %v6439 = vshll.u32 %v5777, 16
        %v6441 = vrot.slane %v6439, 5
        %v6442 = vsel %vm361, %v6437, %v6441
        %v6444 = vshrl.u32 %v5778, 16
        %v6446 = vrot.slane %v6444, 4
        %v6447 = vshll.u32 %v5778, 16
        %v6449 = vrot.slane %v6447, 5
        %v6450 = vor.u32 %v6446, %v6449
        %v6451 = vrot.slane %v6450, 4
        %v6453 = vshll.u32 %v5779, 16
        %v6455 = vrot.slane %v6453, 5
        %v6456 = vsel %vm361, %v6451, %v6455
        %v6457 = vshrl.u32 %v5779, 16
        %v6459 = vrot.slane %v6457, 4
        %v6460 = vor.u32 %v6459, %v6455
        %v6461 = vrot.slane %v6460, 4
        %v6463 = vshll.u32 %v5780, 16
        %v6465 = vrot.slane %v6463, 5
        %v6466 = vsel %vm361, %v6461, %v6465
        %v6467 = vshrl.u32 %v5780, 16
        %v6469 = vrot.slane %v6467, 4
        %v6470 = vor.u32 %v6469, %v6465
        %v6471 = vrot.slane %v6470, 4
        %v6473 = vshll.u32 %v5781, 16
        %v6475 = vrot.slane %v6473, 5
        %v6476 = vsel %vm361, %v6471, %v6475
        %v6477 = vshrl.u32 %v5781, 16
        %v6479 = vrot.slane %v6477, 4
        %v6480 = vor.u32 %v6479, %v6475
        %v6481 = vrot.slane %v6480, 4
        %v6483 = vshll.u32 %v5782, 16
        %v6485 = vrot.slane %v6483, 5
        %v6486 = vsel %vm361, %v6481, %v6485
        %s6487 = scalar_lea.vmem %s2, 112
        %v6488 = vld [vmem:[%s6487] sm:$0xf]
        %v6489 = vld [vmem:[%s6487 + $0x4] sm:$0xf]
        %v6490 = vld [vmem:[%s6487 + $0x8] sm:$0xf]
        %v6491 = vld [vmem:[%s6487 + $0xc] sm:$0xf]
        %v6492 = vunpack.c.l.b16 %v5796
        %v6493 = vunpack.c.l.b16 %v5806
        %v6494 = vunpack.c.l.b16 %v5816
        %v6495 = vunpack.c.l.b16 %v5826
        %v6496 = vunpack.c.l.b16 %v5840
        %v6497 = vunpack.c.l.b16 %v5850
        %v6498 = vunpack.c.l.b16 %v5860
        %v6499 = vunpack.c.l.b16 %v5870
        %v6500 = vunpack.c.l.b16 %v5884
        %v6501 = vunpack.c.l.b16 %v5894
        %v6502 = vunpack.c.l.b16 %v5904
        %v6503 = vunpack.c.l.b16 %v5914
        %v6504 = vunpack.c.l.b16 %v5928
        %v6505 = vunpack.c.l.b16 %v5938
        %v6506 = vunpack.c.l.b16 %v5948
        %v6507 = vunpack.c.l.b16 %v5958
        %v6508 = vunpack.c.l.b16 %v5972
        %v6509 = vunpack.c.l.b16 %v5982
        %v6510 = vunpack.c.l.b16 %v5992
        %v6511 = vunpack.c.l.b16 %v6002
        %v6512 = vunpack.c.l.b16 %v6016
        %v6513 = vunpack.c.l.b16 %v6026
        %v6514 = vunpack.c.l.b16 %v6036
        %v6515 = vunpack.c.l.b16 %v6046
        %v6516 = vunpack.c.l.b16 %v6060
        %v6517 = vunpack.c.l.b16 %v6070
        %v6518 = vunpack.c.l.b16 %v6080
        %v6519 = vunpack.c.l.b16 %v6090
        %v6520 = vunpack.c.l.b16 %v6104
        %v6521 = vunpack.c.l.b16 %v6114
        %v6522 = vunpack.c.l.b16 %v6124
        %v6523 = vunpack.c.l.b16 %v6134
        %v6524 = vunpack.c.l.b16 %v6148
        %v6525 = vunpack.c.l.b16 %v6158
        %v6526 = vunpack.c.l.b16 %v6168
        %v6527 = vunpack.c.l.b16 %v6178
        %v6528 = vunpack.c.l.b16 %v6192
        %v6529 = vunpack.c.l.b16 %v6202
        %v6530 = vunpack.c.l.b16 %v6212
        %v6531 = vunpack.c.l.b16 %v6222
        %v6532 = vunpack.c.l.b16 %v6236
        %v6533 = vunpack.c.l.b16 %v6246
        %v6534 = vunpack.c.l.b16 %v6256
        %v6535 = vunpack.c.l.b16 %v6266
        %v6536 = vunpack.c.l.b16 %v6280
        %v6537 = vunpack.c.l.b16 %v6290
        %v6538 = vunpack.c.l.b16 %v6300
        %v6539 = vunpack.c.l.b16 %v6310
        %v6540 = vunpack.c.l.b16 %v6324
        %v6541 = vunpack.c.l.b16 %v6334
        %v6542 = vunpack.c.l.b16 %v6344
        %v6543 = vunpack.c.l.b16 %v6354
        %v6544 = vunpack.c.l.b16 %v6368
        %v6545 = vunpack.c.l.b16 %v6378
        %v6546 = vunpack.c.l.b16 %v6388
        %v6547 = vunpack.c.l.b16 %v6398
        %v6548 = vunpack.c.l.b16 %v6412
        %v6549 = vunpack.c.l.b16 %v6422
        %v6550 = vunpack.c.l.b16 %v6432
        %v6551 = vunpack.c.l.b16 %v6442
        %v6552 = vunpack.c.l.b16 %v6456
        %v6553 = vunpack.c.l.b16 %v6466
        %v6554 = vunpack.c.l.b16 %v6476
        %v6555 = vunpack.c.l.b16 %v6486
        %v6556 = vpack.c.b16 %v6493, %v6492
        %v6557 = vpack.c.b16 %v6495, %v6494
        %v6558 = vpack.c.b16 %v6497, %v6496
        %v6559 = vpack.c.b16 %v6499, %v6498
        %v6560 = vpack.c.b16 %v6501, %v6500
        %v6561 = vpack.c.b16 %v6503, %v6502
        %v6562 = vpack.c.b16 %v6505, %v6504
        %v6563 = vpack.c.b16 %v6507, %v6506
        %v6564 = vpack.c.b16 %v6509, %v6508
        %v6565 = vpack.c.b16 %v6511, %v6510
        %v6566 = vpack.c.b16 %v6513, %v6512
        %v6567 = vpack.c.b16 %v6515, %v6514
        %v6568 = vpack.c.b16 %v6517, %v6516
        %v6569 = vpack.c.b16 %v6519, %v6518
        %v6570 = vpack.c.b16 %v6521, %v6520
        %v6571 = vpack.c.b16 %v6523, %v6522
        %v6572 = vpack.c.b16 %v6525, %v6524
        %v6573 = vpack.c.b16 %v6527, %v6526
        %v6574 = vpack.c.b16 %v6529, %v6528
        %v6575 = vpack.c.b16 %v6531, %v6530
        %v6576 = vpack.c.b16 %v6533, %v6532
        %v6577 = vpack.c.b16 %v6535, %v6534
        %v6578 = vpack.c.b16 %v6537, %v6536
        %v6579 = vpack.c.b16 %v6539, %v6538
        %v6580 = vpack.c.b16 %v6541, %v6540
        %v6581 = vpack.c.b16 %v6543, %v6542
        %v6582 = vpack.c.b16 %v6545, %v6544
        %v6583 = vpack.c.b16 %v6547, %v6546
        %v6584 = vpack.c.b16 %v6549, %v6548
        %v6585 = vpack.c.b16 %v6551, %v6550
        %v6586 = vpack.c.b16 %v6553, %v6552
        %v6587 = vpack.c.b16 %v6555, %v6554
        %v6592 = vunpack.c.l.b16 %v6488
        %v6593 = vunpack.c.l.b16 %v6489
        %v6594 = vunpack.c.l.b16 %v6490
        %v6595 = vunpack.c.l.b16 %v6491
        %v6596 = vpack.c.b16 %v6593, %v6592
        %v6597 = vpack.c.b16 %v6595, %v6594
        %v6601 = vsel %vm1179, %v6556, 0
        %v6604 = vsel %vm1179, %v6557, 0
        %v6607 = vsel %vm1179, %v6558, 0
        %v6610 = vsel %vm1179, %v6559, 0
        %v6613 = vsel %vm1179, %v6560, 0
        %v6616 = vsel %vm1179, %v6561, 0
        %v6619 = vsel %vm1179, %v6562, 0
        %v6622 = vsel %vm1179, %v6563, 0
        %v6625 = vsel %vm1179, %v6564, 0
        %v6628 = vsel %vm1179, %v6565, 0
        %v6631 = vsel %vm1179, %v6566, 0
        %v6634 = vsel %vm1179, %v6567, 0
        %v6637 = vsel %vm1179, %v6568, 0
        %v6640 = vsel %vm1179, %v6569, 0
        %v6643 = vsel %vm1179, %v6570, 0
        %v6646 = vsel %vm1179, %v6571, 0
        %v6649 = vsel %vm1179, %v6572, 0
        %v6652 = vsel %vm1179, %v6573, 0
        %v6655 = vsel %vm1179, %v6574, 0
        %v6658 = vsel %vm1179, %v6575, 0
        %v6661 = vsel %vm1179, %v6576, 0
        %v6664 = vsel %vm1179, %v6577, 0
        %v6667 = vsel %vm1179, %v6578, 0
        %v6670 = vsel %vm1179, %v6579, 0
        %v6673 = vsel %vm1179, %v6580, 0
        %v6676 = vsel %vm1179, %v6581, 0
        %v6679 = vsel %vm1179, %v6582, 0
        %v6682 = vsel %vm1179, %v6583, 0
        %v6685 = vsel %vm1179, %v6584, 0
        %v6688 = vsel %vm1179, %v6585, 0
        %v6691 = vsel %vm1179, %v6586, 0
        %v6694 = vsel %vm1179, %v6587, 0
        %6696 = vmatpush.bf16.msra.mxu0 0
        %6697 = vmatpush.bf16.msra.mxu0 0
        %6698 = vmatpush.bf16.msra.mxu0 0
        %6699 = vmatpush.bf16.msra.mxu0 0
        %6700 = vmatpush.bf16.msra.mxu0 0
        %6701 = vmatpush.bf16.msra.mxu0 0
        %6702 = vmatpush.bf16.msra.mxu0 %v6597
        %6703 = vmatpush.bf16.msra.mxu0 %v6596
        %6704 = vmatmul.bf16.gmra.mxu0 %v6601
        %v6705 = vpop.f32.mrf.mxu0
        %v6706 = vadd.f32 0.0, %v6705
        %v6707 = vpop.f32.mrf.mxu0
        %v6708 = vadd.f32 0.0, %v6707
        %6709 = vmatmul.bf16.gmra.mxu0 %v6604
        %v6710 = vpop.f32.mrf.mxu0
        %v6711 = vadd.f32 0.0, %v6710
        %v6712 = vpop.f32.mrf.mxu0
        %v6713 = vadd.f32 0.0, %v6712
        %6714 = vmatmul.bf16.gmra.mxu0 %v6607
        %v6715 = vpop.f32.mrf.mxu0
        %v6716 = vadd.f32 0.0, %v6715
        %v6717 = vpop.f32.mrf.mxu0
        %v6718 = vadd.f32 0.0, %v6717
        %6719 = vmatmul.bf16.gmra.mxu0 %v6610
        %v6720 = vpop.f32.mrf.mxu0
        %v6721 = vadd.f32 0.0, %v6720
        %v6722 = vpop.f32.mrf.mxu0
        %v6723 = vadd.f32 0.0, %v6722
        %6724 = vmatmul.bf16.gmra.mxu0 %v6613
        %v6725 = vpop.f32.mrf.mxu0
        %v6726 = vadd.f32 0.0, %v6725
        %v6727 = vpop.f32.mrf.mxu0
        %v6728 = vadd.f32 0.0, %v6727
        %6729 = vmatmul.bf16.gmra.mxu0 %v6616
        %v6730 = vpop.f32.mrf.mxu0
        %v6731 = vadd.f32 0.0, %v6730
        %v6732 = vpop.f32.mrf.mxu0
        %v6733 = vadd.f32 0.0, %v6732
        %6734 = vmatmul.bf16.gmra.mxu0 %v6619
        %v6735 = vpop.f32.mrf.mxu0
        %v6736 = vadd.f32 0.0, %v6735
        %v6737 = vpop.f32.mrf.mxu0
        %v6738 = vadd.f32 0.0, %v6737
        %6739 = vmatmul.bf16.gmra.mxu0 %v6622
        %v6740 = vpop.f32.mrf.mxu0
        %v6741 = vadd.f32 0.0, %v6740
        %v6742 = vpop.f32.mrf.mxu0
        %v6743 = vadd.f32 0.0, %v6742
        %6744 = vmatmul.bf16.gmra.mxu0 %v6625
        %v6745 = vpop.f32.mrf.mxu0
        %v6746 = vadd.f32 0.0, %v6745
        %v6747 = vpop.f32.mrf.mxu0
        %v6748 = vadd.f32 0.0, %v6747
        %6749 = vmatmul.bf16.gmra.mxu0 %v6628
        %v6750 = vpop.f32.mrf.mxu0
        %v6751 = vadd.f32 0.0, %v6750
        %v6752 = vpop.f32.mrf.mxu0
        %v6753 = vadd.f32 0.0, %v6752
        %6754 = vmatmul.bf16.gmra.mxu0 %v6631
        %v6755 = vpop.f32.mrf.mxu0
        %v6756 = vadd.f32 0.0, %v6755
        %v6757 = vpop.f32.mrf.mxu0
        %v6758 = vadd.f32 0.0, %v6757
        %6759 = vmatmul.bf16.gmra.mxu0 %v6634
        %v6760 = vpop.f32.mrf.mxu0
        %v6761 = vadd.f32 0.0, %v6760
        %v6762 = vpop.f32.mrf.mxu0
        %v6763 = vadd.f32 0.0, %v6762
        %6764 = vmatmul.bf16.gmra.mxu0 %v6637
        %v6765 = vpop.f32.mrf.mxu0
        %v6766 = vadd.f32 0.0, %v6765
        %v6767 = vpop.f32.mrf.mxu0
        %v6768 = vadd.f32 0.0, %v6767
        %6769 = vmatmul.bf16.gmra.mxu0 %v6640
        %v6770 = vpop.f32.mrf.mxu0
        %v6771 = vadd.f32 0.0, %v6770
        %v6772 = vpop.f32.mrf.mxu0
        %v6773 = vadd.f32 0.0, %v6772
        %6774 = vmatmul.bf16.gmra.mxu0 %v6643
        %v6775 = vpop.f32.mrf.mxu0
        %v6776 = vadd.f32 0.0, %v6775
        %v6777 = vpop.f32.mrf.mxu0
        %v6778 = vadd.f32 0.0, %v6777
        %6779 = vmatmul.bf16.gmra.mxu0 %v6646
        %v6780 = vpop.f32.mrf.mxu0
        %v6781 = vadd.f32 0.0, %v6780
        %v6782 = vpop.f32.mrf.mxu0
        %v6783 = vadd.f32 0.0, %v6782
        %6784 = vmatmul.bf16.gmra.mxu0 %v6649
        %v6785 = vpop.f32.mrf.mxu0
        %v6786 = vadd.f32 0.0, %v6785
        %v6787 = vpop.f32.mrf.mxu0
        %v6788 = vadd.f32 0.0, %v6787
        %6789 = vmatmul.bf16.gmra.mxu0 %v6652
        %v6790 = vpop.f32.mrf.mxu0
        %v6791 = vadd.f32 0.0, %v6790
        %v6792 = vpop.f32.mrf.mxu0
        %v6793 = vadd.f32 0.0, %v6792
        %6794 = vmatmul.bf16.gmra.mxu0 %v6655
        %v6795 = vpop.f32.mrf.mxu0
        %v6796 = vadd.f32 0.0, %v6795
        %v6797 = vpop.f32.mrf.mxu0
        %v6798 = vadd.f32 0.0, %v6797
        %6799 = vmatmul.bf16.gmra.mxu0 %v6658
        %v6800 = vpop.f32.mrf.mxu0
        %v6801 = vadd.f32 0.0, %v6800
        %v6802 = vpop.f32.mrf.mxu0
        %v6803 = vadd.f32 0.0, %v6802
        %6804 = vmatmul.bf16.gmra.mxu0 %v6661
        %v6805 = vpop.f32.mrf.mxu0
        %v6806 = vadd.f32 0.0, %v6805
        %v6807 = vpop.f32.mrf.mxu0
        %v6808 = vadd.f32 0.0, %v6807
        %6809 = vmatmul.bf16.gmra.mxu0 %v6664
        %v6810 = vpop.f32.mrf.mxu0
        %v6811 = vadd.f32 0.0, %v6810
        %v6812 = vpop.f32.mrf.mxu0
        %v6813 = vadd.f32 0.0, %v6812
        %6814 = vmatmul.bf16.gmra.mxu0 %v6667
        %v6815 = vpop.f32.mrf.mxu0
        %v6816 = vadd.f32 0.0, %v6815
        %v6817 = vpop.f32.mrf.mxu0
        %v6818 = vadd.f32 0.0, %v6817
        %6819 = vmatmul.bf16.gmra.mxu0 %v6670
        %v6820 = vpop.f32.mrf.mxu0
        %v6821 = vadd.f32 0.0, %v6820
        %v6822 = vpop.f32.mrf.mxu0
        %v6823 = vadd.f32 0.0, %v6822
        %6824 = vmatmul.bf16.gmra.mxu0 %v6673
        %v6825 = vpop.f32.mrf.mxu0
        %v6826 = vadd.f32 0.0, %v6825
        %v6827 = vpop.f32.mrf.mxu0
        %v6828 = vadd.f32 0.0, %v6827
        %6829 = vmatmul.bf16.gmra.mxu0 %v6676
        %v6830 = vpop.f32.mrf.mxu0
        %v6831 = vadd.f32 0.0, %v6830
        %v6832 = vpop.f32.mrf.mxu0
        %v6833 = vadd.f32 0.0, %v6832
        %6834 = vmatmul.bf16.gmra.mxu0 %v6679
        %v6835 = vpop.f32.mrf.mxu0
        %v6836 = vadd.f32 0.0, %v6835
        %v6837 = vpop.f32.mrf.mxu0
        %v6838 = vadd.f32 0.0, %v6837
        %6839 = vmatmul.bf16.gmra.mxu0 %v6682
        %v6840 = vpop.f32.mrf.mxu0
        %v6841 = vadd.f32 0.0, %v6840
        %v6842 = vpop.f32.mrf.mxu0
        %v6843 = vadd.f32 0.0, %v6842
        %6844 = vmatmul.bf16.gmra.mxu0 %v6685
        %v6845 = vpop.f32.mrf.mxu0
        %v6846 = vadd.f32 0.0, %v6845
        %v6847 = vpop.f32.mrf.mxu0
        %v6848 = vadd.f32 0.0, %v6847
        %6849 = vmatmul.bf16.gmra.mxu0 %v6688
        %v6850 = vpop.f32.mrf.mxu0
        %v6851 = vadd.f32 0.0, %v6850
        %v6852 = vpop.f32.mrf.mxu0
        %v6853 = vadd.f32 0.0, %v6852
        %6854 = vmatmul.bf16.gmra.mxu0 %v6691
        %v6855 = vpop.f32.mrf.mxu0
        %v6856 = vadd.f32 0.0, %v6855
        %v6857 = vpop.f32.mrf.mxu0
        %v6858 = vadd.f32 0.0, %v6857
        %6859 = vmatmul.bf16.gmra.mxu0 %v6694
        %v6860 = vpop.f32.mrf.mxu0
        %v6861 = vadd.f32 0.0, %v6860
        %v6862 = vpop.f32.mrf.mxu0
        %v6863 = vadd.f32 0.0, %v6862
        %6864 = vdwg.mxu0
        %v6865 = vadd.f32 %v5639, %v6706
        %v6866 = vadd.f32 %v5640, %v6708
        %v6867 = vadd.f32 %v5641, %v6711
        %v6868 = vadd.f32 %v5642, %v6713
        %v6869 = vadd.f32 %v5643, %v6716
        %v6870 = vadd.f32 %v5644, %v6718
        %v6871 = vadd.f32 %v5645, %v6721
        %v6872 = vadd.f32 %v5646, %v6723
        %v6873 = vadd.f32 %v5647, %v6726
        %v6874 = vadd.f32 %v5648, %v6728
        %v6875 = vadd.f32 %v5649, %v6731
        %v6876 = vadd.f32 %v5650, %v6733
        %v6877 = vadd.f32 %v5651, %v6736
        %v6878 = vadd.f32 %v5652, %v6738
        %v6879 = vadd.f32 %v5653, %v6741
        %v6880 = vadd.f32 %v5654, %v6743
        %v6881 = vadd.f32 %v5655, %v6746
        %v6882 = vadd.f32 %v5656, %v6748
        %v6883 = vadd.f32 %v5657, %v6751
        %v6884 = vadd.f32 %v5658, %v6753
        %v6885 = vadd.f32 %v5659, %v6756
        %v6886 = vadd.f32 %v5660, %v6758
        %v6887 = vadd.f32 %v5661, %v6761
        %v6888 = vadd.f32 %v5662, %v6763
        %v6889 = vadd.f32 %v5663, %v6766
        %v6890 = vadd.f32 %v5664, %v6768
        %v6891 = vadd.f32 %v5665, %v6771
        %v6892 = vadd.f32 %v5666, %v6773
        %v6893 = vadd.f32 %v5667, %v6776
        %v6894 = vadd.f32 %v5668, %v6778
        %v6895 = vadd.f32 %v5669, %v6781
        %v6896 = vadd.f32 %v5670, %v6783
        %v6897 = vadd.f32 %v5671, %v6786
        %v6898 = vadd.f32 %v5672, %v6788
        %v6899 = vadd.f32 %v5673, %v6791
        %v6900 = vadd.f32 %v5674, %v6793
        %v6901 = vadd.f32 %v5675, %v6796
        %v6902 = vadd.f32 %v5676, %v6798
        %v6903 = vadd.f32 %v5677, %v6801
        %v6904 = vadd.f32 %v5678, %v6803
        %v6905 = vadd.f32 %v5679, %v6806
        %v6906 = vadd.f32 %v5680, %v6808
        %v6907 = vadd.f32 %v5681, %v6811
        %v6908 = vadd.f32 %v5682, %v6813
        %v6909 = vadd.f32 %v5683, %v6816
        %v6910 = vadd.f32 %v5684, %v6818
        %v6911 = vadd.f32 %v5685, %v6821
        %v6912 = vadd.f32 %v5686, %v6823
        %v6913 = vadd.f32 %v5687, %v6826
        %v6914 = vadd.f32 %v5688, %v6828
        %v6915 = vadd.f32 %v5689, %v6831
        %v6916 = vadd.f32 %v5690, %v6833
        %v6917 = vadd.f32 %v5691, %v6836
        %v6918 = vadd.f32 %v5692, %v6838
        %v6919 = vadd.f32 %v5693, %v6841
        %v6920 = vadd.f32 %v5694, %v6843
        %v6921 = vadd.f32 %v5695, %v6846
        %v6922 = vadd.f32 %v5696, %v6848
        %v6923 = vadd.f32 %v5697, %v6851
        %v6924 = vadd.f32 %v5698, %v6853
        %v6925 = vadd.f32 %v5699, %v6856
        %v6926 = vadd.f32 %v5700, %v6858
        %v6927 = vadd.f32 %v5701, %v6861
        %v6928 = vadd.f32 %v5702, %v6863
        %v6929 = vld [vmem:[%s5132] sm:$0xe]
        %v6930 = vld [vmem:[%s5132 + $0x14] sm:$0xe]
        %v6931 = vld [vmem:[%s5132 + $0x28] sm:$0xe]
        %v6932 = vld [vmem:[%s5132 + $0x3c] sm:$0xe]
        %v6933 = vld [vmem:[%s5132 + $0x50] sm:$0xe]
        %v6934 = vld [vmem:[%s5132 + $0x64] sm:$0xe]
        %v6935 = vld [vmem:[%s5132 + $0x78] sm:$0xe]
        %v6936 = vld [vmem:[%s5132 + $0x8c] sm:$0xe]
        %v6937 = vld [vmem:[%s5132 + $0xa0] sm:$0xe]
        %v6938 = vld [vmem:[%s5132 + $0xb4] sm:$0xe]
        %v6939 = vld [vmem:[%s5132 + $0xc8] sm:$0xe]
        %v6940 = vld [vmem:[%s5132 + $0xdc] sm:$0xe]
        %v6941 = vld [vmem:[%s5132 + $0xf0] sm:$0xe]
        %v6942 = vld [vmem:[%s5132 + $0x104] sm:$0xe]
        %v6943 = vld [vmem:[%s5132 + $0x118] sm:$0xe]
        %v6944 = vld [vmem:[%s5132 + $0x12c] sm:$0xe]
        %v7025 = vrot.slane %v6929, 5
        %v7026 = vrot.slane %v7025, 4
        %v7027 = vrot.slane %v5704, 5
        %v7028 = vsel %vm1932, %v7026, %v7027
        %v7029 = vrot.slane %v7027, 4
        %v7030 = vrot.slane %v5705, 5
        %v7031 = vsel %vm1932, %v7029, %v7030
        %v7032 = vrot.slane %v7030, 4
        %v7033 = vrot.slane %v5706, 5
        %v7034 = vsel %vm1932, %v7032, %v7033
        %v7035 = vrot.slane %v7033, 4
        %v7036 = vrot.slane %v5707, 5
        %v7037 = vsel %vm1932, %v7035, %v7036
        %v7038 = vrot.slane %v6930, 5
        %v7039 = vrot.slane %v7038, 4
        %v7040 = vrot.slane %v5709, 5
        %v7041 = vsel %vm1932, %v7039, %v7040
        %v7042 = vrot.slane %v7040, 4
        %v7043 = vrot.slane %v5710, 5
        %v7044 = vsel %vm1932, %v7042, %v7043
        %v7045 = vrot.slane %v7043, 4
        %v7046 = vrot.slane %v5711, 5
        %v7047 = vsel %vm1932, %v7045, %v7046
        %v7048 = vrot.slane %v7046, 4
        %v7049 = vrot.slane %v5712, 5
        %v7050 = vsel %vm1932, %v7048, %v7049
        %v7051 = vrot.slane %v6931, 5
        %v7052 = vrot.slane %v7051, 4
        %v7053 = vrot.slane %v5714, 5
        %v7054 = vsel %vm1932, %v7052, %v7053
        %v7055 = vrot.slane %v7053, 4
        %v7056 = vrot.slane %v5715, 5
        %v7057 = vsel %vm1932, %v7055, %v7056
        %v7058 = vrot.slane %v7056, 4
        %v7059 = vrot.slane %v5716, 5
        %v7060 = vsel %vm1932, %v7058, %v7059
        %v7061 = vrot.slane %v7059, 4
        %v7062 = vrot.slane %v5717, 5
        %v7063 = vsel %vm1932, %v7061, %v7062
        %v7064 = vrot.slane %v6932, 5
        %v7065 = vrot.slane %v7064, 4
        %v7066 = vrot.slane %v5719, 5
        %v7067 = vsel %vm1932, %v7065, %v7066
        %v7068 = vrot.slane %v7066, 4
        %v7069 = vrot.slane %v5720, 5
        %v7070 = vsel %vm1932, %v7068, %v7069
        %v7071 = vrot.slane %v7069, 4
        %v7072 = vrot.slane %v5721, 5
        %v7073 = vsel %vm1932, %v7071, %v7072
        %v7074 = vrot.slane %v7072, 4
        %v7075 = vrot.slane %v5722, 5
        %v7076 = vsel %vm1932, %v7074, %v7075
        %v7077 = vrot.slane %v6933, 5
        %v7078 = vrot.slane %v7077, 4
        %v7079 = vrot.slane %v5724, 5
        %v7080 = vsel %vm1932, %v7078, %v7079
        %v7081 = vrot.slane %v7079, 4
        %v7082 = vrot.slane %v5725, 5
        %v7083 = vsel %vm1932, %v7081, %v7082
        %v7084 = vrot.slane %v7082, 4
        %v7085 = vrot.slane %v5726, 5
        %v7086 = vsel %vm1932, %v7084, %v7085
        %v7087 = vrot.slane %v7085, 4
        %v7088 = vrot.slane %v5727, 5
        %v7089 = vsel %vm1932, %v7087, %v7088
        %v7090 = vrot.slane %v6934, 5
        %v7091 = vrot.slane %v7090, 4
        %v7092 = vrot.slane %v5729, 5
        %v7093 = vsel %vm1932, %v7091, %v7092
        %v7094 = vrot.slane %v7092, 4
        %v7095 = vrot.slane %v5730, 5
        %v7096 = vsel %vm1932, %v7094, %v7095
        %v7097 = vrot.slane %v7095, 4
        %v7098 = vrot.slane %v5731, 5
        %v7099 = vsel %vm1932, %v7097, %v7098
        %v7100 = vrot.slane %v7098, 4
        %v7101 = vrot.slane %v5732, 5
        %v7102 = vsel %vm1932, %v7100, %v7101
        %v7103 = vrot.slane %v6935, 5
        %v7104 = vrot.slane %v7103, 4
        %v7105 = vrot.slane %v5734, 5
        %v7106 = vsel %vm1932, %v7104, %v7105
        %v7107 = vrot.slane %v7105, 4
        %v7108 = vrot.slane %v5735, 5
        %v7109 = vsel %vm1932, %v7107, %v7108
        %v7110 = vrot.slane %v7108, 4
        %v7111 = vrot.slane %v5736, 5
        %v7112 = vsel %vm1932, %v7110, %v7111
        %v7113 = vrot.slane %v7111, 4
        %v7114 = vrot.slane %v5737, 5
        %v7115 = vsel %vm1932, %v7113, %v7114
        %v7116 = vrot.slane %v6936, 5
        %v7117 = vrot.slane %v7116, 4
        %v7118 = vrot.slane %v5739, 5
        %v7119 = vsel %vm1932, %v7117, %v7118
        %v7120 = vrot.slane %v7118, 4
        %v7121 = vrot.slane %v5740, 5
        %v7122 = vsel %vm1932, %v7120, %v7121
        %v7123 = vrot.slane %v7121, 4
        %v7124 = vrot.slane %v5741, 5
        %v7125 = vsel %vm1932, %v7123, %v7124
        %v7126 = vrot.slane %v7124, 4
        %v7127 = vrot.slane %v5742, 5
        %v7128 = vsel %vm1932, %v7126, %v7127
        %v7129 = vrot.slane %v6937, 5
        %v7130 = vrot.slane %v7129, 4
        %v7131 = vrot.slane %v5744, 5
        %v7132 = vsel %vm1932, %v7130, %v7131
        %v7133 = vrot.slane %v7131, 4
        %v7134 = vrot.slane %v5745, 5
        %v7135 = vsel %vm1932, %v7133, %v7134
        %v7136 = vrot.slane %v7134, 4
        %v7137 = vrot.slane %v5746, 5
        %v7138 = vsel %vm1932, %v7136, %v7137
        %v7139 = vrot.slane %v7137, 4
        %v7140 = vrot.slane %v5747, 5
        %v7141 = vsel %vm1932, %v7139, %v7140
        %v7142 = vrot.slane %v6938, 5
        %v7143 = vrot.slane %v7142, 4
        %v7144 = vrot.slane %v5749, 5
        %v7145 = vsel %vm1932, %v7143, %v7144
        %v7146 = vrot.slane %v7144, 4
        %v7147 = vrot.slane %v5750, 5
        %v7148 = vsel %vm1932, %v7146, %v7147
        %v7149 = vrot.slane %v7147, 4
        %v7150 = vrot.slane %v5751, 5
        %v7151 = vsel %vm1932, %v7149, %v7150
        %v7152 = vrot.slane %v7150, 4
        %v7153 = vrot.slane %v5752, 5
        %v7154 = vsel %vm1932, %v7152, %v7153
        %v7155 = vrot.slane %v6939, 5
        %v7156 = vrot.slane %v7155, 4
        %v7157 = vrot.slane %v5754, 5
        %v7158 = vsel %vm1932, %v7156, %v7157
        %v7159 = vrot.slane %v7157, 4
        %v7160 = vrot.slane %v5755, 5
        %v7161 = vsel %vm1932, %v7159, %v7160
        %v7162 = vrot.slane %v7160, 4
        %v7163 = vrot.slane %v5756, 5
        %v7164 = vsel %vm1932, %v7162, %v7163
        %v7165 = vrot.slane %v7163, 4
        %v7166 = vrot.slane %v5757, 5
        %v7167 = vsel %vm1932, %v7165, %v7166
        %v7168 = vrot.slane %v6940, 5
        %v7169 = vrot.slane %v7168, 4
        %v7170 = vrot.slane %v5759, 5
        %v7171 = vsel %vm1932, %v7169, %v7170
        %v7172 = vrot.slane %v7170, 4
        %v7173 = vrot.slane %v5760, 5
        %v7174 = vsel %vm1932, %v7172, %v7173
        %v7175 = vrot.slane %v7173, 4
        %v7176 = vrot.slane %v5761, 5
        %v7177 = vsel %vm1932, %v7175, %v7176
        %v7178 = vrot.slane %v7176, 4
        %v7179 = vrot.slane %v5762, 5
        %v7180 = vsel %vm1932, %v7178, %v7179
        %v7181 = vrot.slane %v6941, 5
        %v7182 = vrot.slane %v7181, 4
        %v7183 = vrot.slane %v5764, 5
        %v7184 = vsel %vm1932, %v7182, %v7183
        %v7185 = vrot.slane %v7183, 4
        %v7186 = vrot.slane %v5765, 5
        %v7187 = vsel %vm1932, %v7185, %v7186
        %v7188 = vrot.slane %v7186, 4
        %v7189 = vrot.slane %v5766, 5
        %v7190 = vsel %vm1932, %v7188, %v7189
        %v7191 = vrot.slane %v7189, 4
        %v7192 = vrot.slane %v5767, 5
        %v7193 = vsel %vm1932, %v7191, %v7192
        %v7194 = vrot.slane %v6942, 5
        %v7195 = vrot.slane %v7194, 4
        %v7196 = vrot.slane %v5769, 5
        %v7197 = vsel %vm1932, %v7195, %v7196
        %v7198 = vrot.slane %v7196, 4
        %v7199 = vrot.slane %v5770, 5
        %v7200 = vsel %vm1932, %v7198, %v7199
        %v7201 = vrot.slane %v7199, 4
        %v7202 = vrot.slane %v5771, 5
        %v7203 = vsel %vm1932, %v7201, %v7202
        %v7204 = vrot.slane %v7202, 4
        %v7205 = vrot.slane %v5772, 5
        %v7206 = vsel %vm1932, %v7204, %v7205
        %v7207 = vrot.slane %v6943, 5
        %v7208 = vrot.slane %v7207, 4
        %v7209 = vrot.slane %v5774, 5
        %v7210 = vsel %vm1932, %v7208, %v7209
        %v7211 = vrot.slane %v7209, 4
        %v7212 = vrot.slane %v5775, 5
        %v7213 = vsel %vm1932, %v7211, %v7212
        %v7214 = vrot.slane %v7212, 4
        %v7215 = vrot.slane %v5776, 5
        %v7216 = vsel %vm1932, %v7214, %v7215
        %v7217 = vrot.slane %v7215, 4
        %v7218 = vrot.slane %v5777, 5
        %v7219 = vsel %vm1932, %v7217, %v7218
        %v7220 = vrot.slane %v6944, 5
        %v7221 = vrot.slane %v7220, 4
        %v7222 = vrot.slane %v5779, 5
        %v7223 = vsel %vm1932, %v7221, %v7222
        %v7224 = vrot.slane %v7222, 4
        %v7225 = vrot.slane %v5780, 5
        %v7226 = vsel %vm1932, %v7224, %v7225
        %v7227 = vrot.slane %v7225, 4
        %v7228 = vrot.slane %v5781, 5
        %v7229 = vsel %vm1932, %v7227, %v7228
        %v7230 = vrot.slane %v7228, 4
        %v7231 = vrot.slane %v5782, 5
        %v7232 = vsel %vm1932, %v7230, %v7231
        %s7233 = scalar_lea.vmem %s2, 128
        %v7234 = vld [vmem:[%s7233] sm:$0xf]
        %v7235 = vld [vmem:[%s7233 + $0x4] sm:$0xf]
        %v7236 = vld [vmem:[%s7233 + $0x8] sm:$0xf]
        %v7237 = vld [vmem:[%s7233 + $0xc] sm:$0xf]
        %v7238 = vunpack.c.l.b16 %v7028
        %v7239 = vunpack.c.l.b16 %v7031
        %v7240 = vunpack.c.l.b16 %v7034
        %v7241 = vunpack.c.l.b16 %v7037
        %v7242 = vunpack.c.l.b16 %v7041
        %v7243 = vunpack.c.l.b16 %v7044
        %v7244 = vunpack.c.l.b16 %v7047
        %v7245 = vunpack.c.l.b16 %v7050
        %v7246 = vunpack.c.l.b16 %v7054
        %v7247 = vunpack.c.l.b16 %v7057
        %v7248 = vunpack.c.l.b16 %v7060
        %v7249 = vunpack.c.l.b16 %v7063
        %v7250 = vunpack.c.l.b16 %v7067
        %v7251 = vunpack.c.l.b16 %v7070
        %v7252 = vunpack.c.l.b16 %v7073
        %v7253 = vunpack.c.l.b16 %v7076
        %v7254 = vunpack.c.l.b16 %v7080
        %v7255 = vunpack.c.l.b16 %v7083
        %v7256 = vunpack.c.l.b16 %v7086
        %v7257 = vunpack.c.l.b16 %v7089
        %v7258 = vunpack.c.l.b16 %v7093
        %v7259 = vunpack.c.l.b16 %v7096
        %v7260 = vunpack.c.l.b16 %v7099
        %v7261 = vunpack.c.l.b16 %v7102
        %v7262 = vunpack.c.l.b16 %v7106
        %v7263 = vunpack.c.l.b16 %v7109
        %v7264 = vunpack.c.l.b16 %v7112
        %v7265 = vunpack.c.l.b16 %v7115
        %v7266 = vunpack.c.l.b16 %v7119
        %v7267 = vunpack.c.l.b16 %v7122
        %v7268 = vunpack.c.l.b16 %v7125
        %v7269 = vunpack.c.l.b16 %v7128
        %v7270 = vunpack.c.l.b16 %v7132
        %v7271 = vunpack.c.l.b16 %v7135
        %v7272 = vunpack.c.l.b16 %v7138
        %v7273 = vunpack.c.l.b16 %v7141
        %v7274 = vunpack.c.l.b16 %v7145
        %v7275 = vunpack.c.l.b16 %v7148
        %v7276 = vunpack.c.l.b16 %v7151
        %v7277 = vunpack.c.l.b16 %v7154
        %v7278 = vunpack.c.l.b16 %v7158
        %v7279 = vunpack.c.l.b16 %v7161
        %v7280 = vunpack.c.l.b16 %v7164
        %v7281 = vunpack.c.l.b16 %v7167
        %v7282 = vunpack.c.l.b16 %v7171
        %v7283 = vunpack.c.l.b16 %v7174
        %v7284 = vunpack.c.l.b16 %v7177
        %v7285 = vunpack.c.l.b16 %v7180
        %v7286 = vunpack.c.l.b16 %v7184
        %v7287 = vunpack.c.l.b16 %v7187
        %v7288 = vunpack.c.l.b16 %v7190
        %v7289 = vunpack.c.l.b16 %v7193
        %v7290 = vunpack.c.l.b16 %v7197
        %v7291 = vunpack.c.l.b16 %v7200
        %v7292 = vunpack.c.l.b16 %v7203
        %v7293 = vunpack.c.l.b16 %v7206
        %v7294 = vunpack.c.l.b16 %v7210
        %v7295 = vunpack.c.l.b16 %v7213
        %v7296 = vunpack.c.l.b16 %v7216
        %v7297 = vunpack.c.l.b16 %v7219
        %v7298 = vunpack.c.l.b16 %v7223
        %v7299 = vunpack.c.l.b16 %v7226
        %v7300 = vunpack.c.l.b16 %v7229
        %v7301 = vunpack.c.l.b16 %v7232
        %v7302 = vpack.c.b16 %v7239, %v7238
        %v7303 = vpack.c.b16 %v7241, %v7240
        %v7304 = vpack.c.b16 %v7243, %v7242
        %v7305 = vpack.c.b16 %v7245, %v7244
        %v7306 = vpack.c.b16 %v7247, %v7246
        %v7307 = vpack.c.b16 %v7249, %v7248
        %v7308 = vpack.c.b16 %v7251, %v7250
        %v7309 = vpack.c.b16 %v7253, %v7252
        %v7310 = vpack.c.b16 %v7255, %v7254
        %v7311 = vpack.c.b16 %v7257, %v7256
        %v7312 = vpack.c.b16 %v7259, %v7258
        %v7313 = vpack.c.b16 %v7261, %v7260
        %v7314 = vpack.c.b16 %v7263, %v7262
        %v7315 = vpack.c.b16 %v7265, %v7264
        %v7316 = vpack.c.b16 %v7267, %v7266
        %v7317 = vpack.c.b16 %v7269, %v7268
        %v7318 = vpack.c.b16 %v7271, %v7270
        %v7319 = vpack.c.b16 %v7273, %v7272
        %v7320 = vpack.c.b16 %v7275, %v7274
        %v7321 = vpack.c.b16 %v7277, %v7276
        %v7322 = vpack.c.b16 %v7279, %v7278
        %v7323 = vpack.c.b16 %v7281, %v7280
        %v7324 = vpack.c.b16 %v7283, %v7282
        %v7325 = vpack.c.b16 %v7285, %v7284
        %v7326 = vpack.c.b16 %v7287, %v7286
        %v7327 = vpack.c.b16 %v7289, %v7288
        %v7328 = vpack.c.b16 %v7291, %v7290
        %v7329 = vpack.c.b16 %v7293, %v7292
        %v7330 = vpack.c.b16 %v7295, %v7294
        %v7331 = vpack.c.b16 %v7297, %v7296
        %v7332 = vpack.c.b16 %v7299, %v7298
        %v7333 = vpack.c.b16 %v7301, %v7300
        %v7338 = vunpack.c.l.b16 %v7234
        %v7339 = vunpack.c.l.b16 %v7235
        %v7340 = vunpack.c.l.b16 %v7236
        %v7341 = vunpack.c.l.b16 %v7237
        %v7342 = vpack.c.b16 %v7339, %v7338
        %v7343 = vpack.c.b16 %v7341, %v7340
        %v7347 = vsel %vm1179, %v7302, 0
        %v7350 = vsel %vm1179, %v7303, 0
        %v7353 = vsel %vm1179, %v7304, 0
        %v7356 = vsel %vm1179, %v7305, 0
        %v7359 = vsel %vm1179, %v7306, 0
        %v7362 = vsel %vm1179, %v7307, 0
        %v7365 = vsel %vm1179, %v7308, 0
        %v7368 = vsel %vm1179, %v7309, 0
        %v7371 = vsel %vm1179, %v7310, 0
        %v7374 = vsel %vm1179, %v7311, 0
        %v7377 = vsel %vm1179, %v7312, 0
        %v7380 = vsel %vm1179, %v7313, 0
        %v7383 = vsel %vm1179, %v7314, 0
        %v7386 = vsel %vm1179, %v7315, 0
        %v7389 = vsel %vm1179, %v7316, 0
        %v7392 = vsel %vm1179, %v7317, 0
        %v7395 = vsel %vm1179, %v7318, 0
        %v7398 = vsel %vm1179, %v7319, 0
        %v7401 = vsel %vm1179, %v7320, 0
        %v7404 = vsel %vm1179, %v7321, 0
        %v7407 = vsel %vm1179, %v7322, 0
        %v7410 = vsel %vm1179, %v7323, 0
        %v7413 = vsel %vm1179, %v7324, 0
        %v7416 = vsel %vm1179, %v7325, 0
        %v7419 = vsel %vm1179, %v7326, 0
        %v7422 = vsel %vm1179, %v7327, 0
        %v7425 = vsel %vm1179, %v7328, 0
        %v7428 = vsel %vm1179, %v7329, 0
        %v7431 = vsel %vm1179, %v7330, 0
        %v7434 = vsel %vm1179, %v7331, 0
        %v7437 = vsel %vm1179, %v7332, 0
        %v7440 = vsel %vm1179, %v7333, 0
        %7442 = vmatpush.bf16.msra.mxu0 0
        %7443 = vmatpush.bf16.msra.mxu0 0
        %7444 = vmatpush.bf16.msra.mxu0 0
        %7445 = vmatpush.bf16.msra.mxu0 0
        %7446 = vmatpush.bf16.msra.mxu0 0
        %7447 = vmatpush.bf16.msra.mxu0 0
        %7448 = vmatpush.bf16.msra.mxu0 %v7343
        %7449 = vmatpush.bf16.msra.mxu0 %v7342
        %7450 = vmatmul.bf16.gmra.mxu0 %v7347
        %v7451 = vpop.f32.mrf.mxu0
        %v7452 = vadd.f32 0.0, %v7451
        %v7453 = vpop.f32.mrf.mxu0
        %v7454 = vadd.f32 0.0, %v7453
        %7455 = vmatmul.bf16.gmra.mxu0 %v7350
        %v7456 = vpop.f32.mrf.mxu0
        %v7457 = vadd.f32 0.0, %v7456
        %v7458 = vpop.f32.mrf.mxu0
        %v7459 = vadd.f32 0.0, %v7458
        %7460 = vmatmul.bf16.gmra.mxu0 %v7353
        %v7461 = vpop.f32.mrf.mxu0
        %v7462 = vadd.f32 0.0, %v7461
        %v7463 = vpop.f32.mrf.mxu0
        %v7464 = vadd.f32 0.0, %v7463
        %7465 = vmatmul.bf16.gmra.mxu0 %v7356
        %v7466 = vpop.f32.mrf.mxu0
        %v7467 = vadd.f32 0.0, %v7466
        %v7468 = vpop.f32.mrf.mxu0
        %v7469 = vadd.f32 0.0, %v7468
        %7470 = vmatmul.bf16.gmra.mxu0 %v7359
        %v7471 = vpop.f32.mrf.mxu0
        %v7472 = vadd.f32 0.0, %v7471
        %v7473 = vpop.f32.mrf.mxu0
        %v7474 = vadd.f32 0.0, %v7473
        %7475 = vmatmul.bf16.gmra.mxu0 %v7362
        %v7476 = vpop.f32.mrf.mxu0
        %v7477 = vadd.f32 0.0, %v7476
        %v7478 = vpop.f32.mrf.mxu0
        %v7479 = vadd.f32 0.0, %v7478
        %7480 = vmatmul.bf16.gmra.mxu0 %v7365
        %v7481 = vpop.f32.mrf.mxu0
        %v7482 = vadd.f32 0.0, %v7481
        %v7483 = vpop.f32.mrf.mxu0
        %v7484 = vadd.f32 0.0, %v7483
        %7485 = vmatmul.bf16.gmra.mxu0 %v7368
        %v7486 = vpop.f32.mrf.mxu0
        %v7487 = vadd.f32 0.0, %v7486
        %v7488 = vpop.f32.mrf.mxu0
        %v7489 = vadd.f32 0.0, %v7488
        %7490 = vmatmul.bf16.gmra.mxu0 %v7371
        %v7491 = vpop.f32.mrf.mxu0
        %v7492 = vadd.f32 0.0, %v7491
        %v7493 = vpop.f32.mrf.mxu0
        %v7494 = vadd.f32 0.0, %v7493
        %7495 = vmatmul.bf16.gmra.mxu0 %v7374
        %v7496 = vpop.f32.mrf.mxu0
        %v7497 = vadd.f32 0.0, %v7496
        %v7498 = vpop.f32.mrf.mxu0
        %v7499 = vadd.f32 0.0, %v7498
        %7500 = vmatmul.bf16.gmra.mxu0 %v7377
        %v7501 = vpop.f32.mrf.mxu0
        %v7502 = vadd.f32 0.0, %v7501
        %v7503 = vpop.f32.mrf.mxu0
        %v7504 = vadd.f32 0.0, %v7503
        %7505 = vmatmul.bf16.gmra.mxu0 %v7380
        %v7506 = vpop.f32.mrf.mxu0
        %v7507 = vadd.f32 0.0, %v7506
        %v7508 = vpop.f32.mrf.mxu0
        %v7509 = vadd.f32 0.0, %v7508
        %7510 = vmatmul.bf16.gmra.mxu0 %v7383
        %v7511 = vpop.f32.mrf.mxu0
        %v7512 = vadd.f32 0.0, %v7511
        %v7513 = vpop.f32.mrf.mxu0
        %v7514 = vadd.f32 0.0, %v7513
        %7515 = vmatmul.bf16.gmra.mxu0 %v7386
        %v7516 = vpop.f32.mrf.mxu0
        %v7517 = vadd.f32 0.0, %v7516
        %v7518 = vpop.f32.mrf.mxu0
        %v7519 = vadd.f32 0.0, %v7518
        %7520 = vmatmul.bf16.gmra.mxu0 %v7389
        %v7521 = vpop.f32.mrf.mxu0
        %v7522 = vadd.f32 0.0, %v7521
        %v7523 = vpop.f32.mrf.mxu0
        %v7524 = vadd.f32 0.0, %v7523
        %7525 = vmatmul.bf16.gmra.mxu0 %v7392
        %v7526 = vpop.f32.mrf.mxu0
        %v7527 = vadd.f32 0.0, %v7526
        %v7528 = vpop.f32.mrf.mxu0
        %v7529 = vadd.f32 0.0, %v7528
        %7530 = vmatmul.bf16.gmra.mxu0 %v7395
        %v7531 = vpop.f32.mrf.mxu0
        %v7532 = vadd.f32 0.0, %v7531
        %v7533 = vpop.f32.mrf.mxu0
        %v7534 = vadd.f32 0.0, %v7533
        %7535 = vmatmul.bf16.gmra.mxu0 %v7398
        %v7536 = vpop.f32.mrf.mxu0
        %v7537 = vadd.f32 0.0, %v7536
        %v7538 = vpop.f32.mrf.mxu0
        %v7539 = vadd.f32 0.0, %v7538
        %7540 = vmatmul.bf16.gmra.mxu0 %v7401
        %v7541 = vpop.f32.mrf.mxu0
        %v7542 = vadd.f32 0.0, %v7541
        %v7543 = vpop.f32.mrf.mxu0
        %v7544 = vadd.f32 0.0, %v7543
        %7545 = vmatmul.bf16.gmra.mxu0 %v7404
        %v7546 = vpop.f32.mrf.mxu0
        %v7547 = vadd.f32 0.0, %v7546
        %v7548 = vpop.f32.mrf.mxu0
        %v7549 = vadd.f32 0.0, %v7548
        %7550 = vmatmul.bf16.gmra.mxu0 %v7407
        %v7551 = vpop.f32.mrf.mxu0
        %v7552 = vadd.f32 0.0, %v7551
        %v7553 = vpop.f32.mrf.mxu0
        %v7554 = vadd.f32 0.0, %v7553
        %7555 = vmatmul.bf16.gmra.mxu0 %v7410
        %v7556 = vpop.f32.mrf.mxu0
        %v7557 = vadd.f32 0.0, %v7556
        %v7558 = vpop.f32.mrf.mxu0
        %v7559 = vadd.f32 0.0, %v7558
        %7560 = vmatmul.bf16.gmra.mxu0 %v7413
        %v7561 = vpop.f32.mrf.mxu0
        %v7562 = vadd.f32 0.0, %v7561
        %v7563 = vpop.f32.mrf.mxu0
        %v7564 = vadd.f32 0.0, %v7563
        %7565 = vmatmul.bf16.gmra.mxu0 %v7416
        %v7566 = vpop.f32.mrf.mxu0
        %v7567 = vadd.f32 0.0, %v7566
        %v7568 = vpop.f32.mrf.mxu0
        %v7569 = vadd.f32 0.0, %v7568
        %7570 = vmatmul.bf16.gmra.mxu0 %v7419
        %v7571 = vpop.f32.mrf.mxu0
        %v7572 = vadd.f32 0.0, %v7571
        %v7573 = vpop.f32.mrf.mxu0
        %v7574 = vadd.f32 0.0, %v7573
        %7575 = vmatmul.bf16.gmra.mxu0 %v7422
        %v7576 = vpop.f32.mrf.mxu0
        %v7577 = vadd.f32 0.0, %v7576
        %v7578 = vpop.f32.mrf.mxu0
        %v7579 = vadd.f32 0.0, %v7578
        %7580 = vmatmul.bf16.gmra.mxu0 %v7425
        %v7581 = vpop.f32.mrf.mxu0
        %v7582 = vadd.f32 0.0, %v7581
        %v7583 = vpop.f32.mrf.mxu0
        %v7584 = vadd.f32 0.0, %v7583
        %7585 = vmatmul.bf16.gmra.mxu0 %v7428
        %v7586 = vpop.f32.mrf.mxu0
        %v7587 = vadd.f32 0.0, %v7586
        %v7588 = vpop.f32.mrf.mxu0
        %v7589 = vadd.f32 0.0, %v7588
        %7590 = vmatmul.bf16.gmra.mxu0 %v7431
        %v7591 = vpop.f32.mrf.mxu0
        %v7592 = vadd.f32 0.0, %v7591
        %v7593 = vpop.f32.mrf.mxu0
        %v7594 = vadd.f32 0.0, %v7593
        %7595 = vmatmul.bf16.gmra.mxu0 %v7434
        %v7596 = vpop.f32.mrf.mxu0
        %v7597 = vadd.f32 0.0, %v7596
        %v7598 = vpop.f32.mrf.mxu0
        %v7599 = vadd.f32 0.0, %v7598
        %7600 = vmatmul.bf16.gmra.mxu0 %v7437
        %v7601 = vpop.f32.mrf.mxu0
        %v7602 = vadd.f32 0.0, %v7601
        %v7603 = vpop.f32.mrf.mxu0
        %v7604 = vadd.f32 0.0, %v7603
        %7605 = vmatmul.bf16.gmra.mxu0 %v7440
        %v7606 = vpop.f32.mrf.mxu0
        %v7607 = vadd.f32 0.0, %v7606
        %v7608 = vpop.f32.mrf.mxu0
        %v7609 = vadd.f32 0.0, %v7608
        %7610 = vdwg.mxu0
        %v7611 = vadd.f32 %v6865, %v7452
        %v7612 = vadd.f32 %v6866, %v7454
        %v7613 = vadd.f32 %v6867, %v7457
        %v7614 = vadd.f32 %v6868, %v7459
        %v7615 = vadd.f32 %v6869, %v7462
        %v7616 = vadd.f32 %v6870, %v7464
        %v7617 = vadd.f32 %v6871, %v7467
        %v7618 = vadd.f32 %v6872, %v7469
        %v7619 = vadd.f32 %v6873, %v7472
        %v7620 = vadd.f32 %v6874, %v7474
        %v7621 = vadd.f32 %v6875, %v7477
        %v7622 = vadd.f32 %v6876, %v7479
        %v7623 = vadd.f32 %v6877, %v7482
        %v7624 = vadd.f32 %v6878, %v7484
        %v7625 = vadd.f32 %v6879, %v7487
        %v7626 = vadd.f32 %v6880, %v7489
        %v7627 = vadd.f32 %v6881, %v7492
        %v7628 = vadd.f32 %v6882, %v7494
        %v7629 = vadd.f32 %v6883, %v7497
        %v7630 = vadd.f32 %v6884, %v7499
        %v7631 = vadd.f32 %v6885, %v7502
        %v7632 = vadd.f32 %v6886, %v7504
        %v7633 = vadd.f32 %v6887, %v7507
        %v7634 = vadd.f32 %v6888, %v7509
        %v7635 = vadd.f32 %v6889, %v7512
        %v7636 = vadd.f32 %v6890, %v7514
        %v7637 = vadd.f32 %v6891, %v7517
        %v7638 = vadd.f32 %v6892, %v7519
        %v7639 = vadd.f32 %v6893, %v7522
        %v7640 = vadd.f32 %v6894, %v7524
        %v7641 = vadd.f32 %v6895, %v7527
        %v7642 = vadd.f32 %v6896, %v7529
        %v7643 = vadd.f32 %v6897, %v7532
        %v7644 = vadd.f32 %v6898, %v7534
        %v7645 = vadd.f32 %v6899, %v7537
        %v7646 = vadd.f32 %v6900, %v7539
        %v7647 = vadd.f32 %v6901, %v7542
        %v7648 = vadd.f32 %v6902, %v7544
        %v7649 = vadd.f32 %v6903, %v7547
        %v7650 = vadd.f32 %v6904, %v7549
        %v7651 = vadd.f32 %v6905, %v7552
        %v7652 = vadd.f32 %v6906, %v7554
        %v7653 = vadd.f32 %v6907, %v7557
        %v7654 = vadd.f32 %v6908, %v7559
        %v7655 = vadd.f32 %v6909, %v7562
        %v7656 = vadd.f32 %v6910, %v7564
        %v7657 = vadd.f32 %v6911, %v7567
        %v7658 = vadd.f32 %v6912, %v7569
        %v7659 = vadd.f32 %v6913, %v7572
        %v7660 = vadd.f32 %v6914, %v7574
        %v7661 = vadd.f32 %v6915, %v7577
        %v7662 = vadd.f32 %v6916, %v7579
        %v7663 = vadd.f32 %v6917, %v7582
        %v7664 = vadd.f32 %v6918, %v7584
        %v7665 = vadd.f32 %v6919, %v7587
        %v7666 = vadd.f32 %v6920, %v7589
        %v7667 = vadd.f32 %v6921, %v7592
        %v7668 = vadd.f32 %v6922, %v7594
        %v7669 = vadd.f32 %v6923, %v7597
        %v7670 = vadd.f32 %v6924, %v7599
        %v7671 = vadd.f32 %v6925, %v7602
        %v7672 = vadd.f32 %v6926, %v7604
        %v7673 = vadd.f32 %v6927, %v7607
        %v7674 = vadd.f32 %v6928, %v7609
        %v7675 = vld [vmem:[#allocation2] sm:$0x1]
        %v7677 = vperm.slane %v7675, 0
        %v7679 = vadd.f32 %v7611, %v7677
        %v7680 = vadd.f32 %v7612, %v7677
        %v7681 = vadd.f32 %v7613, %v7677
        %v7682 = vadd.f32 %v7614, %v7677
        %v7683 = vadd.f32 %v7615, %v7677
        %v7684 = vadd.f32 %v7616, %v7677
        %v7685 = vadd.f32 %v7617, %v7677
        %v7686 = vadd.f32 %v7618, %v7677
        %v7687 = vadd.f32 %v7619, %v7677
        %v7688 = vadd.f32 %v7620, %v7677
        %v7689 = vadd.f32 %v7621, %v7677
        %v7690 = vadd.f32 %v7622, %v7677
        %v7691 = vadd.f32 %v7623, %v7677
        %v7692 = vadd.f32 %v7624, %v7677
        %v7693 = vadd.f32 %v7625, %v7677
        %v7694 = vadd.f32 %v7626, %v7677
        %v7695 = vadd.f32 %v7627, %v7677
        %v7696 = vadd.f32 %v7628, %v7677
        %v7697 = vadd.f32 %v7629, %v7677
        %v7698 = vadd.f32 %v7630, %v7677
        %v7699 = vadd.f32 %v7631, %v7677
        %v7700 = vadd.f32 %v7632, %v7677
        %v7701 = vadd.f32 %v7633, %v7677
        %v7702 = vadd.f32 %v7634, %v7677
        %v7703 = vadd.f32 %v7635, %v7677
        %v7704 = vadd.f32 %v7636, %v7677
        %v7705 = vadd.f32 %v7637, %v7677
        %v7706 = vadd.f32 %v7638, %v7677
        %v7707 = vadd.f32 %v7639, %v7677
        %v7708 = vadd.f32 %v7640, %v7677
        %v7709 = vadd.f32 %v7641, %v7677
        %v7710 = vadd.f32 %v7642, %v7677
        %v7711 = vadd.f32 %v7643, %v7677
        %v7712 = vadd.f32 %v7644, %v7677
        %v7713 = vadd.f32 %v7645, %v7677
        %v7714 = vadd.f32 %v7646, %v7677
        %v7715 = vadd.f32 %v7647, %v7677
        %v7716 = vadd.f32 %v7648, %v7677
        %v7717 = vadd.f32 %v7649, %v7677
        %v7718 = vadd.f32 %v7650, %v7677
        %v7719 = vadd.f32 %v7651, %v7677
        %v7720 = vadd.f32 %v7652, %v7677
        %v7721 = vadd.f32 %v7653, %v7677
        %v7722 = vadd.f32 %v7654, %v7677
        %v7723 = vadd.f32 %v7655, %v7677
        %v7724 = vadd.f32 %v7656, %v7677
        %v7725 = vadd.f32 %v7657, %v7677
        %v7726 = vadd.f32 %v7658, %v7677
        %v7727 = vadd.f32 %v7659, %v7677
        %v7728 = vadd.f32 %v7660, %v7677
        %v7729 = vadd.f32 %v7661, %v7677
        %v7730 = vadd.f32 %v7662, %v7677
        %v7731 = vadd.f32 %v7663, %v7677
        %v7732 = vadd.f32 %v7664, %v7677
        %v7733 = vadd.f32 %v7665, %v7677
        %v7734 = vadd.f32 %v7666, %v7677
        %v7735 = vadd.f32 %v7667, %v7677
        %v7736 = vadd.f32 %v7668, %v7677
        %v7737 = vadd.f32 %v7669, %v7677
        %v7738 = vadd.f32 %v7670, %v7677
        %v7739 = vadd.f32 %v7671, %v7677
        %v7740 = vadd.f32 %v7672, %v7677
        %v7741 = vadd.f32 %v7673, %v7677
        %v7742 = vadd.f32 %v7674, %v7677
        %v7743 = vmax.f32 %v7679, 0.0
        %v7744 = vmax.f32 %v7680, 0.0
        %v7745 = vmax.f32 %v7681, 0.0
        %v7746 = vmax.f32 %v7682, 0.0
        %v7747 = vmax.f32 %v7683, 0.0
        %v7748 = vmax.f32 %v7684, 0.0
        %v7749 = vmax.f32 %v7685, 0.0
        %v7750 = vmax.f32 %v7686, 0.0
        %v7751 = vmax.f32 %v7687, 0.0
        %v7752 = vmax.f32 %v7688, 0.0
        %v7753 = vmax.f32 %v7689, 0.0
        %v7754 = vmax.f32 %v7690, 0.0
        %v7755 = vmax.f32 %v7691, 0.0
        %v7756 = vmax.f32 %v7692, 0.0
        %v7757 = vmax.f32 %v7693, 0.0
        %v7758 = vmax.f32 %v7694, 0.0
        %v7759 = vmax.f32 %v7695, 0.0
        %v7760 = vmax.f32 %v7696, 0.0
        %v7761 = vmax.f32 %v7697, 0.0
        %v7762 = vmax.f32 %v7698, 0.0
        %v7763 = vmax.f32 %v7699, 0.0
        %v7764 = vmax.f32 %v7700, 0.0
        %v7765 = vmax.f32 %v7701, 0.0
        %v7766 = vmax.f32 %v7702, 0.0
        %v7767 = vmax.f32 %v7703, 0.0
        %v7768 = vmax.f32 %v7704, 0.0
        %v7769 = vmax.f32 %v7705, 0.0
        %v7770 = vmax.f32 %v7706, 0.0
        %v7771 = vmax.f32 %v7707, 0.0
        %v7772 = vmax.f32 %v7708, 0.0
        %v7773 = vmax.f32 %v7709, 0.0
        %v7774 = vmax.f32 %v7710, 0.0
        %v7775 = vmax.f32 %v7711, 0.0
        %v7776 = vmax.f32 %v7712, 0.0
        %v7777 = vmax.f32 %v7713, 0.0
        %v7778 = vmax.f32 %v7714, 0.0
        %v7779 = vmax.f32 %v7715, 0.0
        %v7780 = vmax.f32 %v7716, 0.0
        %v7781 = vmax.f32 %v7717, 0.0
        %v7782 = vmax.f32 %v7718, 0.0
        %v7783 = vmax.f32 %v7719, 0.0
        %v7784 = vmax.f32 %v7720, 0.0
        %v7785 = vmax.f32 %v7721, 0.0
        %v7786 = vmax.f32 %v7722, 0.0
        %v7787 = vmax.f32 %v7723, 0.0
        %v7788 = vmax.f32 %v7724, 0.0
        %v7789 = vmax.f32 %v7725, 0.0
        %v7790 = vmax.f32 %v7726, 0.0
        %v7791 = vmax.f32 %v7727, 0.0
        %v7792 = vmax.f32 %v7728, 0.0
        %v7793 = vmax.f32 %v7729, 0.0
        %v7794 = vmax.f32 %v7730, 0.0
        %v7795 = vmax.f32 %v7731, 0.0
        %v7796 = vmax.f32 %v7732, 0.0
        %v7797 = vmax.f32 %v7733, 0.0
        %v7798 = vmax.f32 %v7734, 0.0
        %v7799 = vmax.f32 %v7735, 0.0
        %v7800 = vmax.f32 %v7736, 0.0
        %v7801 = vmax.f32 %v7737, 0.0
        %v7802 = vmax.f32 %v7738, 0.0
        %v7803 = vmax.f32 %v7739, 0.0
        %v7804 = vmax.f32 %v7740, 0.0
        %v7805 = vmax.f32 %v7741, 0.0
        %v7806 = vmax.f32 %v7742, 0.0
        %v7807 = vpack.c.bf16 %v7744, %v7743
        %v7808 = vpack.c.bf16 %v7746, %v7745
        %v7809 = vpack.c.bf16 %v7748, %v7747
        %v7810 = vpack.c.bf16 %v7750, %v7749
        %v7811 = vpack.c.bf16 %v7752, %v7751
        %v7812 = vpack.c.bf16 %v7754, %v7753
        %v7813 = vpack.c.bf16 %v7756, %v7755
        %v7814 = vpack.c.bf16 %v7758, %v7757
        %v7815 = vpack.c.bf16 %v7760, %v7759
        %v7816 = vpack.c.bf16 %v7762, %v7761
        %v7817 = vpack.c.bf16 %v7764, %v7763
        %v7818 = vpack.c.bf16 %v7766, %v7765
        %v7819 = vpack.c.bf16 %v7768, %v7767
        %v7820 = vpack.c.bf16 %v7770, %v7769
        %v7821 = vpack.c.bf16 %v7772, %v7771
        %v7822 = vpack.c.bf16 %v7774, %v7773
        %v7823 = vpack.c.bf16 %v7776, %v7775
        %v7824 = vpack.c.bf16 %v7778, %v7777
        %v7825 = vpack.c.bf16 %v7780, %v7779
        %v7826 = vpack.c.bf16 %v7782, %v7781
        %v7827 = vpack.c.bf16 %v7784, %v7783
        %v7828 = vpack.c.bf16 %v7786, %v7785
        %v7829 = vpack.c.bf16 %v7788, %v7787
        %v7830 = vpack.c.bf16 %v7790, %v7789
        %v7831 = vpack.c.bf16 %v7792, %v7791
        %v7832 = vpack.c.bf16 %v7794, %v7793
        %v7833 = vpack.c.bf16 %v7796, %v7795
        %v7834 = vpack.c.bf16 %v7798, %v7797
        %v7835 = vpack.c.bf16 %v7800, %v7799
        %v7836 = vpack.c.bf16 %v7802, %v7801
        %v7837 = vpack.c.bf16 %v7804, %v7803
        %v7838 = vpack.c.bf16 %v7806, %v7805
        %v7839 = vld [vmem:[%s4] sm:$0xf]
        %v7840 = vld [vmem:[%s4 + $0x4] sm:$0xf]
        %v7841 = vld [vmem:[%s4 + $0x8] sm:$0xf]
        %v7842 = vld [vmem:[%s4 + $0xc] sm:$0xf]
        %v7843 = vld [vmem:[%s5] sm:$0x1]
        %v7845 = vperm.slane %v7843, 0
        %v7851 = vunpack.c.l.b16 %v7839
        %v7852 = vunpack.c.l.b16 %v7840
        %v7853 = vunpack.c.l.b16 %v7841
        %v7854 = vunpack.c.l.b16 %v7842
        %v7855 = vpack.c.b16 %v7852, %v7851
        %v7856 = vpack.c.b16 %v7854, %v7853
        %v7860 = vsel %vm1179, %v7807, 0
        %v7863 = vsel %vm1179, %v7808, 0
        %v7866 = vsel %vm1179, %v7809, 0
        %v7869 = vsel %vm1179, %v7810, 0
        %v7872 = vsel %vm1179, %v7811, 0
        %v7875 = vsel %vm1179, %v7812, 0
        %v7878 = vsel %vm1179, %v7813, 0
        %v7881 = vsel %vm1179, %v7814, 0
        %v7884 = vsel %vm1179, %v7815, 0
        %v7887 = vsel %vm1179, %v7816, 0
        %v7890 = vsel %vm1179, %v7817, 0
        %v7893 = vsel %vm1179, %v7818, 0
        %v7896 = vsel %vm1179, %v7819, 0
        %v7899 = vsel %vm1179, %v7820, 0
        %v7902 = vsel %vm1179, %v7821, 0
        %v7905 = vsel %vm1179, %v7822, 0
        %v7908 = vsel %vm1179, %v7823, 0
        %v7911 = vsel %vm1179, %v7824, 0
        %v7914 = vsel %vm1179, %v7825, 0
        %v7917 = vsel %vm1179, %v7826, 0
        %v7920 = vsel %vm1179, %v7827, 0
        %v7923 = vsel %vm1179, %v7828, 0
        %v7926 = vsel %vm1179, %v7829, 0
        %v7929 = vsel %vm1179, %v7830, 0
        %v7932 = vsel %vm1179, %v7831, 0
        %v7935 = vsel %vm1179, %v7832, 0
        %v7938 = vsel %vm1179, %v7833, 0
        %v7941 = vsel %vm1179, %v7834, 0
        %v7944 = vsel %vm1179, %v7835, 0
        %v7947 = vsel %vm1179, %v7836, 0
        %v7950 = vsel %vm1179, %v7837, 0
        %v7953 = vsel %vm1179, %v7838, 0
        %7955 = vmatpush.bf16.msra.mxu0 0
        %7956 = vmatpush.bf16.msra.mxu0 0
        %7957 = vmatpush.bf16.msra.mxu0 0
        %7958 = vmatpush.bf16.msra.mxu0 0
        %7959 = vmatpush.bf16.msra.mxu0 0
        %7960 = vmatpush.bf16.msra.mxu0 0
        %7961 = vmatpush.bf16.msra.mxu0 %v7856
        %7962 = vmatpush.bf16.msra.mxu0 %v7855
        %7963 = vmatmul.bf16.gmra.mxu0 %v7860
        %v7964 = vpop.f32.mrf.mxu0
        %v7965 = vadd.f32 %v7845, %v7964
        %v7966 = vpop.f32.mrf.mxu0
        %v7967 = vadd.f32 %v7845, %v7966
        %7968 = vmatmul.bf16.gmra.mxu0 %v7863
        %v7969 = vpop.f32.mrf.mxu0
        %v7970 = vadd.f32 %v7845, %v7969
        %v7971 = vpop.f32.mrf.mxu0
        %v7972 = vadd.f32 %v7845, %v7971
        %7973 = vmatmul.bf16.gmra.mxu0 %v7866
        %v7974 = vpop.f32.mrf.mxu0
        %v7975 = vadd.f32 %v7845, %v7974
        %v7976 = vpop.f32.mrf.mxu0
        %v7977 = vadd.f32 %v7845, %v7976
        %7978 = vmatmul.bf16.gmra.mxu0 %v7869
        %v7979 = vpop.f32.mrf.mxu0
        %v7980 = vadd.f32 %v7845, %v7979
        %v7981 = vpop.f32.mrf.mxu0
        %v7982 = vadd.f32 %v7845, %v7981
        %7983 = vmatmul.bf16.gmra.mxu0 %v7872
        %v7984 = vpop.f32.mrf.mxu0
        %v7985 = vadd.f32 %v7845, %v7984
        %v7986 = vpop.f32.mrf.mxu0
        %v7987 = vadd.f32 %v7845, %v7986
        %7988 = vmatmul.bf16.gmra.mxu0 %v7875
        %v7989 = vpop.f32.mrf.mxu0
        %v7990 = vadd.f32 %v7845, %v7989
        %v7991 = vpop.f32.mrf.mxu0
        %v7992 = vadd.f32 %v7845, %v7991
        %7993 = vmatmul.bf16.gmra.mxu0 %v7878
        %v7994 = vpop.f32.mrf.mxu0
        %v7995 = vadd.f32 %v7845, %v7994
        %v7996 = vpop.f32.mrf.mxu0
        %v7997 = vadd.f32 %v7845, %v7996
        %7998 = vmatmul.bf16.gmra.mxu0 %v7881
        %v7999 = vpop.f32.mrf.mxu0
        %v8000 = vadd.f32 %v7845, %v7999
        %v8001 = vpop.f32.mrf.mxu0
        %v8002 = vadd.f32 %v7845, %v8001
        %8003 = vmatmul.bf16.gmra.mxu0 %v7884
        %v8004 = vpop.f32.mrf.mxu0
        %v8005 = vadd.f32 %v7845, %v8004
        %v8006 = vpop.f32.mrf.mxu0
        %v8007 = vadd.f32 %v7845, %v8006
        %8008 = vmatmul.bf16.gmra.mxu0 %v7887
        %v8009 = vpop.f32.mrf.mxu0
        %v8010 = vadd.f32 %v7845, %v8009
        %v8011 = vpop.f32.mrf.mxu0
        %v8012 = vadd.f32 %v7845, %v8011
        %8013 = vmatmul.bf16.gmra.mxu0 %v7890
        %v8014 = vpop.f32.mrf.mxu0
        %v8015 = vadd.f32 %v7845, %v8014
        %v8016 = vpop.f32.mrf.mxu0
        %v8017 = vadd.f32 %v7845, %v8016
        %8018 = vmatmul.bf16.gmra.mxu0 %v7893
        %v8019 = vpop.f32.mrf.mxu0
        %v8020 = vadd.f32 %v7845, %v8019
        %v8021 = vpop.f32.mrf.mxu0
        %v8022 = vadd.f32 %v7845, %v8021
        %8023 = vmatmul.bf16.gmra.mxu0 %v7896
        %v8024 = vpop.f32.mrf.mxu0
        %v8025 = vadd.f32 %v7845, %v8024
        %v8026 = vpop.f32.mrf.mxu0
        %v8027 = vadd.f32 %v7845, %v8026
        %8028 = vmatmul.bf16.gmra.mxu0 %v7899
        %v8029 = vpop.f32.mrf.mxu0
        %v8030 = vadd.f32 %v7845, %v8029
        %v8031 = vpop.f32.mrf.mxu0
        %v8032 = vadd.f32 %v7845, %v8031
        %8033 = vmatmul.bf16.gmra.mxu0 %v7902
        %v8034 = vpop.f32.mrf.mxu0
        %v8035 = vadd.f32 %v7845, %v8034
        %v8036 = vpop.f32.mrf.mxu0
        %v8037 = vadd.f32 %v7845, %v8036
        %8038 = vmatmul.bf16.gmra.mxu0 %v7905
        %v8039 = vpop.f32.mrf.mxu0
        %v8040 = vadd.f32 %v7845, %v8039
        %v8041 = vpop.f32.mrf.mxu0
        %v8042 = vadd.f32 %v7845, %v8041
        %8043 = vmatmul.bf16.gmra.mxu0 %v7908
        %v8044 = vpop.f32.mrf.mxu0
        %v8045 = vadd.f32 %v7845, %v8044
        %v8046 = vpop.f32.mrf.mxu0
        %v8047 = vadd.f32 %v7845, %v8046
        %8048 = vmatmul.bf16.gmra.mxu0 %v7911
        %v8049 = vpop.f32.mrf.mxu0
        %v8050 = vadd.f32 %v7845, %v8049
        %v8051 = vpop.f32.mrf.mxu0
        %v8052 = vadd.f32 %v7845, %v8051
        %8053 = vmatmul.bf16.gmra.mxu0 %v7914
        %v8054 = vpop.f32.mrf.mxu0
        %v8055 = vadd.f32 %v7845, %v8054
        %v8056 = vpop.f32.mrf.mxu0
        %v8057 = vadd.f32 %v7845, %v8056
        %8058 = vmatmul.bf16.gmra.mxu0 %v7917
        %v8059 = vpop.f32.mrf.mxu0
        %v8060 = vadd.f32 %v7845, %v8059
        %v8061 = vpop.f32.mrf.mxu0
        %v8062 = vadd.f32 %v7845, %v8061
        %8063 = vmatmul.bf16.gmra.mxu0 %v7920
        %v8064 = vpop.f32.mrf.mxu0
        %v8065 = vadd.f32 %v7845, %v8064
        %v8066 = vpop.f32.mrf.mxu0
        %v8067 = vadd.f32 %v7845, %v8066
        %8068 = vmatmul.bf16.gmra.mxu0 %v7923
        %v8069 = vpop.f32.mrf.mxu0
        %v8070 = vadd.f32 %v7845, %v8069
        %v8071 = vpop.f32.mrf.mxu0
        %v8072 = vadd.f32 %v7845, %v8071
        %8073 = vmatmul.bf16.gmra.mxu0 %v7926
        %v8074 = vpop.f32.mrf.mxu0
        %v8075 = vadd.f32 %v7845, %v8074
        %v8076 = vpop.f32.mrf.mxu0
        %v8077 = vadd.f32 %v7845, %v8076
        %8078 = vmatmul.bf16.gmra.mxu0 %v7929
        %v8079 = vpop.f32.mrf.mxu0
        %v8080 = vadd.f32 %v7845, %v8079
        %v8081 = vpop.f32.mrf.mxu0
        %v8082 = vadd.f32 %v7845, %v8081
        %8083 = vmatmul.bf16.gmra.mxu0 %v7932
        %v8084 = vpop.f32.mrf.mxu0
        %v8085 = vadd.f32 %v7845, %v8084
        %v8086 = vpop.f32.mrf.mxu0
        %v8087 = vadd.f32 %v7845, %v8086
        %8088 = vmatmul.bf16.gmra.mxu0 %v7935
        %v8089 = vpop.f32.mrf.mxu0
        %v8090 = vadd.f32 %v7845, %v8089
        %v8091 = vpop.f32.mrf.mxu0
        %v8092 = vadd.f32 %v7845, %v8091
        %8093 = vmatmul.bf16.gmra.mxu0 %v7938
        %v8094 = vpop.f32.mrf.mxu0
        %v8095 = vadd.f32 %v7845, %v8094
        %v8096 = vpop.f32.mrf.mxu0
        %v8097 = vadd.f32 %v7845, %v8096
        %8098 = vmatmul.bf16.gmra.mxu0 %v7941
        %v8099 = vpop.f32.mrf.mxu0
        %v8100 = vadd.f32 %v7845, %v8099
        %v8101 = vpop.f32.mrf.mxu0
        %v8102 = vadd.f32 %v7845, %v8101
        %8103 = vmatmul.bf16.gmra.mxu0 %v7944
        %v8104 = vpop.f32.mrf.mxu0
        %v8105 = vadd.f32 %v7845, %v8104
        %v8106 = vpop.f32.mrf.mxu0
        %v8107 = vadd.f32 %v7845, %v8106
        %8108 = vmatmul.bf16.gmra.mxu0 %v7947
        %v8109 = vpop.f32.mrf.mxu0
        %v8110 = vadd.f32 %v7845, %v8109
        %v8111 = vpop.f32.mrf.mxu0
        %v8112 = vadd.f32 %v7845, %v8111
        %8113 = vmatmul.bf16.gmra.mxu0 %v7950
        %v8114 = vpop.f32.mrf.mxu0
        %v8115 = vadd.f32 %v7845, %v8114
        %v8116 = vpop.f32.mrf.mxu0
        %v8117 = vadd.f32 %v7845, %v8116
        %8118 = vmatmul.bf16.gmra.mxu0 %v7953
        %v8119 = vpop.f32.mrf.mxu0
        %v8120 = vadd.f32 %v7845, %v8119
        %v8121 = vpop.f32.mrf.mxu0
        %v8122 = vadd.f32 %v7845, %v8121
        %8123 = vdwg.mxu0
        %v8124 = vmin.f32 %v7965, 4.1351666
        %v8125 = vmin.f32 %v7967, 4.1351666
        %v8126 = vmin.f32 %v7970, 4.1351666
        %v8127 = vmin.f32 %v7972, 4.1351666
        %v8128 = vmin.f32 %v7975, 4.1351666
        %v8129 = vmin.f32 %v7977, 4.1351666
        %v8130 = vmin.f32 %v7980, 4.1351666
        %v8131 = vmin.f32 %v7982, 4.1351666
        %v8132 = vmin.f32 %v7985, 4.1351666
        %v8133 = vmin.f32 %v7987, 4.1351666
        %v8134 = vmin.f32 %v7990, 4.1351666
        %v8135 = vmin.f32 %v7992, 4.1351666
        %v8136 = vmin.f32 %v7995, 4.1351666
        %v8137 = vmin.f32 %v7997, 4.1351666
        %v8138 = vmin.f32 %v8000, 4.1351666
        %v8139 = vmin.f32 %v8002, 4.1351666
        %v8140 = vmin.f32 %v8005, 4.1351666
        %v8141 = vmin.f32 %v8007, 4.1351666
        %v8142 = vmin.f32 %v8010, 4.1351666
        %v8143 = vmin.f32 %v8012, 4.1351666
        %v8144 = vmin.f32 %v8015, 4.1351666
        %v8145 = vmin.f32 %v8017, 4.1351666
        %v8146 = vmin.f32 %v8020, 4.1351666
        %v8147 = vmin.f32 %v8022, 4.1351666
        %v8148 = vmin.f32 %v8025, 4.1351666
        %v8149 = vmin.f32 %v8027, 4.1351666
        %v8150 = vmin.f32 %v8030, 4.1351666
        %v8151 = vmin.f32 %v8032, 4.1351666
        %v8152 = vmin.f32 %v8035, 4.1351666
        %v8153 = vmin.f32 %v8037, 4.1351666
        %v8154 = vmin.f32 %v8040, 4.1351666
        %v8155 = vmin.f32 %v8042, 4.1351666
        %v8156 = vmin.f32 %v8045, 4.1351666
        %v8157 = vmin.f32 %v8047, 4.1351666
        %v8158 = vmin.f32 %v8050, 4.1351666
        %v8159 = vmin.f32 %v8052, 4.1351666
        %v8160 = vmin.f32 %v8055, 4.1351666
        %v8161 = vmin.f32 %v8057, 4.1351666
        %v8162 = vmin.f32 %v8060, 4.1351666
        %v8163 = vmin.f32 %v8062, 4.1351666
        %v8164 = vmin.f32 %v8065, 4.1351666
        %v8165 = vmin.f32 %v8067, 4.1351666
        %v8166 = vmin.f32 %v8070, 4.1351666
        %v8167 = vmin.f32 %v8072, 4.1351666
        %v8168 = vmin.f32 %v8075, 4.1351666
        %v8169 = vmin.f32 %v8077, 4.1351666
        %v8170 = vmin.f32 %v8080, 4.1351666
        %v8171 = vmin.f32 %v8082, 4.1351666
        %v8172 = vmin.f32 %v8085, 4.1351666
        %v8173 = vmin.f32 %v8087, 4.1351666
        %v8174 = vmin.f32 %v8090, 4.1351666
        %v8175 = vmin.f32 %v8092, 4.1351666
        %v8176 = vmin.f32 %v8095, 4.1351666
        %v8177 = vmin.f32 %v8097, 4.1351666
        %v8178 = vmin.f32 %v8100, 4.1351666
        %v8179 = vmin.f32 %v8102, 4.1351666
        %v8180 = vmin.f32 %v8105, 4.1351666
        %v8181 = vmin.f32 %v8107, 4.1351666
        %v8182 = vmin.f32 %v8110, 4.1351666
        %v8183 = vmin.f32 %v8112, 4.1351666
        %v8184 = vmin.f32 %v8115, 4.1351666
        %v8185 = vmin.f32 %v8117, 4.1351666
        %v8186 = vmin.f32 %v8120, 4.1351666
        %v8187 = vmin.f32 %v8122, 4.1351666
        %v8188 = vld [vmem:[%s262] sm:$0xff]
        %v8189 = vld [vmem:[%s262 + $0x8] sm:$0xff]
        %v8190 = vld [vmem:[%s262 + $0x10] sm:$0xff]
        %v8191 = vld [vmem:[%s262 + $0x18] sm:$0xff]
        %v8192 = vld [vmem:[%s262 + $0x20] sm:$0xff]
        %v8193 = vld [vmem:[%s262 + $0x28] sm:$0xff]
        %v8194 = vld [vmem:[%s262 + $0x30] sm:$0xff]
        %v8195 = vld [vmem:[%s262 + $0x38] sm:$0xff]
        %v8196 = vld [vmem:[%s262 + $0x40] sm:$0xff]
        %v8197 = vld [vmem:[%s262 + $0x48] sm:$0xff]
        %v8198 = vld [vmem:[%s262 + $0x50] sm:$0xff]
        %v8199 = vld [vmem:[%s262 + $0x58] sm:$0xff]
        %v8200 = vld [vmem:[%s262 + $0x60] sm:$0xff]
        %v8201 = vld [vmem:[%s262 + $0x68] sm:$0xff]
        %v8202 = vld [vmem:[%s262 + $0x70] sm:$0xff]
        %v8203 = vld [vmem:[%s262 + $0x78] sm:$0xff]
        %v8204 = vld [vmem:[%s262 + $0x80] sm:$0xff]
        %v8205 = vld [vmem:[%s262 + $0x88] sm:$0xff]
        %v8206 = vld [vmem:[%s262 + $0x90] sm:$0xff]
        %v8207 = vld [vmem:[%s262 + $0x98] sm:$0xff]
        %v8208 = vld [vmem:[%s262 + $0xa0] sm:$0xff]
        %v8209 = vld [vmem:[%s262 + $0xa8] sm:$0xff]
        %v8210 = vld [vmem:[%s262 + $0xb0] sm:$0xff]
        %v8211 = vld [vmem:[%s262 + $0xb8] sm:$0xff]
        %v8212 = vld [vmem:[%s262 + $0xc0] sm:$0xff]
        %v8213 = vld [vmem:[%s262 + $0xc8] sm:$0xff]
        %v8214 = vld [vmem:[%s262 + $0xd0] sm:$0xff]
        %v8215 = vld [vmem:[%s262 + $0xd8] sm:$0xff]
        %v8216 = vld [vmem:[%s262 + $0xe0] sm:$0xff]
        %v8217 = vld [vmem:[%s262 + $0xe8] sm:$0xff]
        %v8218 = vld [vmem:[%s262 + $0xf0] sm:$0xff]
        %v8219 = vld [vmem:[%s262 + $0xf8] sm:$0xff]
        %v8220 = vld [vmem:[%s262 + $0x100] sm:$0xff]
        %v8221 = vld [vmem:[%s262 + $0x108] sm:$0xff]
        %v8222 = vld [vmem:[%s262 + $0x110] sm:$0xff]
        %v8223 = vld [vmem:[%s262 + $0x118] sm:$0xff]
        %v8224 = vld [vmem:[%s262 + $0x120] sm:$0xff]
        %v8225 = vld [vmem:[%s262 + $0x128] sm:$0xff]
        %v8226 = vld [vmem:[%s262 + $0x130] sm:$0xff]
        %v8227 = vld [vmem:[%s262 + $0x138] sm:$0xff]
        %v8228 = vld [vmem:[%s262 + $0x140] sm:$0xff]
        %v8229 = vld [vmem:[%s262 + $0x148] sm:$0xff]
        %v8230 = vld [vmem:[%s262 + $0x150] sm:$0xff]
        %v8231 = vld [vmem:[%s262 + $0x158] sm:$0xff]
        %v8232 = vld [vmem:[%s262 + $0x160] sm:$0xff]
        %v8233 = vld [vmem:[%s262 + $0x168] sm:$0xff]
        %v8234 = vld [vmem:[%s262 + $0x170] sm:$0xff]
        %v8235 = vld [vmem:[%s262 + $0x178] sm:$0xff]
        %v8236 = vld [vmem:[%s262 + $0x180] sm:$0xff]
        %v8237 = vld [vmem:[%s262 + $0x188] sm:$0xff]
        %v8238 = vld [vmem:[%s262 + $0x190] sm:$0xff]
        %v8239 = vld [vmem:[%s262 + $0x198] sm:$0xff]
        %v8240 = vld [vmem:[%s262 + $0x1a0] sm:$0xff]
        %v8241 = vld [vmem:[%s262 + $0x1a8] sm:$0xff]
        %v8242 = vld [vmem:[%s262 + $0x1b0] sm:$0xff]
        %v8243 = vld [vmem:[%s262 + $0x1b8] sm:$0xff]
        %v8244 = vld [vmem:[%s262 + $0x1c0] sm:$0xff]
        %v8245 = vld [vmem:[%s262 + $0x1c8] sm:$0xff]
        %v8246 = vld [vmem:[%s262 + $0x1d0] sm:$0xff]
        %v8247 = vld [vmem:[%s262 + $0x1d8] sm:$0xff]
        %v8248 = vld [vmem:[%s262 + $0x1e0] sm:$0xff]
        %v8249 = vld [vmem:[%s262 + $0x1e8] sm:$0xff]
        %v8250 = vld [vmem:[%s262 + $0x1f0] sm:$0xff]
        %v8251 = vld [vmem:[%s262 + $0x1f8] sm:$0xff]
        %8316 = vrot.lane.b32.xlu0 %v8188, 18
        %v8317 = vpop.permute.xlu0 %8316
        %8318 = vrot.lane.b32.xlu0 %v8189, 18
        %v8319 = vpop.permute.xlu0 %8318
        %8320 = vrot.lane.b32.xlu0 %v8190, 18
        %v8321 = vpop.permute.xlu0 %8320
        %8322 = vrot.lane.b32.xlu0 %v8191, 18
        %v8323 = vpop.permute.xlu0 %8322
        %8324 = vrot.lane.b32.xlu0 %v8192, 18
        %v8325 = vpop.permute.xlu0 %8324
        %8326 = vrot.lane.b32.xlu0 %v8193, 18
        %v8327 = vpop.permute.xlu0 %8326
        %8328 = vrot.lane.b32.xlu0 %v8194, 18
        %v8329 = vpop.permute.xlu0 %8328
        %8330 = vrot.lane.b32.xlu0 %v8195, 18
        %v8331 = vpop.permute.xlu0 %8330
        %8332 = vrot.lane.b32.xlu0 %v8196, 18
        %v8333 = vpop.permute.xlu0 %8332
        %8334 = vrot.lane.b32.xlu0 %v8197, 18
        %v8335 = vpop.permute.xlu0 %8334
        %8336 = vrot.lane.b32.xlu0 %v8198, 18
        %v8337 = vpop.permute.xlu0 %8336
        %8338 = vrot.lane.b32.xlu0 %v8199, 18
        %v8339 = vpop.permute.xlu0 %8338
        %8340 = vrot.lane.b32.xlu0 %v8200, 18
        %v8341 = vpop.permute.xlu0 %8340
        %8342 = vrot.lane.b32.xlu0 %v8201, 18
        %v8343 = vpop.permute.xlu0 %8342
        %8344 = vrot.lane.b32.xlu0 %v8202, 18
        %v8345 = vpop.permute.xlu0 %8344
        %8346 = vrot.lane.b32.xlu0 %v8203, 18
        %v8347 = vpop.permute.xlu0 %8346
        %8348 = vrot.lane.b32.xlu0 %v8204, 18
        %v8349 = vpop.permute.xlu0 %8348
        %8350 = vrot.lane.b32.xlu0 %v8205, 18
        %v8351 = vpop.permute.xlu0 %8350
        %8352 = vrot.lane.b32.xlu0 %v8206, 18
        %v8353 = vpop.permute.xlu0 %8352
        %8354 = vrot.lane.b32.xlu0 %v8207, 18
        %v8355 = vpop.permute.xlu0 %8354
        %8356 = vrot.lane.b32.xlu0 %v8208, 18
        %v8357 = vpop.permute.xlu0 %8356
        %8358 = vrot.lane.b32.xlu0 %v8209, 18
        %v8359 = vpop.permute.xlu0 %8358
        %8360 = vrot.lane.b32.xlu0 %v8210, 18
        %v8361 = vpop.permute.xlu0 %8360
        %8362 = vrot.lane.b32.xlu0 %v8211, 18
        %v8363 = vpop.permute.xlu0 %8362
        %8364 = vrot.lane.b32.xlu0 %v8212, 18
        %v8365 = vpop.permute.xlu0 %8364
        %8366 = vrot.lane.b32.xlu0 %v8213, 18
        %v8367 = vpop.permute.xlu0 %8366
        %8368 = vrot.lane.b32.xlu0 %v8214, 18
        %v8369 = vpop.permute.xlu0 %8368
        %8370 = vrot.lane.b32.xlu0 %v8215, 18
        %v8371 = vpop.permute.xlu0 %8370
        %8372 = vrot.lane.b32.xlu0 %v8216, 18
        %v8373 = vpop.permute.xlu0 %8372
        %8374 = vrot.lane.b32.xlu0 %v8217, 18
        %v8375 = vpop.permute.xlu0 %8374
        %8376 = vrot.lane.b32.xlu0 %v8218, 18
        %v8377 = vpop.permute.xlu0 %8376
        %8378 = vrot.lane.b32.xlu0 %v8219, 18
        %v8379 = vpop.permute.xlu0 %8378
        %8380 = vrot.lane.b32.xlu0 %v8220, 18
        %v8381 = vpop.permute.xlu0 %8380
        %8382 = vrot.lane.b32.xlu0 %v8221, 18
        %v8383 = vpop.permute.xlu0 %8382
        %8384 = vrot.lane.b32.xlu0 %v8222, 18
        %v8385 = vpop.permute.xlu0 %8384
        %8386 = vrot.lane.b32.xlu0 %v8223, 18
        %v8387 = vpop.permute.xlu0 %8386
        %8388 = vrot.lane.b32.xlu0 %v8224, 18
        %v8389 = vpop.permute.xlu0 %8388
        %8390 = vrot.lane.b32.xlu0 %v8225, 18
        %v8391 = vpop.permute.xlu0 %8390
        %8392 = vrot.lane.b32.xlu0 %v8226, 18
        %v8393 = vpop.permute.xlu0 %8392
        %8394 = vrot.lane.b32.xlu0 %v8227, 18
        %v8395 = vpop.permute.xlu0 %8394
        %8396 = vrot.lane.b32.xlu0 %v8228, 18
        %v8397 = vpop.permute.xlu0 %8396
        %8398 = vrot.lane.b32.xlu0 %v8229, 18
        %v8399 = vpop.permute.xlu0 %8398
        %8400 = vrot.lane.b32.xlu0 %v8230, 18
        %v8401 = vpop.permute.xlu0 %8400
        %8402 = vrot.lane.b32.xlu0 %v8231, 18
        %v8403 = vpop.permute.xlu0 %8402
        %8404 = vrot.lane.b32.xlu0 %v8232, 18
        %v8405 = vpop.permute.xlu0 %8404
        %8406 = vrot.lane.b32.xlu0 %v8233, 18
        %v8407 = vpop.permute.xlu0 %8406
        %8408 = vrot.lane.b32.xlu0 %v8234, 18
        %v8409 = vpop.permute.xlu0 %8408
        %8410 = vrot.lane.b32.xlu0 %v8235, 18
        %v8411 = vpop.permute.xlu0 %8410
        %8412 = vrot.lane.b32.xlu0 %v8236, 18
        %v8413 = vpop.permute.xlu0 %8412
        %8414 = vrot.lane.b32.xlu0 %v8237, 18
        %v8415 = vpop.permute.xlu0 %8414
        %8416 = vrot.lane.b32.xlu0 %v8238, 18
        %v8417 = vpop.permute.xlu0 %8416
        %8418 = vrot.lane.b32.xlu0 %v8239, 18
        %v8419 = vpop.permute.xlu0 %8418
        %8420 = vrot.lane.b32.xlu0 %v8240, 18
        %v8421 = vpop.permute.xlu0 %8420
        %8422 = vrot.lane.b32.xlu0 %v8241, 18
        %v8423 = vpop.permute.xlu0 %8422
        %8424 = vrot.lane.b32.xlu0 %v8242, 18
        %v8425 = vpop.permute.xlu0 %8424
        %8426 = vrot.lane.b32.xlu0 %v8243, 18
        %v8427 = vpop.permute.xlu0 %8426
        %8428 = vrot.lane.b32.xlu0 %v8244, 18
        %v8429 = vpop.permute.xlu0 %8428
        %8430 = vrot.lane.b32.xlu0 %v8245, 18
        %v8431 = vpop.permute.xlu0 %8430
        %8432 = vrot.lane.b32.xlu0 %v8246, 18
        %v8433 = vpop.permute.xlu0 %8432
        %8434 = vrot.lane.b32.xlu0 %v8247, 18
        %v8435 = vpop.permute.xlu0 %8434
        %8436 = vrot.lane.b32.xlu0 %v8248, 18
        %v8437 = vpop.permute.xlu0 %8436
        %8438 = vrot.lane.b32.xlu0 %v8249, 18
        %v8439 = vpop.permute.xlu0 %8438
        %8440 = vrot.lane.b32.xlu0 %v8250, 18
        %v8441 = vpop.permute.xlu0 %8440
        %8442 = vrot.lane.b32.xlu0 %v8251, 18
        %v8443 = vpop.permute.xlu0 %8442
        %v8508 = vsub.f32 %v8188, %v8317
        %v8509 = vsub.f32 %v8189, %v8319
        %v8510 = vsub.f32 %v8190, %v8321
        %v8511 = vsub.f32 %v8191, %v8323
        %v8512 = vsub.f32 %v8192, %v8325
        %v8513 = vsub.f32 %v8193, %v8327
        %v8514 = vsub.f32 %v8194, %v8329
        %v8515 = vsub.f32 %v8195, %v8331
        %v8516 = vsub.f32 %v8196, %v8333
        %v8517 = vsub.f32 %v8197, %v8335
        %v8518 = vsub.f32 %v8198, %v8337
        %v8519 = vsub.f32 %v8199, %v8339
        %v8520 = vsub.f32 %v8200, %v8341
        %v8521 = vsub.f32 %v8201, %v8343
        %v8522 = vsub.f32 %v8202, %v8345
        %v8523 = vsub.f32 %v8203, %v8347
        %v8524 = vsub.f32 %v8204, %v8349
        %v8525 = vsub.f32 %v8205, %v8351
        %v8526 = vsub.f32 %v8206, %v8353
        %v8527 = vsub.f32 %v8207, %v8355
        %v8528 = vsub.f32 %v8208, %v8357
        %v8529 = vsub.f32 %v8209, %v8359
        %v8530 = vsub.f32 %v8210, %v8361
        %v8531 = vsub.f32 %v8211, %v8363
        %v8532 = vsub.f32 %v8212, %v8365
        %v8533 = vsub.f32 %v8213, %v8367
        %v8534 = vsub.f32 %v8214, %v8369
        %v8535 = vsub.f32 %v8215, %v8371
        %v8536 = vsub.f32 %v8216, %v8373
        %v8537 = vsub.f32 %v8217, %v8375
        %v8538 = vsub.f32 %v8218, %v8377
        %v8539 = vsub.f32 %v8219, %v8379
        %v8540 = vsub.f32 %v8220, %v8381
        %v8541 = vsub.f32 %v8221, %v8383
        %v8542 = vsub.f32 %v8222, %v8385
        %v8543 = vsub.f32 %v8223, %v8387
        %v8544 = vsub.f32 %v8224, %v8389
        %v8545 = vsub.f32 %v8225, %v8391
        %v8546 = vsub.f32 %v8226, %v8393
        %v8547 = vsub.f32 %v8227, %v8395
        %v8548 = vsub.f32 %v8228, %v8397
        %v8549 = vsub.f32 %v8229, %v8399
        %v8550 = vsub.f32 %v8230, %v8401
        %v8551 = vsub.f32 %v8231, %v8403
        %v8552 = vsub.f32 %v8232, %v8405
        %v8553 = vsub.f32 %v8233, %v8407
        %v8554 = vsub.f32 %v8234, %v8409
        %v8555 = vsub.f32 %v8235, %v8411
        %v8556 = vsub.f32 %v8236, %v8413
        %v8557 = vsub.f32 %v8237, %v8415
        %v8558 = vsub.f32 %v8238, %v8417
        %v8559 = vsub.f32 %v8239, %v8419
        %v8560 = vsub.f32 %v8240, %v8421
        %v8561 = vsub.f32 %v8241, %v8423
        %v8562 = vsub.f32 %v8242, %v8425
        %v8563 = vsub.f32 %v8243, %v8427
        %v8564 = vsub.f32 %v8244, %v8429
        %v8565 = vsub.f32 %v8245, %v8431
        %v8566 = vsub.f32 %v8246, %v8433
        %v8567 = vsub.f32 %v8247, %v8435
        %v8568 = vsub.f32 %v8248, %v8437
        %v8569 = vsub.f32 %v8249, %v8439
        %v8570 = vsub.f32 %v8250, %v8441
        %v8571 = vsub.f32 %v8251, %v8443
        %v8572 = vmul.f32 %v8508, 0.5
        %v8573 = vmul.f32 %v8509, 0.5
        %v8574 = vmul.f32 %v8510, 0.5
        %v8575 = vmul.f32 %v8511, 0.5
        %v8576 = vmul.f32 %v8512, 0.5
        %v8577 = vmul.f32 %v8513, 0.5
        %v8578 = vmul.f32 %v8514, 0.5
        %v8579 = vmul.f32 %v8515, 0.5
        %v8580 = vmul.f32 %v8516, 0.5
        %v8581 = vmul.f32 %v8517, 0.5
        %v8582 = vmul.f32 %v8518, 0.5
        %v8583 = vmul.f32 %v8519, 0.5
        %v8584 = vmul.f32 %v8520, 0.5
        %v8585 = vmul.f32 %v8521, 0.5
        %v8586 = vmul.f32 %v8522, 0.5
        %v8587 = vmul.f32 %v8523, 0.5
        %v8588 = vmul.f32 %v8524, 0.5
        %v8589 = vmul.f32 %v8525, 0.5
        %v8590 = vmul.f32 %v8526, 0.5
        %v8591 = vmul.f32 %v8527, 0.5
        %v8592 = vmul.f32 %v8528, 0.5
        %v8593 = vmul.f32 %v8529, 0.5
        %v8594 = vmul.f32 %v8530, 0.5
        %v8595 = vmul.f32 %v8531, 0.5
        %v8596 = vmul.f32 %v8532, 0.5
        %v8597 = vmul.f32 %v8533, 0.5
        %v8598 = vmul.f32 %v8534, 0.5
        %v8599 = vmul.f32 %v8535, 0.5
        %v8600 = vmul.f32 %v8536, 0.5
        %v8601 = vmul.f32 %v8537, 0.5
        %v8602 = vmul.f32 %v8538, 0.5
        %v8603 = vmul.f32 %v8539, 0.5
        %v8604 = vmul.f32 %v8540, 0.5
        %v8605 = vmul.f32 %v8541, 0.5
        %v8606 = vmul.f32 %v8542, 0.5
        %v8607 = vmul.f32 %v8543, 0.5
        %v8608 = vmul.f32 %v8544, 0.5
        %v8609 = vmul.f32 %v8545, 0.5
        %v8610 = vmul.f32 %v8546, 0.5
        %v8611 = vmul.f32 %v8547, 0.5
        %v8612 = vmul.f32 %v8548, 0.5
        %v8613 = vmul.f32 %v8549, 0.5
        %v8614 = vmul.f32 %v8550, 0.5
        %v8615 = vmul.f32 %v8551, 0.5
        %v8616 = vmul.f32 %v8552, 0.5
        %v8617 = vmul.f32 %v8553, 0.5
        %v8618 = vmul.f32 %v8554, 0.5
        %v8619 = vmul.f32 %v8555, 0.5
        %v8620 = vmul.f32 %v8556, 0.5
        %v8621 = vmul.f32 %v8557, 0.5
        %v8622 = vmul.f32 %v8558, 0.5
        %v8623 = vmul.f32 %v8559, 0.5
        %v8624 = vmul.f32 %v8560, 0.5
        %v8625 = vmul.f32 %v8561, 0.5
        %v8626 = vmul.f32 %v8562, 0.5
        %v8627 = vmul.f32 %v8563, 0.5
        %v8628 = vmul.f32 %v8564, 0.5
        %v8629 = vmul.f32 %v8565, 0.5
        %v8630 = vmul.f32 %v8566, 0.5
        %v8631 = vmul.f32 %v8567, 0.5
        %v8632 = vmul.f32 %v8568, 0.5
        %v8633 = vmul.f32 %v8569, 0.5
        %v8634 = vmul.f32 %v8570, 0.5
        %v8635 = vmul.f32 %v8571, 0.5
        %8700 = vrot.lane.b32.xlu0 %v8572, 110
        %v8701 = vpop.permute.xlu0 %8700
        %8702 = vrot.lane.b32.xlu0 %v8573, 110
        %v8703 = vpop.permute.xlu0 %8702
        %8704 = vrot.lane.b32.xlu0 %v8574, 110
        %v8705 = vpop.permute.xlu0 %8704
        %8706 = vrot.lane.b32.xlu0 %v8575, 110
        %v8707 = vpop.permute.xlu0 %8706
        %8708 = vrot.lane.b32.xlu0 %v8576, 110
        %v8709 = vpop.permute.xlu0 %8708
        %8710 = vrot.lane.b32.xlu0 %v8577, 110
        %v8711 = vpop.permute.xlu0 %8710
        %8712 = vrot.lane.b32.xlu0 %v8578, 110
        %v8713 = vpop.permute.xlu0 %8712
        %8714 = vrot.lane.b32.xlu0 %v8579, 110
        %v8715 = vpop.permute.xlu0 %8714
        %8716 = vrot.lane.b32.xlu0 %v8580, 110
        %v8717 = vpop.permute.xlu0 %8716
        %8718 = vrot.lane.b32.xlu0 %v8581, 110
        %v8719 = vpop.permute.xlu0 %8718
        %8720 = vrot.lane.b32.xlu0 %v8582, 110
        %v8721 = vpop.permute.xlu0 %8720
        %8722 = vrot.lane.b32.xlu0 %v8583, 110
        %v8723 = vpop.permute.xlu0 %8722
        %8724 = vrot.lane.b32.xlu0 %v8584, 110
        %v8725 = vpop.permute.xlu0 %8724
        %8726 = vrot.lane.b32.xlu0 %v8585, 110
        %v8727 = vpop.permute.xlu0 %8726
        %8728 = vrot.lane.b32.xlu0 %v8586, 110
        %v8729 = vpop.permute.xlu0 %8728
        %8730 = vrot.lane.b32.xlu0 %v8587, 110
        %v8731 = vpop.permute.xlu0 %8730
        %8732 = vrot.lane.b32.xlu0 %v8588, 110
        %v8733 = vpop.permute.xlu0 %8732
        %8734 = vrot.lane.b32.xlu0 %v8589, 110
        %v8735 = vpop.permute.xlu0 %8734
        %8736 = vrot.lane.b32.xlu0 %v8590, 110
        %v8737 = vpop.permute.xlu0 %8736
        %8738 = vrot.lane.b32.xlu0 %v8591, 110
        %v8739 = vpop.permute.xlu0 %8738
        %8740 = vrot.lane.b32.xlu0 %v8592, 110
        %v8741 = vpop.permute.xlu0 %8740
        %8742 = vrot.lane.b32.xlu0 %v8593, 110
        %v8743 = vpop.permute.xlu0 %8742
        %8744 = vrot.lane.b32.xlu0 %v8594, 110
        %v8745 = vpop.permute.xlu0 %8744
        %8746 = vrot.lane.b32.xlu0 %v8595, 110
        %v8747 = vpop.permute.xlu0 %8746
        %8748 = vrot.lane.b32.xlu0 %v8596, 110
        %v8749 = vpop.permute.xlu0 %8748
        %8750 = vrot.lane.b32.xlu0 %v8597, 110
        %v8751 = vpop.permute.xlu0 %8750
        %8752 = vrot.lane.b32.xlu0 %v8598, 110
        %v8753 = vpop.permute.xlu0 %8752
        %8754 = vrot.lane.b32.xlu0 %v8599, 110
        %v8755 = vpop.permute.xlu0 %8754
        %8756 = vrot.lane.b32.xlu0 %v8600, 110
        %v8757 = vpop.permute.xlu0 %8756
        %8758 = vrot.lane.b32.xlu0 %v8601, 110
        %v8759 = vpop.permute.xlu0 %8758
        %8760 = vrot.lane.b32.xlu0 %v8602, 110
        %v8761 = vpop.permute.xlu0 %8760
        %8762 = vrot.lane.b32.xlu0 %v8603, 110
        %v8763 = vpop.permute.xlu0 %8762
        %8764 = vrot.lane.b32.xlu0 %v8604, 110
        %v8765 = vpop.permute.xlu0 %8764
        %8766 = vrot.lane.b32.xlu0 %v8605, 110
        %v8767 = vpop.permute.xlu0 %8766
        %8768 = vrot.lane.b32.xlu0 %v8606, 110
        %v8769 = vpop.permute.xlu0 %8768
        %8770 = vrot.lane.b32.xlu0 %v8607, 110
        %v8771 = vpop.permute.xlu0 %8770
        %8772 = vrot.lane.b32.xlu0 %v8608, 110
        %v8773 = vpop.permute.xlu0 %8772
        %8774 = vrot.lane.b32.xlu0 %v8609, 110
        %v8775 = vpop.permute.xlu0 %8774
        %8776 = vrot.lane.b32.xlu0 %v8610, 110
        %v8777 = vpop.permute.xlu0 %8776
        %8778 = vrot.lane.b32.xlu0 %v8611, 110
        %v8779 = vpop.permute.xlu0 %8778
        %8780 = vrot.lane.b32.xlu0 %v8612, 110
        %v8781 = vpop.permute.xlu0 %8780
        %8782 = vrot.lane.b32.xlu0 %v8613, 110
        %v8783 = vpop.permute.xlu0 %8782
        %8784 = vrot.lane.b32.xlu0 %v8614, 110
        %v8785 = vpop.permute.xlu0 %8784
        %8786 = vrot.lane.b32.xlu0 %v8615, 110
        %v8787 = vpop.permute.xlu0 %8786
        %8788 = vrot.lane.b32.xlu0 %v8616, 110
        %v8789 = vpop.permute.xlu0 %8788
        %8790 = vrot.lane.b32.xlu0 %v8617, 110
        %v8791 = vpop.permute.xlu0 %8790
        %8792 = vrot.lane.b32.xlu0 %v8618, 110
        %v8793 = vpop.permute.xlu0 %8792
        %8794 = vrot.lane.b32.xlu0 %v8619, 110
        %v8795 = vpop.permute.xlu0 %8794
        %8796 = vrot.lane.b32.xlu0 %v8620, 110
        %v8797 = vpop.permute.xlu0 %8796
        %8798 = vrot.lane.b32.xlu0 %v8621, 110
        %v8799 = vpop.permute.xlu0 %8798
        %8800 = vrot.lane.b32.xlu0 %v8622, 110
        %v8801 = vpop.permute.xlu0 %8800
        %8802 = vrot.lane.b32.xlu0 %v8623, 110
        %v8803 = vpop.permute.xlu0 %8802
        %8804 = vrot.lane.b32.xlu0 %v8624, 110
        %v8805 = vpop.permute.xlu0 %8804
        %8806 = vrot.lane.b32.xlu0 %v8625, 110
        %v8807 = vpop.permute.xlu0 %8806
        %8808 = vrot.lane.b32.xlu0 %v8626, 110
        %v8809 = vpop.permute.xlu0 %8808
        %8810 = vrot.lane.b32.xlu0 %v8627, 110
        %v8811 = vpop.permute.xlu0 %8810
        %8812 = vrot.lane.b32.xlu0 %v8628, 110
        %v8813 = vpop.permute.xlu0 %8812
        %8814 = vrot.lane.b32.xlu0 %v8629, 110
        %v8815 = vpop.permute.xlu0 %8814
        %8816 = vrot.lane.b32.xlu0 %v8630, 110
        %v8817 = vpop.permute.xlu0 %8816
        %8818 = vrot.lane.b32.xlu0 %v8631, 110
        %v8819 = vpop.permute.xlu0 %8818
        %8820 = vrot.lane.b32.xlu0 %v8632, 110
        %v8821 = vpop.permute.xlu0 %8820
        %8822 = vrot.lane.b32.xlu0 %v8633, 110
        %v8823 = vpop.permute.xlu0 %8822
        %8824 = vrot.lane.b32.xlu0 %v8634, 110
        %v8825 = vpop.permute.xlu0 %8824
        %8826 = vrot.lane.b32.xlu0 %v8635, 110
        %v8827 = vpop.permute.xlu0 %8826
        %v8892 = vadd.f32 %v8188, %v8701
        %v8893 = vadd.f32 %v8189, %v8703
        %v8894 = vadd.f32 %v8190, %v8705
        %v8895 = vadd.f32 %v8191, %v8707
        %v8896 = vadd.f32 %v8192, %v8709
        %v8897 = vadd.f32 %v8193, %v8711
        %v8898 = vadd.f32 %v8194, %v8713
        %v8899 = vadd.f32 %v8195, %v8715
        %v8900 = vadd.f32 %v8196, %v8717
        %v8901 = vadd.f32 %v8197, %v8719
        %v8902 = vadd.f32 %v8198, %v8721
        %v8903 = vadd.f32 %v8199, %v8723
        %v8904 = vadd.f32 %v8200, %v8725
        %v8905 = vadd.f32 %v8201, %v8727
        %v8906 = vadd.f32 %v8202, %v8729
        %v8907 = vadd.f32 %v8203, %v8731
        %v8908 = vadd.f32 %v8204, %v8733
        %v8909 = vadd.f32 %v8205, %v8735
        %v8910 = vadd.f32 %v8206, %v8737
        %v8911 = vadd.f32 %v8207, %v8739
        %v8912 = vadd.f32 %v8208, %v8741
        %v8913 = vadd.f32 %v8209, %v8743
        %v8914 = vadd.f32 %v8210, %v8745
        %v8915 = vadd.f32 %v8211, %v8747
        %v8916 = vadd.f32 %v8212, %v8749
        %v8917 = vadd.f32 %v8213, %v8751
        %v8918 = vadd.f32 %v8214, %v8753
        %v8919 = vadd.f32 %v8215, %v8755
        %v8920 = vadd.f32 %v8216, %v8757
        %v8921 = vadd.f32 %v8217, %v8759
        %v8922 = vadd.f32 %v8218, %v8761
        %v8923 = vadd.f32 %v8219, %v8763
        %v8924 = vadd.f32 %v8220, %v8765
        %v8925 = vadd.f32 %v8221, %v8767
        %v8926 = vadd.f32 %v8222, %v8769
        %v8927 = vadd.f32 %v8223, %v8771
        %v8928 = vadd.f32 %v8224, %v8773
        %v8929 = vadd.f32 %v8225, %v8775
        %v8930 = vadd.f32 %v8226, %v8777
        %v8931 = vadd.f32 %v8227, %v8779
        %v8932 = vadd.f32 %v8228, %v8781
        %v8933 = vadd.f32 %v8229, %v8783
        %v8934 = vadd.f32 %v8230, %v8785
        %v8935 = vadd.f32 %v8231, %v8787
        %v8936 = vadd.f32 %v8232, %v8789
        %v8937 = vadd.f32 %v8233, %v8791
        %v8938 = vadd.f32 %v8234, %v8793
        %v8939 = vadd.f32 %v8235, %v8795
        %v8940 = vadd.f32 %v8236, %v8797
        %v8941 = vadd.f32 %v8237, %v8799
        %v8942 = vadd.f32 %v8238, %v8801
        %v8943 = vadd.f32 %v8239, %v8803
        %v8944 = vadd.f32 %v8240, %v8805
        %v8945 = vadd.f32 %v8241, %v8807
        %v8946 = vadd.f32 %v8242, %v8809
        %v8947 = vadd.f32 %v8243, %v8811
        %v8948 = vadd.f32 %v8244, %v8813
        %v8949 = vadd.f32 %v8245, %v8815
        %v8950 = vadd.f32 %v8246, %v8817
        %v8951 = vadd.f32 %v8247, %v8819
        %v8952 = vadd.f32 %v8248, %v8821
        %v8953 = vadd.f32 %v8249, %v8823
        %v8954 = vadd.f32 %v8250, %v8825
        %v8955 = vadd.f32 %v8251, %v8827
        %9020 = vrot.lane.b32.xlu0 %v8508, 119
        %v9021 = vpop.permute.xlu0 %9020
        %9022 = vrot.lane.b32.xlu0 %v8509, 119
        %v9023 = vpop.permute.xlu0 %9022
        %9024 = vrot.lane.b32.xlu0 %v8510, 119
        %v9025 = vpop.permute.xlu0 %9024
        %9026 = vrot.lane.b32.xlu0 %v8511, 119
        %v9027 = vpop.permute.xlu0 %9026
        %9028 = vrot.lane.b32.xlu0 %v8512, 119
        %v9029 = vpop.permute.xlu0 %9028
        %9030 = vrot.lane.b32.xlu0 %v8513, 119
        %v9031 = vpop.permute.xlu0 %9030
        %9032 = vrot.lane.b32.xlu0 %v8514, 119
        %v9033 = vpop.permute.xlu0 %9032
        %9034 = vrot.lane.b32.xlu0 %v8515, 119
        %v9035 = vpop.permute.xlu0 %9034
        %9036 = vrot.lane.b32.xlu0 %v8516, 119
        %v9037 = vpop.permute.xlu0 %9036
        %9038 = vrot.lane.b32.xlu0 %v8517, 119
        %v9039 = vpop.permute.xlu0 %9038
        %9040 = vrot.lane.b32.xlu0 %v8518, 119
        %v9041 = vpop.permute.xlu0 %9040
        %9042 = vrot.lane.b32.xlu0 %v8519, 119
        %v9043 = vpop.permute.xlu0 %9042
        %9044 = vrot.lane.b32.xlu0 %v8520, 119
        %v9045 = vpop.permute.xlu0 %9044
        %9046 = vrot.lane.b32.xlu0 %v8521, 119
        %v9047 = vpop.permute.xlu0 %9046
        %9048 = vrot.lane.b32.xlu0 %v8522, 119
        %v9049 = vpop.permute.xlu0 %9048
        %9050 = vrot.lane.b32.xlu0 %v8523, 119
        %v9051 = vpop.permute.xlu0 %9050
        %9052 = vrot.lane.b32.xlu0 %v8524, 119
        %v9053 = vpop.permute.xlu0 %9052
        %9054 = vrot.lane.b32.xlu0 %v8525, 119
        %v9055 = vpop.permute.xlu0 %9054
        %9056 = vrot.lane.b32.xlu0 %v8526, 119
        %v9057 = vpop.permute.xlu0 %9056
        %9058 = vrot.lane.b32.xlu0 %v8527, 119
        %v9059 = vpop.permute.xlu0 %9058
        %9060 = vrot.lane.b32.xlu0 %v8528, 119
        %v9061 = vpop.permute.xlu0 %9060
        %9062 = vrot.lane.b32.xlu0 %v8529, 119
        %v9063 = vpop.permute.xlu0 %9062
        %9064 = vrot.lane.b32.xlu0 %v8530, 119
        %v9065 = vpop.permute.xlu0 %9064
        %9066 = vrot.lane.b32.xlu0 %v8531, 119
        %v9067 = vpop.permute.xlu0 %9066
        %9068 = vrot.lane.b32.xlu0 %v8532, 119
        %v9069 = vpop.permute.xlu0 %9068
        %9070 = vrot.lane.b32.xlu0 %v8533, 119
        %v9071 = vpop.permute.xlu0 %9070
        %9072 = vrot.lane.b32.xlu0 %v8534, 119
        %v9073 = vpop.permute.xlu0 %9072
        %9074 = vrot.lane.b32.xlu0 %v8535, 119
        %v9075 = vpop.permute.xlu0 %9074
        %9076 = vrot.lane.b32.xlu0 %v8536, 119
        %v9077 = vpop.permute.xlu0 %9076
        %9078 = vrot.lane.b32.xlu0 %v8537, 119
        %v9079 = vpop.permute.xlu0 %9078
        %9080 = vrot.lane.b32.xlu0 %v8538, 119
        %v9081 = vpop.permute.xlu0 %9080
        %9082 = vrot.lane.b32.xlu0 %v8539, 119
        %v9083 = vpop.permute.xlu0 %9082
        %9084 = vrot.lane.b32.xlu0 %v8540, 119
        %v9085 = vpop.permute.xlu0 %9084
        %9086 = vrot.lane.b32.xlu0 %v8541, 119
        %v9087 = vpop.permute.xlu0 %9086
        %9088 = vrot.lane.b32.xlu0 %v8542, 119
        %v9089 = vpop.permute.xlu0 %9088
        %9090 = vrot.lane.b32.xlu0 %v8543, 119
        %v9091 = vpop.permute.xlu0 %9090
        %9092 = vrot.lane.b32.xlu0 %v8544, 119
        %v9093 = vpop.permute.xlu0 %9092
        %9094 = vrot.lane.b32.xlu0 %v8545, 119
        %v9095 = vpop.permute.xlu0 %9094
        %9096 = vrot.lane.b32.xlu0 %v8546, 119
        %v9097 = vpop.permute.xlu0 %9096
        %9098 = vrot.lane.b32.xlu0 %v8547, 119
        %v9099 = vpop.permute.xlu0 %9098
        %9100 = vrot.lane.b32.xlu0 %v8548, 119
        %v9101 = vpop.permute.xlu0 %9100
        %9102 = vrot.lane.b32.xlu0 %v8549, 119
        %v9103 = vpop.permute.xlu0 %9102
        %9104 = vrot.lane.b32.xlu0 %v8550, 119
        %v9105 = vpop.permute.xlu0 %9104
        %9106 = vrot.lane.b32.xlu0 %v8551, 119
        %v9107 = vpop.permute.xlu0 %9106
        %9108 = vrot.lane.b32.xlu0 %v8552, 119
        %v9109 = vpop.permute.xlu0 %9108
        %9110 = vrot.lane.b32.xlu0 %v8553, 119
        %v9111 = vpop.permute.xlu0 %9110
        %9112 = vrot.lane.b32.xlu0 %v8554, 119
        %v9113 = vpop.permute.xlu0 %9112
        %9114 = vrot.lane.b32.xlu0 %v8555, 119
        %v9115 = vpop.permute.xlu0 %9114
        %9116 = vrot.lane.b32.xlu0 %v8556, 119
        %v9117 = vpop.permute.xlu0 %9116
        %9118 = vrot.lane.b32.xlu0 %v8557, 119
        %v9119 = vpop.permute.xlu0 %9118
        %9120 = vrot.lane.b32.xlu0 %v8558, 119
        %v9121 = vpop.permute.xlu0 %9120
        %9122 = vrot.lane.b32.xlu0 %v8559, 119
        %v9123 = vpop.permute.xlu0 %9122
        %9124 = vrot.lane.b32.xlu0 %v8560, 119
        %v9125 = vpop.permute.xlu0 %9124
        %9126 = vrot.lane.b32.xlu0 %v8561, 119
        %v9127 = vpop.permute.xlu0 %9126
        %9128 = vrot.lane.b32.xlu0 %v8562, 119
        %v9129 = vpop.permute.xlu0 %9128
        %9130 = vrot.lane.b32.xlu0 %v8563, 119
        %v9131 = vpop.permute.xlu0 %9130
        %9132 = vrot.lane.b32.xlu0 %v8564, 119
        %v9133 = vpop.permute.xlu0 %9132
        %9134 = vrot.lane.b32.xlu0 %v8565, 119
        %v9135 = vpop.permute.xlu0 %9134
        %9136 = vrot.lane.b32.xlu0 %v8566, 119
        %v9137 = vpop.permute.xlu0 %9136
        %9138 = vrot.lane.b32.xlu0 %v8567, 119
        %v9139 = vpop.permute.xlu0 %9138
        %9140 = vrot.lane.b32.xlu0 %v8568, 119
        %v9141 = vpop.permute.xlu0 %9140
        %9142 = vrot.lane.b32.xlu0 %v8569, 119
        %v9143 = vpop.permute.xlu0 %9142
        %9144 = vrot.lane.b32.xlu0 %v8570, 119
        %v9145 = vpop.permute.xlu0 %9144
        %9146 = vrot.lane.b32.xlu0 %v8571, 119
        %v9147 = vpop.permute.xlu0 %9146
        %v9212 = vmul.f32 %v7965, %v9021
        %v9213 = vmul.f32 %v7967, %v9023
        %v9214 = vmul.f32 %v7970, %v9025
        %v9215 = vmul.f32 %v7972, %v9027
        %v9216 = vmul.f32 %v7975, %v9029
        %v9217 = vmul.f32 %v7977, %v9031
        %v9218 = vmul.f32 %v7980, %v9033
        %v9219 = vmul.f32 %v7982, %v9035
        %v9220 = vmul.f32 %v7985, %v9037
        %v9221 = vmul.f32 %v7987, %v9039
        %v9222 = vmul.f32 %v7990, %v9041
        %v9223 = vmul.f32 %v7992, %v9043
        %v9224 = vmul.f32 %v7995, %v9045
        %v9225 = vmul.f32 %v7997, %v9047
        %v9226 = vmul.f32 %v8000, %v9049
        %v9227 = vmul.f32 %v8002, %v9051
        %v9228 = vmul.f32 %v8005, %v9053
        %v9229 = vmul.f32 %v8007, %v9055
        %v9230 = vmul.f32 %v8010, %v9057
        %v9231 = vmul.f32 %v8012, %v9059
        %v9232 = vmul.f32 %v8015, %v9061
        %v9233 = vmul.f32 %v8017, %v9063
        %v9234 = vmul.f32 %v8020, %v9065
        %v9235 = vmul.f32 %v8022, %v9067
        %v9236 = vmul.f32 %v8025, %v9069
        %v9237 = vmul.f32 %v8027, %v9071
        %v9238 = vmul.f32 %v8030, %v9073
        %v9239 = vmul.f32 %v8032, %v9075
        %v9240 = vmul.f32 %v8035, %v9077
        %v9241 = vmul.f32 %v8037, %v9079
        %v9242 = vmul.f32 %v8040, %v9081
        %v9243 = vmul.f32 %v8042, %v9083
        %v9244 = vmul.f32 %v8045, %v9085
        %v9245 = vmul.f32 %v8047, %v9087
        %v9246 = vmul.f32 %v8050, %v9089
        %v9247 = vmul.f32 %v8052, %v9091
        %v9248 = vmul.f32 %v8055, %v9093
        %v9249 = vmul.f32 %v8057, %v9095
        %v9250 = vmul.f32 %v8060, %v9097
        %v9251 = vmul.f32 %v8062, %v9099
        %v9252 = vmul.f32 %v8065, %v9101
        %v9253 = vmul.f32 %v8067, %v9103
        %v9254 = vmul.f32 %v8070, %v9105
        %v9255 = vmul.f32 %v8072, %v9107
        %v9256 = vmul.f32 %v8075, %v9109
        %v9257 = vmul.f32 %v8077, %v9111
        %v9258 = vmul.f32 %v8080, %v9113
        %v9259 = vmul.f32 %v8082, %v9115
        %v9260 = vmul.f32 %v8085, %v9117
        %v9261 = vmul.f32 %v8087, %v9119
        %v9262 = vmul.f32 %v8090, %v9121
        %v9263 = vmul.f32 %v8092, %v9123
        %v9264 = vmul.f32 %v8095, %v9125
        %v9265 = vmul.f32 %v8097, %v9127
        %v9266 = vmul.f32 %v8100, %v9129
        %v9267 = vmul.f32 %v8102, %v9131
        %v9268 = vmul.f32 %v8105, %v9133
        %v9269 = vmul.f32 %v8107, %v9135
        %v9270 = vmul.f32 %v8110, %v9137
        %v9271 = vmul.f32 %v8112, %v9139
        %v9272 = vmul.f32 %v8115, %v9141
        %v9273 = vmul.f32 %v8117, %v9143
        %v9274 = vmul.f32 %v8120, %v9145
        %v9275 = vmul.f32 %v8122, %v9147
        %9340 = vrot.lane.b32.xlu0 %v8892, 9
        %v9341 = vpop.permute.xlu0 %9340
        %9342 = vrot.lane.b32.xlu0 %v8893, 9
        %v9343 = vpop.permute.xlu0 %9342
        %9344 = vrot.lane.b32.xlu0 %v8894, 9
        %v9345 = vpop.permute.xlu0 %9344
        %9346 = vrot.lane.b32.xlu0 %v8895, 9
        %v9347 = vpop.permute.xlu0 %9346
        %9348 = vrot.lane.b32.xlu0 %v8896, 9
        %v9349 = vpop.permute.xlu0 %9348
        %9350 = vrot.lane.b32.xlu0 %v8897, 9
        %v9351 = vpop.permute.xlu0 %9350
        %9352 = vrot.lane.b32.xlu0 %v8898, 9
        %v9353 = vpop.permute.xlu0 %9352
        %9354 = vrot.lane.b32.xlu0 %v8899, 9
        %v9355 = vpop.permute.xlu0 %9354
        %9356 = vrot.lane.b32.xlu0 %v8900, 9
        %v9357 = vpop.permute.xlu0 %9356
        %9358 = vrot.lane.b32.xlu0 %v8901, 9
        %v9359 = vpop.permute.xlu0 %9358
        %9360 = vrot.lane.b32.xlu0 %v8902, 9
        %v9361 = vpop.permute.xlu0 %9360
        %9362 = vrot.lane.b32.xlu0 %v8903, 9
        %v9363 = vpop.permute.xlu0 %9362
        %9364 = vrot.lane.b32.xlu0 %v8904, 9
        %v9365 = vpop.permute.xlu0 %9364
        %9366 = vrot.lane.b32.xlu0 %v8905, 9
        %v9367 = vpop.permute.xlu0 %9366
        %9368 = vrot.lane.b32.xlu0 %v8906, 9
        %v9369 = vpop.permute.xlu0 %9368
        %9370 = vrot.lane.b32.xlu0 %v8907, 9
        %v9371 = vpop.permute.xlu0 %9370
        %9372 = vrot.lane.b32.xlu0 %v8908, 9
        %v9373 = vpop.permute.xlu0 %9372
        %9374 = vrot.lane.b32.xlu0 %v8909, 9
        %v9375 = vpop.permute.xlu0 %9374
        %9376 = vrot.lane.b32.xlu0 %v8910, 9
        %v9377 = vpop.permute.xlu0 %9376
        %9378 = vrot.lane.b32.xlu0 %v8911, 9
        %v9379 = vpop.permute.xlu0 %9378
        %9380 = vrot.lane.b32.xlu0 %v8912, 9
        %v9381 = vpop.permute.xlu0 %9380
        %9382 = vrot.lane.b32.xlu0 %v8913, 9
        %v9383 = vpop.permute.xlu0 %9382
        %9384 = vrot.lane.b32.xlu0 %v8914, 9
        %v9385 = vpop.permute.xlu0 %9384
        %9386 = vrot.lane.b32.xlu0 %v8915, 9
        %v9387 = vpop.permute.xlu0 %9386
        %9388 = vrot.lane.b32.xlu0 %v8916, 9
        %v9389 = vpop.permute.xlu0 %9388
        %9390 = vrot.lane.b32.xlu0 %v8917, 9
        %v9391 = vpop.permute.xlu0 %9390
        %9392 = vrot.lane.b32.xlu0 %v8918, 9
        %v9393 = vpop.permute.xlu0 %9392
        %9394 = vrot.lane.b32.xlu0 %v8919, 9
        %v9395 = vpop.permute.xlu0 %9394
        %9396 = vrot.lane.b32.xlu0 %v8920, 9
        %v9397 = vpop.permute.xlu0 %9396
        %9398 = vrot.lane.b32.xlu0 %v8921, 9
        %v9399 = vpop.permute.xlu0 %9398
        %9400 = vrot.lane.b32.xlu0 %v8922, 9
        %v9401 = vpop.permute.xlu0 %9400
        %9402 = vrot.lane.b32.xlu0 %v8923, 9
        %v9403 = vpop.permute.xlu0 %9402
        %9404 = vrot.lane.b32.xlu0 %v8924, 9
        %v9405 = vpop.permute.xlu0 %9404
        %9406 = vrot.lane.b32.xlu0 %v8925, 9
        %v9407 = vpop.permute.xlu0 %9406
        %9408 = vrot.lane.b32.xlu0 %v8926, 9
        %v9409 = vpop.permute.xlu0 %9408
        %9410 = vrot.lane.b32.xlu0 %v8927, 9
        %v9411 = vpop.permute.xlu0 %9410
        %9412 = vrot.lane.b32.xlu0 %v8928, 9
        %v9413 = vpop.permute.xlu0 %9412
        %9414 = vrot.lane.b32.xlu0 %v8929, 9
        %v9415 = vpop.permute.xlu0 %9414
        %9416 = vrot.lane.b32.xlu0 %v8930, 9
        %v9417 = vpop.permute.xlu0 %9416
        %9418 = vrot.lane.b32.xlu0 %v8931, 9
        %v9419 = vpop.permute.xlu0 %9418
        %9420 = vrot.lane.b32.xlu0 %v8932, 9
        %v9421 = vpop.permute.xlu0 %9420
        %9422 = vrot.lane.b32.xlu0 %v8933, 9
        %v9423 = vpop.permute.xlu0 %9422
        %9424 = vrot.lane.b32.xlu0 %v8934, 9
        %v9425 = vpop.permute.xlu0 %9424
        %9426 = vrot.lane.b32.xlu0 %v8935, 9
        %v9427 = vpop.permute.xlu0 %9426
        %9428 = vrot.lane.b32.xlu0 %v8936, 9
        %v9429 = vpop.permute.xlu0 %9428
        %9430 = vrot.lane.b32.xlu0 %v8937, 9
        %v9431 = vpop.permute.xlu0 %9430
        %9432 = vrot.lane.b32.xlu0 %v8938, 9
        %v9433 = vpop.permute.xlu0 %9432
        %9434 = vrot.lane.b32.xlu0 %v8939, 9
        %v9435 = vpop.permute.xlu0 %9434
        %9436 = vrot.lane.b32.xlu0 %v8940, 9
        %v9437 = vpop.permute.xlu0 %9436
        %9438 = vrot.lane.b32.xlu0 %v8941, 9
        %v9439 = vpop.permute.xlu0 %9438
        %9440 = vrot.lane.b32.xlu0 %v8942, 9
        %v9441 = vpop.permute.xlu0 %9440
        %9442 = vrot.lane.b32.xlu0 %v8943, 9
        %v9443 = vpop.permute.xlu0 %9442
        %9444 = vrot.lane.b32.xlu0 %v8944, 9
        %v9445 = vpop.permute.xlu0 %9444
        %9446 = vrot.lane.b32.xlu0 %v8945, 9
        %v9447 = vpop.permute.xlu0 %9446
        %9448 = vrot.lane.b32.xlu0 %v8946, 9
        %v9449 = vpop.permute.xlu0 %9448
        %9450 = vrot.lane.b32.xlu0 %v8947, 9
        %v9451 = vpop.permute.xlu0 %9450
        %9452 = vrot.lane.b32.xlu0 %v8948, 9
        %v9453 = vpop.permute.xlu0 %9452
        %9454 = vrot.lane.b32.xlu0 %v8949, 9
        %v9455 = vpop.permute.xlu0 %9454
        %9456 = vrot.lane.b32.xlu0 %v8950, 9
        %v9457 = vpop.permute.xlu0 %9456
        %9458 = vrot.lane.b32.xlu0 %v8951, 9
        %v9459 = vpop.permute.xlu0 %9458
        %9460 = vrot.lane.b32.xlu0 %v8952, 9
        %v9461 = vpop.permute.xlu0 %9460
        %9462 = vrot.lane.b32.xlu0 %v8953, 9
        %v9463 = vpop.permute.xlu0 %9462
        %9464 = vrot.lane.b32.xlu0 %v8954, 9
        %v9465 = vpop.permute.xlu0 %9464
        %9466 = vrot.lane.b32.xlu0 %v8955, 9
        %v9467 = vpop.permute.xlu0 %9466
        %v9532 = vadd.f32 %v9212, %v9341
        %v9533 = vadd.f32 %v9213, %v9343
        %v9534 = vadd.f32 %v9214, %v9345
        %v9535 = vadd.f32 %v9215, %v9347
        %v9536 = vadd.f32 %v9216, %v9349
        %v9537 = vadd.f32 %v9217, %v9351
        %v9538 = vadd.f32 %v9218, %v9353
        %v9539 = vadd.f32 %v9219, %v9355
        %v9540 = vadd.f32 %v9220, %v9357
        %v9541 = vadd.f32 %v9221, %v9359
        %v9542 = vadd.f32 %v9222, %v9361
        %v9543 = vadd.f32 %v9223, %v9363
        %v9544 = vadd.f32 %v9224, %v9365
        %v9545 = vadd.f32 %v9225, %v9367
        %v9546 = vadd.f32 %v9226, %v9369
        %v9547 = vadd.f32 %v9227, %v9371
        %v9548 = vadd.f32 %v9228, %v9373
        %v9549 = vadd.f32 %v9229, %v9375
        %v9550 = vadd.f32 %v9230, %v9377
        %v9551 = vadd.f32 %v9231, %v9379
        %v9552 = vadd.f32 %v9232, %v9381
        %v9553 = vadd.f32 %v9233, %v9383
        %v9554 = vadd.f32 %v9234, %v9385
        %v9555 = vadd.f32 %v9235, %v9387
        %v9556 = vadd.f32 %v9236, %v9389
        %v9557 = vadd.f32 %v9237, %v9391
        %v9558 = vadd.f32 %v9238, %v9393
        %v9559 = vadd.f32 %v9239, %v9395
        %v9560 = vadd.f32 %v9240, %v9397
        %v9561 = vadd.f32 %v9241, %v9399
        %v9562 = vadd.f32 %v9242, %v9401
        %v9563 = vadd.f32 %v9243, %v9403
        %v9564 = vadd.f32 %v9244, %v9405
        %v9565 = vadd.f32 %v9245, %v9407
        %v9566 = vadd.f32 %v9246, %v9409
        %v9567 = vadd.f32 %v9247, %v9411
        %v9568 = vadd.f32 %v9248, %v9413
        %v9569 = vadd.f32 %v9249, %v9415
        %v9570 = vadd.f32 %v9250, %v9417
        %v9571 = vadd.f32 %v9251, %v9419
        %v9572 = vadd.f32 %v9252, %v9421
        %v9573 = vadd.f32 %v9253, %v9423
        %v9574 = vadd.f32 %v9254, %v9425
        %v9575 = vadd.f32 %v9255, %v9427
        %v9576 = vadd.f32 %v9256, %v9429
        %v9577 = vadd.f32 %v9257, %v9431
        %v9578 = vadd.f32 %v9258, %v9433
        %v9579 = vadd.f32 %v9259, %v9435
        %v9580 = vadd.f32 %v9260, %v9437
        %v9581 = vadd.f32 %v9261, %v9439
        %v9582 = vadd.f32 %v9262, %v9441
        %v9583 = vadd.f32 %v9263, %v9443
        %v9584 = vadd.f32 %v9264, %v9445
        %v9585 = vadd.f32 %v9265, %v9447
        %v9586 = vadd.f32 %v9266, %v9449
        %v9587 = vadd.f32 %v9267, %v9451
        %v9588 = vadd.f32 %v9268, %v9453
        %v9589 = vadd.f32 %v9269, %v9455
        %v9590 = vadd.f32 %v9270, %v9457
        %v9591 = vadd.f32 %v9271, %v9459
        %v9592 = vadd.f32 %v9272, %v9461
        %v9593 = vadd.f32 %v9273, %v9463
        %v9594 = vadd.f32 %v9274, %v9465
        %v9595 = vadd.f32 %v9275, %v9467
        %v9596 = vmul.f32 %v8124, 1.442695
        %v9597 = vpow.pop %v9596
        %v9598 = vmul.f32 %v8125, 1.442695
        %v9599 = vpow.pop %v9598
        %v9600 = vmul.f32 %v8126, 1.442695
        %v9601 = vpow.pop %v9600
        %v9602 = vmul.f32 %v8127, 1.442695
        %v9603 = vpow.pop %v9602
        %v9604 = vmul.f32 %v8128, 1.442695
        %v9605 = vpow.pop %v9604
        %v9606 = vmul.f32 %v8129, 1.442695
        %v9607 = vpow.pop %v9606
        %v9608 = vmul.f32 %v8130, 1.442695
        %v9609 = vpow.pop %v9608
        %v9610 = vmul.f32 %v8131, 1.442695
        %v9611 = vpow.pop %v9610
        %v9612 = vmul.f32 %v8132, 1.442695
        %v9613 = vpow.pop %v9612
        %v9614 = vmul.f32 %v8133, 1.442695
        %v9615 = vpow.pop %v9614
        %v9616 = vmul.f32 %v8134, 1.442695
        %v9617 = vpow.pop %v9616
        %v9618 = vmul.f32 %v8135, 1.442695
        %v9619 = vpow.pop %v9618
        %v9620 = vmul.f32 %v8136, 1.442695
        %v9621 = vpow.pop %v9620
        %v9622 = vmul.f32 %v8137, 1.442695
        %v9623 = vpow.pop %v9622
        %v9624 = vmul.f32 %v8138, 1.442695
        %v9625 = vpow.pop %v9624
        %v9626 = vmul.f32 %v8139, 1.442695
        %v9627 = vpow.pop %v9626
        %v9628 = vmul.f32 %v8140, 1.442695
        %v9629 = vpow.pop %v9628
        %v9630 = vmul.f32 %v8141, 1.442695
        %v9631 = vpow.pop %v9630
        %v9632 = vmul.f32 %v8142, 1.442695
        %v9633 = vpow.pop %v9632
        %v9634 = vmul.f32 %v8143, 1.442695
        %v9635 = vpow.pop %v9634
        %v9636 = vmul.f32 %v8144, 1.442695
        %v9637 = vpow.pop %v9636
        %v9638 = vmul.f32 %v8145, 1.442695
        %v9639 = vpow.pop %v9638
        %v9640 = vmul.f32 %v8146, 1.442695
        %v9641 = vpow.pop %v9640
        %v9642 = vmul.f32 %v8147, 1.442695
        %v9643 = vpow.pop %v9642
        %v9644 = vmul.f32 %v8148, 1.442695
        %v9645 = vpow.pop %v9644
        %v9646 = vmul.f32 %v8149, 1.442695
        %v9647 = vpow.pop %v9646
        %v9648 = vmul.f32 %v8150, 1.442695
        %v9649 = vpow.pop %v9648
        %v9650 = vmul.f32 %v8151, 1.442695
        %v9651 = vpow.pop %v9650
        %v9652 = vmul.f32 %v8152, 1.442695
        %v9653 = vpow.pop %v9652
        %v9654 = vmul.f32 %v8153, 1.442695
        %v9655 = vpow.pop %v9654
        %v9656 = vmul.f32 %v8154, 1.442695
        %v9657 = vpow.pop %v9656
        %v9658 = vmul.f32 %v8155, 1.442695
        %v9659 = vpow.pop %v9658
        %v9660 = vmul.f32 %v8156, 1.442695
        %v9661 = vpow.pop %v9660
        %v9662 = vmul.f32 %v8157, 1.442695
        %v9663 = vpow.pop %v9662
        %v9664 = vmul.f32 %v8158, 1.442695
        %v9665 = vpow.pop %v9664
        %v9666 = vmul.f32 %v8159, 1.442695
        %v9667 = vpow.pop %v9666
        %v9668 = vmul.f32 %v8160, 1.442695
        %v9669 = vpow.pop %v9668
        %v9670 = vmul.f32 %v8161, 1.442695
        %v9671 = vpow.pop %v9670
        %v9672 = vmul.f32 %v8162, 1.442695
        %v9673 = vpow.pop %v9672
        %v9674 = vmul.f32 %v8163, 1.442695
        %v9675 = vpow.pop %v9674
        %v9676 = vmul.f32 %v8164, 1.442695
        %v9677 = vpow.pop %v9676
        %v9678 = vmul.f32 %v8165, 1.442695
        %v9679 = vpow.pop %v9678
        %v9680 = vmul.f32 %v8166, 1.442695
        %v9681 = vpow.pop %v9680
        %v9682 = vmul.f32 %v8167, 1.442695
        %v9683 = vpow.pop %v9682
        %v9684 = vmul.f32 %v8168, 1.442695
        %v9685 = vpow.pop %v9684
        %v9686 = vmul.f32 %v8169, 1.442695
        %v9687 = vpow.pop %v9686
        %v9688 = vmul.f32 %v8170, 1.442695
        %v9689 = vpow.pop %v9688
        %v9690 = vmul.f32 %v8171, 1.442695
        %v9691 = vpow.pop %v9690
        %v9692 = vmul.f32 %v8172, 1.442695
        %v9693 = vpow.pop %v9692
        %v9694 = vmul.f32 %v8173, 1.442695
        %v9695 = vpow.pop %v9694
        %v9696 = vmul.f32 %v8174, 1.442695
        %v9697 = vpow.pop %v9696
        %v9698 = vmul.f32 %v8175, 1.442695
        %v9699 = vpow.pop %v9698
        %v9700 = vmul.f32 %v8176, 1.442695
        %v9701 = vpow.pop %v9700
        %v9702 = vmul.f32 %v8177, 1.442695
        %v9703 = vpow.pop %v9702
        %v9704 = vmul.f32 %v8178, 1.442695
        %v9705 = vpow.pop %v9704
        %v9706 = vmul.f32 %v8179, 1.442695
        %v9707 = vpow.pop %v9706
        %v9708 = vmul.f32 %v8180, 1.442695
        %v9709 = vpow.pop %v9708
        %v9710 = vmul.f32 %v8181, 1.442695
        %v9711 = vpow.pop %v9710
        %v9712 = vmul.f32 %v8182, 1.442695
        %v9713 = vpow.pop %v9712
        %v9714 = vmul.f32 %v8183, 1.442695
        %v9715 = vpow.pop %v9714
        %v9716 = vmul.f32 %v8184, 1.442695
        %v9717 = vpow.pop %v9716
        %v9718 = vmul.f32 %v8185, 1.442695
        %v9719 = vpow.pop %v9718
        %v9720 = vmul.f32 %v8186, 1.442695
        %v9721 = vpow.pop %v9720
        %v9722 = vmul.f32 %v8187, 1.442695
        %v9723 = vpow.pop %v9722
        %9724 = vrot.lane.b32.xlu0 %v8508, 9
        %v9725 = vpop.permute.xlu0 %9724
        %9726 = vrot.lane.b32.xlu0 %v8509, 9
        %v9727 = vpop.permute.xlu0 %9726
        %9728 = vrot.lane.b32.xlu0 %v8510, 9
        %v9729 = vpop.permute.xlu0 %9728
        %9730 = vrot.lane.b32.xlu0 %v8511, 9
        %v9731 = vpop.permute.xlu0 %9730
        %9732 = vrot.lane.b32.xlu0 %v8512, 9
        %v9733 = vpop.permute.xlu0 %9732
        %9734 = vrot.lane.b32.xlu0 %v8513, 9
        %v9735 = vpop.permute.xlu0 %9734
        %9736 = vrot.lane.b32.xlu0 %v8514, 9
        %v9737 = vpop.permute.xlu0 %9736
        %9738 = vrot.lane.b32.xlu0 %v8515, 9
        %v9739 = vpop.permute.xlu0 %9738
        %9740 = vrot.lane.b32.xlu0 %v8516, 9
        %v9741 = vpop.permute.xlu0 %9740
        %9742 = vrot.lane.b32.xlu0 %v8517, 9
        %v9743 = vpop.permute.xlu0 %9742
        %9744 = vrot.lane.b32.xlu0 %v8518, 9
        %v9745 = vpop.permute.xlu0 %9744
        %9746 = vrot.lane.b32.xlu0 %v8519, 9
        %v9747 = vpop.permute.xlu0 %9746
        %9748 = vrot.lane.b32.xlu0 %v8520, 9
        %v9749 = vpop.permute.xlu0 %9748
        %9750 = vrot.lane.b32.xlu0 %v8521, 9
        %v9751 = vpop.permute.xlu0 %9750
        %9752 = vrot.lane.b32.xlu0 %v8522, 9
        %v9753 = vpop.permute.xlu0 %9752
        %9754 = vrot.lane.b32.xlu0 %v8523, 9
        %v9755 = vpop.permute.xlu0 %9754
        %9756 = vrot.lane.b32.xlu0 %v8524, 9
        %v9757 = vpop.permute.xlu0 %9756
        %9758 = vrot.lane.b32.xlu0 %v8525, 9
        %v9759 = vpop.permute.xlu0 %9758
        %9760 = vrot.lane.b32.xlu0 %v8526, 9
        %v9761 = vpop.permute.xlu0 %9760
        %9762 = vrot.lane.b32.xlu0 %v8527, 9
        %v9763 = vpop.permute.xlu0 %9762
        %9764 = vrot.lane.b32.xlu0 %v8528, 9
        %v9765 = vpop.permute.xlu0 %9764
        %9766 = vrot.lane.b32.xlu0 %v8529, 9
        %v9767 = vpop.permute.xlu0 %9766
        %9768 = vrot.lane.b32.xlu0 %v8530, 9
        %v9769 = vpop.permute.xlu0 %9768
        %9770 = vrot.lane.b32.xlu0 %v8531, 9
        %v9771 = vpop.permute.xlu0 %9770
        %9772 = vrot.lane.b32.xlu0 %v8532, 9
        %v9773 = vpop.permute.xlu0 %9772
        %9774 = vrot.lane.b32.xlu0 %v8533, 9
        %v9775 = vpop.permute.xlu0 %9774
        %9776 = vrot.lane.b32.xlu0 %v8534, 9
        %v9777 = vpop.permute.xlu0 %9776
        %9778 = vrot.lane.b32.xlu0 %v8535, 9
        %v9779 = vpop.permute.xlu0 %9778
        %9780 = vrot.lane.b32.xlu0 %v8536, 9
        %v9781 = vpop.permute.xlu0 %9780
        %9782 = vrot.lane.b32.xlu0 %v8537, 9
        %v9783 = vpop.permute.xlu0 %9782
        %9784 = vrot.lane.b32.xlu0 %v8538, 9
        %v9785 = vpop.permute.xlu0 %9784
        %9786 = vrot.lane.b32.xlu0 %v8539, 9
        %v9787 = vpop.permute.xlu0 %9786
        %9788 = vrot.lane.b32.xlu0 %v8540, 9
        %v9789 = vpop.permute.xlu0 %9788
        %9790 = vrot.lane.b32.xlu0 %v8541, 9
        %v9791 = vpop.permute.xlu0 %9790
        %9792 = vrot.lane.b32.xlu0 %v8542, 9
        %v9793 = vpop.permute.xlu0 %9792
        %9794 = vrot.lane.b32.xlu0 %v8543, 9
        %v9795 = vpop.permute.xlu0 %9794
        %9796 = vrot.lane.b32.xlu0 %v8544, 9
        %v9797 = vpop.permute.xlu0 %9796
        %9798 = vrot.lane.b32.xlu0 %v8545, 9
        %v9799 = vpop.permute.xlu0 %9798
        %9800 = vrot.lane.b32.xlu0 %v8546, 9
        %v9801 = vpop.permute.xlu0 %9800
        %9802 = vrot.lane.b32.xlu0 %v8547, 9
        %v9803 = vpop.permute.xlu0 %9802
        %9804 = vrot.lane.b32.xlu0 %v8548, 9
        %v9805 = vpop.permute.xlu0 %9804
        %9806 = vrot.lane.b32.xlu0 %v8549, 9
        %v9807 = vpop.permute.xlu0 %9806
        %9808 = vrot.lane.b32.xlu0 %v8550, 9
        %v9809 = vpop.permute.xlu0 %9808
        %9810 = vrot.lane.b32.xlu0 %v8551, 9
        %v9811 = vpop.permute.xlu0 %9810
        %9812 = vrot.lane.b32.xlu0 %v8552, 9
        %v9813 = vpop.permute.xlu0 %9812
        %9814 = vrot.lane.b32.xlu0 %v8553, 9
        %v9815 = vpop.permute.xlu0 %9814
        %9816 = vrot.lane.b32.xlu0 %v8554, 9
        %v9817 = vpop.permute.xlu0 %9816
        %9818 = vrot.lane.b32.xlu0 %v8555, 9
        %v9819 = vpop.permute.xlu0 %9818
        %9820 = vrot.lane.b32.xlu0 %v8556, 9
        %v9821 = vpop.permute.xlu0 %9820
        %9822 = vrot.lane.b32.xlu0 %v8557, 9
        %v9823 = vpop.permute.xlu0 %9822
        %9824 = vrot.lane.b32.xlu0 %v8558, 9
        %v9825 = vpop.permute.xlu0 %9824
        %9826 = vrot.lane.b32.xlu0 %v8559, 9
        %v9827 = vpop.permute.xlu0 %9826
        %9828 = vrot.lane.b32.xlu0 %v8560, 9
        %v9829 = vpop.permute.xlu0 %9828
        %9830 = vrot.lane.b32.xlu0 %v8561, 9
        %v9831 = vpop.permute.xlu0 %9830
        %9832 = vrot.lane.b32.xlu0 %v8562, 9
        %v9833 = vpop.permute.xlu0 %9832
        %9834 = vrot.lane.b32.xlu0 %v8563, 9
        %v9835 = vpop.permute.xlu0 %9834
        %9836 = vrot.lane.b32.xlu0 %v8564, 9
        %v9837 = vpop.permute.xlu0 %9836
        %9838 = vrot.lane.b32.xlu0 %v8565, 9
        %v9839 = vpop.permute.xlu0 %9838
        %9840 = vrot.lane.b32.xlu0 %v8566, 9
        %v9841 = vpop.permute.xlu0 %9840
        %9842 = vrot.lane.b32.xlu0 %v8567, 9
        %v9843 = vpop.permute.xlu0 %9842
        %9844 = vrot.lane.b32.xlu0 %v8568, 9
        %v9845 = vpop.permute.xlu0 %9844
        %9846 = vrot.lane.b32.xlu0 %v8569, 9
        %v9847 = vpop.permute.xlu0 %9846
        %9848 = vrot.lane.b32.xlu0 %v8570, 9
        %v9849 = vpop.permute.xlu0 %9848
        %9850 = vrot.lane.b32.xlu0 %v8571, 9
        %v9851 = vpop.permute.xlu0 %9850
        %v9916 = vmul.f32 %v9597, %v9725
        %v9917 = vmul.f32 %v9599, %v9727
        %v9918 = vmul.f32 %v9601, %v9729
        %v9919 = vmul.f32 %v9603, %v9731
        %v9920 = vmul.f32 %v9605, %v9733
        %v9921 = vmul.f32 %v9607, %v9735
        %v9922 = vmul.f32 %v9609, %v9737
        %v9923 = vmul.f32 %v9611, %v9739
        %v9924 = vmul.f32 %v9613, %v9741
        %v9925 = vmul.f32 %v9615, %v9743
        %v9926 = vmul.f32 %v9617, %v9745
        %v9927 = vmul.f32 %v9619, %v9747
        %v9928 = vmul.f32 %v9621, %v9749
        %v9929 = vmul.f32 %v9623, %v9751
        %v9930 = vmul.f32 %v9625, %v9753
        %v9931 = vmul.f32 %v9627, %v9755
        %v9932 = vmul.f32 %v9629, %v9757
        %v9933 = vmul.f32 %v9631, %v9759
        %v9934 = vmul.f32 %v9633, %v9761
        %v9935 = vmul.f32 %v9635, %v9763
        %v9936 = vmul.f32 %v9637, %v9765
        %v9937 = vmul.f32 %v9639, %v9767
        %v9938 = vmul.f32 %v9641, %v9769
        %v9939 = vmul.f32 %v9643, %v9771
        %v9940 = vmul.f32 %v9645, %v9773
        %v9941 = vmul.f32 %v9647, %v9775
        %v9942 = vmul.f32 %v9649, %v9777
        %v9943 = vmul.f32 %v9651, %v9779
        %v9944 = vmul.f32 %v9653, %v9781
        %v9945 = vmul.f32 %v9655, %v9783
        %v9946 = vmul.f32 %v9657, %v9785
        %v9947 = vmul.f32 %v9659, %v9787
        %v9948 = vmul.f32 %v9661, %v9789
        %v9949 = vmul.f32 %v9663, %v9791
        %v9950 = vmul.f32 %v9665, %v9793
        %v9951 = vmul.f32 %v9667, %v9795
        %v9952 = vmul.f32 %v9669, %v9797
        %v9953 = vmul.f32 %v9671, %v9799
        %v9954 = vmul.f32 %v9673, %v9801
        %v9955 = vmul.f32 %v9675, %v9803
        %v9956 = vmul.f32 %v9677, %v9805
        %v9957 = vmul.f32 %v9679, %v9807
        %v9958 = vmul.f32 %v9681, %v9809
        %v9959 = vmul.f32 %v9683, %v9811
        %v9960 = vmul.f32 %v9685, %v9813
        %v9961 = vmul.f32 %v9687, %v9815
        %v9962 = vmul.f32 %v9689, %v9817
        %v9963 = vmul.f32 %v9691, %v9819
        %v9964 = vmul.f32 %v9693, %v9821
        %v9965 = vmul.f32 %v9695, %v9823
        %v9966 = vmul.f32 %v9697, %v9825
        %v9967 = vmul.f32 %v9699, %v9827
        %v9968 = vmul.f32 %v9701, %v9829
        %v9969 = vmul.f32 %v9703, %v9831
        %v9970 = vmul.f32 %v9705, %v9833
        %v9971 = vmul.f32 %v9707, %v9835
        %v9972 = vmul.f32 %v9709, %v9837
        %v9973 = vmul.f32 %v9711, %v9839
        %v9974 = vmul.f32 %v9713, %v9841
        %v9975 = vmul.f32 %v9715, %v9843
        %v9976 = vmul.f32 %v9717, %v9845
        %v9977 = vmul.f32 %v9719, %v9847
        %v9978 = vmul.f32 %v9721, %v9849
        %v9979 = vmul.f32 %v9723, %v9851
        %v9980 = vmul.f32 %v9916, 0.5
        %v9981 = vmul.f32 %v9917, 0.5
        %v9982 = vmul.f32 %v9918, 0.5
        %v9983 = vmul.f32 %v9919, 0.5
        %v9984 = vmul.f32 %v9920, 0.5
        %v9985 = vmul.f32 %v9921, 0.5
        %v9986 = vmul.f32 %v9922, 0.5
        %v9987 = vmul.f32 %v9923, 0.5
        %v9988 = vmul.f32 %v9924, 0.5
        %v9989 = vmul.f32 %v9925, 0.5
        %v9990 = vmul.f32 %v9926, 0.5
        %v9991 = vmul.f32 %v9927, 0.5
        %v9992 = vmul.f32 %v9928, 0.5
        %v9993 = vmul.f32 %v9929, 0.5
        %v9994 = vmul.f32 %v9930, 0.5
        %v9995 = vmul.f32 %v9931, 0.5
        %v9996 = vmul.f32 %v9932, 0.5
        %v9997 = vmul.f32 %v9933, 0.5
        %v9998 = vmul.f32 %v9934, 0.5
        %v9999 = vmul.f32 %v9935, 0.5
        %v10000 = vmul.f32 %v9936, 0.5
        %v10001 = vmul.f32 %v9937, 0.5
        %v10002 = vmul.f32 %v9938, 0.5
        %v10003 = vmul.f32 %v9939, 0.5
        %v10004 = vmul.f32 %v9940, 0.5
        %v10005 = vmul.f32 %v9941, 0.5
        %v10006 = vmul.f32 %v9942, 0.5
        %v10007 = vmul.f32 %v9943, 0.5
        %v10008 = vmul.f32 %v9944, 0.5
        %v10009 = vmul.f32 %v9945, 0.5
        %v10010 = vmul.f32 %v9946, 0.5
        %v10011 = vmul.f32 %v9947, 0.5
        %v10012 = vmul.f32 %v9948, 0.5
        %v10013 = vmul.f32 %v9949, 0.5
        %v10014 = vmul.f32 %v9950, 0.5
        %v10015 = vmul.f32 %v9951, 0.5
        %v10016 = vmul.f32 %v9952, 0.5
        %v10017 = vmul.f32 %v9953, 0.5
        %v10018 = vmul.f32 %v9954, 0.5
        %v10019 = vmul.f32 %v9955, 0.5
        %v10020 = vmul.f32 %v9956, 0.5
        %v10021 = vmul.f32 %v9957, 0.5
        %v10022 = vmul.f32 %v9958, 0.5
        %v10023 = vmul.f32 %v9959, 0.5
        %v10024 = vmul.f32 %v9960, 0.5
        %v10025 = vmul.f32 %v9961, 0.5
        %v10026 = vmul.f32 %v9962, 0.5
        %v10027 = vmul.f32 %v9963, 0.5
        %v10028 = vmul.f32 %v9964, 0.5
        %v10029 = vmul.f32 %v9965, 0.5
        %v10030 = vmul.f32 %v9966, 0.5
        %v10031 = vmul.f32 %v9967, 0.5
        %v10032 = vmul.f32 %v9968, 0.5
        %v10033 = vmul.f32 %v9969, 0.5
        %v10034 = vmul.f32 %v9970, 0.5
        %v10035 = vmul.f32 %v9971, 0.5
        %v10036 = vmul.f32 %v9972, 0.5
        %v10037 = vmul.f32 %v9973, 0.5
        %v10038 = vmul.f32 %v9974, 0.5
        %v10039 = vmul.f32 %v9975, 0.5
        %v10040 = vmul.f32 %v9976, 0.5
        %v10041 = vmul.f32 %v9977, 0.5
        %v10042 = vmul.f32 %v9978, 0.5
        %v10043 = vmul.f32 %v9979, 0.5
        %10108 = vrot.lane.b32.xlu0 %v9980, 110
        %v10109 = vpop.permute.xlu0 %10108
        %10110 = vrot.lane.b32.xlu0 %v9981, 110
        %v10111 = vpop.permute.xlu0 %10110
        %10112 = vrot.lane.b32.xlu0 %v9982, 110
        %v10113 = vpop.permute.xlu0 %10112
        %10114 = vrot.lane.b32.xlu0 %v9983, 110
        %v10115 = vpop.permute.xlu0 %10114
        %10116 = vrot.lane.b32.xlu0 %v9984, 110
        %v10117 = vpop.permute.xlu0 %10116
        %10118 = vrot.lane.b32.xlu0 %v9985, 110
        %v10119 = vpop.permute.xlu0 %10118
        %10120 = vrot.lane.b32.xlu0 %v9986, 110
        %v10121 = vpop.permute.xlu0 %10120
        %10122 = vrot.lane.b32.xlu0 %v9987, 110
        %v10123 = vpop.permute.xlu0 %10122
        %10124 = vrot.lane.b32.xlu0 %v9988, 110
        %v10125 = vpop.permute.xlu0 %10124
        %10126 = vrot.lane.b32.xlu0 %v9989, 110
        %v10127 = vpop.permute.xlu0 %10126
        %10128 = vrot.lane.b32.xlu0 %v9990, 110
        %v10129 = vpop.permute.xlu0 %10128
        %10130 = vrot.lane.b32.xlu0 %v9991, 110
        %v10131 = vpop.permute.xlu0 %10130
        %10132 = vrot.lane.b32.xlu0 %v9992, 110
        %v10133 = vpop.permute.xlu0 %10132
        %10134 = vrot.lane.b32.xlu0 %v9993, 110
        %v10135 = vpop.permute.xlu0 %10134
        %10136 = vrot.lane.b32.xlu0 %v9994, 110
        %v10137 = vpop.permute.xlu0 %10136
        %10138 = vrot.lane.b32.xlu0 %v9995, 110
        %v10139 = vpop.permute.xlu0 %10138
        %10140 = vrot.lane.b32.xlu0 %v9996, 110
        %v10141 = vpop.permute.xlu0 %10140
        %10142 = vrot.lane.b32.xlu0 %v9997, 110
        %v10143 = vpop.permute.xlu0 %10142
        %10144 = vrot.lane.b32.xlu0 %v9998, 110
        %v10145 = vpop.permute.xlu0 %10144
        %10146 = vrot.lane.b32.xlu0 %v9999, 110
        %v10147 = vpop.permute.xlu0 %10146
        %10148 = vrot.lane.b32.xlu0 %v10000, 110
        %v10149 = vpop.permute.xlu0 %10148
        %10150 = vrot.lane.b32.xlu0 %v10001, 110
        %v10151 = vpop.permute.xlu0 %10150
        %10152 = vrot.lane.b32.xlu0 %v10002, 110
        %v10153 = vpop.permute.xlu0 %10152
        %10154 = vrot.lane.b32.xlu0 %v10003, 110
        %v10155 = vpop.permute.xlu0 %10154
        %10156 = vrot.lane.b32.xlu0 %v10004, 110
        %v10157 = vpop.permute.xlu0 %10156
        %10158 = vrot.lane.b32.xlu0 %v10005, 110
        %v10159 = vpop.permute.xlu0 %10158
        %10160 = vrot.lane.b32.xlu0 %v10006, 110
        %v10161 = vpop.permute.xlu0 %10160
        %10162 = vrot.lane.b32.xlu0 %v10007, 110
        %v10163 = vpop.permute.xlu0 %10162
        %10164 = vrot.lane.b32.xlu0 %v10008, 110
        %v10165 = vpop.permute.xlu0 %10164
        %10166 = vrot.lane.b32.xlu0 %v10009, 110
        %v10167 = vpop.permute.xlu0 %10166
        %10168 = vrot.lane.b32.xlu0 %v10010, 110
        %v10169 = vpop.permute.xlu0 %10168
        %10170 = vrot.lane.b32.xlu0 %v10011, 110
        %v10171 = vpop.permute.xlu0 %10170
        %10172 = vrot.lane.b32.xlu0 %v10012, 110
        %v10173 = vpop.permute.xlu0 %10172
        %10174 = vrot.lane.b32.xlu0 %v10013, 110
        %v10175 = vpop.permute.xlu0 %10174
        %10176 = vrot.lane.b32.xlu0 %v10014, 110
        %v10177 = vpop.permute.xlu0 %10176
        %10178 = vrot.lane.b32.xlu0 %v10015, 110
        %v10179 = vpop.permute.xlu0 %10178
        %10180 = vrot.lane.b32.xlu0 %v10016, 110
        %v10181 = vpop.permute.xlu0 %10180
        %10182 = vrot.lane.b32.xlu0 %v10017, 110
        %v10183 = vpop.permute.xlu0 %10182
        %10184 = vrot.lane.b32.xlu0 %v10018, 110
        %v10185 = vpop.permute.xlu0 %10184
        %10186 = vrot.lane.b32.xlu0 %v10019, 110
        %v10187 = vpop.permute.xlu0 %10186
        %10188 = vrot.lane.b32.xlu0 %v10020, 110
        %v10189 = vpop.permute.xlu0 %10188
        %10190 = vrot.lane.b32.xlu0 %v10021, 110
        %v10191 = vpop.permute.xlu0 %10190
        %10192 = vrot.lane.b32.xlu0 %v10022, 110
        %v10193 = vpop.permute.xlu0 %10192
        %10194 = vrot.lane.b32.xlu0 %v10023, 110
        %v10195 = vpop.permute.xlu0 %10194
        %10196 = vrot.lane.b32.xlu0 %v10024, 110
        %v10197 = vpop.permute.xlu0 %10196
        %10198 = vrot.lane.b32.xlu0 %v10025, 110
        %v10199 = vpop.permute.xlu0 %10198
        %10200 = vrot.lane.b32.xlu0 %v10026, 110
        %v10201 = vpop.permute.xlu0 %10200
        %10202 = vrot.lane.b32.xlu0 %v10027, 110
        %v10203 = vpop.permute.xlu0 %10202
        %10204 = vrot.lane.b32.xlu0 %v10028, 110
        %v10205 = vpop.permute.xlu0 %10204
        %10206 = vrot.lane.b32.xlu0 %v10029, 110
        %v10207 = vpop.permute.xlu0 %10206
        %10208 = vrot.lane.b32.xlu0 %v10030, 110
        %v10209 = vpop.permute.xlu0 %10208
        %10210 = vrot.lane.b32.xlu0 %v10031, 110
        %v10211 = vpop.permute.xlu0 %10210
        %10212 = vrot.lane.b32.xlu0 %v10032, 110
        %v10213 = vpop.permute.xlu0 %10212
        %10214 = vrot.lane.b32.xlu0 %v10033, 110
        %v10215 = vpop.permute.xlu0 %10214
        %10216 = vrot.lane.b32.xlu0 %v10034, 110
        %v10217 = vpop.permute.xlu0 %10216
        %10218 = vrot.lane.b32.xlu0 %v10035, 110
        %v10219 = vpop.permute.xlu0 %10218
        %10220 = vrot.lane.b32.xlu0 %v10036, 110
        %v10221 = vpop.permute.xlu0 %10220
        %10222 = vrot.lane.b32.xlu0 %v10037, 110
        %v10223 = vpop.permute.xlu0 %10222
        %10224 = vrot.lane.b32.xlu0 %v10038, 110
        %v10225 = vpop.permute.xlu0 %10224
        %10226 = vrot.lane.b32.xlu0 %v10039, 110
        %v10227 = vpop.permute.xlu0 %10226
        %10228 = vrot.lane.b32.xlu0 %v10040, 110
        %v10229 = vpop.permute.xlu0 %10228
        %10230 = vrot.lane.b32.xlu0 %v10041, 110
        %v10231 = vpop.permute.xlu0 %10230
        %10232 = vrot.lane.b32.xlu0 %v10042, 110
        %v10233 = vpop.permute.xlu0 %10232
        %10234 = vrot.lane.b32.xlu0 %v10043, 110
        %v10235 = vpop.permute.xlu0 %10234
        %v10300 = vsub.f32 %v9532, %v10109
        %v10301 = vsub.f32 %v9533, %v10111
        %v10302 = vsub.f32 %v9534, %v10113
        %v10303 = vsub.f32 %v9535, %v10115
        %v10304 = vsub.f32 %v9536, %v10117
        %v10305 = vsub.f32 %v9537, %v10119
        %v10306 = vsub.f32 %v9538, %v10121
        %v10307 = vsub.f32 %v9539, %v10123
        %v10308 = vsub.f32 %v9540, %v10125
        %v10309 = vsub.f32 %v9541, %v10127
        %v10310 = vsub.f32 %v9542, %v10129
        %v10311 = vsub.f32 %v9543, %v10131
        %v10312 = vsub.f32 %v9544, %v10133
        %v10313 = vsub.f32 %v9545, %v10135
        %v10314 = vsub.f32 %v9546, %v10137
        %v10315 = vsub.f32 %v9547, %v10139
        %v10316 = vsub.f32 %v9548, %v10141
        %v10317 = vsub.f32 %v9549, %v10143
        %v10318 = vsub.f32 %v9550, %v10145
        %v10319 = vsub.f32 %v9551, %v10147
        %v10320 = vsub.f32 %v9552, %v10149
        %v10321 = vsub.f32 %v9553, %v10151
        %v10322 = vsub.f32 %v9554, %v10153
        %v10323 = vsub.f32 %v9555, %v10155
        %v10324 = vsub.f32 %v9556, %v10157
        %v10325 = vsub.f32 %v9557, %v10159
        %v10326 = vsub.f32 %v9558, %v10161
        %v10327 = vsub.f32 %v9559, %v10163
        %v10328 = vsub.f32 %v9560, %v10165
        %v10329 = vsub.f32 %v9561, %v10167
        %v10330 = vsub.f32 %v9562, %v10169
        %v10331 = vsub.f32 %v9563, %v10171
        %v10332 = vsub.f32 %v9564, %v10173
        %v10333 = vsub.f32 %v9565, %v10175
        %v10334 = vsub.f32 %v9566, %v10177
        %v10335 = vsub.f32 %v9567, %v10179
        %v10336 = vsub.f32 %v9568, %v10181
        %v10337 = vsub.f32 %v9569, %v10183
        %v10338 = vsub.f32 %v9570, %v10185
        %v10339 = vsub.f32 %v9571, %v10187
        %v10340 = vsub.f32 %v9572, %v10189
        %v10341 = vsub.f32 %v9573, %v10191
        %v10342 = vsub.f32 %v9574, %v10193
        %v10343 = vsub.f32 %v9575, %v10195
        %v10344 = vsub.f32 %v9576, %v10197
        %v10345 = vsub.f32 %v9577, %v10199
        %v10346 = vsub.f32 %v9578, %v10201
        %v10347 = vsub.f32 %v9579, %v10203
        %v10348 = vsub.f32 %v9580, %v10205
        %v10349 = vsub.f32 %v9581, %v10207
        %v10350 = vsub.f32 %v9582, %v10209
        %v10351 = vsub.f32 %v9583, %v10211
        %v10352 = vsub.f32 %v9584, %v10213
        %v10353 = vsub.f32 %v9585, %v10215
        %v10354 = vsub.f32 %v9586, %v10217
        %v10355 = vsub.f32 %v9587, %v10219
        %v10356 = vsub.f32 %v9588, %v10221
        %v10357 = vsub.f32 %v9589, %v10223
        %v10358 = vsub.f32 %v9590, %v10225
        %v10359 = vsub.f32 %v9591, %v10227
        %v10360 = vsub.f32 %v9592, %v10229
        %v10361 = vsub.f32 %v9593, %v10231
        %v10362 = vsub.f32 %v9594, %v10233
        %v10363 = vsub.f32 %v9595, %v10235
        %v10364 = vmax.f32 %v10300, 0.0
        %v10365 = vmax.f32 %v10301, 0.0
        %v10366 = vmax.f32 %v10302, 0.0
        %v10367 = vmax.f32 %v10303, 0.0
        %v10368 = vmax.f32 %v10304, 0.0
        %v10369 = vmax.f32 %v10305, 0.0
        %v10370 = vmax.f32 %v10306, 0.0
        %v10371 = vmax.f32 %v10307, 0.0
        %v10372 = vmax.f32 %v10308, 0.0
        %v10373 = vmax.f32 %v10309, 0.0
        %v10374 = vmax.f32 %v10310, 0.0
        %v10375 = vmax.f32 %v10311, 0.0
        %v10376 = vmax.f32 %v10312, 0.0
        %v10377 = vmax.f32 %v10313, 0.0
        %v10378 = vmax.f32 %v10314, 0.0
        %v10379 = vmax.f32 %v10315, 0.0
        %v10380 = vmax.f32 %v10316, 0.0
        %v10381 = vmax.f32 %v10317, 0.0
        %v10382 = vmax.f32 %v10318, 0.0
        %v10383 = vmax.f32 %v10319, 0.0
        %v10384 = vmax.f32 %v10320, 0.0
        %v10385 = vmax.f32 %v10321, 0.0
        %v10386 = vmax.f32 %v10322, 0.0
        %v10387 = vmax.f32 %v10323, 0.0
        %v10388 = vmax.f32 %v10324, 0.0
        %v10389 = vmax.f32 %v10325, 0.0
        %v10390 = vmax.f32 %v10326, 0.0
        %v10391 = vmax.f32 %v10327, 0.0
        %v10392 = vmax.f32 %v10328, 0.0
        %v10393 = vmax.f32 %v10329, 0.0
        %v10394 = vmax.f32 %v10330, 0.0
        %v10395 = vmax.f32 %v10331, 0.0
        %v10396 = vmax.f32 %v10332, 0.0
        %v10397 = vmax.f32 %v10333, 0.0
        %v10398 = vmax.f32 %v10334, 0.0
        %v10399 = vmax.f32 %v10335, 0.0
        %v10400 = vmax.f32 %v10336, 0.0
        %v10401 = vmax.f32 %v10337, 0.0
        %v10402 = vmax.f32 %v10338, 0.0
        %v10403 = vmax.f32 %v10339, 0.0
        %v10404 = vmax.f32 %v10340, 0.0
        %v10405 = vmax.f32 %v10341, 0.0
        %v10406 = vmax.f32 %v10342, 0.0
        %v10407 = vmax.f32 %v10343, 0.0
        %v10408 = vmax.f32 %v10344, 0.0
        %v10409 = vmax.f32 %v10345, 0.0
        %v10410 = vmax.f32 %v10346, 0.0
        %v10411 = vmax.f32 %v10347, 0.0
        %v10412 = vmax.f32 %v10348, 0.0
        %v10413 = vmax.f32 %v10349, 0.0
        %v10414 = vmax.f32 %v10350, 0.0
        %v10415 = vmax.f32 %v10351, 0.0
        %v10416 = vmax.f32 %v10352, 0.0
        %v10417 = vmax.f32 %v10353, 0.0
        %v10418 = vmax.f32 %v10354, 0.0
        %v10419 = vmax.f32 %v10355, 0.0
        %v10420 = vmax.f32 %v10356, 0.0
        %v10421 = vmax.f32 %v10357, 0.0
        %v10422 = vmax.f32 %v10358, 0.0
        %v10423 = vmax.f32 %v10359, 0.0
        %v10424 = vmax.f32 %v10360, 0.0
        %v10425 = vmax.f32 %v10361, 0.0
        %v10426 = vmax.f32 %v10362, 0.0
        %v10427 = vmax.f32 %v10363, 0.0
        %v10428 = vmin.f32 %v10364, 128.0
        %v10429 = vmin.f32 %v10365, 128.0
        %v10430 = vmin.f32 %v10366, 128.0
        %v10431 = vmin.f32 %v10367, 128.0
        %v10432 = vmin.f32 %v10368, 128.0
        %v10433 = vmin.f32 %v10369, 128.0
        %v10434 = vmin.f32 %v10370, 128.0
        %v10435 = vmin.f32 %v10371, 128.0
        %v10436 = vmin.f32 %v10372, 128.0
        %v10437 = vmin.f32 %v10373, 128.0
        %v10438 = vmin.f32 %v10374, 128.0
        %v10439 = vmin.f32 %v10375, 128.0
        %v10440 = vmin.f32 %v10376, 128.0
        %v10441 = vmin.f32 %v10377, 128.0
        %v10442 = vmin.f32 %v10378, 128.0
        %v10443 = vmin.f32 %v10379, 128.0
        %v10444 = vmin.f32 %v10380, 128.0
        %v10445 = vmin.f32 %v10381, 128.0
        %v10446 = vmin.f32 %v10382, 128.0
        %v10447 = vmin.f32 %v10383, 128.0
        %v10448 = vmin.f32 %v10384, 128.0
        %v10449 = vmin.f32 %v10385, 128.0
        %v10450 = vmin.f32 %v10386, 128.0
        %v10451 = vmin.f32 %v10387, 128.0
        %v10452 = vmin.f32 %v10388, 128.0
        %v10453 = vmin.f32 %v10389, 128.0
        %v10454 = vmin.f32 %v10390, 128.0
        %v10455 = vmin.f32 %v10391, 128.0
        %v10456 = vmin.f32 %v10392, 128.0
        %v10457 = vmin.f32 %v10393, 128.0
        %v10458 = vmin.f32 %v10394, 128.0
        %v10459 = vmin.f32 %v10395, 128.0
        %v10460 = vmin.f32 %v10396, 128.0
        %v10461 = vmin.f32 %v10397, 128.0
        %v10462 = vmin.f32 %v10398, 128.0
        %v10463 = vmin.f32 %v10399, 128.0
        %v10464 = vmin.f32 %v10400, 128.0
        %v10465 = vmin.f32 %v10401, 128.0
        %v10466 = vmin.f32 %v10402, 128.0
        %v10467 = vmin.f32 %v10403, 128.0
        %v10468 = vmin.f32 %v10404, 128.0
        %v10469 = vmin.f32 %v10405, 128.0
        %v10470 = vmin.f32 %v10406, 128.0
        %v10471 = vmin.f32 %v10407, 128.0
        %v10472 = vmin.f32 %v10408, 128.0
        %v10473 = vmin.f32 %v10409, 128.0
        %v10474 = vmin.f32 %v10410, 128.0
        %v10475 = vmin.f32 %v10411, 128.0
        %v10476 = vmin.f32 %v10412, 128.0
        %v10477 = vmin.f32 %v10413, 128.0
        %v10478 = vmin.f32 %v10414, 128.0
        %v10479 = vmin.f32 %v10415, 128.0
        %v10480 = vmin.f32 %v10416, 128.0
        %v10481 = vmin.f32 %v10417, 128.0
        %v10482 = vmin.f32 %v10418, 128.0
        %v10483 = vmin.f32 %v10419, 128.0
        %v10484 = vmin.f32 %v10420, 128.0
        %v10485 = vmin.f32 %v10421, 128.0
        %v10486 = vmin.f32 %v10422, 128.0
        %v10487 = vmin.f32 %v10423, 128.0
        %v10488 = vmin.f32 %v10424, 128.0
        %v10489 = vmin.f32 %v10425, 128.0
        %v10490 = vmin.f32 %v10426, 128.0
        %v10491 = vmin.f32 %v10427, 128.0
        %v10492 = vadd.f32 %v9532, %v10109
        %v10493 = vadd.f32 %v9533, %v10111
        %v10494 = vadd.f32 %v9534, %v10113
        %v10495 = vadd.f32 %v9535, %v10115
        %v10496 = vadd.f32 %v9536, %v10117
        %v10497 = vadd.f32 %v9537, %v10119
        %v10498 = vadd.f32 %v9538, %v10121
        %v10499 = vadd.f32 %v9539, %v10123
        %v10500 = vadd.f32 %v9540, %v10125
        %v10501 = vadd.f32 %v9541, %v10127
        %v10502 = vadd.f32 %v9542, %v10129
        %v10503 = vadd.f32 %v9543, %v10131
        %v10504 = vadd.f32 %v9544, %v10133
        %v10505 = vadd.f32 %v9545, %v10135
        %v10506 = vadd.f32 %v9546, %v10137
        %v10507 = vadd.f32 %v9547, %v10139
        %v10508 = vadd.f32 %v9548, %v10141
        %v10509 = vadd.f32 %v9549, %v10143
        %v10510 = vadd.f32 %v9550, %v10145
        %v10511 = vadd.f32 %v9551, %v10147
        %v10512 = vadd.f32 %v9552, %v10149
        %v10513 = vadd.f32 %v9553, %v10151
        %v10514 = vadd.f32 %v9554, %v10153
        %v10515 = vadd.f32 %v9555, %v10155
        %v10516 = vadd.f32 %v9556, %v10157
        %v10517 = vadd.f32 %v9557, %v10159
        %v10518 = vadd.f32 %v9558, %v10161
        %v10519 = vadd.f32 %v9559, %v10163
        %v10520 = vadd.f32 %v9560, %v10165
        %v10521 = vadd.f32 %v9561, %v10167
        %v10522 = vadd.f32 %v9562, %v10169
        %v10523 = vadd.f32 %v9563, %v10171
        %v10524 = vadd.f32 %v9564, %v10173
        %v10525 = vadd.f32 %v9565, %v10175
        %v10526 = vadd.f32 %v9566, %v10177
        %v10527 = vadd.f32 %v9567, %v10179
        %v10528 = vadd.f32 %v9568, %v10181
        %v10529 = vadd.f32 %v9569, %v10183
        %v10530 = vadd.f32 %v9570, %v10185
        %v10531 = vadd.f32 %v9571, %v10187
        %v10532 = vadd.f32 %v9572, %v10189
        %v10533 = vadd.f32 %v9573, %v10191
        %v10534 = vadd.f32 %v9574, %v10193
        %v10535 = vadd.f32 %v9575, %v10195
        %v10536 = vadd.f32 %v9576, %v10197
        %v10537 = vadd.f32 %v9577, %v10199
        %v10538 = vadd.f32 %v9578, %v10201
        %v10539 = vadd.f32 %v9579, %v10203
        %v10540 = vadd.f32 %v9580, %v10205
        %v10541 = vadd.f32 %v9581, %v10207
        %v10542 = vadd.f32 %v9582, %v10209
        %v10543 = vadd.f32 %v9583, %v10211
        %v10544 = vadd.f32 %v9584, %v10213
        %v10545 = vadd.f32 %v9585, %v10215
        %v10546 = vadd.f32 %v9586, %v10217
        %v10547 = vadd.f32 %v9587, %v10219
        %v10548 = vadd.f32 %v9588, %v10221
        %v10549 = vadd.f32 %v9589, %v10223
        %v10550 = vadd.f32 %v9590, %v10225
        %v10551 = vadd.f32 %v9591, %v10227
        %v10552 = vadd.f32 %v9592, %v10229
        %v10553 = vadd.f32 %v9593, %v10231
        %v10554 = vadd.f32 %v9594, %v10233
        %v10555 = vadd.f32 %v9595, %v10235
        %v10556 = vmax.f32 %v10492, 0.0
        %v10557 = vmax.f32 %v10493, 0.0
        %v10558 = vmax.f32 %v10494, 0.0
        %v10559 = vmax.f32 %v10495, 0.0
        %v10560 = vmax.f32 %v10496, 0.0
        %v10561 = vmax.f32 %v10497, 0.0
        %v10562 = vmax.f32 %v10498, 0.0
        %v10563 = vmax.f32 %v10499, 0.0
        %v10564 = vmax.f32 %v10500, 0.0
        %v10565 = vmax.f32 %v10501, 0.0
        %v10566 = vmax.f32 %v10502, 0.0
        %v10567 = vmax.f32 %v10503, 0.0
        %v10568 = vmax.f32 %v10504, 0.0
        %v10569 = vmax.f32 %v10505, 0.0
        %v10570 = vmax.f32 %v10506, 0.0
        %v10571 = vmax.f32 %v10507, 0.0
        %v10572 = vmax.f32 %v10508, 0.0
        %v10573 = vmax.f32 %v10509, 0.0
        %v10574 = vmax.f32 %v10510, 0.0
        %v10575 = vmax.f32 %v10511, 0.0
        %v10576 = vmax.f32 %v10512, 0.0
        %v10577 = vmax.f32 %v10513, 0.0
        %v10578 = vmax.f32 %v10514, 0.0
        %v10579 = vmax.f32 %v10515, 0.0
        %v10580 = vmax.f32 %v10516, 0.0
        %v10581 = vmax.f32 %v10517, 0.0
        %v10582 = vmax.f32 %v10518, 0.0
        %v10583 = vmax.f32 %v10519, 0.0
        %v10584 = vmax.f32 %v10520, 0.0
        %v10585 = vmax.f32 %v10521, 0.0
        %v10586 = vmax.f32 %v10522, 0.0
        %v10587 = vmax.f32 %v10523, 0.0
        %v10588 = vmax.f32 %v10524, 0.0
        %v10589 = vmax.f32 %v10525, 0.0
        %v10590 = vmax.f32 %v10526, 0.0
        %v10591 = vmax.f32 %v10527, 0.0
        %v10592 = vmax.f32 %v10528, 0.0
        %v10593 = vmax.f32 %v10529, 0.0
        %v10594 = vmax.f32 %v10530, 0.0
        %v10595 = vmax.f32 %v10531, 0.0
        %v10596 = vmax.f32 %v10532, 0.0
        %v10597 = vmax.f32 %v10533, 0.0
        %v10598 = vmax.f32 %v10534, 0.0
        %v10599 = vmax.f32 %v10535, 0.0
        %v10600 = vmax.f32 %v10536, 0.0
        %v10601 = vmax.f32 %v10537, 0.0
        %v10602 = vmax.f32 %v10538, 0.0
        %v10603 = vmax.f32 %v10539, 0.0
        %v10604 = vmax.f32 %v10540, 0.0
        %v10605 = vmax.f32 %v10541, 0.0
        %v10606 = vmax.f32 %v10542, 0.0
        %v10607 = vmax.f32 %v10543, 0.0
        %v10608 = vmax.f32 %v10544, 0.0
        %v10609 = vmax.f32 %v10545, 0.0
        %v10610 = vmax.f32 %v10546, 0.0
        %v10611 = vmax.f32 %v10547, 0.0
        %v10612 = vmax.f32 %v10548, 0.0
        %v10613 = vmax.f32 %v10549, 0.0
        %v10614 = vmax.f32 %v10550, 0.0
        %v10615 = vmax.f32 %v10551, 0.0
        %v10616 = vmax.f32 %v10552, 0.0
        %v10617 = vmax.f32 %v10553, 0.0
        %v10618 = vmax.f32 %v10554, 0.0
        %v10619 = vmax.f32 %v10555, 0.0
        %v10620 = vmin.f32 %v10556, 128.0
        %v10621 = vmin.f32 %v10557, 128.0
        %v10622 = vmin.f32 %v10558, 128.0
        %v10623 = vmin.f32 %v10559, 128.0
        %v10624 = vmin.f32 %v10560, 128.0
        %v10625 = vmin.f32 %v10561, 128.0
        %v10626 = vmin.f32 %v10562, 128.0
        %v10627 = vmin.f32 %v10563, 128.0
        %v10628 = vmin.f32 %v10564, 128.0
        %v10629 = vmin.f32 %v10565, 128.0
        %v10630 = vmin.f32 %v10566, 128.0
        %v10631 = vmin.f32 %v10567, 128.0
        %v10632 = vmin.f32 %v10568, 128.0
        %v10633 = vmin.f32 %v10569, 128.0
        %v10634 = vmin.f32 %v10570, 128.0
        %v10635 = vmin.f32 %v10571, 128.0
        %v10636 = vmin.f32 %v10572, 128.0
        %v10637 = vmin.f32 %v10573, 128.0
        %v10638 = vmin.f32 %v10574, 128.0
        %v10639 = vmin.f32 %v10575, 128.0
        %v10640 = vmin.f32 %v10576, 128.0
        %v10641 = vmin.f32 %v10577, 128.0
        %v10642 = vmin.f32 %v10578, 128.0
        %v10643 = vmin.f32 %v10579, 128.0
        %v10644 = vmin.f32 %v10580, 128.0
        %v10645 = vmin.f32 %v10581, 128.0
        %v10646 = vmin.f32 %v10582, 128.0
        %v10647 = vmin.f32 %v10583, 128.0
        %v10648 = vmin.f32 %v10584, 128.0
        %v10649 = vmin.f32 %v10585, 128.0
        %v10650 = vmin.f32 %v10586, 128.0
        %v10651 = vmin.f32 %v10587, 128.0
        %v10652 = vmin.f32 %v10588, 128.0
        %v10653 = vmin.f32 %v10589, 128.0
        %v10654 = vmin.f32 %v10590, 128.0
        %v10655 = vmin.f32 %v10591, 128.0
        %v10656 = vmin.f32 %v10592, 128.0
        %v10657 = vmin.f32 %v10593, 128.0
        %v10658 = vmin.f32 %v10594, 128.0
        %v10659 = vmin.f32 %v10595, 128.0
        %v10660 = vmin.f32 %v10596, 128.0
        %v10661 = vmin.f32 %v10597, 128.0
        %v10662 = vmin.f32 %v10598, 128.0
        %v10663 = vmin.f32 %v10599, 128.0
        %v10664 = vmin.f32 %v10600, 128.0
        %v10665 = vmin.f32 %v10601, 128.0
        %v10666 = vmin.f32 %v10602, 128.0
        %v10667 = vmin.f32 %v10603, 128.0
        %v10668 = vmin.f32 %v10604, 128.0
        %v10669 = vmin.f32 %v10605, 128.0
        %v10670 = vmin.f32 %v10606, 128.0
        %v10671 = vmin.f32 %v10607, 128.0
        %v10672 = vmin.f32 %v10608, 128.0
        %v10673 = vmin.f32 %v10609, 128.0
        %v10674 = vmin.f32 %v10610, 128.0
        %v10675 = vmin.f32 %v10611, 128.0
        %v10676 = vmin.f32 %v10612, 128.0
        %v10677 = vmin.f32 %v10613, 128.0
        %v10678 = vmin.f32 %v10614, 128.0
        %v10679 = vmin.f32 %v10615, 128.0
        %v10680 = vmin.f32 %v10616, 128.0
        %v10681 = vmin.f32 %v10617, 128.0
        %v10682 = vmin.f32 %v10618, 128.0
        %v10683 = vmin.f32 %v10619, 128.0
        %v10684 = vxor.u32 %v7965, 2147483648
        %v10685 = vxor.u32 %v7967, 2147483648
        %v10686 = vxor.u32 %v7970, 2147483648
        %v10687 = vxor.u32 %v7972, 2147483648
        %v10688 = vxor.u32 %v7975, 2147483648
        %v10689 = vxor.u32 %v7977, 2147483648
        %v10690 = vxor.u32 %v7980, 2147483648
        %v10691 = vxor.u32 %v7982, 2147483648
        %v10692 = vxor.u32 %v7985, 2147483648
        %v10693 = vxor.u32 %v7987, 2147483648
        %v10694 = vxor.u32 %v7990, 2147483648
        %v10695 = vxor.u32 %v7992, 2147483648
        %v10696 = vxor.u32 %v7995, 2147483648
        %v10697 = vxor.u32 %v7997, 2147483648
        %v10698 = vxor.u32 %v8000, 2147483648
        %v10699 = vxor.u32 %v8002, 2147483648
        %v10700 = vxor.u32 %v8005, 2147483648
        %v10701 = vxor.u32 %v8007, 2147483648
        %v10702 = vxor.u32 %v8010, 2147483648
        %v10703 = vxor.u32 %v8012, 2147483648
        %v10704 = vxor.u32 %v8015, 2147483648
        %v10705 = vxor.u32 %v8017, 2147483648
        %v10706 = vxor.u32 %v8020, 2147483648
        %v10707 = vxor.u32 %v8022, 2147483648
        %v10708 = vxor.u32 %v8025, 2147483648
        %v10709 = vxor.u32 %v8027, 2147483648
        %v10710 = vxor.u32 %v8030, 2147483648
        %v10711 = vxor.u32 %v8032, 2147483648
        %v10712 = vxor.u32 %v8035, 2147483648
        %v10713 = vxor.u32 %v8037, 2147483648
        %v10714 = vxor.u32 %v8040, 2147483648
        %v10715 = vxor.u32 %v8042, 2147483648
        %v10716 = vxor.u32 %v8045, 2147483648
        %v10717 = vxor.u32 %v8047, 2147483648
        %v10718 = vxor.u32 %v8050, 2147483648
        %v10719 = vxor.u32 %v8052, 2147483648
        %v10720 = vxor.u32 %v8055, 2147483648
        %v10721 = vxor.u32 %v8057, 2147483648
        %v10722 = vxor.u32 %v8060, 2147483648
        %v10723 = vxor.u32 %v8062, 2147483648
        %v10724 = vxor.u32 %v8065, 2147483648
        %v10725 = vxor.u32 %v8067, 2147483648
        %v10726 = vxor.u32 %v8070, 2147483648
        %v10727 = vxor.u32 %v8072, 2147483648
        %v10728 = vxor.u32 %v8075, 2147483648
        %v10729 = vxor.u32 %v8077, 2147483648
        %v10730 = vxor.u32 %v8080, 2147483648
        %v10731 = vxor.u32 %v8082, 2147483648
        %v10732 = vxor.u32 %v8085, 2147483648
        %v10733 = vxor.u32 %v8087, 2147483648
        %v10734 = vxor.u32 %v8090, 2147483648
        %v10735 = vxor.u32 %v8092, 2147483648
        %v10736 = vxor.u32 %v8095, 2147483648
        %v10737 = vxor.u32 %v8097, 2147483648
        %v10738 = vxor.u32 %v8100, 2147483648
        %v10739 = vxor.u32 %v8102, 2147483648
        %v10740 = vxor.u32 %v8105, 2147483648
        %v10741 = vxor.u32 %v8107, 2147483648
        %v10742 = vxor.u32 %v8110, 2147483648
        %v10743 = vxor.u32 %v8112, 2147483648
        %v10744 = vxor.u32 %v8115, 2147483648
        %v10745 = vxor.u32 %v8117, 2147483648
        %v10746 = vxor.u32 %v8120, 2147483648
        %v10747 = vxor.u32 %v8122, 2147483648
        %v10748 = vmul.f32 %v10684, 1.442695
        %v10749 = vpow.pop %v10748
        %v10750 = vmul.f32 %v10685, 1.442695
        %v10751 = vpow.pop %v10750
        %v10752 = vmul.f32 %v10686, 1.442695
        %v10753 = vpow.pop %v10752
        %v10754 = vmul.f32 %v10687, 1.442695
        %v10755 = vpow.pop %v10754
        %v10756 = vmul.f32 %v10688, 1.442695
        %v10757 = vpow.pop %v10756
        %v10758 = vmul.f32 %v10689, 1.442695
        %v10759 = vpow.pop %v10758
        %v10760 = vmul.f32 %v10690, 1.442695
        %v10761 = vpow.pop %v10760
        %v10762 = vmul.f32 %v10691, 1.442695
        %v10763 = vpow.pop %v10762
        %v10764 = vmul.f32 %v10692, 1.442695
        %v10765 = vpow.pop %v10764
        %v10766 = vmul.f32 %v10693, 1.442695
        %v10767 = vpow.pop %v10766
        %v10768 = vmul.f32 %v10694, 1.442695
        %v10769 = vpow.pop %v10768
        %v10770 = vmul.f32 %v10695, 1.442695
        %v10771 = vpow.pop %v10770
        %v10772 = vmul.f32 %v10696, 1.442695
        %v10773 = vpow.pop %v10772
        %v10774 = vmul.f32 %v10697, 1.442695
        %v10775 = vpow.pop %v10774
        %v10776 = vmul.f32 %v10698, 1.442695
        %v10777 = vpow.pop %v10776
        %v10778 = vmul.f32 %v10699, 1.442695
        %v10779 = vpow.pop %v10778
        %v10780 = vmul.f32 %v10700, 1.442695
        %v10781 = vpow.pop %v10780
        %v10782 = vmul.f32 %v10701, 1.442695
        %v10783 = vpow.pop %v10782
        %v10784 = vmul.f32 %v10702, 1.442695
        %v10785 = vpow.pop %v10784
        %v10786 = vmul.f32 %v10703, 1.442695
        %v10787 = vpow.pop %v10786
        %v10788 = vmul.f32 %v10704, 1.442695
        %v10789 = vpow.pop %v10788
        %v10790 = vmul.f32 %v10705, 1.442695
        %v10791 = vpow.pop %v10790
        %v10792 = vmul.f32 %v10706, 1.442695
        %v10793 = vpow.pop %v10792
        %v10794 = vmul.f32 %v10707, 1.442695
        %v10795 = vpow.pop %v10794
        %v10796 = vmul.f32 %v10708, 1.442695
        %v10797 = vpow.pop %v10796
        %v10798 = vmul.f32 %v10709, 1.442695
        %v10799 = vpow.pop %v10798
        %v10800 = vmul.f32 %v10710, 1.442695
        %v10801 = vpow.pop %v10800
        %v10802 = vmul.f32 %v10711, 1.442695
        %v10803 = vpow.pop %v10802
        %v10804 = vmul.f32 %v10712, 1.442695
        %v10805 = vpow.pop %v10804
        %v10806 = vmul.f32 %v10713, 1.442695
        %v10807 = vpow.pop %v10806
        %v10808 = vmul.f32 %v10714, 1.442695
        %v10809 = vpow.pop %v10808
        %v10810 = vmul.f32 %v10715, 1.442695
        %v10811 = vpow.pop %v10810
        %v10812 = vmul.f32 %v10716, 1.442695
        %v10813 = vpow.pop %v10812
        %v10814 = vmul.f32 %v10717, 1.442695
        %v10815 = vpow.pop %v10814
        %v10816 = vmul.f32 %v10718, 1.442695
        %v10817 = vpow.pop %v10816
        %v10818 = vmul.f32 %v10719, 1.442695
        %v10819 = vpow.pop %v10818
        %v10820 = vmul.f32 %v10720, 1.442695
        %v10821 = vpow.pop %v10820
        %v10822 = vmul.f32 %v10721, 1.442695
        %v10823 = vpow.pop %v10822
        %v10824 = vmul.f32 %v10722, 1.442695
        %v10825 = vpow.pop %v10824
        %v10826 = vmul.f32 %v10723, 1.442695
        %v10827 = vpow.pop %v10826
        %v10828 = vmul.f32 %v10724, 1.442695
        %v10829 = vpow.pop %v10828
        %v10830 = vmul.f32 %v10725, 1.442695
        %v10831 = vpow.pop %v10830
        %v10832 = vmul.f32 %v10726, 1.442695
        %v10833 = vpow.pop %v10832
        %v10834 = vmul.f32 %v10727, 1.442695
        %v10835 = vpow.pop %v10834
        %v10836 = vmul.f32 %v10728, 1.442695
        %v10837 = vpow.pop %v10836
        %v10838 = vmul.f32 %v10729, 1.442695
        %v10839 = vpow.pop %v10838
        %v10840 = vmul.f32 %v10730, 1.442695
        %v10841 = vpow.pop %v10840
        %v10842 = vmul.f32 %v10731, 1.442695
        %v10843 = vpow.pop %v10842
        %v10844 = vmul.f32 %v10732, 1.442695
        %v10845 = vpow.pop %v10844
        %v10846 = vmul.f32 %v10733, 1.442695
        %v10847 = vpow.pop %v10846
        %v10848 = vmul.f32 %v10734, 1.442695
        %v10849 = vpow.pop %v10848
        %v10850 = vmul.f32 %v10735, 1.442695
        %v10851 = vpow.pop %v10850
        %v10852 = vmul.f32 %v10736, 1.442695
        %v10853 = vpow.pop %v10852
        %v10854 = vmul.f32 %v10737, 1.442695
        %v10855 = vpow.pop %v10854
        %v10856 = vmul.f32 %v10738, 1.442695
        %v10857 = vpow.pop %v10856
        %v10858 = vmul.f32 %v10739, 1.442695
        %v10859 = vpow.pop %v10858
        %v10860 = vmul.f32 %v10740, 1.442695
        %v10861 = vpow.pop %v10860
        %v10862 = vmul.f32 %v10741, 1.442695
        %v10863 = vpow.pop %v10862
        %v10864 = vmul.f32 %v10742, 1.442695
        %v10865 = vpow.pop %v10864
        %v10866 = vmul.f32 %v10743, 1.442695
        %v10867 = vpow.pop %v10866
        %v10868 = vmul.f32 %v10744, 1.442695
        %v10869 = vpow.pop %v10868
        %v10870 = vmul.f32 %v10745, 1.442695
        %v10871 = vpow.pop %v10870
        %v10872 = vmul.f32 %v10746, 1.442695
        %v10873 = vpow.pop %v10872
        %v10874 = vmul.f32 %v10747, 1.442695
        %v10875 = vpow.pop %v10874
        %v10876 = vadd.f32 %v10749, 1.0
        %v10877 = vadd.f32 %v10751, 1.0
        %v10878 = vadd.f32 %v10753, 1.0
        %v10879 = vadd.f32 %v10755, 1.0
        %v10880 = vadd.f32 %v10757, 1.0
        %v10881 = vadd.f32 %v10759, 1.0
        %v10882 = vadd.f32 %v10761, 1.0
        %v10883 = vadd.f32 %v10763, 1.0
        %v10884 = vadd.f32 %v10765, 1.0
        %v10885 = vadd.f32 %v10767, 1.0
        %v10886 = vadd.f32 %v10769, 1.0
        %v10887 = vadd.f32 %v10771, 1.0
        %v10888 = vadd.f32 %v10773, 1.0
        %v10889 = vadd.f32 %v10775, 1.0
        %v10890 = vadd.f32 %v10777, 1.0
        %v10891 = vadd.f32 %v10779, 1.0
        %v10892 = vadd.f32 %v10781, 1.0
        %v10893 = vadd.f32 %v10783, 1.0
        %v10894 = vadd.f32 %v10785, 1.0
        %v10895 = vadd.f32 %v10787, 1.0
        %v10896 = vadd.f32 %v10789, 1.0
        %v10897 = vadd.f32 %v10791, 1.0
        %v10898 = vadd.f32 %v10793, 1.0
        %v10899 = vadd.f32 %v10795, 1.0
        %v10900 = vadd.f32 %v10797, 1.0
        %v10901 = vadd.f32 %v10799, 1.0
        %v10902 = vadd.f32 %v10801, 1.0
        %v10903 = vadd.f32 %v10803, 1.0
        %v10904 = vadd.f32 %v10805, 1.0
        %v10905 = vadd.f32 %v10807, 1.0
        %v10906 = vadd.f32 %v10809, 1.0
        %v10907 = vadd.f32 %v10811, 1.0
        %v10908 = vadd.f32 %v10813, 1.0
        %v10909 = vadd.f32 %v10815, 1.0
        %v10910 = vadd.f32 %v10817, 1.0
        %v10911 = vadd.f32 %v10819, 1.0
        %v10912 = vadd.f32 %v10821, 1.0
        %v10913 = vadd.f32 %v10823, 1.0
        %v10914 = vadd.f32 %v10825, 1.0
        %v10915 = vadd.f32 %v10827, 1.0
        %v10916 = vadd.f32 %v10829, 1.0
        %v10917 = vadd.f32 %v10831, 1.0
        %v10918 = vadd.f32 %v10833, 1.0
        %v10919 = vadd.f32 %v10835, 1.0
        %v10920 = vadd.f32 %v10837, 1.0
        %v10921 = vadd.f32 %v10839, 1.0
        %v10922 = vadd.f32 %v10841, 1.0
        %v10923 = vadd.f32 %v10843, 1.0
        %v10924 = vadd.f32 %v10845, 1.0
        %v10925 = vadd.f32 %v10847, 1.0
        %v10926 = vadd.f32 %v10849, 1.0
        %v10927 = vadd.f32 %v10851, 1.0
        %v10928 = vadd.f32 %v10853, 1.0
        %v10929 = vadd.f32 %v10855, 1.0
        %v10930 = vadd.f32 %v10857, 1.0
        %v10931 = vadd.f32 %v10859, 1.0
        %v10932 = vadd.f32 %v10861, 1.0
        %v10933 = vadd.f32 %v10863, 1.0
        %v10934 = vadd.f32 %v10865, 1.0
        %v10935 = vadd.f32 %v10867, 1.0
        %v10936 = vadd.f32 %v10869, 1.0
        %v10937 = vadd.f32 %v10871, 1.0
        %v10938 = vadd.f32 %v10873, 1.0
        %v10939 = vadd.f32 %v10875, 1.0
        %v10940 = vrcp.pop %v10876
        %v10941 = vmul.f32 %v10876, %v10940
        %v10942 = vsub.f32 1.0, %v10941
        %v10943 = vmul.f32 %v10940, %v10942
        %v10944 = vadd.f32 %v10940, %v10943
        %vm10945 = vweird.f32 %v10876
        %vm10946 = vweird.f32 %v10940
        %vm10947 = vmor %vm10945, %vm10946
        %v10948 = vsel %vm10947, %v10940, %v10944
        %v10949 = vand.u32 2147483647, %v10876
        %vm10950 = vcmp.eq.f32.partialorder %v10949, 8.507059e+37
        %v10951 = vand.u32 %v10876, 2147483648
        %v10952 = vor.u32 1.1754944e-38, %v10951
        %v10953 = vsel %vm10950, %v10952, %v10948
        %v10954 = vmul.f32 1.0, %v10953
        %v10955 = vrcp.pop %v10877
        %v10956 = vmul.f32 %v10877, %v10955
        %v10957 = vsub.f32 1.0, %v10956
        %v10958 = vmul.f32 %v10955, %v10957
        %v10959 = vadd.f32 %v10955, %v10958
        %vm10960 = vweird.f32 %v10877
        %vm10961 = vweird.f32 %v10955
        %vm10962 = vmor %vm10960, %vm10961
        %v10963 = vsel %vm10962, %v10955, %v10959
        %v10964 = vand.u32 2147483647, %v10877
        %vm10965 = vcmp.eq.f32.partialorder %v10964, 8.507059e+37
        %v10966 = vand.u32 %v10877, 2147483648
        %v10967 = vor.u32 1.1754944e-38, %v10966
        %v10968 = vsel %vm10965, %v10967, %v10963
        %v10969 = vmul.f32 1.0, %v10968
        %v10970 = vrcp.pop %v10878
        %v10971 = vmul.f32 %v10878, %v10970
        %v10972 = vsub.f32 1.0, %v10971
        %v10973 = vmul.f32 %v10970, %v10972
        %v10974 = vadd.f32 %v10970, %v10973
        %vm10975 = vweird.f32 %v10878
        %vm10976 = vweird.f32 %v10970
        %vm10977 = vmor %vm10975, %vm10976
        %v10978 = vsel %vm10977, %v10970, %v10974
        %v10979 = vand.u32 2147483647, %v10878
        %vm10980 = vcmp.eq.f32.partialorder %v10979, 8.507059e+37
        %v10981 = vand.u32 %v10878, 2147483648
        %v10982 = vor.u32 1.1754944e-38, %v10981
        %v10983 = vsel %vm10980, %v10982, %v10978
        %v10984 = vmul.f32 1.0, %v10983
        %v10985 = vrcp.pop %v10879
        %v10986 = vmul.f32 %v10879, %v10985
        %v10987 = vsub.f32 1.0, %v10986
        %v10988 = vmul.f32 %v10985, %v10987
        %v10989 = vadd.f32 %v10985, %v10988
        %vm10990 = vweird.f32 %v10879
        %vm10991 = vweird.f32 %v10985
        %vm10992 = vmor %vm10990, %vm10991
        %v10993 = vsel %vm10992, %v10985, %v10989
        %v10994 = vand.u32 2147483647, %v10879
        %vm10995 = vcmp.eq.f32.partialorder %v10994, 8.507059e+37
        %v10996 = vand.u32 %v10879, 2147483648
        %v10997 = vor.u32 1.1754944e-38, %v10996
        %v10998 = vsel %vm10995, %v10997, %v10993
        %v10999 = vmul.f32 1.0, %v10998
        %v11000 = vrcp.pop %v10880
        %v11001 = vmul.f32 %v10880, %v11000
        %v11002 = vsub.f32 1.0, %v11001
        %v11003 = vmul.f32 %v11000, %v11002
        %v11004 = vadd.f32 %v11000, %v11003
        %vm11005 = vweird.f32 %v10880
        %vm11006 = vweird.f32 %v11000
        %vm11007 = vmor %vm11005, %vm11006
        %v11008 = vsel %vm11007, %v11000, %v11004
        %v11009 = vand.u32 2147483647, %v10880
        %vm11010 = vcmp.eq.f32.partialorder %v11009, 8.507059e+37
        %v11011 = vand.u32 %v10880, 2147483648
        %v11012 = vor.u32 1.1754944e-38, %v11011
        %v11013 = vsel %vm11010, %v11012, %v11008
        %v11014 = vmul.f32 1.0, %v11013
        %v11015 = vrcp.pop %v10881
        %v11016 = vmul.f32 %v10881, %v11015
        %v11017 = vsub.f32 1.0, %v11016
        %v11018 = vmul.f32 %v11015, %v11017
        %v11019 = vadd.f32 %v11015, %v11018
        %vm11020 = vweird.f32 %v10881
        %vm11021 = vweird.f32 %v11015
        %vm11022 = vmor %vm11020, %vm11021
        %v11023 = vsel %vm11022, %v11015, %v11019
        %v11024 = vand.u32 2147483647, %v10881
        %vm11025 = vcmp.eq.f32.partialorder %v11024, 8.507059e+37
        %v11026 = vand.u32 %v10881, 2147483648
        %v11027 = vor.u32 1.1754944e-38, %v11026
        %v11028 = vsel %vm11025, %v11027, %v11023
        %v11029 = vmul.f32 1.0, %v11028
        %v11030 = vrcp.pop %v10882
        %v11031 = vmul.f32 %v10882, %v11030
        %v11032 = vsub.f32 1.0, %v11031
        %v11033 = vmul.f32 %v11030, %v11032
        %v11034 = vadd.f32 %v11030, %v11033
        %vm11035 = vweird.f32 %v10882
        %vm11036 = vweird.f32 %v11030
        %vm11037 = vmor %vm11035, %vm11036
        %v11038 = vsel %vm11037, %v11030, %v11034
        %v11039 = vand.u32 2147483647, %v10882
        %vm11040 = vcmp.eq.f32.partialorder %v11039, 8.507059e+37
        %v11041 = vand.u32 %v10882, 2147483648
        %v11042 = vor.u32 1.1754944e-38, %v11041
        %v11043 = vsel %vm11040, %v11042, %v11038
        %v11044 = vmul.f32 1.0, %v11043
        %v11045 = vrcp.pop %v10883
        %v11046 = vmul.f32 %v10883, %v11045
        %v11047 = vsub.f32 1.0, %v11046
        %v11048 = vmul.f32 %v11045, %v11047
        %v11049 = vadd.f32 %v11045, %v11048
        %vm11050 = vweird.f32 %v10883
        %vm11051 = vweird.f32 %v11045
        %vm11052 = vmor %vm11050, %vm11051
        %v11053 = vsel %vm11052, %v11045, %v11049
        %v11054 = vand.u32 2147483647, %v10883
        %vm11055 = vcmp.eq.f32.partialorder %v11054, 8.507059e+37
        %v11056 = vand.u32 %v10883, 2147483648
        %v11057 = vor.u32 1.1754944e-38, %v11056
        %v11058 = vsel %vm11055, %v11057, %v11053
        %v11059 = vmul.f32 1.0, %v11058
        %v11060 = vrcp.pop %v10884
        %v11061 = vmul.f32 %v10884, %v11060
        %v11062 = vsub.f32 1.0, %v11061
        %v11063 = vmul.f32 %v11060, %v11062
        %v11064 = vadd.f32 %v11060, %v11063
        %vm11065 = vweird.f32 %v10884
        %vm11066 = vweird.f32 %v11060
        %vm11067 = vmor %vm11065, %vm11066
        %v11068 = vsel %vm11067, %v11060, %v11064
        %v11069 = vand.u32 2147483647, %v10884
        %vm11070 = vcmp.eq.f32.partialorder %v11069, 8.507059e+37
        %v11071 = vand.u32 %v10884, 2147483648
        %v11072 = vor.u32 1.1754944e-38, %v11071
        %v11073 = vsel %vm11070, %v11072, %v11068
        %v11074 = vmul.f32 1.0, %v11073
        %v11075 = vrcp.pop %v10885
        %v11076 = vmul.f32 %v10885, %v11075
        %v11077 = vsub.f32 1.0, %v11076
        %v11078 = vmul.f32 %v11075, %v11077
        %v11079 = vadd.f32 %v11075, %v11078
        %vm11080 = vweird.f32 %v10885
        %vm11081 = vweird.f32 %v11075
        %vm11082 = vmor %vm11080, %vm11081
        %v11083 = vsel %vm11082, %v11075, %v11079
        %v11084 = vand.u32 2147483647, %v10885
        %vm11085 = vcmp.eq.f32.partialorder %v11084, 8.507059e+37
        %v11086 = vand.u32 %v10885, 2147483648
        %v11087 = vor.u32 1.1754944e-38, %v11086
        %v11088 = vsel %vm11085, %v11087, %v11083
        %v11089 = vmul.f32 1.0, %v11088
        %v11090 = vrcp.pop %v10886
        %v11091 = vmul.f32 %v10886, %v11090
        %v11092 = vsub.f32 1.0, %v11091
        %v11093 = vmul.f32 %v11090, %v11092
        %v11094 = vadd.f32 %v11090, %v11093
        %vm11095 = vweird.f32 %v10886
        %vm11096 = vweird.f32 %v11090
        %vm11097 = vmor %vm11095, %vm11096
        %v11098 = vsel %vm11097, %v11090, %v11094
        %v11099 = vand.u32 2147483647, %v10886
        %vm11100 = vcmp.eq.f32.partialorder %v11099, 8.507059e+37
        %v11101 = vand.u32 %v10886, 2147483648
        %v11102 = vor.u32 1.1754944e-38, %v11101
        %v11103 = vsel %vm11100, %v11102, %v11098
        %v11104 = vmul.f32 1.0, %v11103
        %v11105 = vrcp.pop %v10887
        %v11106 = vmul.f32 %v10887, %v11105
        %v11107 = vsub.f32 1.0, %v11106
        %v11108 = vmul.f32 %v11105, %v11107
        %v11109 = vadd.f32 %v11105, %v11108
        %vm11110 = vweird.f32 %v10887
        %vm11111 = vweird.f32 %v11105
        %vm11112 = vmor %vm11110, %vm11111
        %v11113 = vsel %vm11112, %v11105, %v11109
        %v11114 = vand.u32 2147483647, %v10887
        %vm11115 = vcmp.eq.f32.partialorder %v11114, 8.507059e+37
        %v11116 = vand.u32 %v10887, 2147483648
        %v11117 = vor.u32 1.1754944e-38, %v11116
        %v11118 = vsel %vm11115, %v11117, %v11113
        %v11119 = vmul.f32 1.0, %v11118
        %v11120 = vrcp.pop %v10888
        %v11121 = vmul.f32 %v10888, %v11120
        %v11122 = vsub.f32 1.0, %v11121
        %v11123 = vmul.f32 %v11120, %v11122
        %v11124 = vadd.f32 %v11120, %v11123
        %vm11125 = vweird.f32 %v10888
        %vm11126 = vweird.f32 %v11120
        %vm11127 = vmor %vm11125, %vm11126
        %v11128 = vsel %vm11127, %v11120, %v11124
        %v11129 = vand.u32 2147483647, %v10888
        %vm11130 = vcmp.eq.f32.partialorder %v11129, 8.507059e+37
        %v11131 = vand.u32 %v10888, 2147483648
        %v11132 = vor.u32 1.1754944e-38, %v11131
        %v11133 = vsel %vm11130, %v11132, %v11128
        %v11134 = vmul.f32 1.0, %v11133
        %v11135 = vrcp.pop %v10889
        %v11136 = vmul.f32 %v10889, %v11135
        %v11137 = vsub.f32 1.0, %v11136
        %v11138 = vmul.f32 %v11135, %v11137
        %v11139 = vadd.f32 %v11135, %v11138
        %vm11140 = vweird.f32 %v10889
        %vm11141 = vweird.f32 %v11135
        %vm11142 = vmor %vm11140, %vm11141
        %v11143 = vsel %vm11142, %v11135, %v11139
        %v11144 = vand.u32 2147483647, %v10889
        %vm11145 = vcmp.eq.f32.partialorder %v11144, 8.507059e+37
        %v11146 = vand.u32 %v10889, 2147483648
        %v11147 = vor.u32 1.1754944e-38, %v11146
        %v11148 = vsel %vm11145, %v11147, %v11143
        %v11149 = vmul.f32 1.0, %v11148
        %v11150 = vrcp.pop %v10890
        %v11151 = vmul.f32 %v10890, %v11150
        %v11152 = vsub.f32 1.0, %v11151
        %v11153 = vmul.f32 %v11150, %v11152
        %v11154 = vadd.f32 %v11150, %v11153
        %vm11155 = vweird.f32 %v10890
        %vm11156 = vweird.f32 %v11150
        %vm11157 = vmor %vm11155, %vm11156
        %v11158 = vsel %vm11157, %v11150, %v11154
        %v11159 = vand.u32 2147483647, %v10890
        %vm11160 = vcmp.eq.f32.partialorder %v11159, 8.507059e+37
        %v11161 = vand.u32 %v10890, 2147483648
        %v11162 = vor.u32 1.1754944e-38, %v11161
        %v11163 = vsel %vm11160, %v11162, %v11158
        %v11164 = vmul.f32 1.0, %v11163
        %v11165 = vrcp.pop %v10891
        %v11166 = vmul.f32 %v10891, %v11165
        %v11167 = vsub.f32 1.0, %v11166
        %v11168 = vmul.f32 %v11165, %v11167
        %v11169 = vadd.f32 %v11165, %v11168
        %vm11170 = vweird.f32 %v10891
        %vm11171 = vweird.f32 %v11165
        %vm11172 = vmor %vm11170, %vm11171
        %v11173 = vsel %vm11172, %v11165, %v11169
        %v11174 = vand.u32 2147483647, %v10891
        %vm11175 = vcmp.eq.f32.partialorder %v11174, 8.507059e+37
        %v11176 = vand.u32 %v10891, 2147483648
        %v11177 = vor.u32 1.1754944e-38, %v11176
        %v11178 = vsel %vm11175, %v11177, %v11173
        %v11179 = vmul.f32 1.0, %v11178
        %v11180 = vrcp.pop %v10892
        %v11181 = vmul.f32 %v10892, %v11180
        %v11182 = vsub.f32 1.0, %v11181
        %v11183 = vmul.f32 %v11180, %v11182
        %v11184 = vadd.f32 %v11180, %v11183
        %vm11185 = vweird.f32 %v10892
        %vm11186 = vweird.f32 %v11180
        %vm11187 = vmor %vm11185, %vm11186
        %v11188 = vsel %vm11187, %v11180, %v11184
        %v11189 = vand.u32 2147483647, %v10892
        %vm11190 = vcmp.eq.f32.partialorder %v11189, 8.507059e+37
        %v11191 = vand.u32 %v10892, 2147483648
        %v11192 = vor.u32 1.1754944e-38, %v11191
        %v11193 = vsel %vm11190, %v11192, %v11188
        %v11194 = vmul.f32 1.0, %v11193
        %v11195 = vrcp.pop %v10893
        %v11196 = vmul.f32 %v10893, %v11195
        %v11197 = vsub.f32 1.0, %v11196
        %v11198 = vmul.f32 %v11195, %v11197
        %v11199 = vadd.f32 %v11195, %v11198
        %vm11200 = vweird.f32 %v10893
        %vm11201 = vweird.f32 %v11195
        %vm11202 = vmor %vm11200, %vm11201
        %v11203 = vsel %vm11202, %v11195, %v11199
        %v11204 = vand.u32 2147483647, %v10893
        %vm11205 = vcmp.eq.f32.partialorder %v11204, 8.507059e+37
        %v11206 = vand.u32 %v10893, 2147483648
        %v11207 = vor.u32 1.1754944e-38, %v11206
        %v11208 = vsel %vm11205, %v11207, %v11203
        %v11209 = vmul.f32 1.0, %v11208
        %v11210 = vrcp.pop %v10894
        %v11211 = vmul.f32 %v10894, %v11210
        %v11212 = vsub.f32 1.0, %v11211
        %v11213 = vmul.f32 %v11210, %v11212
        %v11214 = vadd.f32 %v11210, %v11213
        %vm11215 = vweird.f32 %v10894
        %vm11216 = vweird.f32 %v11210
        %vm11217 = vmor %vm11215, %vm11216
        %v11218 = vsel %vm11217, %v11210, %v11214
        %v11219 = vand.u32 2147483647, %v10894
        %vm11220 = vcmp.eq.f32.partialorder %v11219, 8.507059e+37
        %v11221 = vand.u32 %v10894, 2147483648
        %v11222 = vor.u32 1.1754944e-38, %v11221
        %v11223 = vsel %vm11220, %v11222, %v11218
        %v11224 = vmul.f32 1.0, %v11223
        %v11225 = vrcp.pop %v10895
        %v11226 = vmul.f32 %v10895, %v11225
        %v11227 = vsub.f32 1.0, %v11226
        %v11228 = vmul.f32 %v11225, %v11227
        %v11229 = vadd.f32 %v11225, %v11228
        %vm11230 = vweird.f32 %v10895
        %vm11231 = vweird.f32 %v11225
        %vm11232 = vmor %vm11230, %vm11231
        %v11233 = vsel %vm11232, %v11225, %v11229
        %v11234 = vand.u32 2147483647, %v10895
        %vm11235 = vcmp.eq.f32.partialorder %v11234, 8.507059e+37
        %v11236 = vand.u32 %v10895, 2147483648
        %v11237 = vor.u32 1.1754944e-38, %v11236
        %v11238 = vsel %vm11235, %v11237, %v11233
        %v11239 = vmul.f32 1.0, %v11238
        %v11240 = vrcp.pop %v10896
        %v11241 = vmul.f32 %v10896, %v11240
        %v11242 = vsub.f32 1.0, %v11241
        %v11243 = vmul.f32 %v11240, %v11242
        %v11244 = vadd.f32 %v11240, %v11243
        %vm11245 = vweird.f32 %v10896
        %vm11246 = vweird.f32 %v11240
        %vm11247 = vmor %vm11245, %vm11246
        %v11248 = vsel %vm11247, %v11240, %v11244
        %v11249 = vand.u32 2147483647, %v10896
        %vm11250 = vcmp.eq.f32.partialorder %v11249, 8.507059e+37
        %v11251 = vand.u32 %v10896, 2147483648
        %v11252 = vor.u32 1.1754944e-38, %v11251
        %v11253 = vsel %vm11250, %v11252, %v11248
        %v11254 = vmul.f32 1.0, %v11253
        %v11255 = vrcp.pop %v10897
        %v11256 = vmul.f32 %v10897, %v11255
        %v11257 = vsub.f32 1.0, %v11256
        %v11258 = vmul.f32 %v11255, %v11257
        %v11259 = vadd.f32 %v11255, %v11258
        %vm11260 = vweird.f32 %v10897
        %vm11261 = vweird.f32 %v11255
        %vm11262 = vmor %vm11260, %vm11261
        %v11263 = vsel %vm11262, %v11255, %v11259
        %v11264 = vand.u32 2147483647, %v10897
        %vm11265 = vcmp.eq.f32.partialorder %v11264, 8.507059e+37
        %v11266 = vand.u32 %v10897, 2147483648
        %v11267 = vor.u32 1.1754944e-38, %v11266
        %v11268 = vsel %vm11265, %v11267, %v11263
        %v11269 = vmul.f32 1.0, %v11268
        %v11270 = vrcp.pop %v10898
        %v11271 = vmul.f32 %v10898, %v11270
        %v11272 = vsub.f32 1.0, %v11271
        %v11273 = vmul.f32 %v11270, %v11272
        %v11274 = vadd.f32 %v11270, %v11273
        %vm11275 = vweird.f32 %v10898
        %vm11276 = vweird.f32 %v11270
        %vm11277 = vmor %vm11275, %vm11276
        %v11278 = vsel %vm11277, %v11270, %v11274
        %v11279 = vand.u32 2147483647, %v10898
        %vm11280 = vcmp.eq.f32.partialorder %v11279, 8.507059e+37
        %v11281 = vand.u32 %v10898, 2147483648
        %v11282 = vor.u32 1.1754944e-38, %v11281
        %v11283 = vsel %vm11280, %v11282, %v11278
        %v11284 = vmul.f32 1.0, %v11283
        %v11285 = vrcp.pop %v10899
        %v11286 = vmul.f32 %v10899, %v11285
        %v11287 = vsub.f32 1.0, %v11286
        %v11288 = vmul.f32 %v11285, %v11287
        %v11289 = vadd.f32 %v11285, %v11288
        %vm11290 = vweird.f32 %v10899
        %vm11291 = vweird.f32 %v11285
        %vm11292 = vmor %vm11290, %vm11291
        %v11293 = vsel %vm11292, %v11285, %v11289
        %v11294 = vand.u32 2147483647, %v10899
        %vm11295 = vcmp.eq.f32.partialorder %v11294, 8.507059e+37
        %v11296 = vand.u32 %v10899, 2147483648
        %v11297 = vor.u32 1.1754944e-38, %v11296
        %v11298 = vsel %vm11295, %v11297, %v11293
        %v11299 = vmul.f32 1.0, %v11298
        %v11300 = vrcp.pop %v10900
        %v11301 = vmul.f32 %v10900, %v11300
        %v11302 = vsub.f32 1.0, %v11301
        %v11303 = vmul.f32 %v11300, %v11302
        %v11304 = vadd.f32 %v11300, %v11303
        %vm11305 = vweird.f32 %v10900
        %vm11306 = vweird.f32 %v11300
        %vm11307 = vmor %vm11305, %vm11306
        %v11308 = vsel %vm11307, %v11300, %v11304
        %v11309 = vand.u32 2147483647, %v10900
        %vm11310 = vcmp.eq.f32.partialorder %v11309, 8.507059e+37
        %v11311 = vand.u32 %v10900, 2147483648
        %v11312 = vor.u32 1.1754944e-38, %v11311
        %v11313 = vsel %vm11310, %v11312, %v11308
        %v11314 = vmul.f32 1.0, %v11313
        %v11315 = vrcp.pop %v10901
        %v11316 = vmul.f32 %v10901, %v11315
        %v11317 = vsub.f32 1.0, %v11316
        %v11318 = vmul.f32 %v11315, %v11317
        %v11319 = vadd.f32 %v11315, %v11318
        %vm11320 = vweird.f32 %v10901
        %vm11321 = vweird.f32 %v11315
        %vm11322 = vmor %vm11320, %vm11321
        %v11323 = vsel %vm11322, %v11315, %v11319
        %v11324 = vand.u32 2147483647, %v10901
        %vm11325 = vcmp.eq.f32.partialorder %v11324, 8.507059e+37
        %v11326 = vand.u32 %v10901, 2147483648
        %v11327 = vor.u32 1.1754944e-38, %v11326
        %v11328 = vsel %vm11325, %v11327, %v11323
        %v11329 = vmul.f32 1.0, %v11328
        %v11330 = vrcp.pop %v10902
        %v11331 = vmul.f32 %v10902, %v11330
        %v11332 = vsub.f32 1.0, %v11331
        %v11333 = vmul.f32 %v11330, %v11332
        %v11334 = vadd.f32 %v11330, %v11333
        %vm11335 = vweird.f32 %v10902
        %vm11336 = vweird.f32 %v11330
        %vm11337 = vmor %vm11335, %vm11336
        %v11338 = vsel %vm11337, %v11330, %v11334
        %v11339 = vand.u32 2147483647, %v10902
        %vm11340 = vcmp.eq.f32.partialorder %v11339, 8.507059e+37
        %v11341 = vand.u32 %v10902, 2147483648
        %v11342 = vor.u32 1.1754944e-38, %v11341
        %v11343 = vsel %vm11340, %v11342, %v11338
        %v11344 = vmul.f32 1.0, %v11343
        %v11345 = vrcp.pop %v10903
        %v11346 = vmul.f32 %v10903, %v11345
        %v11347 = vsub.f32 1.0, %v11346
        %v11348 = vmul.f32 %v11345, %v11347
        %v11349 = vadd.f32 %v11345, %v11348
        %vm11350 = vweird.f32 %v10903
        %vm11351 = vweird.f32 %v11345
        %vm11352 = vmor %vm11350, %vm11351
        %v11353 = vsel %vm11352, %v11345, %v11349
        %v11354 = vand.u32 2147483647, %v10903
        %vm11355 = vcmp.eq.f32.partialorder %v11354, 8.507059e+37
        %v11356 = vand.u32 %v10903, 2147483648
        %v11357 = vor.u32 1.1754944e-38, %v11356
        %v11358 = vsel %vm11355, %v11357, %v11353
        %v11359 = vmul.f32 1.0, %v11358
        %v11360 = vrcp.pop %v10904
        %v11361 = vmul.f32 %v10904, %v11360
        %v11362 = vsub.f32 1.0, %v11361
        %v11363 = vmul.f32 %v11360, %v11362
        %v11364 = vadd.f32 %v11360, %v11363
        %vm11365 = vweird.f32 %v10904
        %vm11366 = vweird.f32 %v11360
        %vm11367 = vmor %vm11365, %vm11366
        %v11368 = vsel %vm11367, %v11360, %v11364
        %v11369 = vand.u32 2147483647, %v10904
        %vm11370 = vcmp.eq.f32.partialorder %v11369, 8.507059e+37
        %v11371 = vand.u32 %v10904, 2147483648
        %v11372 = vor.u32 1.1754944e-38, %v11371
        %v11373 = vsel %vm11370, %v11372, %v11368
        %v11374 = vmul.f32 1.0, %v11373
        %v11375 = vrcp.pop %v10905
        %v11376 = vmul.f32 %v10905, %v11375
        %v11377 = vsub.f32 1.0, %v11376
        %v11378 = vmul.f32 %v11375, %v11377
        %v11379 = vadd.f32 %v11375, %v11378
        %vm11380 = vweird.f32 %v10905
        %vm11381 = vweird.f32 %v11375
        %vm11382 = vmor %vm11380, %vm11381
        %v11383 = vsel %vm11382, %v11375, %v11379
        %v11384 = vand.u32 2147483647, %v10905
        %vm11385 = vcmp.eq.f32.partialorder %v11384, 8.507059e+37
        %v11386 = vand.u32 %v10905, 2147483648
        %v11387 = vor.u32 1.1754944e-38, %v11386
        %v11388 = vsel %vm11385, %v11387, %v11383
        %v11389 = vmul.f32 1.0, %v11388
        %v11390 = vrcp.pop %v10906
        %v11391 = vmul.f32 %v10906, %v11390
        %v11392 = vsub.f32 1.0, %v11391
        %v11393 = vmul.f32 %v11390, %v11392
        %v11394 = vadd.f32 %v11390, %v11393
        %vm11395 = vweird.f32 %v10906
        %vm11396 = vweird.f32 %v11390
        %vm11397 = vmor %vm11395, %vm11396
        %v11398 = vsel %vm11397, %v11390, %v11394
        %v11399 = vand.u32 2147483647, %v10906
        %vm11400 = vcmp.eq.f32.partialorder %v11399, 8.507059e+37
        %v11401 = vand.u32 %v10906, 2147483648
        %v11402 = vor.u32 1.1754944e-38, %v11401
        %v11403 = vsel %vm11400, %v11402, %v11398
        %v11404 = vmul.f32 1.0, %v11403
        %v11405 = vrcp.pop %v10907
        %v11406 = vmul.f32 %v10907, %v11405
        %v11407 = vsub.f32 1.0, %v11406
        %v11408 = vmul.f32 %v11405, %v11407
        %v11409 = vadd.f32 %v11405, %v11408
        %vm11410 = vweird.f32 %v10907
        %vm11411 = vweird.f32 %v11405
        %vm11412 = vmor %vm11410, %vm11411
        %v11413 = vsel %vm11412, %v11405, %v11409
        %v11414 = vand.u32 2147483647, %v10907
        %vm11415 = vcmp.eq.f32.partialorder %v11414, 8.507059e+37
        %v11416 = vand.u32 %v10907, 2147483648
        %v11417 = vor.u32 1.1754944e-38, %v11416
        %v11418 = vsel %vm11415, %v11417, %v11413
        %v11419 = vmul.f32 1.0, %v11418
        %v11420 = vrcp.pop %v10908
        %v11421 = vmul.f32 %v10908, %v11420
        %v11422 = vsub.f32 1.0, %v11421
        %v11423 = vmul.f32 %v11420, %v11422
        %v11424 = vadd.f32 %v11420, %v11423
        %vm11425 = vweird.f32 %v10908
        %vm11426 = vweird.f32 %v11420
        %vm11427 = vmor %vm11425, %vm11426
        %v11428 = vsel %vm11427, %v11420, %v11424
        %v11429 = vand.u32 2147483647, %v10908
        %vm11430 = vcmp.eq.f32.partialorder %v11429, 8.507059e+37
        %v11431 = vand.u32 %v10908, 2147483648
        %v11432 = vor.u32 1.1754944e-38, %v11431
        %v11433 = vsel %vm11430, %v11432, %v11428
        %v11434 = vmul.f32 1.0, %v11433
        %v11435 = vrcp.pop %v10909
        %v11436 = vmul.f32 %v10909, %v11435
        %v11437 = vsub.f32 1.0, %v11436
        %v11438 = vmul.f32 %v11435, %v11437
        %v11439 = vadd.f32 %v11435, %v11438
        %vm11440 = vweird.f32 %v10909
        %vm11441 = vweird.f32 %v11435
        %vm11442 = vmor %vm11440, %vm11441
        %v11443 = vsel %vm11442, %v11435, %v11439
        %v11444 = vand.u32 2147483647, %v10909
        %vm11445 = vcmp.eq.f32.partialorder %v11444, 8.507059e+37
        %v11446 = vand.u32 %v10909, 2147483648
        %v11447 = vor.u32 1.1754944e-38, %v11446
        %v11448 = vsel %vm11445, %v11447, %v11443
        %v11449 = vmul.f32 1.0, %v11448
        %v11450 = vrcp.pop %v10910
        %v11451 = vmul.f32 %v10910, %v11450
        %v11452 = vsub.f32 1.0, %v11451
        %v11453 = vmul.f32 %v11450, %v11452
        %v11454 = vadd.f32 %v11450, %v11453
        %vm11455 = vweird.f32 %v10910
        %vm11456 = vweird.f32 %v11450
        %vm11457 = vmor %vm11455, %vm11456
        %v11458 = vsel %vm11457, %v11450, %v11454
        %v11459 = vand.u32 2147483647, %v10910
        %vm11460 = vcmp.eq.f32.partialorder %v11459, 8.507059e+37
        %v11461 = vand.u32 %v10910, 2147483648
        %v11462 = vor.u32 1.1754944e-38, %v11461
        %v11463 = vsel %vm11460, %v11462, %v11458
        %v11464 = vmul.f32 1.0, %v11463
        %v11465 = vrcp.pop %v10911
        %v11466 = vmul.f32 %v10911, %v11465
        %v11467 = vsub.f32 1.0, %v11466
        %v11468 = vmul.f32 %v11465, %v11467
        %v11469 = vadd.f32 %v11465, %v11468
        %vm11470 = vweird.f32 %v10911
        %vm11471 = vweird.f32 %v11465
        %vm11472 = vmor %vm11470, %vm11471
        %v11473 = vsel %vm11472, %v11465, %v11469
        %v11474 = vand.u32 2147483647, %v10911
        %vm11475 = vcmp.eq.f32.partialorder %v11474, 8.507059e+37
        %v11476 = vand.u32 %v10911, 2147483648
        %v11477 = vor.u32 1.1754944e-38, %v11476
        %v11478 = vsel %vm11475, %v11477, %v11473
        %v11479 = vmul.f32 1.0, %v11478
        %v11480 = vrcp.pop %v10912
        %v11481 = vmul.f32 %v10912, %v11480
        %v11482 = vsub.f32 1.0, %v11481
        %v11483 = vmul.f32 %v11480, %v11482
        %v11484 = vadd.f32 %v11480, %v11483
        %vm11485 = vweird.f32 %v10912
        %vm11486 = vweird.f32 %v11480
        %vm11487 = vmor %vm11485, %vm11486
        %v11488 = vsel %vm11487, %v11480, %v11484
        %v11489 = vand.u32 2147483647, %v10912
        %vm11490 = vcmp.eq.f32.partialorder %v11489, 8.507059e+37
        %v11491 = vand.u32 %v10912, 2147483648
        %v11492 = vor.u32 1.1754944e-38, %v11491
        %v11493 = vsel %vm11490, %v11492, %v11488
        %v11494 = vmul.f32 1.0, %v11493
        %v11495 = vrcp.pop %v10913
        %v11496 = vmul.f32 %v10913, %v11495
        %v11497 = vsub.f32 1.0, %v11496
        %v11498 = vmul.f32 %v11495, %v11497
        %v11499 = vadd.f32 %v11495, %v11498
        %vm11500 = vweird.f32 %v10913
        %vm11501 = vweird.f32 %v11495
        %vm11502 = vmor %vm11500, %vm11501
        %v11503 = vsel %vm11502, %v11495, %v11499
        %v11504 = vand.u32 2147483647, %v10913
        %vm11505 = vcmp.eq.f32.partialorder %v11504, 8.507059e+37
        %v11506 = vand.u32 %v10913, 2147483648
        %v11507 = vor.u32 1.1754944e-38, %v11506
        %v11508 = vsel %vm11505, %v11507, %v11503
        %v11509 = vmul.f32 1.0, %v11508
        %v11510 = vrcp.pop %v10914
        %v11511 = vmul.f32 %v10914, %v11510
        %v11512 = vsub.f32 1.0, %v11511
        %v11513 = vmul.f32 %v11510, %v11512
        %v11514 = vadd.f32 %v11510, %v11513
        %vm11515 = vweird.f32 %v10914
        %vm11516 = vweird.f32 %v11510
        %vm11517 = vmor %vm11515, %vm11516
        %v11518 = vsel %vm11517, %v11510, %v11514
        %v11519 = vand.u32 2147483647, %v10914
        %vm11520 = vcmp.eq.f32.partialorder %v11519, 8.507059e+37
        %v11521 = vand.u32 %v10914, 2147483648
        %v11522 = vor.u32 1.1754944e-38, %v11521
        %v11523 = vsel %vm11520, %v11522, %v11518
        %v11524 = vmul.f32 1.0, %v11523
        %v11525 = vrcp.pop %v10915
        %v11526 = vmul.f32 %v10915, %v11525
        %v11527 = vsub.f32 1.0, %v11526
        %v11528 = vmul.f32 %v11525, %v11527
        %v11529 = vadd.f32 %v11525, %v11528
        %vm11530 = vweird.f32 %v10915
        %vm11531 = vweird.f32 %v11525
        %vm11532 = vmor %vm11530, %vm11531
        %v11533 = vsel %vm11532, %v11525, %v11529
        %v11534 = vand.u32 2147483647, %v10915
        %vm11535 = vcmp.eq.f32.partialorder %v11534, 8.507059e+37
        %v11536 = vand.u32 %v10915, 2147483648
        %v11537 = vor.u32 1.1754944e-38, %v11536
        %v11538 = vsel %vm11535, %v11537, %v11533
        %v11539 = vmul.f32 1.0, %v11538
        %v11540 = vrcp.pop %v10916
        %v11541 = vmul.f32 %v10916, %v11540
        %v11542 = vsub.f32 1.0, %v11541
        %v11543 = vmul.f32 %v11540, %v11542
        %v11544 = vadd.f32 %v11540, %v11543
        %vm11545 = vweird.f32 %v10916
        %vm11546 = vweird.f32 %v11540
        %vm11547 = vmor %vm11545, %vm11546
        %v11548 = vsel %vm11547, %v11540, %v11544
        %v11549 = vand.u32 2147483647, %v10916
        %vm11550 = vcmp.eq.f32.partialorder %v11549, 8.507059e+37
        %v11551 = vand.u32 %v10916, 2147483648
        %v11552 = vor.u32 1.1754944e-38, %v11551
        %v11553 = vsel %vm11550, %v11552, %v11548
        %v11554 = vmul.f32 1.0, %v11553
        %v11555 = vrcp.pop %v10917
        %v11556 = vmul.f32 %v10917, %v11555
        %v11557 = vsub.f32 1.0, %v11556
        %v11558 = vmul.f32 %v11555, %v11557
        %v11559 = vadd.f32 %v11555, %v11558
        %vm11560 = vweird.f32 %v10917
        %vm11561 = vweird.f32 %v11555
        %vm11562 = vmor %vm11560, %vm11561
        %v11563 = vsel %vm11562, %v11555, %v11559
        %v11564 = vand.u32 2147483647, %v10917
        %vm11565 = vcmp.eq.f32.partialorder %v11564, 8.507059e+37
        %v11566 = vand.u32 %v10917, 2147483648
        %v11567 = vor.u32 1.1754944e-38, %v11566
        %v11568 = vsel %vm11565, %v11567, %v11563
        %v11569 = vmul.f32 1.0, %v11568
        %v11570 = vrcp.pop %v10918
        %v11571 = vmul.f32 %v10918, %v11570
        %v11572 = vsub.f32 1.0, %v11571
        %v11573 = vmul.f32 %v11570, %v11572
        %v11574 = vadd.f32 %v11570, %v11573
        %vm11575 = vweird.f32 %v10918
        %vm11576 = vweird.f32 %v11570
        %vm11577 = vmor %vm11575, %vm11576
        %v11578 = vsel %vm11577, %v11570, %v11574
        %v11579 = vand.u32 2147483647, %v10918
        %vm11580 = vcmp.eq.f32.partialorder %v11579, 8.507059e+37
        %v11581 = vand.u32 %v10918, 2147483648
        %v11582 = vor.u32 1.1754944e-38, %v11581
        %v11583 = vsel %vm11580, %v11582, %v11578
        %v11584 = vmul.f32 1.0, %v11583
        %v11585 = vrcp.pop %v10919
        %v11586 = vmul.f32 %v10919, %v11585
        %v11587 = vsub.f32 1.0, %v11586
        %v11588 = vmul.f32 %v11585, %v11587
        %v11589 = vadd.f32 %v11585, %v11588
        %vm11590 = vweird.f32 %v10919
        %vm11591 = vweird.f32 %v11585
        %vm11592 = vmor %vm11590, %vm11591
        %v11593 = vsel %vm11592, %v11585, %v11589
        %v11594 = vand.u32 2147483647, %v10919
        %vm11595 = vcmp.eq.f32.partialorder %v11594, 8.507059e+37
        %v11596 = vand.u32 %v10919, 2147483648
        %v11597 = vor.u32 1.1754944e-38, %v11596
        %v11598 = vsel %vm11595, %v11597, %v11593
        %v11599 = vmul.f32 1.0, %v11598
        %v11600 = vrcp.pop %v10920
        %v11601 = vmul.f32 %v10920, %v11600
        %v11602 = vsub.f32 1.0, %v11601
        %v11603 = vmul.f32 %v11600, %v11602
        %v11604 = vadd.f32 %v11600, %v11603
        %vm11605 = vweird.f32 %v10920
        %vm11606 = vweird.f32 %v11600
        %vm11607 = vmor %vm11605, %vm11606
        %v11608 = vsel %vm11607, %v11600, %v11604
        %v11609 = vand.u32 2147483647, %v10920
        %vm11610 = vcmp.eq.f32.partialorder %v11609, 8.507059e+37
        %v11611 = vand.u32 %v10920, 2147483648
        %v11612 = vor.u32 1.1754944e-38, %v11611
        %v11613 = vsel %vm11610, %v11612, %v11608
        %v11614 = vmul.f32 1.0, %v11613
        %v11615 = vrcp.pop %v10921
        %v11616 = vmul.f32 %v10921, %v11615
        %v11617 = vsub.f32 1.0, %v11616
        %v11618 = vmul.f32 %v11615, %v11617
        %v11619 = vadd.f32 %v11615, %v11618
        %vm11620 = vweird.f32 %v10921
        %vm11621 = vweird.f32 %v11615
        %vm11622 = vmor %vm11620, %vm11621
        %v11623 = vsel %vm11622, %v11615, %v11619
        %v11624 = vand.u32 2147483647, %v10921
        %vm11625 = vcmp.eq.f32.partialorder %v11624, 8.507059e+37
        %v11626 = vand.u32 %v10921, 2147483648
        %v11627 = vor.u32 1.1754944e-38, %v11626
        %v11628 = vsel %vm11625, %v11627, %v11623
        %v11629 = vmul.f32 1.0, %v11628
        %v11630 = vrcp.pop %v10922
        %v11631 = vmul.f32 %v10922, %v11630
        %v11632 = vsub.f32 1.0, %v11631
        %v11633 = vmul.f32 %v11630, %v11632
        %v11634 = vadd.f32 %v11630, %v11633
        %vm11635 = vweird.f32 %v10922
        %vm11636 = vweird.f32 %v11630
        %vm11637 = vmor %vm11635, %vm11636
        %v11638 = vsel %vm11637, %v11630, %v11634
        %v11639 = vand.u32 2147483647, %v10922
        %vm11640 = vcmp.eq.f32.partialorder %v11639, 8.507059e+37
        %v11641 = vand.u32 %v10922, 2147483648
        %v11642 = vor.u32 1.1754944e-38, %v11641
        %v11643 = vsel %vm11640, %v11642, %v11638
        %v11644 = vmul.f32 1.0, %v11643
        %v11645 = vrcp.pop %v10923
        %v11646 = vmul.f32 %v10923, %v11645
        %v11647 = vsub.f32 1.0, %v11646
        %v11648 = vmul.f32 %v11645, %v11647
        %v11649 = vadd.f32 %v11645, %v11648
        %vm11650 = vweird.f32 %v10923
        %vm11651 = vweird.f32 %v11645
        %vm11652 = vmor %vm11650, %vm11651
        %v11653 = vsel %vm11652, %v11645, %v11649
        %v11654 = vand.u32 2147483647, %v10923
        %vm11655 = vcmp.eq.f32.partialorder %v11654, 8.507059e+37
        %v11656 = vand.u32 %v10923, 2147483648
        %v11657 = vor.u32 1.1754944e-38, %v11656
        %v11658 = vsel %vm11655, %v11657, %v11653
        %v11659 = vmul.f32 1.0, %v11658
        %v11660 = vrcp.pop %v10924
        %v11661 = vmul.f32 %v10924, %v11660
        %v11662 = vsub.f32 1.0, %v11661
        %v11663 = vmul.f32 %v11660, %v11662
        %v11664 = vadd.f32 %v11660, %v11663
        %vm11665 = vweird.f32 %v10924
        %vm11666 = vweird.f32 %v11660
        %vm11667 = vmor %vm11665, %vm11666
        %v11668 = vsel %vm11667, %v11660, %v11664
        %v11669 = vand.u32 2147483647, %v10924
        %vm11670 = vcmp.eq.f32.partialorder %v11669, 8.507059e+37
        %v11671 = vand.u32 %v10924, 2147483648
        %v11672 = vor.u32 1.1754944e-38, %v11671
        %v11673 = vsel %vm11670, %v11672, %v11668
        %v11674 = vmul.f32 1.0, %v11673
        %v11675 = vrcp.pop %v10925
        %v11676 = vmul.f32 %v10925, %v11675
        %v11677 = vsub.f32 1.0, %v11676
        %v11678 = vmul.f32 %v11675, %v11677
        %v11679 = vadd.f32 %v11675, %v11678
        %vm11680 = vweird.f32 %v10925
        %vm11681 = vweird.f32 %v11675
        %vm11682 = vmor %vm11680, %vm11681
        %v11683 = vsel %vm11682, %v11675, %v11679
        %v11684 = vand.u32 2147483647, %v10925
        %vm11685 = vcmp.eq.f32.partialorder %v11684, 8.507059e+37
        %v11686 = vand.u32 %v10925, 2147483648
        %v11687 = vor.u32 1.1754944e-38, %v11686
        %v11688 = vsel %vm11685, %v11687, %v11683
        %v11689 = vmul.f32 1.0, %v11688
        %v11690 = vrcp.pop %v10926
        %v11691 = vmul.f32 %v10926, %v11690
        %v11692 = vsub.f32 1.0, %v11691
        %v11693 = vmul.f32 %v11690, %v11692
        %v11694 = vadd.f32 %v11690, %v11693
        %vm11695 = vweird.f32 %v10926
        %vm11696 = vweird.f32 %v11690
        %vm11697 = vmor %vm11695, %vm11696
        %v11698 = vsel %vm11697, %v11690, %v11694
        %v11699 = vand.u32 2147483647, %v10926
        %vm11700 = vcmp.eq.f32.partialorder %v11699, 8.507059e+37
        %v11701 = vand.u32 %v10926, 2147483648
        %v11702 = vor.u32 1.1754944e-38, %v11701
        %v11703 = vsel %vm11700, %v11702, %v11698
        %v11704 = vmul.f32 1.0, %v11703
        %v11705 = vrcp.pop %v10927
        %v11706 = vmul.f32 %v10927, %v11705
        %v11707 = vsub.f32 1.0, %v11706
        %v11708 = vmul.f32 %v11705, %v11707
        %v11709 = vadd.f32 %v11705, %v11708
        %vm11710 = vweird.f32 %v10927
        %vm11711 = vweird.f32 %v11705
        %vm11712 = vmor %vm11710, %vm11711
        %v11713 = vsel %vm11712, %v11705, %v11709
        %v11714 = vand.u32 2147483647, %v10927
        %vm11715 = vcmp.eq.f32.partialorder %v11714, 8.507059e+37
        %v11716 = vand.u32 %v10927, 2147483648
        %v11717 = vor.u32 1.1754944e-38, %v11716
        %v11718 = vsel %vm11715, %v11717, %v11713
        %v11719 = vmul.f32 1.0, %v11718
        %v11720 = vrcp.pop %v10928
        %v11721 = vmul.f32 %v10928, %v11720
        %v11722 = vsub.f32 1.0, %v11721
        %v11723 = vmul.f32 %v11720, %v11722
        %v11724 = vadd.f32 %v11720, %v11723
        %vm11725 = vweird.f32 %v10928
        %vm11726 = vweird.f32 %v11720
        %vm11727 = vmor %vm11725, %vm11726
        %v11728 = vsel %vm11727, %v11720, %v11724
        %v11729 = vand.u32 2147483647, %v10928
        %vm11730 = vcmp.eq.f32.partialorder %v11729, 8.507059e+37
        %v11731 = vand.u32 %v10928, 2147483648
        %v11732 = vor.u32 1.1754944e-38, %v11731
        %v11733 = vsel %vm11730, %v11732, %v11728
        %v11734 = vmul.f32 1.0, %v11733
        %v11735 = vrcp.pop %v10929
        %v11736 = vmul.f32 %v10929, %v11735
        %v11737 = vsub.f32 1.0, %v11736
        %v11738 = vmul.f32 %v11735, %v11737
        %v11739 = vadd.f32 %v11735, %v11738
        %vm11740 = vweird.f32 %v10929
        %vm11741 = vweird.f32 %v11735
        %vm11742 = vmor %vm11740, %vm11741
        %v11743 = vsel %vm11742, %v11735, %v11739
        %v11744 = vand.u32 2147483647, %v10929
        %vm11745 = vcmp.eq.f32.partialorder %v11744, 8.507059e+37
        %v11746 = vand.u32 %v10929, 2147483648
        %v11747 = vor.u32 1.1754944e-38, %v11746
        %v11748 = vsel %vm11745, %v11747, %v11743
        %v11749 = vmul.f32 1.0, %v11748
        %v11750 = vrcp.pop %v10930
        %v11751 = vmul.f32 %v10930, %v11750
        %v11752 = vsub.f32 1.0, %v11751
        %v11753 = vmul.f32 %v11750, %v11752
        %v11754 = vadd.f32 %v11750, %v11753
        %vm11755 = vweird.f32 %v10930
        %vm11756 = vweird.f32 %v11750
        %vm11757 = vmor %vm11755, %vm11756
        %v11758 = vsel %vm11757, %v11750, %v11754
        %v11759 = vand.u32 2147483647, %v10930
        %vm11760 = vcmp.eq.f32.partialorder %v11759, 8.507059e+37
        %v11761 = vand.u32 %v10930, 2147483648
        %v11762 = vor.u32 1.1754944e-38, %v11761
        %v11763 = vsel %vm11760, %v11762, %v11758
        %v11764 = vmul.f32 1.0, %v11763
        %v11765 = vrcp.pop %v10931
        %v11766 = vmul.f32 %v10931, %v11765
        %v11767 = vsub.f32 1.0, %v11766
        %v11768 = vmul.f32 %v11765, %v11767
        %v11769 = vadd.f32 %v11765, %v11768
        %vm11770 = vweird.f32 %v10931
        %vm11771 = vweird.f32 %v11765
        %vm11772 = vmor %vm11770, %vm11771
        %v11773 = vsel %vm11772, %v11765, %v11769
        %v11774 = vand.u32 2147483647, %v10931
        %vm11775 = vcmp.eq.f32.partialorder %v11774, 8.507059e+37
        %v11776 = vand.u32 %v10931, 2147483648
        %v11777 = vor.u32 1.1754944e-38, %v11776
        %v11778 = vsel %vm11775, %v11777, %v11773
        %v11779 = vmul.f32 1.0, %v11778
        %v11780 = vrcp.pop %v10932
        %v11781 = vmul.f32 %v10932, %v11780
        %v11782 = vsub.f32 1.0, %v11781
        %v11783 = vmul.f32 %v11780, %v11782
        %v11784 = vadd.f32 %v11780, %v11783
        %vm11785 = vweird.f32 %v10932
        %vm11786 = vweird.f32 %v11780
        %vm11787 = vmor %vm11785, %vm11786
        %v11788 = vsel %vm11787, %v11780, %v11784
        %v11789 = vand.u32 2147483647, %v10932
        %vm11790 = vcmp.eq.f32.partialorder %v11789, 8.507059e+37
        %v11791 = vand.u32 %v10932, 2147483648
        %v11792 = vor.u32 1.1754944e-38, %v11791
        %v11793 = vsel %vm11790, %v11792, %v11788
        %v11794 = vmul.f32 1.0, %v11793
        %v11795 = vrcp.pop %v10933
        %v11796 = vmul.f32 %v10933, %v11795
        %v11797 = vsub.f32 1.0, %v11796
        %v11798 = vmul.f32 %v11795, %v11797
        %v11799 = vadd.f32 %v11795, %v11798
        %vm11800 = vweird.f32 %v10933
        %vm11801 = vweird.f32 %v11795
        %vm11802 = vmor %vm11800, %vm11801
        %v11803 = vsel %vm11802, %v11795, %v11799
        %v11804 = vand.u32 2147483647, %v10933
        %vm11805 = vcmp.eq.f32.partialorder %v11804, 8.507059e+37
        %v11806 = vand.u32 %v10933, 2147483648
        %v11807 = vor.u32 1.1754944e-38, %v11806
        %v11808 = vsel %vm11805, %v11807, %v11803
        %v11809 = vmul.f32 1.0, %v11808
        %v11810 = vrcp.pop %v10934
        %v11811 = vmul.f32 %v10934, %v11810
        %v11812 = vsub.f32 1.0, %v11811
        %v11813 = vmul.f32 %v11810, %v11812
        %v11814 = vadd.f32 %v11810, %v11813
        %vm11815 = vweird.f32 %v10934
        %vm11816 = vweird.f32 %v11810
        %vm11817 = vmor %vm11815, %vm11816
        %v11818 = vsel %vm11817, %v11810, %v11814
        %v11819 = vand.u32 2147483647, %v10934
        %vm11820 = vcmp.eq.f32.partialorder %v11819, 8.507059e+37
        %v11821 = vand.u32 %v10934, 2147483648
        %v11822 = vor.u32 1.1754944e-38, %v11821
        %v11823 = vsel %vm11820, %v11822, %v11818
        %v11824 = vmul.f32 1.0, %v11823
        %v11825 = vrcp.pop %v10935
        %v11826 = vmul.f32 %v10935, %v11825
        %v11827 = vsub.f32 1.0, %v11826
        %v11828 = vmul.f32 %v11825, %v11827
        %v11829 = vadd.f32 %v11825, %v11828
        %vm11830 = vweird.f32 %v10935
        %vm11831 = vweird.f32 %v11825
        %vm11832 = vmor %vm11830, %vm11831
        %v11833 = vsel %vm11832, %v11825, %v11829
        %v11834 = vand.u32 2147483647, %v10935
        %vm11835 = vcmp.eq.f32.partialorder %v11834, 8.507059e+37
        %v11836 = vand.u32 %v10935, 2147483648
        %v11837 = vor.u32 1.1754944e-38, %v11836
        %v11838 = vsel %vm11835, %v11837, %v11833
        %v11839 = vmul.f32 1.0, %v11838
        %v11840 = vrcp.pop %v10936
        %v11841 = vmul.f32 %v10936, %v11840
        %v11842 = vsub.f32 1.0, %v11841
        %v11843 = vmul.f32 %v11840, %v11842
        %v11844 = vadd.f32 %v11840, %v11843
        %vm11845 = vweird.f32 %v10936
        %vm11846 = vweird.f32 %v11840
        %vm11847 = vmor %vm11845, %vm11846
        %v11848 = vsel %vm11847, %v11840, %v11844
        %v11849 = vand.u32 2147483647, %v10936
        %vm11850 = vcmp.eq.f32.partialorder %v11849, 8.507059e+37
        %v11851 = vand.u32 %v10936, 2147483648
        %v11852 = vor.u32 1.1754944e-38, %v11851
        %v11853 = vsel %vm11850, %v11852, %v11848
        %v11854 = vmul.f32 1.0, %v11853
        %v11855 = vrcp.pop %v10937
        %v11856 = vmul.f32 %v10937, %v11855
        %v11857 = vsub.f32 1.0, %v11856
        %v11858 = vmul.f32 %v11855, %v11857
        %v11859 = vadd.f32 %v11855, %v11858
        %vm11860 = vweird.f32 %v10937
        %vm11861 = vweird.f32 %v11855
        %vm11862 = vmor %vm11860, %vm11861
        %v11863 = vsel %vm11862, %v11855, %v11859
        %v11864 = vand.u32 2147483647, %v10937
        %vm11865 = vcmp.eq.f32.partialorder %v11864, 8.507059e+37
        %v11866 = vand.u32 %v10937, 2147483648
        %v11867 = vor.u32 1.1754944e-38, %v11866
        %v11868 = vsel %vm11865, %v11867, %v11863
        %v11869 = vmul.f32 1.0, %v11868
        %v11870 = vrcp.pop %v10938
        %v11871 = vmul.f32 %v10938, %v11870
        %v11872 = vsub.f32 1.0, %v11871
        %v11873 = vmul.f32 %v11870, %v11872
        %v11874 = vadd.f32 %v11870, %v11873
        %vm11875 = vweird.f32 %v10938
        %vm11876 = vweird.f32 %v11870
        %vm11877 = vmor %vm11875, %vm11876
        %v11878 = vsel %vm11877, %v11870, %v11874
        %v11879 = vand.u32 2147483647, %v10938
        %vm11880 = vcmp.eq.f32.partialorder %v11879, 8.507059e+37
        %v11881 = vand.u32 %v10938, 2147483648
        %v11882 = vor.u32 1.1754944e-38, %v11881
        %v11883 = vsel %vm11880, %v11882, %v11878
        %v11884 = vmul.f32 1.0, %v11883
        %v11885 = vrcp.pop %v10939
        %v11886 = vmul.f32 %v10939, %v11885
        %v11887 = vsub.f32 1.0, %v11886
        %v11888 = vmul.f32 %v11885, %v11887
        %v11889 = vadd.f32 %v11885, %v11888
        %vm11890 = vweird.f32 %v10939
        %vm11891 = vweird.f32 %v11885
        %vm11892 = vmor %vm11890, %vm11891
        %v11893 = vsel %vm11892, %v11885, %v11889
        %v11894 = vand.u32 2147483647, %v10939
        %vm11895 = vcmp.eq.f32.partialorder %v11894, 8.507059e+37
        %v11896 = vand.u32 %v10939, 2147483648
        %v11897 = vor.u32 1.1754944e-38, %v11896
        %v11898 = vsel %vm11895, %v11897, %v11893
        %v11899 = vmul.f32 1.0, %v11898
        %11964 = vrot.lane.b32.xlu0 %v10620, 18
        %v11965 = vpop.permute.xlu0 %11964
        %11966 = vrot.lane.b32.xlu0 %v10621, 18
        %v11967 = vpop.permute.xlu0 %11966
        %11968 = vrot.lane.b32.xlu0 %v10622, 18
        %v11969 = vpop.permute.xlu0 %11968
        %11970 = vrot.lane.b32.xlu0 %v10623, 18
        %v11971 = vpop.permute.xlu0 %11970
        %11972 = vrot.lane.b32.xlu0 %v10624, 18
        %v11973 = vpop.permute.xlu0 %11972
        %11974 = vrot.lane.b32.xlu0 %v10625, 18
        %v11975 = vpop.permute.xlu0 %11974
        %11976 = vrot.lane.b32.xlu0 %v10626, 18
        %v11977 = vpop.permute.xlu0 %11976
        %11978 = vrot.lane.b32.xlu0 %v10627, 18
        %v11979 = vpop.permute.xlu0 %11978
        %11980 = vrot.lane.b32.xlu0 %v10628, 18
        %v11981 = vpop.permute.xlu0 %11980
        %11982 = vrot.lane.b32.xlu0 %v10629, 18
        %v11983 = vpop.permute.xlu0 %11982
        %11984 = vrot.lane.b32.xlu0 %v10630, 18
        %v11985 = vpop.permute.xlu0 %11984
        %11986 = vrot.lane.b32.xlu0 %v10631, 18
        %v11987 = vpop.permute.xlu0 %11986
        %11988 = vrot.lane.b32.xlu0 %v10632, 18
        %v11989 = vpop.permute.xlu0 %11988
        %11990 = vrot.lane.b32.xlu0 %v10633, 18
        %v11991 = vpop.permute.xlu0 %11990
        %11992 = vrot.lane.b32.xlu0 %v10634, 18
        %v11993 = vpop.permute.xlu0 %11992
        %11994 = vrot.lane.b32.xlu0 %v10635, 18
        %v11995 = vpop.permute.xlu0 %11994
        %11996 = vrot.lane.b32.xlu0 %v10636, 18
        %v11997 = vpop.permute.xlu0 %11996
        %11998 = vrot.lane.b32.xlu0 %v10637, 18
        %v11999 = vpop.permute.xlu0 %11998
        %12000 = vrot.lane.b32.xlu0 %v10638, 18
        %v12001 = vpop.permute.xlu0 %12000
        %12002 = vrot.lane.b32.xlu0 %v10639, 18
        %v12003 = vpop.permute.xlu0 %12002
        %12004 = vrot.lane.b32.xlu0 %v10640, 18
        %v12005 = vpop.permute.xlu0 %12004
        %12006 = vrot.lane.b32.xlu0 %v10641, 18
        %v12007 = vpop.permute.xlu0 %12006
        %12008 = vrot.lane.b32.xlu0 %v10642, 18
        %v12009 = vpop.permute.xlu0 %12008
        %12010 = vrot.lane.b32.xlu0 %v10643, 18
        %v12011 = vpop.permute.xlu0 %12010
        %12012 = vrot.lane.b32.xlu0 %v10644, 18
        %v12013 = vpop.permute.xlu0 %12012
        %12014 = vrot.lane.b32.xlu0 %v10645, 18
        %v12015 = vpop.permute.xlu0 %12014
        %12016 = vrot.lane.b32.xlu0 %v10646, 18
        %v12017 = vpop.permute.xlu0 %12016
        %12018 = vrot.lane.b32.xlu0 %v10647, 18
        %v12019 = vpop.permute.xlu0 %12018
        %12020 = vrot.lane.b32.xlu0 %v10648, 18
        %v12021 = vpop.permute.xlu0 %12020
        %12022 = vrot.lane.b32.xlu0 %v10649, 18
        %v12023 = vpop.permute.xlu0 %12022
        %12024 = vrot.lane.b32.xlu0 %v10650, 18
        %v12025 = vpop.permute.xlu0 %12024
        %12026 = vrot.lane.b32.xlu0 %v10651, 18
        %v12027 = vpop.permute.xlu0 %12026
        %12028 = vrot.lane.b32.xlu0 %v10652, 18
        %v12029 = vpop.permute.xlu0 %12028
        %12030 = vrot.lane.b32.xlu0 %v10653, 18
        %v12031 = vpop.permute.xlu0 %12030
        %12032 = vrot.lane.b32.xlu0 %v10654, 18
        %v12033 = vpop.permute.xlu0 %12032
        %12034 = vrot.lane.b32.xlu0 %v10655, 18
        %v12035 = vpop.permute.xlu0 %12034
        %12036 = vrot.lane.b32.xlu0 %v10656, 18
        %v12037 = vpop.permute.xlu0 %12036
        %12038 = vrot.lane.b32.xlu0 %v10657, 18
        %v12039 = vpop.permute.xlu0 %12038
        %12040 = vrot.lane.b32.xlu0 %v10658, 18
        %v12041 = vpop.permute.xlu0 %12040
        %12042 = vrot.lane.b32.xlu0 %v10659, 18
        %v12043 = vpop.permute.xlu0 %12042
        %12044 = vrot.lane.b32.xlu0 %v10660, 18
        %v12045 = vpop.permute.xlu0 %12044
        %12046 = vrot.lane.b32.xlu0 %v10661, 18
        %v12047 = vpop.permute.xlu0 %12046
        %12048 = vrot.lane.b32.xlu0 %v10662, 18
        %v12049 = vpop.permute.xlu0 %12048
        %12050 = vrot.lane.b32.xlu0 %v10663, 18
        %v12051 = vpop.permute.xlu0 %12050
        %12052 = vrot.lane.b32.xlu0 %v10664, 18
        %v12053 = vpop.permute.xlu0 %12052
        %12054 = vrot.lane.b32.xlu0 %v10665, 18
        %v12055 = vpop.permute.xlu0 %12054
        %12056 = vrot.lane.b32.xlu0 %v10666, 18
        %v12057 = vpop.permute.xlu0 %12056
        %12058 = vrot.lane.b32.xlu0 %v10667, 18
        %v12059 = vpop.permute.xlu0 %12058
        %12060 = vrot.lane.b32.xlu0 %v10668, 18
        %v12061 = vpop.permute.xlu0 %12060
        %12062 = vrot.lane.b32.xlu0 %v10669, 18
        %v12063 = vpop.permute.xlu0 %12062
        %12064 = vrot.lane.b32.xlu0 %v10670, 18
        %v12065 = vpop.permute.xlu0 %12064
        %12066 = vrot.lane.b32.xlu0 %v10671, 18
        %v12067 = vpop.permute.xlu0 %12066
        %12068 = vrot.lane.b32.xlu0 %v10672, 18
        %v12069 = vpop.permute.xlu0 %12068
        %12070 = vrot.lane.b32.xlu0 %v10673, 18
        %v12071 = vpop.permute.xlu0 %12070
        %12072 = vrot.lane.b32.xlu0 %v10674, 18
        %v12073 = vpop.permute.xlu0 %12072
        %12074 = vrot.lane.b32.xlu0 %v10675, 18
        %v12075 = vpop.permute.xlu0 %12074
        %12076 = vrot.lane.b32.xlu0 %v10676, 18
        %v12077 = vpop.permute.xlu0 %12076
        %12078 = vrot.lane.b32.xlu0 %v10677, 18
        %v12079 = vpop.permute.xlu0 %12078
        %12080 = vrot.lane.b32.xlu0 %v10678, 18
        %v12081 = vpop.permute.xlu0 %12080
        %12082 = vrot.lane.b32.xlu0 %v10679, 18
        %v12083 = vpop.permute.xlu0 %12082
        %12084 = vrot.lane.b32.xlu0 %v10680, 18
        %v12085 = vpop.permute.xlu0 %12084
        %12086 = vrot.lane.b32.xlu0 %v10681, 18
        %v12087 = vpop.permute.xlu0 %12086
        %12088 = vrot.lane.b32.xlu0 %v10682, 18
        %v12089 = vpop.permute.xlu0 %12088
        %12090 = vrot.lane.b32.xlu0 %v10683, 18
        %v12091 = vpop.permute.xlu0 %12090
        %vm12156 = vcmask 72704
        %v12157 = vsel %vm12156, %v10954, %v10428
        %v12158 = vsel %vm12156, %v10969, %v10429
        %v12159 = vsel %vm12156, %v10984, %v10430
        %v12160 = vsel %vm12156, %v10999, %v10431
        %v12161 = vsel %vm12156, %v11014, %v10432
        %v12162 = vsel %vm12156, %v11029, %v10433
        %v12163 = vsel %vm12156, %v11044, %v10434
        %v12164 = vsel %vm12156, %v11059, %v10435
        %v12165 = vsel %vm12156, %v11074, %v10436
        %v12166 = vsel %vm12156, %v11089, %v10437
        %v12167 = vsel %vm12156, %v11104, %v10438
        %v12168 = vsel %vm12156, %v11119, %v10439
        %v12169 = vsel %vm12156, %v11134, %v10440
        %v12170 = vsel %vm12156, %v11149, %v10441
        %v12171 = vsel %vm12156, %v11164, %v10442
        %v12172 = vsel %vm12156, %v11179, %v10443
        %v12173 = vsel %vm12156, %v11194, %v10444
        %v12174 = vsel %vm12156, %v11209, %v10445
        %v12175 = vsel %vm12156, %v11224, %v10446
        %v12176 = vsel %vm12156, %v11239, %v10447
        %v12177 = vsel %vm12156, %v11254, %v10448
        %v12178 = vsel %vm12156, %v11269, %v10449
        %v12179 = vsel %vm12156, %v11284, %v10450
        %v12180 = vsel %vm12156, %v11299, %v10451
        %v12181 = vsel %vm12156, %v11314, %v10452
        %v12182 = vsel %vm12156, %v11329, %v10453
        %v12183 = vsel %vm12156, %v11344, %v10454
        %v12184 = vsel %vm12156, %v11359, %v10455
        %v12185 = vsel %vm12156, %v11374, %v10456
        %v12186 = vsel %vm12156, %v11389, %v10457
        %v12187 = vsel %vm12156, %v11404, %v10458
        %v12188 = vsel %vm12156, %v11419, %v10459
        %v12189 = vsel %vm12156, %v11434, %v10460
        %v12190 = vsel %vm12156, %v11449, %v10461
        %v12191 = vsel %vm12156, %v11464, %v10462
        %v12192 = vsel %vm12156, %v11479, %v10463
        %v12193 = vsel %vm12156, %v11494, %v10464
        %v12194 = vsel %vm12156, %v11509, %v10465
        %v12195 = vsel %vm12156, %v11524, %v10466
        %v12196 = vsel %vm12156, %v11539, %v10467
        %v12197 = vsel %vm12156, %v11554, %v10468
        %v12198 = vsel %vm12156, %v11569, %v10469
        %v12199 = vsel %vm12156, %v11584, %v10470
        %v12200 = vsel %vm12156, %v11599, %v10471
        %v12201 = vsel %vm12156, %v11614, %v10472
        %v12202 = vsel %vm12156, %v11629, %v10473
        %v12203 = vsel %vm12156, %v11644, %v10474
        %v12204 = vsel %vm12156, %v11659, %v10475
        %v12205 = vsel %vm12156, %v11674, %v10476
        %v12206 = vsel %vm12156, %v11689, %v10477
        %v12207 = vsel %vm12156, %v11704, %v10478
        %v12208 = vsel %vm12156, %v11719, %v10479
        %v12209 = vsel %vm12156, %v11734, %v10480
        %v12210 = vsel %vm12156, %v11749, %v10481
        %v12211 = vsel %vm12156, %v11764, %v10482
        %v12212 = vsel %vm12156, %v11779, %v10483
        %v12213 = vsel %vm12156, %v11794, %v10484
        %v12214 = vsel %vm12156, %v11809, %v10485
        %v12215 = vsel %vm12156, %v11824, %v10486
        %v12216 = vsel %vm12156, %v11839, %v10487
        %v12217 = vsel %vm12156, %v11854, %v10488
        %v12218 = vsel %vm12156, %v11869, %v10489
        %v12219 = vsel %vm12156, %v11884, %v10490
        %v12220 = vsel %vm12156, %v11899, %v10491
        %vm12221 = vcmask 146432
        %v12222 = vsel %vm12221, %v12157, %v10428
        %v12223 = vsel %vm12221, %v12158, %v10429
        %v12224 = vsel %vm12221, %v12159, %v10430
        %v12225 = vsel %vm12221, %v12160, %v10431
        %v12226 = vsel %vm12221, %v12161, %v10432
        %v12227 = vsel %vm12221, %v12162, %v10433
        %v12228 = vsel %vm12221, %v12163, %v10434
        %v12229 = vsel %vm12221, %v12164, %v10435
        %v12230 = vsel %vm12221, %v12165, %v10436
        %v12231 = vsel %vm12221, %v12166, %v10437
        %v12232 = vsel %vm12221, %v12167, %v10438
        %v12233 = vsel %vm12221, %v12168, %v10439
        %v12234 = vsel %vm12221, %v12169, %v10440
        %v12235 = vsel %vm12221, %v12170, %v10441
        %v12236 = vsel %vm12221, %v12171, %v10442
        %v12237 = vsel %vm12221, %v12172, %v10443
        %v12238 = vsel %vm12221, %v12173, %v10444
        %v12239 = vsel %vm12221, %v12174, %v10445
        %v12240 = vsel %vm12221, %v12175, %v10446
        %v12241 = vsel %vm12221, %v12176, %v10447
        %v12242 = vsel %vm12221, %v12177, %v10448
        %v12243 = vsel %vm12221, %v12178, %v10449
        %v12244 = vsel %vm12221, %v12179, %v10450
        %v12245 = vsel %vm12221, %v12180, %v10451
        %v12246 = vsel %vm12221, %v12181, %v10452
        %v12247 = vsel %vm12221, %v12182, %v10453
        %v12248 = vsel %vm12221, %v12183, %v10454
        %v12249 = vsel %vm12221, %v12184, %v10455
        %v12250 = vsel %vm12221, %v12185, %v10456
        %v12251 = vsel %vm12221, %v12186, %v10457
        %v12252 = vsel %vm12221, %v12187, %v10458
        %v12253 = vsel %vm12221, %v12188, %v10459
        %v12254 = vsel %vm12221, %v12189, %v10460
        %v12255 = vsel %vm12221, %v12190, %v10461
        %v12256 = vsel %vm12221, %v12191, %v10462
        %v12257 = vsel %vm12221, %v12192, %v10463
        %v12258 = vsel %vm12221, %v12193, %v10464
        %v12259 = vsel %vm12221, %v12194, %v10465
        %v12260 = vsel %vm12221, %v12195, %v10466
        %v12261 = vsel %vm12221, %v12196, %v10467
        %v12262 = vsel %vm12221, %v12197, %v10468
        %v12263 = vsel %vm12221, %v12198, %v10469
        %v12264 = vsel %vm12221, %v12199, %v10470
        %v12265 = vsel %vm12221, %v12200, %v10471
        %v12266 = vsel %vm12221, %v12201, %v10472
        %v12267 = vsel %vm12221, %v12202, %v10473
        %v12268 = vsel %vm12221, %v12203, %v10474
        %v12269 = vsel %vm12221, %v12204, %v10475
        %v12270 = vsel %vm12221, %v12205, %v10476
        %v12271 = vsel %vm12221, %v12206, %v10477
        %v12272 = vsel %vm12221, %v12207, %v10478
        %v12273 = vsel %vm12221, %v12208, %v10479
        %v12274 = vsel %vm12221, %v12209, %v10480
        %v12275 = vsel %vm12221, %v12210, %v10481
        %v12276 = vsel %vm12221, %v12211, %v10482
        %v12277 = vsel %vm12221, %v12212, %v10483
        %v12278 = vsel %vm12221, %v12213, %v10484
        %v12279 = vsel %vm12221, %v12214, %v10485
        %v12280 = vsel %vm12221, %v12215, %v10486
        %v12281 = vsel %vm12221, %v12216, %v10487
        %v12282 = vsel %vm12221, %v12217, %v10488
        %v12283 = vsel %vm12221, %v12218, %v10489
        %v12284 = vsel %vm12221, %v12219, %v10490
        %v12285 = vsel %vm12221, %v12220, %v10491
        %vm12286 = vcmask 220160
        %v12287 = vsel %vm12286, %v12222, %v11965
        %v12288 = vsel %vm12286, %v12223, %v11967
        %v12289 = vsel %vm12286, %v12224, %v11969
        %v12290 = vsel %vm12286, %v12225, %v11971
        %v12291 = vsel %vm12286, %v12226, %v11973
        %v12292 = vsel %vm12286, %v12227, %v11975
        %v12293 = vsel %vm12286, %v12228, %v11977
        %v12294 = vsel %vm12286, %v12229, %v11979
        %v12295 = vsel %vm12286, %v12230, %v11981
        %v12296 = vsel %vm12286, %v12231, %v11983
        %v12297 = vsel %vm12286, %v12232, %v11985
        %v12298 = vsel %vm12286, %v12233, %v11987
        %v12299 = vsel %vm12286, %v12234, %v11989
        %v12300 = vsel %vm12286, %v12235, %v11991
        %v12301 = vsel %vm12286, %v12236, %v11993
        %v12302 = vsel %vm12286, %v12237, %v11995
        %v12303 = vsel %vm12286, %v12238, %v11997
        %v12304 = vsel %vm12286, %v12239, %v11999
        %v12305 = vsel %vm12286, %v12240, %v12001
        %v12306 = vsel %vm12286, %v12241, %v12003
        %v12307 = vsel %vm12286, %v12242, %v12005
        %v12308 = vsel %vm12286, %v12243, %v12007
        %v12309 = vsel %vm12286, %v12244, %v12009
        %v12310 = vsel %vm12286, %v12245, %v12011
        %v12311 = vsel %vm12286, %v12246, %v12013
        %v12312 = vsel %vm12286, %v12247, %v12015
        %v12313 = vsel %vm12286, %v12248, %v12017
        %v12314 = vsel %vm12286, %v12249, %v12019
        %v12315 = vsel %vm12286, %v12250, %v12021
        %v12316 = vsel %vm12286, %v12251, %v12023
        %v12317 = vsel %vm12286, %v12252, %v12025
        %v12318 = vsel %vm12286, %v12253, %v12027
        %v12319 = vsel %vm12286, %v12254, %v12029
        %v12320 = vsel %vm12286, %v12255, %v12031
        %v12321 = vsel %vm12286, %v12256, %v12033
        %v12322 = vsel %vm12286, %v12257, %v12035
        %v12323 = vsel %vm12286, %v12258, %v12037
        %v12324 = vsel %vm12286, %v12259, %v12039
        %v12325 = vsel %vm12286, %v12260, %v12041
        %v12326 = vsel %vm12286, %v12261, %v12043
        %v12327 = vsel %vm12286, %v12262, %v12045
        %v12328 = vsel %vm12286, %v12263, %v12047
        %v12329 = vsel %vm12286, %v12264, %v12049
        %v12330 = vsel %vm12286, %v12265, %v12051
        %v12331 = vsel %vm12286, %v12266, %v12053
        %v12332 = vsel %vm12286, %v12267, %v12055
        %v12333 = vsel %vm12286, %v12268, %v12057
        %v12334 = vsel %vm12286, %v12269, %v12059
        %v12335 = vsel %vm12286, %v12270, %v12061
        %v12336 = vsel %vm12286, %v12271, %v12063
        %v12337 = vsel %vm12286, %v12272, %v12065
        %v12338 = vsel %vm12286, %v12273, %v12067
        %v12339 = vsel %vm12286, %v12274, %v12069
        %v12340 = vsel %vm12286, %v12275, %v12071
        %v12341 = vsel %vm12286, %v12276, %v12073
        %v12342 = vsel %vm12286, %v12277, %v12075
        %v12343 = vsel %vm12286, %v12278, %v12077
        %v12344 = vsel %vm12286, %v12279, %v12079
        %v12345 = vsel %vm12286, %v12280, %v12081
        %v12346 = vsel %vm12286, %v12281, %v12083
        %v12347 = vsel %vm12286, %v12282, %v12085
        %v12348 = vsel %vm12286, %v12283, %v12087
        %v12349 = vsel %vm12286, %v12284, %v12089
        %v12350 = vsel %vm12286, %v12285, %v12091
        %vm12351 = vcmask 293888
        %v12352 = vsel %vm12351, %v12287, %v11965
        %v12353 = vsel %vm12351, %v12288, %v11967
        %v12354 = vsel %vm12351, %v12289, %v11969
        %v12355 = vsel %vm12351, %v12290, %v11971
        %v12356 = vsel %vm12351, %v12291, %v11973
        %v12357 = vsel %vm12351, %v12292, %v11975
        %v12358 = vsel %vm12351, %v12293, %v11977
        %v12359 = vsel %vm12351, %v12294, %v11979
        %v12360 = vsel %vm12351, %v12295, %v11981
        %v12361 = vsel %vm12351, %v12296, %v11983
        %v12362 = vsel %vm12351, %v12297, %v11985
        %v12363 = vsel %vm12351, %v12298, %v11987
        %v12364 = vsel %vm12351, %v12299, %v11989
        %v12365 = vsel %vm12351, %v12300, %v11991
        %v12366 = vsel %vm12351, %v12301, %v11993
        %v12367 = vsel %vm12351, %v12302, %v11995
        %v12368 = vsel %vm12351, %v12303, %v11997
        %v12369 = vsel %vm12351, %v12304, %v11999
        %v12370 = vsel %vm12351, %v12305, %v12001
        %v12371 = vsel %vm12351, %v12306, %v12003
        %v12372 = vsel %vm12351, %v12307, %v12005
        %v12373 = vsel %vm12351, %v12308, %v12007
        %v12374 = vsel %vm12351, %v12309, %v12009
        %v12375 = vsel %vm12351, %v12310, %v12011
        %v12376 = vsel %vm12351, %v12311, %v12013
        %v12377 = vsel %vm12351, %v12312, %v12015
        %v12378 = vsel %vm12351, %v12313, %v12017
        %v12379 = vsel %vm12351, %v12314, %v12019
        %v12380 = vsel %vm12351, %v12315, %v12021
        %v12381 = vsel %vm12351, %v12316, %v12023
        %v12382 = vsel %vm12351, %v12317, %v12025
        %v12383 = vsel %vm12351, %v12318, %v12027
        %v12384 = vsel %vm12351, %v12319, %v12029
        %v12385 = vsel %vm12351, %v12320, %v12031
        %v12386 = vsel %vm12351, %v12321, %v12033
        %v12387 = vsel %vm12351, %v12322, %v12035
        %v12388 = vsel %vm12351, %v12323, %v12037
        %v12389 = vsel %vm12351, %v12324, %v12039
        %v12390 = vsel %vm12351, %v12325, %v12041
        %v12391 = vsel %vm12351, %v12326, %v12043
        %v12392 = vsel %vm12351, %v12327, %v12045
        %v12393 = vsel %vm12351, %v12328, %v12047
        %v12394 = vsel %vm12351, %v12329, %v12049
        %v12395 = vsel %vm12351, %v12330, %v12051
        %v12396 = vsel %vm12351, %v12331, %v12053
        %v12397 = vsel %vm12351, %v12332, %v12055
        %v12398 = vsel %vm12351, %v12333, %v12057
        %v12399 = vsel %vm12351, %v12334, %v12059
        %v12400 = vsel %vm12351, %v12335, %v12061
        %v12401 = vsel %vm12351, %v12336, %v12063
        %v12402 = vsel %vm12351, %v12337, %v12065
        %v12403 = vsel %vm12351, %v12338, %v12067
        %v12404 = vsel %vm12351, %v12339, %v12069
        %v12405 = vsel %vm12351, %v12340, %v12071
        %v12406 = vsel %vm12351, %v12341, %v12073
        %v12407 = vsel %vm12351, %v12342, %v12075
        %v12408 = vsel %vm12351, %v12343, %v12077
        %v12409 = vsel %vm12351, %v12344, %v12079
        %v12410 = vsel %vm12351, %v12345, %v12081
        %v12411 = vsel %vm12351, %v12346, %v12083
        %v12412 = vsel %vm12351, %v12347, %v12085
        %v12413 = vsel %vm12351, %v12348, %v12087
        %v12414 = vsel %vm12351, %v12349, %v12089
        %v12415 = vsel %vm12351, %v12350, %v12091
        %vm12416 = vcmask 367616
        %v12417 = vsel %vm12416, %v12352, 0.0
        %v12418 = vsel %vm12416, %v12353, 0.0
        %v12419 = vsel %vm12416, %v12354, 0.0
        %v12420 = vsel %vm12416, %v12355, 0.0
        %v12421 = vsel %vm12416, %v12356, 0.0
        %v12422 = vsel %vm12416, %v12357, 0.0
        %v12423 = vsel %vm12416, %v12358, 0.0
        %v12424 = vsel %vm12416, %v12359, 0.0
        %v12425 = vsel %vm12416, %v12360, 0.0
        %v12426 = vsel %vm12416, %v12361, 0.0
        %v12427 = vsel %vm12416, %v12362, 0.0
        %v12428 = vsel %vm12416, %v12363, 0.0
        %v12429 = vsel %vm12416, %v12364, 0.0
        %v12430 = vsel %vm12416, %v12365, 0.0
        %v12431 = vsel %vm12416, %v12366, 0.0
        %v12432 = vsel %vm12416, %v12367, 0.0
        %v12433 = vsel %vm12416, %v12368, 0.0
        %v12434 = vsel %vm12416, %v12369, 0.0
        %v12435 = vsel %vm12416, %v12370, 0.0
        %v12436 = vsel %vm12416, %v12371, 0.0
        %v12437 = vsel %vm12416, %v12372, 0.0
        %v12438 = vsel %vm12416, %v12373, 0.0
        %v12439 = vsel %vm12416, %v12374, 0.0
        %v12440 = vsel %vm12416, %v12375, 0.0
        %v12441 = vsel %vm12416, %v12376, 0.0
        %v12442 = vsel %vm12416, %v12377, 0.0
        %v12443 = vsel %vm12416, %v12378, 0.0
        %v12444 = vsel %vm12416, %v12379, 0.0
        %v12445 = vsel %vm12416, %v12380, 0.0
        %v12446 = vsel %vm12416, %v12381, 0.0
        %v12447 = vsel %vm12416, %v12382, 0.0
        %v12448 = vsel %vm12416, %v12383, 0.0
        %v12449 = vsel %vm12416, %v12384, 0.0
        %v12450 = vsel %vm12416, %v12385, 0.0
        %v12451 = vsel %vm12416, %v12386, 0.0
        %v12452 = vsel %vm12416, %v12387, 0.0
        %v12453 = vsel %vm12416, %v12388, 0.0
        %v12454 = vsel %vm12416, %v12389, 0.0
        %v12455 = vsel %vm12416, %v12390, 0.0
        %v12456 = vsel %vm12416, %v12391, 0.0
        %v12457 = vsel %vm12416, %v12392, 0.0
        %v12458 = vsel %vm12416, %v12393, 0.0
        %v12459 = vsel %vm12416, %v12394, 0.0
        %v12460 = vsel %vm12416, %v12395, 0.0
        %v12461 = vsel %vm12416, %v12396, 0.0
        %v12462 = vsel %vm12416, %v12397, 0.0
        %v12463 = vsel %vm12416, %v12398, 0.0
        %v12464 = vsel %vm12416, %v12399, 0.0
        %v12465 = vsel %vm12416, %v12400, 0.0
        %v12466 = vsel %vm12416, %v12401, 0.0
        %v12467 = vsel %vm12416, %v12402, 0.0
        %v12468 = vsel %vm12416, %v12403, 0.0
        %v12469 = vsel %vm12416, %v12404, 0.0
        %v12470 = vsel %vm12416, %v12405, 0.0
        %v12471 = vsel %vm12416, %v12406, 0.0
        %v12472 = vsel %vm12416, %v12407, 0.0
        %v12473 = vsel %vm12416, %v12408, 0.0
        %v12474 = vsel %vm12416, %v12409, 0.0
        %v12475 = vsel %vm12416, %v12410, 0.0
        %v12476 = vsel %vm12416, %v12411, 0.0
        %v12477 = vsel %vm12416, %v12412, 0.0
        %v12478 = vsel %vm12416, %v12413, 0.0
        %v12479 = vsel %vm12416, %v12414, 0.0
        %v12480 = vsel %vm12416, %v12415, 0.0
        %12481 = vst [vmem:[%s268] sm:$0xff] %v12417
        %12482 = vst [vmem:[%s268 + $0x8] sm:$0xff] %v12418
        %12483 = vst [vmem:[%s268 + $0x10] sm:$0xff] %v12419
        %12484 = vst [vmem:[%s268 + $0x18] sm:$0xff] %v12420
        %12485 = vst [vmem:[%s268 + $0x20] sm:$0xff] %v12421
        %12486 = vst [vmem:[%s268 + $0x28] sm:$0xff] %v12422
        %12487 = vst [vmem:[%s268 + $0x30] sm:$0xff] %v12423
        %12488 = vst [vmem:[%s268 + $0x38] sm:$0xff] %v12424
        %12489 = vst [vmem:[%s268 + $0x40] sm:$0xff] %v12425
        %12490 = vst [vmem:[%s268 + $0x48] sm:$0xff] %v12426
        %12491 = vst [vmem:[%s268 + $0x50] sm:$0xff] %v12427
        %12492 = vst [vmem:[%s268 + $0x58] sm:$0xff] %v12428
        %12493 = vst [vmem:[%s268 + $0x60] sm:$0xff] %v12429
        %12494 = vst [vmem:[%s268 + $0x68] sm:$0xff] %v12430
        %12495 = vst [vmem:[%s268 + $0x70] sm:$0xff] %v12431
        %12496 = vst [vmem:[%s268 + $0x78] sm:$0xff] %v12432
        %12497 = vst [vmem:[%s268 + $0x80] sm:$0xff] %v12433
        %12498 = vst [vmem:[%s268 + $0x88] sm:$0xff] %v12434
        %12499 = vst [vmem:[%s268 + $0x90] sm:$0xff] %v12435
        %12500 = vst [vmem:[%s268 + $0x98] sm:$0xff] %v12436
        %12501 = vst [vmem:[%s268 + $0xa0] sm:$0xff] %v12437
        %12502 = vst [vmem:[%s268 + $0xa8] sm:$0xff] %v12438
        %12503 = vst [vmem:[%s268 + $0xb0] sm:$0xff] %v12439
        %12504 = vst [vmem:[%s268 + $0xb8] sm:$0xff] %v12440
        %12505 = vst [vmem:[%s268 + $0xc0] sm:$0xff] %v12441
        %12506 = vst [vmem:[%s268 + $0xc8] sm:$0xff] %v12442
        %12507 = vst [vmem:[%s268 + $0xd0] sm:$0xff] %v12443
        %12508 = vst [vmem:[%s268 + $0xd8] sm:$0xff] %v12444
        %12509 = vst [vmem:[%s268 + $0xe0] sm:$0xff] %v12445
        %12510 = vst [vmem:[%s268 + $0xe8] sm:$0xff] %v12446
        %12511 = vst [vmem:[%s268 + $0xf0] sm:$0xff] %v12447
        %12512 = vst [vmem:[%s268 + $0xf8] sm:$0xff] %v12448
        %12513 = vst [vmem:[%s268 + $0x100] sm:$0xff] %v12449
        %12514 = vst [vmem:[%s268 + $0x108] sm:$0xff] %v12450
        %12515 = vst [vmem:[%s268 + $0x110] sm:$0xff] %v12451
        %12516 = vst [vmem:[%s268 + $0x118] sm:$0xff] %v12452
        %12517 = vst [vmem:[%s268 + $0x120] sm:$0xff] %v12453
        %12518 = vst [vmem:[%s268 + $0x128] sm:$0xff] %v12454
        %12519 = vst [vmem:[%s268 + $0x130] sm:$0xff] %v12455
        %12520 = vst [vmem:[%s268 + $0x138] sm:$0xff] %v12456
        %12521 = vst [vmem:[%s268 + $0x140] sm:$0xff] %v12457
        %12522 = vst [vmem:[%s268 + $0x148] sm:$0xff] %v12458
        %12523 = vst [vmem:[%s268 + $0x150] sm:$0xff] %v12459
        %12524 = vst [vmem:[%s268 + $0x158] sm:$0xff] %v12460
        %12525 = vst [vmem:[%s268 + $0x160] sm:$0xff] %v12461
        %12526 = vst [vmem:[%s268 + $0x168] sm:$0xff] %v12462
        %12527 = vst [vmem:[%s268 + $0x170] sm:$0xff] %v12463
        %12528 = vst [vmem:[%s268 + $0x178] sm:$0xff] %v12464
        %12529 = vst [vmem:[%s268 + $0x180] sm:$0xff] %v12465
        %12530 = vst [vmem:[%s268 + $0x188] sm:$0xff] %v12466
        %12531 = vst [vmem:[%s268 + $0x190] sm:$0xff] %v12467
        %12532 = vst [vmem:[%s268 + $0x198] sm:$0xff] %v12468
        %12533 = vst [vmem:[%s268 + $0x1a0] sm:$0xff] %v12469
        %12534 = vst [vmem:[%s268 + $0x1a8] sm:$0xff] %v12470
        %12535 = vst [vmem:[%s268 + $0x1b0] sm:$0xff] %v12471
        %12536 = vst [vmem:[%s268 + $0x1b8] sm:$0xff] %v12472
        %12537 = vst [vmem:[%s268 + $0x1c0] sm:$0xff] %v12473
        %12538 = vst [vmem:[%s268 + $0x1c8] sm:$0xff] %v12474
        %12539 = vst [vmem:[%s268 + $0x1d0] sm:$0xff] %v12475
        %12540 = vst [vmem:[%s268 + $0x1d8] sm:$0xff] %v12476
        %12541 = vst [vmem:[%s268 + $0x1e0] sm:$0xff] %v12477
        %12542 = vst [vmem:[%s268 + $0x1e8] sm:$0xff] %v12478
        %12543 = vst [vmem:[%s268 + $0x1f0] sm:$0xff] %v12479
        %12544 = vst [vmem:[%s268 + $0x1f8] sm:$0xff] %v12480
        %s12545 = smul.u32 64, %s18
        %p12546 = scmp.lt.s32.totalorder %s12545, 127
        %s12547 = scalar_select %p12546, %s12545, 127
        %s12548 = smul.addr %s12547, 8
        %s12549 = scalar_lea.vmem %s6, %s12548
        // Predicated region
        $region49: #{_lambda_.1} parent=43 // pred_check
          %p12550 = pneg %p167
        $region50: #{_lambda_.1} parent=43 // pred_check_branch
          %12552 = sbr.rel (%p12550) target = $region52
        $region51: #{_lambda_.1} parent=43 // pred_region
          %s12553 = smul.u32 64, %s18
        $region52: #{_lambda_.1} parent=43 // pred_fallthru
          _
      $region44: #{_lambda_.1} parent=5 // pred_fallthru
        _
      %p12554 = scmp.le.s32.totalorder 2, %s13
      // Predicated region
      $region53: #{_lambda_.1} parent=5 // pred_check
        %p12555 = pneg %p12554
      $region54: #{_lambda_.1} parent=5 // pred_check_branch
        %12557 = sbr.rel (%p12555) target = $region56
      $region55: #{_lambda_.1} parent=5 // pred_region
        %s12558 = ssub.s32 %s13, 2
        // Predicated region
        $region57: #{_lambda_.1} parent=55 // pred_check
          %p12559 = pneg %p173
        $region58: #{_lambda_.1} parent=55 // pred_check_branch
          %12561 = sbr.rel (%p12559) target = $region60
        $region59: #{_lambda_.1} parent=55 // pred_region
          %s12562 = smul.u32 64, %s19
          %p12563 = scmp.lt.s32.totalorder %s12562, 127
          %s12564 = scalar_select %p12563, %s12562, 127
          %s12565 = smul.addr %s12564, 8
          %s12566 = scalar_lea.vmem %s6, %s12565
        $region60: #{_lambda_.1} parent=55 // pred_fallthru
          _
      $region56: #{_lambda_.1} parent=5 // pred_fallthru
        _
    $region6: #{_lambda_.1} parent=1 // loop_footer
      %s17 = sadd.s32 1, %s13
    $region7: #{_lambda_.1} parent=1 // loop_footer_branch
      %12 = sbr.rel target = $region3
    $region8: #{_lambda_.1} parent=1 // loop_exit
      _
    %12567 = vsyncpa [#allocation3], 1
    %s12568 = scalar_lea.sflag [#allocation3], 1
    %12569 = vsyncpa %s12568, 1

</llo_original>
